<compile_context>
chip_gen: v5e
topology: v5e:2x2
jax: 0.10.0
libtpu: 0.0.40
codegen_flags: <defaults>
</compile_context>

<pallas_src>
import functools

import jax
import jax.numpy as jnp
from jax.experimental import pallas as pl

_BN_EPS = 1e-5
_SINGLE_BLOCK_GUARD_BYTES = 8 * 1024 * 1024


def _check_single_block(*arrays):
    total = sum(int(a.size) * a.dtype.itemsize for a in arrays)
    assert total < _SINGLE_BLOCK_GUARD_BYTES, (
        "per-layer operands no longer fit a single VMEM block; add an M-grid "
        "before scaling shapes up")


# ----------------------------------------------------------------------------
# Pallas kernels (single-block, fully fused epilogues)
# ----------------------------------------------------------------------------
def _conv_bn_relu_kernel(a_ref, w_ref, b_ref, g_ref, beta_ref, o_ref, *,
                         n_rows, eps):
    # out = relu(batchnorm(A @ W + b)); BN uses batch statistics (train mode).
    r = jnp.dot(a_ref[...], w_ref[...], preferred_element_type=jnp.float32)
    r = r + b_ref[...]
    mean = jnp.sum(r, axis=0, keepdims=True) * (1.0 / n_rows)
    d = r - mean
    var = jnp.sum(d * d, axis=0, keepdims=True) * (1.0 / n_rows)
    y = d * jax.lax.rsqrt(var + eps) * g_ref[...] + beta_ref[...]
    o_ref[...] = jnp.maximum(y, 0.0).astype(o_ref.dtype)


def _conv_act_kernel(a_ref, w_ref, b_ref, o_ref, *, activation):
    r = jnp.dot(a_ref[...], w_ref[...], preferred_element_type=jnp.float32)
    r = r + b_ref[...]
    if activation == "relu":
        r = jnp.maximum(r, 0.0)
    elif activation == "sigmoid":
        r = pl.reciprocal(1.0 + jnp.exp(-r))   # exp on EUP; exact recip keeps [0,1]
    o_ref[...] = r.astype(o_ref.dtype)


def _convt_bn_relu_kernel(a_ref, w_ref, b_ref, g_ref, beta_ref, o_ref, *,
                          n_rows, eps):
    # a_ref: (4, M, K) phase patches, w_ref: (4, K, N) phase weights.
    # BN statistics span all 4 phases (= every output pixel of the convT).
    res = [jnp.dot(a_ref[p], w_ref[p], preferred_element_type=jnp.float32)
           + b_ref[...] for p in range(4)]
    total = res[0] + res[1] + res[2] + res[3]
    mean = jnp.sum(total, axis=0, keepdims=True) * (1.0 / n_rows)
    var = (jnp.sum((res[0] - mean) ** 2, axis=0, keepdims=True)
           + jnp.sum((res[1] - mean) ** 2, axis=0, keepdims=True)
           + jnp.sum((res[2] - mean) ** 2, axis=0, keepdims=True)
           + jnp.sum((res[3] - mean) ** 2, axis=0, keepdims=True)) * (1.0 / n_rows)
    inv = jax.lax.rsqrt(var + eps)
    for p in range(4):
        y = (res[p] - mean) * inv * g_ref[...] + beta_ref[...]
        o_ref[p] = jnp.maximum(y, 0.0).astype(o_ref.dtype)


def _convt_bn_relu_proj_sigmoid_kernel(a_ref, w_ref, b_ref, g_ref, beta_ref,
                                       w2_ref, b2_ref, o_ref, *, n_rows, eps):
    # Final decoder stage: ConvT + BN + ReLU + 1x1 Conv + Sigmoid, fully fused.
    res = [jnp.dot(a_ref[p], w_ref[p], preferred_element_type=jnp.float32)
           + b_ref[...] for p in range(4)]
    total = res[0] + res[1] + res[2] + res[3]
    mean = jnp.sum(total, axis=0, keepdims=True) * (1.0 / n_rows)
    var = (jnp.sum((res[0] - mean) ** 2, axis=0, keepdims=True)
           + jnp.sum((res[1] - mean) ** 2, axis=0, keepdims=True)
           + jnp.sum((res[2] - mean) ** 2, axis=0, keepdims=True)
           + jnp.sum((res[3] - mean) ** 2, axis=0, keepdims=True)) * (1.0 / n_rows)
    inv = jax.lax.rsqrt(var + eps)
    for p in range(4):
        h = jnp.maximum((res[p] - mean) * inv * g_ref[...] + beta_ref[...], 0.0)
        z = jnp.dot(h.astype(w2_ref.dtype), w2_ref[...],
                    preferred_element_type=jnp.float32) + b2_ref[...]
        z = pl.reciprocal(1.0 + jnp.exp(-z))   # sigmoid; exact recip keeps [0,1]
        o_ref[p] = z.astype(o_ref.dtype)


# ----------------------------------------------------------------------------
# Thin wrappers around pallas_call (whole-array single blocks, no padding)
# ----------------------------------------------------------------------------
def fused_conv_bn_relu(patches, w, b, g, beta):
    M = patches.shape[0]
    N = w.shape[1]
    _check_single_block(patches, w)
    return pl.pallas_call(
        functools.partial(_conv_bn_relu_kernel, n_rows=float(M), eps=_BN_EPS),
        out_shape=jax.ShapeDtypeStruct((M, N), jnp.bfloat16),
    )(patches, w, b, g, beta)


def fused_conv_act(patches, w, b, activation, out_dtype=jnp.bfloat16):
    M = patches.shape[0]
    N = w.shape[1]
    _check_single_block(patches, w)
    return pl.pallas_call(
        functools.partial(_conv_act_kernel, activation=activation),
        out_shape=jax.ShapeDtypeStruct((M, N), out_dtype),
    )(patches, w, b)


def fused_convt_bn_relu(phase_patches, w, b, g, beta):
    M = phase_patches.shape[1]
    N = w.shape[2]
    _check_single_block(phase_patches, w)
    return pl.pallas_call(
        functools.partial(_convt_bn_relu_kernel, n_rows=float(4 * M), eps=_BN_EPS),
        out_shape=jax.ShapeDtypeStruct((4, M, N), jnp.bfloat16),
    )(phase_patches, w, b, g, beta)


def fused_convt_bn_relu_proj_sigmoid(phase_patches, w, b, g, beta, w2, b2):
    M = phase_patches.shape[1]
    N2 = w2.shape[1]
    _check_single_block(phase_patches, w)
    return pl.pallas_call(
        functools.partial(_convt_bn_relu_proj_sigmoid_kernel,
                          n_rows=float(4 * M), eps=_BN_EPS),
        out_shape=jax.ShapeDtypeStruct((4, M, N2), jnp.float32),
    )(phase_patches, w, b, g, beta, w2, b2)


# ----------------------------------------------------------------------------
# Plain-JAX data movement: im2col, conv-transpose phase split, interleave
# ----------------------------------------------------------------------------
def _extract_patches(x, k, stride, pad):
    """x: (N,H,W,C) -> (N*Ho*Wo, k*k*C), plus output spatial shape."""
    x = jnp.pad(x, ((0, 0), (pad, pad), (pad, pad), (0, 0)))
    N, H, W, C = x.shape
    Ho = (H - k) // stride + 1
    Wo = (W - k) // stride + 1
    pieces = []
    for i in range(k):
        for j in range(k):
            pieces.append(x[:, i:i + stride * Ho:stride, j:j + stride * Wo:stride, :])
    p = jnp.stack(pieces, axis=3)                      # (N, Ho, Wo, k*k, C)
    return p.reshape(N * Ho * Wo, k * k * C), (N, Ho, Wo)


# ConvTranspose2d(k=4, stride=2, pad=1) phase split: output pixel (2t+py,2s+px)
# depends on a 2x2 window of the (zero-padded) input with kernel taps _TAPS.
_TAPS = ((3, 1), (2, 0))      # phase 0 (even output coord) / phase 1 (odd)


def _convt_phase_patches(x):
    """x: (N,H,W,C) -> (4, N*H*W, 4*C); phase index = py*2 + px."""
    N, H, W, C = x.shape
    xp = jnp.pad(x, ((0, 0), (1, 1), (1, 1), (0, 0)))
    phases = []
    for py in range(2):
        for px in range(2):
            pieces = []
            for dy in range(2):
                for dx in range(2):
                    pieces.append(xp[:, py + dy:py + dy + H, px + dx:px + dx + W, :])
            p = jnp.stack(pieces, axis=3).reshape(N * H * W, 4 * C)
            phases.append(p)
    return jnp.stack(phases, axis=0), (N, H, W)


def _interleave_phases(y, N, H, W, C):
    """y: (4, N*H*W, C) with phase = py*2+px -> (N, 2H, 2W, C)."""
    y = y.reshape(2, 2, N, H, W, C)
    y = jnp.transpose(y, (2, 3, 0, 4, 1, 5))           # (N, H, py, W, px, C)
    return y.reshape(N, 2 * H, 2 * W, C)


# ----------------------------------------------------------------------------
# Parameters: PyTorch-layout init, then one-time repack (outside jit)
# ----------------------------------------------------------------------------
def init_params(key):
    ks = jax.random.split(key, 12)
    n = lambda k, shape, s=0.1: (s * jax.random.normal(k, shape)).astype(jnp.float32)
    return {
        "w1": n(ks[0], (32, 1, 4, 4)),   "b1": n(ks[1], (32,)),
        "g1": jnp.ones((32,), jnp.float32), "be1": jnp.zeros((32,), jnp.float32),
        "w2": n(ks[2], (64, 32, 4, 4)),  "b2": n(ks[3], (64,)),
        "g2": jnp.ones((64,), jnp.float32), "be2": jnp.zeros((64,), jnp.float32),
        "w3": n(ks[4], (128, 64, 3, 3)), "b3": n(ks[5], (128,)),
        "w4": n(ks[6], (128, 64, 4, 4)), "b4": n(ks[7], (64,)),   # ConvT (Cin,Cout,k,k)
        "g4": jnp.ones((64,), jnp.float32), "be4": jnp.zeros((64,), jnp.float32),
        "w5": n(ks[8], (64, 32, 4, 4)),  "b5": n(ks[9], (32,)),   # ConvT (Cin,Cout,k,k)
        "g5": jnp.ones((32,), jnp.float32), "be5": jnp.zeros((32,), jnp.float32),
        "w6": n(ks[10], (3, 32, 1, 1)),  "b6": n(ks[11], (3,)),
    }


def _pack_conv_weight(w):
    """(Cout, Cin, kh, kw) -> (kh*kw*Cin, Cout), matching _extract_patches order."""
    _, cin, kh, kw = w.shape
    return jnp.transpose(w, (2, 3, 1, 0)).reshape(kh * kw * cin, w.shape[0])


def _pack_convt_weight(w):
    """(Cin, Cout, 4, 4) -> (4, 4*Cin, Cout) per-phase matrices."""
    cin, cout = w.shape[0], w.shape[1]
    phases = []
    for py in range(2):
        for px in range(2):
            sub = w[:, :, list(_TAPS[py]), :][:, :, :, list(_TAPS[px])]   # (Cin,Cout,2,2)
            phases.append(jnp.transpose(sub, (2, 3, 0, 1)).reshape(4 * cin, cout))
    return jnp.stack(phases, axis=0)


def pack_params(p):
    """One-time (outside jit): im2col/phase weight layout + bf16 cast."""
    bf = lambda a: a.astype(jnp.bfloat16)
    row = lambda a: a.reshape(1, -1).astype(jnp.float32)
    return {
        "w1": bf(_pack_conv_weight(p["w1"])),  "b1": row(p["b1"]),
        "g1": row(p["g1"]),  "be1": row(p["be1"]),
        "w2": bf(_pack_conv_weight(p["w2"])),  "b2": row(p["b2"]),
        "g2": row(p["g2"]),  "be2": row(p["be2"]),
        "w3": bf(_pack_conv_weight(p["w3"])),  "b3": row(p["b3"]),
        "w4": bf(_pack_convt_weight(p["w4"])), "b4": row(p["b4"]),
        "g4": row(p["g4"]),  "be4": row(p["be4"]),
        "w5": bf(_pack_convt_weight(p["w5"])), "b5": row(p["b5"]),
        "g5": row(p["g5"]),  "be5": row(p["be5"]),
        "w6": bf(_pack_conv_weight(p["w6"])),  "b6": row(p["b6"]),
    }


# ----------------------------------------------------------------------------
# Forward pass (ColorMapper.forward), NCHW in / NCHW out
# ----------------------------------------------------------------------------
def color_mapper_forward(x_nchw, q):
    x = jnp.transpose(x_nchw, (0, 2, 3, 1)).astype(jnp.bfloat16)   # NCHW -> NHWC

    # encoder: Conv(1->32,4,s2,p1) + BN + ReLU
    a, (N, H, W) = _extract_patches(x, 4, 2, 1)
    h = fused_conv_bn_relu(a, q["w1"], q["b1"], q["g1"], q["be1"]).reshape(N, H, W, 32)
    # encoder: Conv(32->64,4,s2,p1) + BN + ReLU
    a, (N, H, W) = _extract_patches(h, 4, 2, 1)
    h = fused_conv_bn_relu(a, q["w2"], q["b2"], q["g2"], q["be2"]).reshape(N, H, W, 64)
    # middle: Conv(64->128,3,s1,p1) + ReLU
    a, (N, H, W) = _extract_patches(h, 3, 1, 1)
    h = fused_conv_act(a, q["w3"], q["b3"], "relu").reshape(N, H, W, 128)
    # decoder: ConvT(128->64,4,s2,p1) + BN + ReLU  (phase split)
    a, (N, H, W) = _convt_phase_patches(h)
    y = fused_convt_bn_relu(a, q["w4"], q["b4"], q["g4"], q["be4"])
    h = _interleave_phases(y, N, H, W, 64)
    # decoder: ConvT(64->32,4,s2,p1) + BN + ReLU + Conv(32->3,1) + Sigmoid (one kernel)
    a, (N, H, W) = _convt_phase_patches(h)
    y = fused_convt_bn_relu_proj_sigmoid(a, q["w5"], q["b5"], q["g5"], q["be5"],
                                         q["w6"], q["b6"])
    out = _interleave_phases(y, N, H, W, 3)            # (N, 2H, 2W, 3) fp32
    return jnp.transpose(out, (0, 3, 1, 2))            # NHWC -> NCHW


if __name__ == "__main__":
    key = jax.random.PRNGKey(0)
    pkey, xkey = jax.random.split(key)
    params = pack_params(init_params(pkey))            # repack/cast once, outside jit

    x = jax.random.normal(xkey, (2, 1, 16, 16), dtype=jnp.float32)  # NCHW grayscale

    fwd = jax.jit(color_mapper_forward)
    y = fwd(x, params)
    jax.block_until_ready(y)

    assert y.shape == (2, 3, 16, 16), y.shape
    assert y.dtype == jnp.float32
    assert bool(jnp.all(jnp.isfinite(y)))
    assert bool(jnp.all((y >= 0.0) & (y <= 1.0)))      # sigmoid output range
    print("KERNEL_OK")
</pallas_src>

<mosaic_0001>
module attributes {stable_mosaic.version = 11 : i64} {
  func.func @_conv_bn_relu_kernel(%arg0: memref<128x16xbf16, #tpu.memory_space<vmem>>, %arg1: memref<16x32xbf16, #tpu.memory_space<vmem>>, %arg2: memref<1x32xf32, #tpu.memory_space<vmem>>, %arg3: memref<1x32xf32, #tpu.memory_space<vmem>>, %arg4: memref<1x32xf32, #tpu.memory_space<vmem>>, %arg5: memref<128x32xbf16, #tpu.memory_space<vmem>>) attributes {dimension_semantics = [], scalar_prefetch = 0 : i64, scratch_operands = 0 : i64, tpu.core_type = #tpu.core_type<tc>} {
    %c0 = arith.constant 0 : index
    %c0_0 = arith.constant 0 : index
    %0 = vector.load %arg0[%c0, %c0_0] : memref<128x16xbf16, #tpu.memory_space<vmem>>, vector<128x16xbf16>
    %c0_1 = arith.constant 0 : index
    %c0_2 = arith.constant 0 : index
    %1 = vector.load %arg1[%c0_1, %c0_2] : memref<16x32xbf16, #tpu.memory_space<vmem>>, vector<16x32xbf16>
    %cst = arith.constant dense<0.000000e+00> : vector<128x32xf32>
    %2 = tpu.matmul %0, %1, %cst {dimension_numbers = #tpu.dot_dimension_numbers<[1], [0], [0], [1], [0, 0, 1, 1], [], []>} : vector<128x16xbf16>, vector<16x32xbf16>, vector<128x32xf32> -> vector<128x32xf32>
    %c0_3 = arith.constant 0 : index
    %c0_4 = arith.constant 0 : index
    %3 = vector.load %arg2[%c0_3, %c0_4] : memref<1x32xf32, #tpu.memory_space<vmem>>, vector<1x32xf32>
    %4 = vector.broadcast %3 : vector<1x32xf32> to vector<128x32xf32>
    %5 = arith.addf %2, %4 : vector<128x32xf32>
    %cst_5 = arith.constant dense<0.000000e+00> : vector<32xf32>
    %6 = vector.multi_reduction <add>, %5, %cst_5 [0] : vector<128x32xf32> to vector<32xf32>
    %7 = vector.shape_cast %6 : vector<32xf32> to vector<1x32xf32>
    %cst_6 = arith.constant 7.812500e-03 : f32
    %8 = vector.broadcast %cst_6 : f32 to vector<1x32xf32>
    %9 = arith.mulf %7, %8 : vector<1x32xf32>
    %10 = vector.broadcast %9 : vector<1x32xf32> to vector<128x32xf32>
    %11 = arith.subf %5, %10 : vector<128x32xf32>
    %12 = arith.mulf %11, %11 : vector<128x32xf32>
    %cst_7 = arith.constant dense<0.000000e+00> : vector<32xf32>
    %13 = vector.multi_reduction <add>, %12, %cst_7 [0] : vector<128x32xf32> to vector<32xf32>
    %14 = vector.shape_cast %13 : vector<32xf32> to vector<1x32xf32>
    %cst_8 = arith.constant 7.812500e-03 : f32
    %15 = vector.broadcast %cst_8 : f32 to vector<1x32xf32>
    %16 = arith.mulf %14, %15 : vector<1x32xf32>
    %cst_9 = arith.constant 9.99999974E-6 : f32
    %17 = vector.broadcast %cst_9 : f32 to vector<1x32xf32>
    %18 = arith.addf %16, %17 : vector<1x32xf32>
    %19 = math.rsqrt %18 : vector<1x32xf32>
    %20 = vector.broadcast %19 : vector<1x32xf32> to vector<128x32xf32>
    %21 = arith.mulf %11, %20 : vector<128x32xf32>
    %c0_10 = arith.constant 0 : index
    %c0_11 = arith.constant 0 : index
    %22 = vector.load %arg3[%c0_10, %c0_11] : memref<1x32xf32, #tpu.memory_space<vmem>>, vector<1x32xf32>
    %23 = vector.broadcast %22 : vector<1x32xf32> to vector<128x32xf32>
    %24 = arith.mulf %21, %23 : vector<128x32xf32>
    %c0_12 = arith.constant 0 : index
    %c0_13 = arith.constant 0 : index
    %25 = vector.load %arg4[%c0_12, %c0_13] : memref<1x32xf32, #tpu.memory_space<vmem>>, vector<1x32xf32>
    %26 = vector.broadcast %25 : vector<1x32xf32> to vector<128x32xf32>
    %27 = arith.addf %24, %26 : vector<128x32xf32>
    %cst_14 = arith.constant 0.000000e+00 : f32
    %28 = vector.broadcast %cst_14 : f32 to vector<128x32xf32>
    %29 = arith.maximumf %27, %28 : vector<128x32xf32>
    %30 = arith.truncf %29 : vector<128x32xf32> to vector<128x32xbf16>
    %c0_15 = arith.constant 0 : index
    %c0_16 = arith.constant 0 : index
    %31 = vector.load %arg5[%c0_15, %c0_16] : memref<128x32xbf16, #tpu.memory_space<vmem>>, vector<128x32xbf16>
    tpu.vector_store %arg5[%c0_15, %c0_16], %30 {strides = array<i32>} : memref<128x32xbf16, #tpu.memory_space<vmem>>, vector<128x32xbf16>,
    return
  }
}

module attributes {stable_mosaic.version = 11 : i64} {
  func.func @_conv_bn_relu_kernel(%arg0: memref<32x512xbf16, #tpu.memory_space<vmem>>, %arg1: memref<512x64xbf16, #tpu.memory_space<vmem>>, %arg2: memref<1x64xf32, #tpu.memory_space<vmem>>, %arg3: memref<1x64xf32, #tpu.memory_space<vmem>>, %arg4: memref<1x64xf32, #tpu.memory_space<vmem>>, %arg5: memref<32x64xbf16, #tpu.memory_space<vmem>>) attributes {dimension_semantics = [], scalar_prefetch = 0 : i64, scratch_operands = 0 : i64, tpu.core_type = #tpu.core_type<tc>} {
    %c0 = arith.constant 0 : index
    %c0_0 = arith.constant 0 : index
    %0 = vector.load %arg0[%c0, %c0_0] : memref<32x512xbf16, #tpu.memory_space<vmem>>, vector<32x512xbf16>
    %c0_1 = arith.constant 0 : index
    %c0_2 = arith.constant 0 : index
    %1 = vector.load %arg1[%c0_1, %c0_2] : memref<512x64xbf16, #tpu.memory_space<vmem>>, vector<512x64xbf16>
    %cst = arith.constant dense<0.000000e+00> : vector<32x64xf32>
    %2 = tpu.matmul %0, %1, %cst {dimension_numbers = #tpu.dot_dimension_numbers<[1], [0], [0], [1], [0, 0, 1, 1], [], []>} : vector<32x512xbf16>, vector<512x64xbf16>, vector<32x64xf32> -> vector<32x64xf32>
    %c0_3 = arith.constant 0 : index
    %c0_4 = arith.constant 0 : index
    %3 = vector.load %arg2[%c0_3, %c0_4] : memref<1x64xf32, #tpu.memory_space<vmem>>, vector<1x64xf32>
    %4 = vector.broadcast %3 : vector<1x64xf32> to vector<32x64xf32>
    %5 = arith.addf %2, %4 : vector<32x64xf32>
    %cst_5 = arith.constant dense<0.000000e+00> : vector<64xf32>
    %6 = vector.multi_reduction <add>, %5, %cst_5 [0] : vector<32x64xf32> to vector<64xf32>
    %7 = vector.shape_cast %6 : vector<64xf32> to vector<1x64xf32>
    %cst_6 = arith.constant 3.125000e-02 : f32
    %8 = vector.broadcast %cst_6 : f32 to vector<1x64xf32>
    %9 = arith.mulf %7, %8 : vector<1x64xf32>
    %10 = vector.broadcast %9 : vector<1x64xf32> to vector<32x64xf32>
    %11 = arith.subf %5, %10 : vector<32x64xf32>
    %12 = arith.mulf %11, %11 : vector<32x64xf32>
    %cst_7 = arith.constant dense<0.000000e+00> : vector<64xf32>
    %13 = vector.multi_reduction <add>, %12, %cst_7 [0] : vector<32x64xf32> to vector<64xf32>
    %14 = vector.shape_cast %13 : vector<64xf32> to vector<1x64xf32>
    %cst_8 = arith.constant 3.125000e-02 : f32
    %15 = vector.broadcast %cst_8 : f32 to vector<1x64xf32>
    %16 = arith.mulf %14, %15 : vector<1x64xf32>
    %cst_9 = arith.constant 9.99999974E-6 : f32
    %17 = vector.broadcast %cst_9 : f32 to vector<1x64xf32>
    %18 = arith.addf %16, %17 : vector<1x64xf32>
    %19 = math.rsqrt %18 : vector<1x64xf32>
    %20 = vector.broadcast %19 : vector<1x64xf32> to vector<32x64xf32>
    %21 = arith.mulf %11, %20 : vector<32x64xf32>
    %c0_10 = arith.constant 0 : index
    %c0_11 = arith.constant 0 : index
    %22 = vector.load %arg3[%c0_10, %c0_11] : memref<1x64xf32, #tpu.memory_space<vmem>>, vector<1x64xf32>
    %23 = vector.broadcast %22 : vector<1x64xf32> to vector<32x64xf32>
    %24 = arith.mulf %21, %23 : vector<32x64xf32>
    %c0_12 = arith.constant 0 : index
    %c0_13 = arith.constant 0 : index
    %25 = vector.load %arg4[%c0_12, %c0_13] : memref<1x64xf32, #tpu.memory_space<vmem>>, vector<1x64xf32>
    %26 = vector.broadcast %25 : vector<1x64xf32> to vector<32x64xf32>
    %27 = arith.addf %24, %26 : vector<32x64xf32>
    %cst_14 = arith.constant 0.000000e+00 : f32
    %28 = vector.broadcast %cst_14 : f32 to vector<32x64xf32>
    %29 = arith.maximumf %27, %28 : vector<32x64xf32>
    %30 = arith.truncf %29 : vector<32x64xf32> to vector<32x64xbf16>
    %c0_15 = arith.constant 0 : index
    %c0_16 = arith.constant 0 : index
    %31 = vector.load %arg5[%c0_15, %c0_16] : memref<32x64xbf16, #tpu.memory_space<vmem>>, vector<32x64xbf16>
    tpu.vector_store %arg5[%c0_15, %c0_16], %30 {strides = array<i32>} : memref<32x64xbf16, #tpu.memory_space<vmem>>, vector<32x64xbf16>,
    return
  }
}

module attributes {stable_mosaic.version = 11 : i64} {
  func.func @_conv_act_kernel(%arg0: memref<32x576xbf16, #tpu.memory_space<vmem>>, %arg1: memref<576x128xbf16, #tpu.memory_space<vmem>>, %arg2: memref<1x128xf32, #tpu.memory_space<vmem>>, %arg3: memref<32x128xbf16, #tpu.memory_space<vmem>>) attributes {dimension_semantics = [], scalar_prefetch = 0 : i64, scratch_operands = 0 : i64, tpu.core_type = #tpu.core_type<tc>} {
    %c0 = arith.constant 0 : index
    %c0_0 = arith.constant 0 : index
    %0 = vector.load %arg0[%c0, %c0_0] : memref<32x576xbf16, #tpu.memory_space<vmem>>, vector<32x576xbf16>
    %c0_1 = arith.constant 0 : index
    %c0_2 = arith.constant 0 : index
    %1 = vector.load %arg1[%c0_1, %c0_2] : memref<576x128xbf16, #tpu.memory_space<vmem>>, vector<576x128xbf16>
    %cst = arith.constant dense<0.000000e+00> : vector<32x128xf32>
    %2 = tpu.matmul %0, %1, %cst {dimension_numbers = #tpu.dot_dimension_numbers<[1], [0], [0], [1], [0, 0, 1, 1], [], []>} : vector<32x576xbf16>, vector<576x128xbf16>, vector<32x128xf32> -> vector<32x128xf32>
    %c0_3 = arith.constant 0 : index
    %c0_4 = arith.constant 0 : index
    %3 = vector.load %arg2[%c0_3, %c0_4] : memref<1x128xf32, #tpu.memory_space<vmem>>, vector<1x128xf32>
    %4 = vector.broadcast %3 : vector<1x128xf32> to vector<32x128xf32>
    %5 = arith.addf %2, %4 : vector<32x128xf32>
    %cst_5 = arith.constant 0.000000e+00 : f32
    %6 = vector.broadcast %cst_5 : f32 to vector<32x128xf32>
    %7 = arith.maximumf %5, %6 : vector<32x128xf32>
    %8 = arith.truncf %7 : vector<32x128xf32> to vector<32x128xbf16>
    %c0_6 = arith.constant 0 : index
    %c0_7 = arith.constant 0 : index
    %9 = vector.load %arg3[%c0_6, %c0_7] : memref<32x128xbf16, #tpu.memory_space<vmem>>, vector<32x128xbf16>
    tpu.vector_store %arg3[%c0_6, %c0_7], %8 {strides = array<i32>} : memref<32x128xbf16, #tpu.memory_space<vmem>>, vector<32x128xbf16>,
    return
  }
}

module attributes {stable_mosaic.version = 11 : i64} {
  func.func @_convt_bn_relu_kernel(%arg0: memref<4x32x512xbf16, #tpu.memory_space<vmem>>, %arg1: memref<4x512x64xbf16, #tpu.memory_space<vmem>>, %arg2: memref<1x64xf32, #tpu.memory_space<vmem>>, %arg3: memref<1x64xf32, #tpu.memory_space<vmem>>, %arg4: memref<1x64xf32, #tpu.memory_space<vmem>>, %arg5: memref<4x32x64xbf16, #tpu.memory_space<vmem>>) attributes {dimension_semantics = [], scalar_prefetch = 0 : i64, scratch_operands = 0 : i64, tpu.core_type = #tpu.core_type<tc>} {
    %c0 = arith.constant 0 : index
    %c0_0 = arith.constant 0 : index
    %c0_1 = arith.constant 0 : index
    %0 = vector.load %arg0[%c0, %c0_0, %c0_1] : memref<4x32x512xbf16, #tpu.memory_space<vmem>>, vector<1x32x512xbf16>
    %1 = vector.shape_cast %0 : vector<1x32x512xbf16> to vector<32x512xbf16>
    %c0_2 = arith.constant 0 : index
    %c0_3 = arith.constant 0 : index
    %c0_4 = arith.constant 0 : index
    %2 = vector.load %arg1[%c0_2, %c0_3, %c0_4] : memref<4x512x64xbf16, #tpu.memory_space<vmem>>, vector<1x512x64xbf16>
    %3 = vector.shape_cast %2 : vector<1x512x64xbf16> to vector<512x64xbf16>
    %cst = arith.constant dense<0.000000e+00> : vector<32x64xf32>
    %4 = tpu.matmul %1, %3, %cst {dimension_numbers = #tpu.dot_dimension_numbers<[1], [0], [0], [1], [0, 0, 1, 1], [], []>} : vector<32x512xbf16>, vector<512x64xbf16>, vector<32x64xf32> -> vector<32x64xf32>
    %c0_5 = arith.constant 0 : index
    %c0_6 = arith.constant 0 : index
    %5 = vector.load %arg2[%c0_5, %c0_6] : memref<1x64xf32, #tpu.memory_space<vmem>>, vector<1x64xf32>
    %6 = vector.broadcast %5 : vector<1x64xf32> to vector<32x64xf32>
    %7 = arith.addf %4, %6 : vector<32x64xf32>
    %c1 = arith.constant 1 : index
    %c0_7 = arith.constant 0 : index
    %c0_8 = arith.constant 0 : index
    %8 = vector.load %arg0[%c1, %c0_7, %c0_8] : memref<4x32x512xbf16, #tpu.memory_space<vmem>>, vector<1x32x512xbf16>
    %9 = vector.shape_cast %8 : vector<1x32x512xbf16> to vector<32x512xbf16>
    %c1_9 = arith.constant 1 : index
    %c0_10 = arith.constant 0 : index
    %c0_11 = arith.constant 0 : index
    %10 = vector.load %arg1[%c1_9, %c0_10, %c0_11] : memref<4x512x64xbf16, #tpu.memory_space<vmem>>, vector<1x512x64xbf16>
    %11 = vector.shape_cast %10 : vector<1x512x64xbf16> to vector<512x64xbf16>
    %cst_12 = arith.constant dense<0.000000e+00> : vector<32x64xf32>
    %12 = tpu.matmul %9, %11, %cst_12 {dimension_numbers = #tpu.dot_dimension_numbers<[1], [0], [0], [1], [0, 0, 1, 1], [], []>} : vector<32x512xbf16>, vector<512x64xbf16>, vector<32x64xf32> -> vector<32x64xf32>
    %c0_13 = arith.constant 0 : index
    %c0_14 = arith.constant 0 : index
    %13 = vector.load %arg2[%c0_13, %c0_14] : memref<1x64xf32, #tpu.memory_space<vmem>>, vector<1x64xf32>
    %14 = vector.broadcast %13 : vector<1x64xf32> to vector<32x64xf32>
    %15 = arith.addf %12, %14 : vector<32x64xf32>
    %c2 = arith.constant 2 : index
    %c0_15 = arith.constant 0 : index
    %c0_16 = arith.constant 0 : index
    %16 = vector.load %arg0[%c2, %c0_15, %c0_16] : memref<4x32x512xbf16, #tpu.memory_space<vmem>>, vector<1x32x512xbf16>
    %17 = vector.shape_cast %16 : vector<1x32x512xbf16> to vector<32x512xbf16>
    %c2_17 = arith.constant 2 : index
    %c0_18 = arith.constant 0 : index
    %c0_19 = arith.constant 0 : index
    %18 = vector.load %arg1[%c2_17, %c0_18, %c0_19] : memref<4x512x64xbf16, #tpu.memory_space<vmem>>, vector<1x512x64xbf16>
    %19 = vector.shape_cast %18 : vector<1x512x64xbf16> to vector<512x64xbf16>
    %cst_20 = arith.constant dense<0.000000e+00> : vector<32x64xf32>
    %20 = tpu.matmul %17, %19, %cst_20 {dimension_numbers = #tpu.dot_dimension_numbers<[1], [0], [0], [1], [0, 0, 1, 1], [], []>} : vector<32x512xbf16>, vector<512x64xbf16>, vector<32x64xf32> -> vector<32x64xf32>
    %c0_21 = arith.constant 0 : index
    %c0_22 = arith.constant 0 : index
    %21 = vector.load %arg2[%c0_21, %c0_22] : memref<1x64xf32, #tpu.memory_space<vmem>>, vector<1x64xf32>
    %22 = vector.broadcast %21 : vector<1x64xf32> to vector<32x64xf32>
    %23 = arith.addf %20, %22 : vector<32x64xf32>
    %c3 = arith.constant 3 : index
    %c0_23 = arith.constant 0 : index
    %c0_24 = arith.constant 0 : index
    %24 = vector.load %arg0[%c3, %c0_23, %c0_24] : memref<4x32x512xbf16, #tpu.memory_space<vmem>>, vector<1x32x512xbf16>
    %25 = vector.shape_cast %24 : vector<1x32x512xbf16> to vector<32x512xbf16>
    %c3_25 = arith.constant 3 : index
    %c0_26 = arith.constant 0 : index
    %c0_27 = arith.constant 0 : index
    %26 = vector.load %arg1[%c3_25, %c0_26, %c0_27] : memref<4x512x64xbf16, #tpu.memory_space<vmem>>, vector<1x512x64xbf16>
    %27 = vector.shape_cast %26 : vector<1x512x64xbf16> to vector<512x64xbf16>
    %cst_28 = arith.constant dense<0.000000e+00> : vector<32x64xf32>
    %28 = tpu.matmul %25, %27, %cst_28 {dimension_numbers = #tpu.dot_dimension_numbers<[1], [0], [0], [1], [0, 0, 1, 1], [], []>} : vector<32x512xbf16>, vector<512x64xbf16>, vector<32x64xf32> -> vector<32x64xf32>
    %c0_29 = arith.constant 0 : index
    %c0_30 = arith.constant 0 : index
    %29 = vector.load %arg2[%c0_29, %c0_30] : memref<1x64xf32, #tpu.memory_space<vmem>>, vector<1x64xf32>
    %30 = vector.broadcast %29 : vector<1x64xf32> to vector<32x64xf32>
    %31 = arith.addf %28, %30 : vector<32x64xf32>
    %32 = arith.addf %7, %15 : vector<32x64xf32>
    %33 = arith.addf %32, %23 : vector<32x64xf32>
    %34 = arith.addf %33, %31 : vector<32x64xf32>
    %cst_31 = arith.constant dense<0.000000e+00> : vector<64xf32>
    %35 = vector.multi_reduction <add>, %34, %cst_31 [0] : vector<32x64xf32> to vector<64xf32>
    %36 = vector.shape_cast %35 : vector<64xf32> to vector<1x64xf32>
    %cst_32 = arith.constant 7.812500e-03 : f32
    %37 = vector.broadcast %cst_32 : f32 to vector<1x64xf32>
    %38 = arith.mulf %36, %37 : vector<1x64xf32>
    %39 = vector.broadcast %38 : vector<1x64xf32> to vector<32x64xf32>
    %40 = arith.subf %7, %39 : vector<32x64xf32>
    %41 = arith.mulf %40, %40 : vector<32x64xf32>
    %cst_33 = arith.constant dense<0.000000e+00> : vector<64xf32>
    %42 = vector.multi_reduction <add>, %41, %cst_33 [0] : vector<32x64xf32> to vector<64xf32>
    %43 = vector.shape_cast %42 : vector<64xf32> to vector<1x64xf32>
    %44 = vector.broadcast %38 : vector<1x64xf32> to vector<32x64xf32>
    %45 = arith.subf %15, %44 : vector<32x64xf32>
    %46 = arith.mulf %45, %45 : vector<32x64xf32>
    %cst_34 = arith.constant dense<0.000000e+00> : vector<64xf32>
    %47 = vector.multi_reduction <add>, %46, %cst_34 [0] : vector<32x64xf32> to vector<64xf32>
    %48 = vector.shape_cast %47 : vector<64xf32> to vector<1x64xf32>
    %49 = arith.addf %43, %48 : vector<1x64xf32>
    %50 = vector.broadcast %38 : vector<1x64xf32> to vector<32x64xf32>
    %51 = arith.subf %23, %50 : vector<32x64xf32>
    %52 = arith.mulf %51, %51 : vector<32x64xf32>
    %cst_35 = arith.constant dense<0.000000e+00> : vector<64xf32>
    %53 = vector.multi_reduction <add>, %52, %cst_35 [0] : vector<32x64xf32> to vector<64xf32>
    %54 = vector.shape_cast %53 : vector<64xf32> to vector<1x64xf32>
    %55 = arith.addf %49, %54 : vector<1x64xf32>
    %56 = vector.broadcast %38 : vector<1x64xf32> to vector<32x64xf32>
    %57 = arith.subf %31, %56 : vector<32x64xf32>
    %58 = arith.mulf %57, %57 : vector<32x64xf32>
    %cst_36 = arith.constant dense<0.000000e+00> : vector<64xf32>
    %59 = vector.multi_reduction <add>, %58, %cst_36 [0] : vector<32x64xf32> to vector<64xf32>
    %60 = vector.shape_cast %59 : vector<64xf32> to vector<1x64xf32>
    %61 = arith.addf %55, %60 : vector<1x64xf32>
    %cst_37 = arith.constant 7.812500e-03 : f32
    %62 = vector.broadcast %cst_37 : f32 to vector<1x64xf32>
    %63 = arith.mulf %61, %62 : vector<1x64xf32>
    %cst_38 = arith.constant 9.99999974E-6 : f32
    %64 = vector.broadcast %cst_38 : f32 to vector<1x64xf32>
    %65 = arith.addf %63, %64 : vector<1x64xf32>
    %66 = math.rsqrt %65 : vector<1x64xf32>
    %67 = vector.broadcast %38 : vector<1x64xf32> to vector<32x64xf32>
    %68 = arith.subf %7, %67 : vector<32x64xf32>
    %69 = vector.broadcast %66 : vector<1x64xf32> to vector<32x64xf32>
    %70 = arith.mulf %68, %69 : vector<32x64xf32>
    %c0_39 = arith.constant 0 : index
    %c0_40 = arith.constant 0 : index
    %71 = vector.load %arg3[%c0_39, %c0_40] : memref<1x64xf32, #tpu.memory_space<vmem>>, vector<1x64xf32>
    %72 = vector.broadcast %71 : vector<1x64xf32> to vector<32x64xf32>
    %73 = arith.mulf %70, %72 : vector<32x64xf32>
    %c0_41 = arith.constant 0 : index
    %c0_42 = arith.constant 0 : index
    %74 = vector.load %arg4[%c0_41, %c0_42] : memref<1x64xf32, #tpu.memory_space<vmem>>, vector<1x64xf32>
    %75 = vector.broadcast %74 : vector<1x64xf32> to vector<32x64xf32>
    %76 = arith.addf %73, %75 : vector<32x64xf32>
    %cst_43 = arith.constant 0.000000e+00 : f32
    %77 = vector.broadcast %cst_43 : f32 to vector<32x64xf32>
    %78 = arith.maximumf %76, %77 : vector<32x64xf32>
    %79 = arith.truncf %78 : vector<32x64xf32> to vector<32x64xbf16>
    %c0_44 = arith.constant 0 : index
    %c0_45 = arith.constant 0 : index
    %c0_46 = arith.constant 0 : index
    %80 = vector.load %arg5[%c0_44, %c0_45, %c0_46] : memref<4x32x64xbf16, #tpu.memory_space<vmem>>, vector<1x32x64xbf16>
    %81 = vector.shape_cast %80 : vector<1x32x64xbf16> to vector<32x64xbf16>
    %82 = vector.shape_cast %79 : vector<32x64xbf16> to vector<1x32x64xbf16>
    tpu.vector_store %arg5[%c0_44, %c0_45, %c0_46], %82 {strides = array<i32>} : memref<4x32x64xbf16, #tpu.memory_space<vmem>>, vector<1x32x64xbf16>,
    %83 = vector.broadcast %38 : vector<1x64xf32> to vector<32x64xf32>
    %84 = arith.subf %15, %83 : vector<32x64xf32>
    %85 = vector.broadcast %66 : vector<1x64xf32> to vector<32x64xf32>
    %86 = arith.mulf %84, %85 : vector<32x64xf32>
    %c0_47 = arith.constant 0 : index
    %c0_48 = arith.constant 0 : index
    %87 = vector.load %arg3[%c0_47, %c0_48] : memref<1x64xf32, #tpu.memory_space<vmem>>, vector<1x64xf32>
    %88 = vector.broadcast %87 : vector<1x64xf32> to vector<32x64xf32>
    %89 = arith.mulf %86, %88 : vector<32x64xf32>
    %c0_49 = arith.constant 0 : index
    %c0_50 = arith.constant 0 : index
    %90 = vector.load %arg4[%c0_49, %c0_50] : memref<1x64xf32, #tpu.memory_space<vmem>>, vector<1x64xf32>
    %91 = vector.broadcast %90 : vector<1x64xf32> to vector<32x64xf32>
    %92 = arith.addf %89, %91 : vector<32x64xf32>
    %cst_51 = arith.constant 0.000000e+00 : f32
    %93 = vector.broadcast %cst_51 : f32 to vector<32x64xf32>
    %94 = arith.maximumf %92, %93 : vector<32x64xf32>
    %95 = arith.truncf %94 : vector<32x64xf32> to vector<32x64xbf16>
    %c1_52 = arith.constant 1 : index
    %c0_53 = arith.constant 0 : index
    %c0_54 = arith.constant 0 : index
    %96 = vector.load %arg5[%c1_52, %c0_53, %c0_54] : memref<4x32x64xbf16, #tpu.memory_space<vmem>>, vector<1x32x64xbf16>
    %97 = vector.shape_cast %96 : vector<1x32x64xbf16> to vector<32x64xbf16>
    %98 = vector.shape_cast %95 : vector<32x64xbf16> to vector<1x32x64xbf16>
    tpu.vector_store %arg5[%c1_52, %c0_53, %c0_54], %98 {strides = array<i32>} : memref<4x32x64xbf16, #tpu.memory_space<vmem>>, vector<1x32x64xbf16>,
    %99 = vector.broadcast %38 : vector<1x64xf32> to vector<32x64xf32>
    %100 = arith.subf %23, %99 : vector<32x64xf32>
    %101 = vector.broadcast %66 : vector<1x64xf32> to vector<32x64xf32>
    %102 = arith.mulf %100, %101 : vector<32x64xf32>
    %c0_55 = arith.constant 0 : index
    %c0_56 = arith.constant 0 : index
    %103 = vector.load %arg3[%c0_55, %c0_56] : memref<1x64xf32, #tpu.memory_space<vmem>>, vector<1x64xf32>
    %104 = vector.broadcast %103 : vector<1x64xf32> to vector<32x64xf32>
    %105 = arith.mulf %102, %104 : vector<32x64xf32>
    %c0_57 = arith.constant 0 : index
    %c0_58 = arith.constant 0 : index
    %106 = vector.load %arg4[%c0_57, %c0_58] : memref<1x64xf32, #tpu.memory_space<vmem>>, vector<1x64xf32>
    %107 = vector.broadcast %106 : vector<1x64xf32> to vector<32x64xf32>
    %108 = arith.addf %105, %107 : vector<32x64xf32>
    %cst_59 = arith.constant 0.000000e+00 : f32
    %109 = vector.broadcast %cst_59 : f32 to vector<32x64xf32>
    %110 = arith.maximumf %108, %109 : vector<32x64xf32>
    %111 = arith.truncf %110 : vector<32x64xf32> to vector<32x64xbf16>
    %c2_60 = arith.constant 2 : index
    %c0_61 = arith.constant 0 : index
    %c0_62 = arith.constant 0 : index
    %112 = vector.load %arg5[%c2_60, %c0_61, %c0_62] : memref<4x32x64xbf16, #tpu.memory_space<vmem>>, vector<1x32x64xbf16>
    %113 = vector.shape_cast %112 : vector<1x32x64xbf16> to vector<32x64xbf16>
    %114 = vector.shape_cast %111 : vector<32x64xbf16> to vector<1x32x64xbf16>
    tpu.vector_store %arg5[%c2_60, %c0_61, %c0_62], %114 {strides = array<i32>} : memref<4x32x64xbf16, #tpu.memory_space<vmem>>, vector<1x32x64xbf16>,
    %115 = vector.broadcast %38 : vector<1x64xf32> to vector<32x64xf32>
    %116 = arith.subf %31, %115 : vector<32x64xf32>
    %117 = vector.broadcast %66 : vector<1x64xf32> to vector<32x64xf32>
    %118 = arith.mulf %116, %117 : vector<32x64xf32>
    %c0_63 = arith.constant 0 : index
    %c0_64 = arith.constant 0 : index
    %119 = vector.load %arg3[%c0_63, %c0_64] : memref<1x64xf32, #tpu.memory_space<vmem>>, vector<1x64xf32>
    %120 = vector.broadcast %119 : vector<1x64xf32> to vector<32x64xf32>
    %121 = arith.mulf %118, %120 : vector<32x64xf32>
    %c0_65 = arith.constant 0 : index
    %c0_66 = arith.constant 0 : index
    %122 = vector.load %arg4[%c0_65, %c0_66] : memref<1x64xf32, #tpu.memory_space<vmem>>, vector<1x64xf32>
    %123 = vector.broadcast %122 : vector<1x64xf32> to vector<32x64xf32>
    %124 = arith.addf %121, %123 : vector<32x64xf32>
    %cst_67 = arith.constant 0.000000e+00 : f32
    %125 = vector.broadcast %cst_67 : f32 to vector<32x64xf32>
    %126 = arith.maximumf %124, %125 : vector<32x64xf32>
    %127 = arith.truncf %126 : vector<32x64xf32> to vector<32x64xbf16>
    %c3_68 = arith.constant 3 : index
    %c0_69 = arith.constant 0 : index
    %c0_70 = arith.constant 0 : index
    %128 = vector.load %arg5[%c3_68, %c0_69, %c0_70] : memref<4x32x64xbf16, #tpu.memory_space<vmem>>, vector<1x32x64xbf16>
    %129 = vector.shape_cast %128 : vector<1x32x64xbf16> to vector<32x64xbf16>
    %130 = vector.shape_cast %127 : vector<32x64xbf16> to vector<1x32x64xbf16>
    tpu.vector_store %arg5[%c3_68, %c0_69, %c0_70], %130 {strides = array<i32>} : memref<4x32x64xbf16, #tpu.memory_space<vmem>>, vector<1x32x64xbf16>,
    return
  }
}

module attributes {stable_mosaic.version = 11 : i64} {
  func.func @_convt_bn_relu_proj_sigmoid_kernel(%arg0: memref<4x128x256xbf16, #tpu.memory_space<vmem>>, %arg1: memref<4x256x32xbf16, #tpu.memory_space<vmem>>, %arg2: memref<1x32xf32, #tpu.memory_space<vmem>>, %arg3: memref<1x32xf32, #tpu.memory_space<vmem>>, %arg4: memref<1x32xf32, #tpu.memory_space<vmem>>, %arg5: memref<32x3xbf16, #tpu.memory_space<vmem>>, %arg6: memref<1x3xf32, #tpu.memory_space<vmem>>, %arg7: memref<4x128x3xf32, #tpu.memory_space<vmem>>) attributes {dimension_semantics = [], scalar_prefetch = 0 : i64, scratch_operands = 0 : i64, tpu.core_type = #tpu.core_type<tc>} {
    %c0 = arith.constant 0 : index
    %c0_0 = arith.constant 0 : index
    %c0_1 = arith.constant 0 : index
    %0 = vector.load %arg0[%c0, %c0_0, %c0_1] : memref<4x128x256xbf16, #tpu.memory_space<vmem>>, vector<1x128x256xbf16>
    %1 = vector.shape_cast %0 : vector<1x128x256xbf16> to vector<128x256xbf16>
    %c0_2 = arith.constant 0 : index
    %c0_3 = arith.constant 0 : index
    %c0_4 = arith.constant 0 : index
    %2 = vector.load %arg1[%c0_2, %c0_3, %c0_4] : memref<4x256x32xbf16, #tpu.memory_space<vmem>>, vector<1x256x32xbf16>
    %3 = vector.shape_cast %2 : vector<1x256x32xbf16> to vector<256x32xbf16>
    %cst = arith.constant dense<0.000000e+00> : vector<128x32xf32>
    %4 = tpu.matmul %1, %3, %cst {dimension_numbers = #tpu.dot_dimension_numbers<[1], [0], [0], [1], [0, 0, 1, 1], [], []>} : vector<128x256xbf16>, vector<256x32xbf16>, vector<128x32xf32> -> vector<128x32xf32>
    %c0_5 = arith.constant 0 : index
    %c0_6 = arith.constant 0 : index
    %5 = vector.load %arg2[%c0_5, %c0_6] : memref<1x32xf32, #tpu.memory_space<vmem>>, vector<1x32xf32>
    %6 = vector.broadcast %5 : vector<1x32xf32> to vector<128x32xf32>
    %7 = arith.addf %4, %6 : vector<128x32xf32>
    %c1 = arith.constant 1 : index
    %c0_7 = arith.constant 0 : index
    %c0_8 = arith.constant 0 : index
    %8 = vector.load %arg0[%c1, %c0_7, %c0_8] : memref<4x128x256xbf16, #tpu.memory_space<vmem>>, vector<1x128x256xbf16>
    %9 = vector.shape_cast %8 : vector<1x128x256xbf16> to vector<128x256xbf16>
    %c1_9 = arith.constant 1 : index
    %c0_10 = arith.constant 0 : index
    %c0_11 = arith.constant 0 : index
    %10 = vector.load %arg1[%c1_9, %c0_10, %c0_11] : memref<4x256x32xbf16, #tpu.memory_space<vmem>>, vector<1x256x32xbf16>
    %11 = vector.shape_cast %10 : vector<1x256x32xbf16> to vector<256x32xbf16>
    %cst_12 = arith.constant dense<0.000000e+00> : vector<128x32xf32>
    %12 = tpu.matmul %9, %11, %cst_12 {dimension_numbers = #tpu.dot_dimension_numbers<[1], [0], [0], [1], [0, 0, 1, 1], [], []>} : vector<128x256xbf16>, vector<256x32xbf16>, vector<128x32xf32> -> vector<128x32xf32>
    %c0_13 = arith.constant 0 : index
    %c0_14 = arith.constant 0 : index
    %13 = vector.load %arg2[%c0_13, %c0_14] : memref<1x32xf32, #tpu.memory_space<vmem>>, vector<1x32xf32>
    %14 = vector.broadcast %13 : vector<1x32xf32> to vector<128x32xf32>
    %15 = arith.addf %12, %14 : vector<128x32xf32>
    %c2 = arith.constant 2 : index
    %c0_15 = arith.constant 0 : index
    %c0_16 = arith.constant 0 : index
    %16 = vector.load %arg0[%c2, %c0_15, %c0_16] : memref<4x128x256xbf16, #tpu.memory_space<vmem>>, vector<1x128x256xbf16>
    %17 = vector.shape_cast %16 : vector<1x128x256xbf16> to vector<128x256xbf16>
    %c2_17 = arith.constant 2 : index
    %c0_18 = arith.constant 0 : index
    %c0_19 = arith.constant 0 : index
    %18 = vector.load %arg1[%c2_17, %c0_18, %c0_19] : memref<4x256x32xbf16, #tpu.memory_space<vmem>>, vector<1x256x32xbf16>
    %19 = vector.shape_cast %18 : vector<1x256x32xbf16> to vector<256x32xbf16>
    %cst_20 = arith.constant dense<0.000000e+00> : vector<128x32xf32>
    %20 = tpu.matmul %17, %19, %cst_20 {dimension_numbers = #tpu.dot_dimension_numbers<[1], [0], [0], [1], [0, 0, 1, 1], [], []>} : vector<128x256xbf16>, vector<256x32xbf16>, vector<128x32xf32> -> vector<128x32xf32>
    %c0_21 = arith.constant 0 : index
    %c0_22 = arith.constant 0 : index
    %21 = vector.load %arg2[%c0_21, %c0_22] : memref<1x32xf32, #tpu.memory_space<vmem>>, vector<1x32xf32>
    %22 = vector.broadcast %21 : vector<1x32xf32> to vector<128x32xf32>
    %23 = arith.addf %20, %22 : vector<128x32xf32>
    %c3 = arith.constant 3 : index
    %c0_23 = arith.constant 0 : index
    %c0_24 = arith.constant 0 : index
    %24 = vector.load %arg0[%c3, %c0_23, %c0_24] : memref<4x128x256xbf16, #tpu.memory_space<vmem>>, vector<1x128x256xbf16>
    %25 = vector.shape_cast %24 : vector<1x128x256xbf16> to vector<128x256xbf16>
    %c3_25 = arith.constant 3 : index
    %c0_26 = arith.constant 0 : index
    %c0_27 = arith.constant 0 : index
    %26 = vector.load %arg1[%c3_25, %c0_26, %c0_27] : memref<4x256x32xbf16, #tpu.memory_space<vmem>>, vector<1x256x32xbf16>
    %27 = vector.shape_cast %26 : vector<1x256x32xbf16> to vector<256x32xbf16>
    %cst_28 = arith.constant dense<0.000000e+00> : vector<128x32xf32>
    %28 = tpu.matmul %25, %27, %cst_28 {dimension_numbers = #tpu.dot_dimension_numbers<[1], [0], [0], [1], [0, 0, 1, 1], [], []>} : vector<128x256xbf16>, vector<256x32xbf16>, vector<128x32xf32> -> vector<128x32xf32>
    %c0_29 = arith.constant 0 : index
    %c0_30 = arith.constant 0 : index
    %29 = vector.load %arg2[%c0_29, %c0_30] : memref<1x32xf32, #tpu.memory_space<vmem>>, vector<1x32xf32>
    %30 = vector.broadcast %29 : vector<1x32xf32> to vector<128x32xf32>
    %31 = arith.addf %28, %30 : vector<128x32xf32>
    %32 = arith.addf %7, %15 : vector<128x32xf32>
    %33 = arith.addf %32, %23 : vector<128x32xf32>
    %34 = arith.addf %33, %31 : vector<128x32xf32>
    %cst_31 = arith.constant dense<0.000000e+00> : vector<32xf32>
    %35 = vector.multi_reduction <add>, %34, %cst_31 [0] : vector<128x32xf32> to vector<32xf32>
    %36 = vector.shape_cast %35 : vector<32xf32> to vector<1x32xf32>
    %cst_32 = arith.constant 0.001953125 : f32
    %37 = vector.broadcast %cst_32 : f32 to vector<1x32xf32>
    %38 = arith.mulf %36, %37 : vector<1x32xf32>
    %39 = vector.broadcast %38 : vector<1x32xf32> to vector<128x32xf32>
    %40 = arith.subf %7, %39 : vector<128x32xf32>
    %41 = arith.mulf %40, %40 : vector<128x32xf32>
    %cst_33 = arith.constant dense<0.000000e+00> : vector<32xf32>
    %42 = vector.multi_reduction <add>, %41, %cst_33 [0] : vector<128x32xf32> to vector<32xf32>
    %43 = vector.shape_cast %42 : vector<32xf32> to vector<1x32xf32>
    %44 = vector.broadcast %38 : vector<1x32xf32> to vector<128x32xf32>
    %45 = arith.subf %15, %44 : vector<128x32xf32>
    %46 = arith.mulf %45, %45 : vector<128x32xf32>
    %cst_34 = arith.constant dense<0.000000e+00> : vector<32xf32>
    %47 = vector.multi_reduction <add>, %46, %cst_34 [0] : vector<128x32xf32> to vector<32xf32>
    %48 = vector.shape_cast %47 : vector<32xf32> to vector<1x32xf32>
    %49 = arith.addf %43, %48 : vector<1x32xf32>
    %50 = vector.broadcast %38 : vector<1x32xf32> to vector<128x32xf32>
    %51 = arith.subf %23, %50 : vector<128x32xf32>
    %52 = arith.mulf %51, %51 : vector<128x32xf32>
    %cst_35 = arith.constant dense<0.000000e+00> : vector<32xf32>
    %53 = vector.multi_reduction <add>, %52, %cst_35 [0] : vector<128x32xf32> to vector<32xf32>
    %54 = vector.shape_cast %53 : vector<32xf32> to vector<1x32xf32>
    %55 = arith.addf %49, %54 : vector<1x32xf32>
    %56 = vector.broadcast %38 : vector<1x32xf32> to vector<128x32xf32>
    %57 = arith.subf %31, %56 : vector<128x32xf32>
    %58 = arith.mulf %57, %57 : vector<128x32xf32>
    %cst_36 = arith.constant dense<0.000000e+00> : vector<32xf32>
    %59 = vector.multi_reduction <add>, %58, %cst_36 [0] : vector<128x32xf32> to vector<32xf32>
    %60 = vector.shape_cast %59 : vector<32xf32> to vector<1x32xf32>
    %61 = arith.addf %55, %60 : vector<1x32xf32>
    %cst_37 = arith.constant 0.001953125 : f32
    %62 = vector.broadcast %cst_37 : f32 to vector<1x32xf32>
    %63 = arith.mulf %61, %62 : vector<1x32xf32>
    %cst_38 = arith.constant 9.99999974E-6 : f32
    %64 = vector.broadcast %cst_38 : f32 to vector<1x32xf32>
    %65 = arith.addf %63, %64 : vector<1x32xf32>
    %66 = math.rsqrt %65 : vector<1x32xf32>
    %67 = vector.broadcast %38 : vector<1x32xf32> to vector<128x32xf32>
    %68 = arith.subf %7, %67 : vector<128x32xf32>
    %69 = vector.broadcast %66 : vector<1x32xf32> to vector<128x32xf32>
    %70 = arith.mulf %68, %69 : vector<128x32xf32>
    %c0_39 = arith.constant 0 : index
    %c0_40 = arith.constant 0 : index
    %71 = vector.load %arg3[%c0_39, %c0_40] : memref<1x32xf32, #tpu.memory_space<vmem>>, vector<1x32xf32>
    %72 = vector.broadcast %71 : vector<1x32xf32> to vector<128x32xf32>
    %73 = arith.mulf %70, %72 : vector<128x32xf32>
    %c0_41 = arith.constant 0 : index
    %c0_42 = arith.constant 0 : index
    %74 = vector.load %arg4[%c0_41, %c0_42] : memref<1x32xf32, #tpu.memory_space<vmem>>, vector<1x32xf32>
    %75 = vector.broadcast %74 : vector<1x32xf32> to vector<128x32xf32>
    %76 = arith.addf %73, %75 : vector<128x32xf32>
    %cst_43 = arith.constant 0.000000e+00 : f32
    %77 = vector.broadcast %cst_43 : f32 to vector<128x32xf32>
    %78 = arith.maximumf %76, %77 : vector<128x32xf32>
    %79 = arith.truncf %78 : vector<128x32xf32> to vector<128x32xbf16>
    %c0_44 = arith.constant 0 : index
    %c0_45 = arith.constant 0 : index
    %80 = vector.load %arg5[%c0_44, %c0_45] : memref<32x3xbf16, #tpu.memory_space<vmem>>, vector<32x3xbf16>
    %cst_46 = arith.constant dense<0.000000e+00> : vector<128x3xf32>
    %81 = tpu.matmul %79, %80, %cst_46 {dimension_numbers = #tpu.dot_dimension_numbers<[1], [0], [0], [1], [0, 0, 1, 1], [], []>} : vector<128x32xbf16>, vector<32x3xbf16>, vector<128x3xf32> -> vector<128x3xf32>
    %c0_47 = arith.constant 0 : index
    %c0_48 = arith.constant 0 : index
    %82 = vector.load %arg6[%c0_47, %c0_48] : memref<1x3xf32, #tpu.memory_space<vmem>>, vector<1x3xf32>
    %83 = vector.broadcast %82 : vector<1x3xf32> to vector<128x3xf32>
    %84 = arith.addf %81, %83 : vector<128x3xf32>
    %cst_49 = arith.constant 0.000000e+00 : f32
    %85 = vector.broadcast %cst_49 : f32 to vector<128x3xf32>
    %86 = arith.subf %85, %84 : vector<128x3xf32>
    %87 = math.exp %86 : vector<128x3xf32>
    %cst_50 = arith.constant 1.000000e+00 : f32
    %88 = vector.broadcast %cst_50 : f32 to vector<128x3xf32>
    %89 = arith.addf %88, %87 : vector<128x3xf32>
    %90 = tpu.reciprocal %89 : vector<128x3xf32> -> vector<128x3xf32>
    %c0_51 = arith.constant 0 : index
    %c0_52 = arith.constant 0 : index
    %c0_53 = arith.constant 0 : index
    %91 = vector.load %arg7[%c0_51, %c0_52, %c0_53] : memref<4x128x3xf32, #tpu.memory_space<vmem>>, vector<1x128x3xf32>
    %92 = vector.shape_cast %91 : vector<1x128x3xf32> to vector<128x3xf32>
    %93 = vector.shape_cast %90 : vector<128x3xf32> to vector<1x128x3xf32>
    tpu.vector_store %arg7[%c0_51, %c0_52, %c0_53], %93 {strides = array<i32>} : memref<4x128x3xf32, #tpu.memory_space<vmem>>, vector<1x128x3xf32>,
    %94 = vector.broadcast %38 : vector<1x32xf32> to vector<128x32xf32>
    %95 = arith.subf %15, %94 : vector<128x32xf32>
    %96 = vector.broadcast %66 : vector<1x32xf32> to vector<128x32xf32>
    %97 = arith.mulf %95, %96 : vector<128x32xf32>
    %c0_54 = arith.constant 0 : index
    %c0_55 = arith.constant 0 : index
    %98 = vector.load %arg3[%c0_54, %c0_55] : memref<1x32xf32, #tpu.memory_space<vmem>>, vector<1x32xf32>
    %99 = vector.broadcast %98 : vector<1x32xf32> to vector<128x32xf32>
    %100 = arith.mulf %97, %99 : vector<128x32xf32>
    %c0_56 = arith.constant 0 : index
    %c0_57 = arith.constant 0 : index
    %101 = vector.load %arg4[%c0_56, %c0_57] : memref<1x32xf32, #tpu.memory_space<vmem>>, vector<1x32xf32>
    %102 = vector.broadcast %101 : vector<1x32xf32> to vector<128x32xf32>
    %103 = arith.addf %100, %102 : vector<128x32xf32>
    %cst_58 = arith.constant 0.000000e+00 : f32
    %104 = vector.broadcast %cst_58 : f32 to vector<128x32xf32>
    %105 = arith.maximumf %103, %104 : vector<128x32xf32>
    %106 = arith.truncf %105 : vector<128x32xf32> to vector<128x32xbf16>
    %c0_59 = arith.constant 0 : index
    %c0_60 = arith.constant 0 : index
    %107 = vector.load %arg5[%c0_59, %c0_60] : memref<32x3xbf16, #tpu.memory_space<vmem>>, vector<32x3xbf16>
    %cst_61 = arith.constant dense<0.000000e+00> : vector<128x3xf32>
    %108 = tpu.matmul %106, %107, %cst_61 {dimension_numbers = #tpu.dot_dimension_numbers<[1], [0], [0], [1], [0, 0, 1, 1], [], []>} : vector<128x32xbf16>, vector<32x3xbf16>, vector<128x3xf32> -> vector<128x3xf32>
    %c0_62 = arith.constant 0 : index
    %c0_63 = arith.constant 0 : index
    %109 = vector.load %arg6[%c0_62, %c0_63] : memref<1x3xf32, #tpu.memory_space<vmem>>, vector<1x3xf32>
    %110 = vector.broadcast %109 : vector<1x3xf32> to vector<128x3xf32>
    %111 = arith.addf %108, %110 : vector<128x3xf32>
    %cst_64 = arith.constant 0.000000e+00 : f32
    %112 = vector.broadcast %cst_64 : f32 to vector<128x3xf32>
    %113 = arith.subf %112, %111 : vector<128x3xf32>
    %114 = math.exp %113 : vector<128x3xf32>
    %cst_65 = arith.constant 1.000000e+00 : f32
    %115 = vector.broadcast %cst_65 : f32 to vector<128x3xf32>
    %116 = arith.addf %115, %114 : vector<128x3xf32>
    %117 = tpu.reciprocal %116 : vector<128x3xf32> -> vector<128x3xf32>
    %c1_66 = arith.constant 1 : index
    %c0_67 = arith.constant 0 : index
    %c0_68 = arith.constant 0 : index
    %118 = vector.load %arg7[%c1_66, %c0_67, %c0_68] : memref<4x128x3xf32, #tpu.memory_space<vmem>>, vector<1x128x3xf32>
    %119 = vector.shape_cast %118 : vector<1x128x3xf32> to vector<128x3xf32>
    %120 = vector.shape_cast %117 : vector<128x3xf32> to vector<1x128x3xf32>
    tpu.vector_store %arg7[%c1_66, %c0_67, %c0_68], %120 {strides = array<i32>} : memref<4x128x3xf32, #tpu.memory_space<vmem>>, vector<1x128x3xf32>,
    %121 = vector.broadcast %38 : vector<1x32xf32> to vector<128x32xf32>
    %122 = arith.subf %23, %121 : vector<128x32xf32>
    %123 = vector.broadcast %66 : vector<1x32xf32> to vector<128x32xf32>
    %124 = arith.mulf %122, %123 : vector<128x32xf32>
    %c0_69 = arith.constant 0 : index
    %c0_70 = arith.constant 0 : index
    %125 = vector.load %arg3[%c0_69, %c0_70] : memref<1x32xf32, #tpu.memory_space<vmem>>, vector<1x32xf32>
    %126 = vector.broadcast %125 : vector<1x32xf32> to vector<128x32xf32>
    %127 = arith.mulf %124, %126 : vector<128x32xf32>
    %c0_71 = arith.constant 0 : index
    %c0_72 = arith.constant 0 : index
    %128 = vector.load %arg4[%c0_71, %c0_72] : memref<1x32xf32, #tpu.memory_space<vmem>>, vector<1x32xf32>
    %129 = vector.broadcast %128 : vector<1x32xf32> to vector<128x32xf32>
    %130 = arith.addf %127, %129 : vector<128x32xf32>
    %cst_73 = arith.constant 0.000000e+00 : f32
    %131 = vector.broadcast %cst_73 : f32 to vector<128x32xf32>
    %132 = arith.maximumf %130, %131 : vector<128x32xf32>
    %133 = arith.truncf %132 : vector<128x32xf32> to vector<128x32xbf16>
    %c0_74 = arith.constant 0 : index
    %c0_75 = arith.constant 0 : index
    %134 = vector.load %arg5[%c0_74, %c0_75] : memref<32x3xbf16, #tpu.memory_space<vmem>>, vector<32x3xbf16>
    %cst_76 = arith.constant dense<0.000000e+00> : vector<128x3xf32>
    %135 = tpu.matmul %133, %134, %cst_76 {dimension_numbers = #tpu.dot_dimension_numbers<[1], [0], [0], [1], [0, 0, 1, 1], [], []>} : vector<128x32xbf16>, vector<32x3xbf16>, vector<128x3xf32> -> vector<128x3xf32>
    %c0_77 = arith.constant 0 : index
    %c0_78 = arith.constant 0 : index
    %136 = vector.load %arg6[%c0_77, %c0_78] : memref<1x3xf32, #tpu.memory_space<vmem>>, vector<1x3xf32>
    %137 = vector.broadcast %136 : vector<1x3xf32> to vector<128x3xf32>
    %138 = arith.addf %135, %137 : vector<128x3xf32>
    %cst_79 = arith.constant 0.000000e+00 : f32
    %139 = vector.broadcast %cst_79 : f32 to vector<128x3xf32>
    %140 = arith.subf %139, %138 : vector<128x3xf32>
    %141 = math.exp %140 : vector<128x3xf32>
    %cst_80 = arith.constant 1.000000e+00 : f32
    %142 = vector.broadcast %cst_80 : f32 to vector<128x3xf32>
    %143 = arith.addf %142, %141 : vector<128x3xf32>
    %144 = tpu.reciprocal %143 : vector<128x3xf32> -> vector<128x3xf32>
    %c2_81 = arith.constant 2 : index
    %c0_82 = arith.constant 0 : index
    %c0_83 = arith.constant 0 : index
    %145 = vector.load %arg7[%c2_81, %c0_82, %c0_83] : memref<4x128x3xf32, #tpu.memory_space<vmem>>, vector<1x128x3xf32>
    %146 = vector.shape_cast %145 : vector<1x128x3xf32> to vector<128x3xf32>
    %147 = vector.shape_cast %144 : vector<128x3xf32> to vector<1x128x3xf32>
    tpu.vector_store %arg7[%c2_81, %c0_82, %c0_83], %147 {strides = array<i32>} : memref<4x128x3xf32, #tpu.memory_space<vmem>>, vector<1x128x3xf32>,
    %148 = vector.broadcast %38 : vector<1x32xf32> to vector<128x32xf32>
    %149 = arith.subf %31, %148 : vector<128x32xf32>
    %150 = vector.broadcast %66 : vector<1x32xf32> to vector<128x32xf32>
    %151 = arith.mulf %149, %150 : vector<128x32xf32>
    %c0_84 = arith.constant 0 : index
    %c0_85 = arith.constant 0 : index
    %152 = vector.load %arg3[%c0_84, %c0_85] : memref<1x32xf32, #tpu.memory_space<vmem>>, vector<1x32xf32>
    %153 = vector.broadcast %152 : vector<1x32xf32> to vector<128x32xf32>
    %154 = arith.mulf %151, %153 : vector<128x32xf32>
    %c0_86 = arith.constant 0 : index
    %c0_87 = arith.constant 0 : index
    %155 = vector.load %arg4[%c0_86, %c0_87] : memref<1x32xf32, #tpu.memory_space<vmem>>, vector<1x32xf32>
    %156 = vector.broadcast %155 : vector<1x32xf32> to vector<128x32xf32>
    %157 = arith.addf %154, %156 : vector<128x32xf32>
    %cst_88 = arith.constant 0.000000e+00 : f32
    %158 = vector.broadcast %cst_88 : f32 to vector<128x32xf32>
    %159 = arith.maximumf %157, %158 : vector<128x32xf32>
    %160 = arith.truncf %159 : vector<128x32xf32> to vector<128x32xbf16>
    %c0_89 = arith.constant 0 : index
    %c0_90 = arith.constant 0 : index
    %161 = vector.load %arg5[%c0_89, %c0_90] : memref<32x3xbf16, #tpu.memory_space<vmem>>, vector<32x3xbf16>
    %cst_91 = arith.constant dense<0.000000e+00> : vector<128x3xf32>
    %162 = tpu.matmul %160, %161, %cst_91 {dimension_numbers = #tpu.dot_dimension_numbers<[1], [0], [0], [1], [0, 0, 1, 1], [], []>} : vector<128x32xbf16>, vector<32x3xbf16>, vector<128x3xf32> -> vector<128x3xf32>
    %c0_92 = arith.constant 0 : index
    %c0_93 = arith.constant 0 : index
    %163 = vector.load %arg6[%c0_92, %c0_93] : memref<1x3xf32, #tpu.memory_space<vmem>>, vector<1x3xf32>
    %164 = vector.broadcast %163 : vector<1x3xf32> to vector<128x3xf32>
    %165 = arith.addf %162, %164 : vector<128x3xf32>
    %cst_94 = arith.constant 0.000000e+00 : f32
    %166 = vector.broadcast %cst_94 : f32 to vector<128x3xf32>
    %167 = arith.subf %166, %165 : vector<128x3xf32>
    %168 = math.exp %167 : vector<128x3xf32>
    %cst_95 = arith.constant 1.000000e+00 : f32
    %169 = vector.broadcast %cst_95 : f32 to vector<128x3xf32>
    %170 = arith.addf %169, %168 : vector<128x3xf32>
    %171 = tpu.reciprocal %170 : vector<128x3xf32> -> vector<128x3xf32>
    %c3_96 = arith.constant 3 : index
    %c0_97 = arith.constant 0 : index
    %c0_98 = arith.constant 0 : index
    %172 = vector.load %arg7[%c3_96, %c0_97, %c0_98] : memref<4x128x3xf32, #tpu.memory_space<vmem>>, vector<1x128x3xf32>
    %173 = vector.shape_cast %172 : vector<1x128x3xf32> to vector<128x3xf32>
    %174 = vector.shape_cast %171 : vector<128x3xf32> to vector<1x128x3xf32>
    tpu.vector_store %arg7[%c3_96, %c0_97, %c0_98], %174 {strides = array<i32>} : memref<4x128x3xf32, #tpu.memory_space<vmem>>, vector<1x128x3xf32>,
    return
  }
}

</mosaic_0001>

<llo_original>
// kernel: color_mapper_forward.5
$region0: #{color_mapper_forward.5}
  #allocation0 [shape = 'u32[]', space=smem, size = 0x4, offset = 0x4, fixed_abs, tag = 'smem constant byte address 0x4 - core index']
  #allocation1 [shape = 'u32[72,128]{1,0:T(1,128)}', space=vmem, size = 0x9000, scoped, tag = 'internal scratch']
  %s0 = inlined_call_operand.vmem [shape: bf16[128,16], index: 0, kind: input, shape index: {}]
  %s1 = inlined_call_operand.vmem [shape: bf16[16,32], index: 1, kind: input, shape index: {}]
  %s2 = inlined_call_operand.vmem [shape: f32[1,32], index: 2, kind: input, shape index: {}]
  %s3 = inlined_call_operand.vmem [shape: f32[1,32], index: 3, kind: input, shape index: {}]
  %s4 = inlined_call_operand.vmem [shape: f32[1,32], index: 4, kind: input, shape index: {}]
  %s5 = inlined_call_operand.vmem [shape: bf16[128,32], index: 5, kind: output, shape index: {}]
  %s6 = sld [smem:[#allocation0]]
  $region30: #{color_mapper_forward.5} parent=0
    _
  %s8 = ssub.s32 1, %s6
  %s9 = scalar_select 0, %s8, %s6
  // Predicated region
  $region2: #{color_mapper_forward.5} parent=0 // pred_check
    _
  $region3: #{color_mapper_forward.5} parent=0 // pred_check_branch
    %11 = sbr.rel (0) target = $region5
  $region4: #{color_mapper_forward.5} parent=0 // pred_region
    _
  $region5: #{color_mapper_forward.5} parent=0 // pred_fallthru
    _
  // Predicated region
  $region6: #{color_mapper_forward.5} parent=0 // pred_check
    _
  $region7: #{color_mapper_forward.5} parent=0 // pred_check_branch
    %13 = sbr.rel (0) target = $region9
  $region8: #{color_mapper_forward.5} parent=0 // pred_region
    _
  $region9: #{color_mapper_forward.5} parent=0 // pred_fallthru
    _
  // Predicated region
  $region10: #{color_mapper_forward.5} parent=0 // pred_check
    _
  $region11: #{color_mapper_forward.5} parent=0 // pred_check_branch
    %15 = sbr.rel (0) target = $region13
  $region12: #{color_mapper_forward.5} parent=0 // pred_region
    _
  $region13: #{color_mapper_forward.5} parent=0 // pred_fallthru
    _
  // Predicated region
  $region14: #{color_mapper_forward.5} parent=0 // pred_check
    _
  $region15: #{color_mapper_forward.5} parent=0 // pred_check_branch
    %17 = sbr.rel (0) target = $region17
  $region16: #{color_mapper_forward.5} parent=0 // pred_region
    _
  $region17: #{color_mapper_forward.5} parent=0 // pred_fallthru
    _
  // Predicated region
  $region18: #{color_mapper_forward.5} parent=0 // pred_check
    _
  $region19: #{color_mapper_forward.5} parent=0 // pred_check_branch
    %19 = sbr.rel (0) target = $region21
  $region20: #{color_mapper_forward.5} parent=0 // pred_region
    _
  $region21: #{color_mapper_forward.5} parent=0 // pred_fallthru
    _
  %v21 = vld [vmem:[%s0] sm:$0xf]
  %v22 = vld [vmem:[%s0 + $0x4] sm:$0xf]
  %v23 = vld [vmem:[%s0 + $0x8] sm:$0xf]
  %v24 = vld [vmem:[%s0 + $0xc] sm:$0xf]
  %v25 = vld [vmem:[%s0 + $0x10] sm:$0xf]
  %v26 = vld [vmem:[%s0 + $0x14] sm:$0xf]
  %v27 = vld [vmem:[%s0 + $0x18] sm:$0xf]
  %v28 = vld [vmem:[%s0 + $0x1c] sm:$0xf]
  %v29 = vld [vmem:[%s0 + $0x20] sm:$0xf]
  %v30 = vld [vmem:[%s0 + $0x24] sm:$0xf]
  %v31 = vld [vmem:[%s0 + $0x28] sm:$0xf]
  %v32 = vld [vmem:[%s0 + $0x2c] sm:$0xf]
  %v33 = vld [vmem:[%s0 + $0x30] sm:$0xf]
  %v34 = vld [vmem:[%s0 + $0x34] sm:$0xf]
  %v35 = vld [vmem:[%s0 + $0x38] sm:$0xf]
  %v36 = vld [vmem:[%s0 + $0x3c] sm:$0xf]
  %v37 = vld [vmem:[%s1] sm:$0xf]
  %v38 = vld [vmem:[%s1 + $0x4] sm:$0xf]
  %v39 = vld [vmem:[%s2] sm:$0x1]
  %v41 = vperm.slane %v39, 0
  %v59 = vunpack.c.l.b16 %v21
  %v60 = vunpack.c.l.b16 %v22
  %v61 = vunpack.c.l.b16 %v23
  %v62 = vunpack.c.l.b16 %v24
  %v63 = vunpack.c.l.b16 %v25
  %v64 = vunpack.c.l.b16 %v26
  %v65 = vunpack.c.l.b16 %v27
  %v66 = vunpack.c.l.b16 %v28
  %v67 = vunpack.c.l.b16 %v29
  %v68 = vunpack.c.l.b16 %v30
  %v69 = vunpack.c.l.b16 %v31
  %v70 = vunpack.c.l.b16 %v32
  %v71 = vunpack.c.l.b16 %v33
  %v72 = vunpack.c.l.b16 %v34
  %v73 = vunpack.c.l.b16 %v35
  %v74 = vunpack.c.l.b16 %v36
  %v75 = vpack.c.b16 %v60, %v59
  %v76 = vpack.c.b16 %v62, %v61
  %v77 = vpack.c.b16 %v64, %v63
  %v78 = vpack.c.b16 %v66, %v65
  %v79 = vpack.c.b16 %v68, %v67
  %v80 = vpack.c.b16 %v70, %v69
  %v81 = vpack.c.b16 %v72, %v71
  %v82 = vpack.c.b16 %v74, %v73
  %v85 = vunpack.c.l.b16 %v37
  %v86 = vunpack.c.l.b16 %v38
  %v87 = vpack.c.b16 %v86, %v85
  %vm89 = vcmask 130048
  %v91 = vsel %vm89, %v75, 0
  %v94 = vsel %vm89, %v76, 0
  %v97 = vsel %vm89, %v77, 0
  %v100 = vsel %vm89, %v78, 0
  %v103 = vsel %vm89, %v79, 0
  %v106 = vsel %vm89, %v80, 0
  %v109 = vsel %vm89, %v81, 0
  %v112 = vsel %vm89, %v82, 0
  %114 = vmatpush.bf16.msra.mxu0 0
  %115 = vmatpush.bf16.msra.mxu0 0
  %116 = vmatpush.bf16.msra.mxu0 0
  %117 = vmatpush.bf16.msra.mxu0 0
  %118 = vmatpush.bf16.msra.mxu0 0
  %119 = vmatpush.bf16.msra.mxu0 0
  %120 = vmatpush.bf16.msra.mxu0 0
  %121 = vmatpush.bf16.msra.mxu0 %v87
  %122 = vmatmul.bf16.gmra.mxu0 %v91
  %v123 = vpop.f32.mrf.mxu0
  %v124 = vadd.f32 %v41, %v123
  %v125 = vpop.f32.mrf.mxu0
  %v126 = vadd.f32 %v41, %v125
  %127 = vmatmul.bf16.gmra.mxu0 %v94
  %v128 = vpop.f32.mrf.mxu0
  %v129 = vadd.f32 %v41, %v128
  %v130 = vpop.f32.mrf.mxu0
  %v131 = vadd.f32 %v41, %v130
  %132 = vmatmul.bf16.gmra.mxu0 %v97
  %v133 = vpop.f32.mrf.mxu0
  %v134 = vadd.f32 %v41, %v133
  %v135 = vpop.f32.mrf.mxu0
  %v136 = vadd.f32 %v41, %v135
  %137 = vmatmul.bf16.gmra.mxu0 %v100
  %v138 = vpop.f32.mrf.mxu0
  %v139 = vadd.f32 %v41, %v138
  %v140 = vpop.f32.mrf.mxu0
  %v141 = vadd.f32 %v41, %v140
  %142 = vmatmul.bf16.gmra.mxu0 %v103
  %v143 = vpop.f32.mrf.mxu0
  %v144 = vadd.f32 %v41, %v143
  %v145 = vpop.f32.mrf.mxu0
  %v146 = vadd.f32 %v41, %v145
  %147 = vmatmul.bf16.gmra.mxu0 %v106
  %v148 = vpop.f32.mrf.mxu0
  %v149 = vadd.f32 %v41, %v148
  %v150 = vpop.f32.mrf.mxu0
  %v151 = vadd.f32 %v41, %v150
  %152 = vmatmul.bf16.gmra.mxu0 %v109
  %v153 = vpop.f32.mrf.mxu0
  %v154 = vadd.f32 %v41, %v153
  %v155 = vpop.f32.mrf.mxu0
  %v156 = vadd.f32 %v41, %v155
  %157 = vmatmul.bf16.gmra.mxu0 %v112
  %v158 = vpop.f32.mrf.mxu0
  %v159 = vadd.f32 %v41, %v158
  %v160 = vpop.f32.mrf.mxu0
  %v161 = vadd.f32 %v41, %v160
  %162 = vdwg.mxu0
  %vm163 = vcmask 261120
  %v164 = vsel %vm163, %v124, 0.0
  %v165 = vsel %vm163, %v126, 0.0
  %v166 = vadd.f32 %v164, %v165
  %v167 = vsel %vm163, %v129, 0.0
  %v168 = vadd.f32 %v166, %v167
  %v169 = vsel %vm163, %v131, 0.0
  %v170 = vadd.f32 %v168, %v169
  %v171 = vsel %vm163, %v134, 0.0
  %v172 = vadd.f32 %v170, %v171
  %v173 = vsel %vm163, %v136, 0.0
  %v174 = vadd.f32 %v172, %v173
  %v175 = vsel %vm163, %v139, 0.0
  %v176 = vadd.f32 %v174, %v175
  %v177 = vsel %vm163, %v141, 0.0
  %v178 = vadd.f32 %v176, %v177
  %v179 = vsel %vm163, %v144, 0.0
  %v180 = vadd.f32 %v178, %v179
  %v181 = vsel %vm163, %v146, 0.0
  %v182 = vadd.f32 %v180, %v181
  %v183 = vsel %vm163, %v149, 0.0
  %v184 = vadd.f32 %v182, %v183
  %v185 = vsel %vm163, %v151, 0.0
  %v186 = vadd.f32 %v184, %v185
  %v187 = vsel %vm163, %v154, 0.0
  %v188 = vadd.f32 %v186, %v187
  %v189 = vsel %vm163, %v156, 0.0
  %v190 = vadd.f32 %v188, %v189
  %v191 = vsel %vm163, %v159, 0.0
  %v192 = vadd.f32 %v190, %v191
  %v193 = vsel %vm163, %v161, 0.0
  %v194 = vadd.f32 %v192, %v193
  %v195 = vrot.slane %v194, 4
  %v196 = vadd.f32 %v194, %v195
  %v197 = vrot.slane %v196, 2
  %v198 = vadd.f32 %v196, %v197
  %v199 = vrot.slane %v198, 1
  %v200 = vadd.f32 %v198, %v199
  %v201 = vmul.f32 %v200, 0.0078125
  %v202 = vsub.f32 %v124, %v201
  %v203 = vsub.f32 %v126, %v201
  %v204 = vsub.f32 %v129, %v201
  %v205 = vsub.f32 %v131, %v201
  %v206 = vsub.f32 %v134, %v201
  %v207 = vsub.f32 %v136, %v201
  %v208 = vsub.f32 %v139, %v201
  %v209 = vsub.f32 %v141, %v201
  %v210 = vsub.f32 %v144, %v201
  %v211 = vsub.f32 %v146, %v201
  %v212 = vsub.f32 %v149, %v201
  %v213 = vsub.f32 %v151, %v201
  %v214 = vsub.f32 %v154, %v201
  %v215 = vsub.f32 %v156, %v201
  %v216 = vsub.f32 %v159, %v201
  %v217 = vsub.f32 %v161, %v201
  %v218 = vmul.f32 %v202, %v202
  %v219 = vmul.f32 %v203, %v203
  %v220 = vmul.f32 %v204, %v204
  %v221 = vmul.f32 %v205, %v205
  %v222 = vmul.f32 %v206, %v206
  %v223 = vmul.f32 %v207, %v207
  %v224 = vmul.f32 %v208, %v208
  %v225 = vmul.f32 %v209, %v209
  %v226 = vmul.f32 %v210, %v210
  %v227 = vmul.f32 %v211, %v211
  %v228 = vmul.f32 %v212, %v212
  %v229 = vmul.f32 %v213, %v213
  %v230 = vmul.f32 %v214, %v214
  %v231 = vmul.f32 %v215, %v215
  %v232 = vmul.f32 %v216, %v216
  %v233 = vmul.f32 %v217, %v217
  %v234 = vsel %vm163, %v218, 0.0
  %v235 = vsel %vm163, %v219, 0.0
  %v236 = vadd.f32 %v234, %v235
  %v237 = vsel %vm163, %v220, 0.0
  %v238 = vadd.f32 %v236, %v237
  %v239 = vsel %vm163, %v221, 0.0
  %v240 = vadd.f32 %v238, %v239
  %v241 = vsel %vm163, %v222, 0.0
  %v242 = vadd.f32 %v240, %v241
  %v243 = vsel %vm163, %v223, 0.0
  %v244 = vadd.f32 %v242, %v243
  %v245 = vsel %vm163, %v224, 0.0
  %v246 = vadd.f32 %v244, %v245
  %v247 = vsel %vm163, %v225, 0.0
  %v248 = vadd.f32 %v246, %v247
  %v249 = vsel %vm163, %v226, 0.0
  %v250 = vadd.f32 %v248, %v249
  %v251 = vsel %vm163, %v227, 0.0
  %v252 = vadd.f32 %v250, %v251
  %v253 = vsel %vm163, %v228, 0.0
  %v254 = vadd.f32 %v252, %v253
  %v255 = vsel %vm163, %v229, 0.0
  %v256 = vadd.f32 %v254, %v255
  %v257 = vsel %vm163, %v230, 0.0
  %v258 = vadd.f32 %v256, %v257
  %v259 = vsel %vm163, %v231, 0.0
  %v260 = vadd.f32 %v258, %v259
  %v261 = vsel %vm163, %v232, 0.0
  %v262 = vadd.f32 %v260, %v261
  %v263 = vsel %vm163, %v233, 0.0
  %v264 = vadd.f32 %v262, %v263
  %v265 = vrot.slane %v264, 4
  %v266 = vadd.f32 %v264, %v265
  %v267 = vrot.slane %v266, 2
  %v268 = vadd.f32 %v266, %v267
  %v269 = vrot.slane %v268, 1
  %v270 = vadd.f32 %v268, %v269
  %v271 = vmul.f32 %v270, 0.0078125
  %v272 = vadd.f32 %v271, 1e-05
  %v273 = vrsqrt.pop %v272
  %v274 = vmul.f32 %v273, %v272
  %v275 = vmul.f32 %v274, %v273
  %v276 = vmul.f32 0.5, %v275
  %v277 = vsub.f32 1.5, %v276
  %v278 = vmul.f32 %v273, %v277
  %vm279 = vweird.f32 %v272
  %vm280 = vweird.f32 %v273
  %vm281 = vmor %vm279, %vm280
  %v282 = vsel %vm281, %v273, %v278
  %v283 = vmul.f32 %v202, %v282
  %v284 = vmul.f32 %v203, %v282
  %v285 = vmul.f32 %v204, %v282
  %v286 = vmul.f32 %v205, %v282
  %v287 = vmul.f32 %v206, %v282
  %v288 = vmul.f32 %v207, %v282
  %v289 = vmul.f32 %v208, %v282
  %v290 = vmul.f32 %v209, %v282
  %v291 = vmul.f32 %v210, %v282
  %v292 = vmul.f32 %v211, %v282
  %v293 = vmul.f32 %v212, %v282
  %v294 = vmul.f32 %v213, %v282
  %v295 = vmul.f32 %v214, %v282
  %v296 = vmul.f32 %v215, %v282
  %v297 = vmul.f32 %v216, %v282
  %v298 = vmul.f32 %v217, %v282
  %v299 = vld [vmem:[%s3] sm:$0x1]
  %v301 = vperm.slane %v299, 0
  %v303 = vmul.f32 %v283, %v301
  %v304 = vmul.f32 %v284, %v301
  %v305 = vmul.f32 %v285, %v301
  %v306 = vmul.f32 %v286, %v301
  %v307 = vmul.f32 %v287, %v301
  %v308 = vmul.f32 %v288, %v301
  %v309 = vmul.f32 %v289, %v301
  %v310 = vmul.f32 %v290, %v301
  %v311 = vmul.f32 %v291, %v301
  %v312 = vmul.f32 %v292, %v301
  %v313 = vmul.f32 %v293, %v301
  %v314 = vmul.f32 %v294, %v301
  %v315 = vmul.f32 %v295, %v301
  %v316 = vmul.f32 %v296, %v301
  %v317 = vmul.f32 %v297, %v301
  %v318 = vmul.f32 %v298, %v301
  %v319 = vld [vmem:[%s4] sm:$0x1]
  %v321 = vperm.slane %v319, 0
  %v323 = vadd.f32 %v303, %v321
  %v324 = vadd.f32 %v304, %v321
  %v325 = vadd.f32 %v305, %v321
  %v326 = vadd.f32 %v306, %v321
  %v327 = vadd.f32 %v307, %v321
  %v328 = vadd.f32 %v308, %v321
  %v329 = vadd.f32 %v309, %v321
  %v330 = vadd.f32 %v310, %v321
  %v331 = vadd.f32 %v311, %v321
  %v332 = vadd.f32 %v312, %v321
  %v333 = vadd.f32 %v313, %v321
  %v334 = vadd.f32 %v314, %v321
  %v335 = vadd.f32 %v315, %v321
  %v336 = vadd.f32 %v316, %v321
  %v337 = vadd.f32 %v317, %v321
  %v338 = vadd.f32 %v318, %v321
  %v339 = vmax.f32 %v323, 0.0
  %v340 = vmax.f32 %v324, 0.0
  %v341 = vmax.f32 %v325, 0.0
  %v342 = vmax.f32 %v326, 0.0
  %v343 = vmax.f32 %v327, 0.0
  %v344 = vmax.f32 %v328, 0.0
  %v345 = vmax.f32 %v329, 0.0
  %v346 = vmax.f32 %v330, 0.0
  %v347 = vmax.f32 %v331, 0.0
  %v348 = vmax.f32 %v332, 0.0
  %v349 = vmax.f32 %v333, 0.0
  %v350 = vmax.f32 %v334, 0.0
  %v351 = vmax.f32 %v335, 0.0
  %v352 = vmax.f32 %v336, 0.0
  %v353 = vmax.f32 %v337, 0.0
  %v354 = vmax.f32 %v338, 0.0
  %v355 = vpack.c.bf16 %v339, %v339
  %v356 = vpack.c.bf16 %v340, %v340
  %v357 = vpack.c.bf16 %v341, %v341
  %v358 = vpack.c.bf16 %v342, %v342
  %v359 = vpack.c.bf16 %v343, %v343
  %v360 = vpack.c.bf16 %v344, %v344
  %v361 = vpack.c.bf16 %v345, %v345
  %v362 = vpack.c.bf16 %v346, %v346
  %v363 = vpack.c.bf16 %v347, %v347
  %v364 = vpack.c.bf16 %v348, %v348
  %v365 = vpack.c.bf16 %v349, %v349
  %v366 = vpack.c.bf16 %v350, %v350
  %v367 = vpack.c.bf16 %v351, %v351
  %v368 = vpack.c.bf16 %v352, %v352
  %v369 = vpack.c.bf16 %v353, %v353
  %v370 = vpack.c.bf16 %v354, %v354
  %vm371 = vcmask 257024
  %372 = vst.msk [vmem:[%s5] sm:$0xf] %vm371, %v355
  %373 = vst.msk [vmem:[%s5 + $0x4] sm:$0xf] %vm371, %v356
  %374 = vst.msk [vmem:[%s5 + $0x8] sm:$0xf] %vm371, %v357
  %375 = vst.msk [vmem:[%s5 + $0xc] sm:$0xf] %vm371, %v358
  %376 = vst.msk [vmem:[%s5 + $0x10] sm:$0xf] %vm371, %v359
  %377 = vst.msk [vmem:[%s5 + $0x14] sm:$0xf] %vm371, %v360
  %378 = vst.msk [vmem:[%s5 + $0x18] sm:$0xf] %vm371, %v361
  %379 = vst.msk [vmem:[%s5 + $0x1c] sm:$0xf] %vm371, %v362
  %380 = vst.msk [vmem:[%s5 + $0x20] sm:$0xf] %vm371, %v363
  %381 = vst.msk [vmem:[%s5 + $0x24] sm:$0xf] %vm371, %v364
  %382 = vst.msk [vmem:[%s5 + $0x28] sm:$0xf] %vm371, %v365
  %383 = vst.msk [vmem:[%s5 + $0x2c] sm:$0xf] %vm371, %v366
  %384 = vst.msk [vmem:[%s5 + $0x30] sm:$0xf] %vm371, %v367
  %385 = vst.msk [vmem:[%s5 + $0x34] sm:$0xf] %vm371, %v368
  %386 = vst.msk [vmem:[%s5 + $0x38] sm:$0xf] %vm371, %v369
  %387 = vst.msk [vmem:[%s5 + $0x3c] sm:$0xf] %vm371, %v370
  // Predicated region
  $region22: #{color_mapper_forward.5} parent=0 // pred_check
    _
  $region23: #{color_mapper_forward.5} parent=0 // pred_check_branch
    %389 = sbr.rel (0) target = $region25
  $region24: #{color_mapper_forward.5} parent=0 // pred_region
    _
  $region25: #{color_mapper_forward.5} parent=0 // pred_fallthru
    _
  // Predicated region
  $region26: #{color_mapper_forward.5} parent=0 // pred_check
    _
  $region27: #{color_mapper_forward.5} parent=0 // pred_check_branch
    %391 = sbr.rel (0) target = $region29
  $region28: #{color_mapper_forward.5} parent=0 // pred_region
    _
  $region29: #{color_mapper_forward.5} parent=0 // pred_fallthru
    _

// kernel: color_mapper_forward.6
$region0: #{color_mapper_forward.6}
  #allocation0 [shape = 'u32[]', space=smem, size = 0x4, offset = 0x4, fixed_abs, tag = 'smem constant byte address 0x4 - core index']
  #allocation1 [shape = 'u32[72,128]{1,0:T(1,128)}', space=vmem, size = 0x9000, scoped, tag = 'internal scratch']
  %s0 = inlined_call_operand.vmem [shape: bf16[32,512], index: 0, kind: input, shape index: {}]
  %s1 = inlined_call_operand.vmem [shape: bf16[512,64], index: 1, kind: input, shape index: {}]
  %s2 = inlined_call_operand.vmem [shape: f32[1,64], index: 2, kind: input, shape index: {}]
  %s3 = inlined_call_operand.vmem [shape: f32[1,64], index: 3, kind: input, shape index: {}]
  %s4 = inlined_call_operand.vmem [shape: f32[1,64], index: 4, kind: input, shape index: {}]
  %s5 = inlined_call_operand.vmem [shape: bf16[32,64], index: 5, kind: output, shape index: {}]
  %s6 = sld [smem:[#allocation0]]
  $region30: #{color_mapper_forward.6} parent=0
    _
  %s8 = ssub.s32 1, %s6
  %s9 = scalar_select 0, %s8, %s6
  // Predicated region
  $region2: #{color_mapper_forward.6} parent=0 // pred_check
    _
  $region3: #{color_mapper_forward.6} parent=0 // pred_check_branch
    %11 = sbr.rel (0) target = $region5
  $region4: #{color_mapper_forward.6} parent=0 // pred_region
    _
  $region5: #{color_mapper_forward.6} parent=0 // pred_fallthru
    _
  // Predicated region
  $region6: #{color_mapper_forward.6} parent=0 // pred_check
    _
  $region7: #{color_mapper_forward.6} parent=0 // pred_check_branch
    %13 = sbr.rel (0) target = $region9
  $region8: #{color_mapper_forward.6} parent=0 // pred_region
    _
  $region9: #{color_mapper_forward.6} parent=0 // pred_fallthru
    _
  // Predicated region
  $region10: #{color_mapper_forward.6} parent=0 // pred_check
    _
  $region11: #{color_mapper_forward.6} parent=0 // pred_check_branch
    %15 = sbr.rel (0) target = $region13
  $region12: #{color_mapper_forward.6} parent=0 // pred_region
    _
  $region13: #{color_mapper_forward.6} parent=0 // pred_fallthru
    _
  // Predicated region
  $region14: #{color_mapper_forward.6} parent=0 // pred_check
    _
  $region15: #{color_mapper_forward.6} parent=0 // pred_check_branch
    %17 = sbr.rel (0) target = $region17
  $region16: #{color_mapper_forward.6} parent=0 // pred_region
    _
  $region17: #{color_mapper_forward.6} parent=0 // pred_fallthru
    _
  // Predicated region
  $region18: #{color_mapper_forward.6} parent=0 // pred_check
    _
  $region19: #{color_mapper_forward.6} parent=0 // pred_check_branch
    %19 = sbr.rel (0) target = $region21
  $region20: #{color_mapper_forward.6} parent=0 // pred_region
    _
  $region21: #{color_mapper_forward.6} parent=0 // pred_fallthru
    _
  %v20 = vld [vmem:[%s0] sm:$0xff]
  %v21 = vld [vmem:[%s0 + $0x8] sm:$0xff]
  %v22 = vld [vmem:[%s0 + $0x10] sm:$0xff]
  %v23 = vld [vmem:[%s0 + $0x18] sm:$0xff]
  %v24 = vld [vmem:[%s0 + $0x20] sm:$0xff]
  %v25 = vld [vmem:[%s0 + $0x28] sm:$0xff]
  %v26 = vld [vmem:[%s0 + $0x30] sm:$0xff]
  %v27 = vld [vmem:[%s0 + $0x38] sm:$0xff]
  %v28 = vld [vmem:[%s1] sm:$0xf]
  %v29 = vld [vmem:[%s1 + $0x4] sm:$0xf]
  %v30 = vld [vmem:[%s1 + $0x8] sm:$0xf]
  %v31 = vld [vmem:[%s1 + $0xc] sm:$0xf]
  %v32 = vld [vmem:[%s1 + $0x10] sm:$0xf]
  %v33 = vld [vmem:[%s1 + $0x14] sm:$0xf]
  %v34 = vld [vmem:[%s1 + $0x18] sm:$0xf]
  %v35 = vld [vmem:[%s1 + $0x1c] sm:$0xf]
  %v36 = vld [vmem:[%s1 + $0x20] sm:$0xf]
  %v37 = vld [vmem:[%s1 + $0x24] sm:$0xf]
  %v38 = vld [vmem:[%s1 + $0x28] sm:$0xf]
  %v39 = vld [vmem:[%s1 + $0x2c] sm:$0xf]
  %v40 = vld [vmem:[%s1 + $0x30] sm:$0xf]
  %v41 = vld [vmem:[%s1 + $0x34] sm:$0xf]
  %v42 = vld [vmem:[%s1 + $0x38] sm:$0xf]
  %v43 = vld [vmem:[%s1 + $0x3c] sm:$0xf]
  %v44 = vld [vmem:[%s1 + $0x40] sm:$0xf]
  %v45 = vld [vmem:[%s1 + $0x44] sm:$0xf]
  %v46 = vld [vmem:[%s1 + $0x48] sm:$0xf]
  %v47 = vld [vmem:[%s1 + $0x4c] sm:$0xf]
  %v48 = vld [vmem:[%s1 + $0x50] sm:$0xf]
  %v49 = vld [vmem:[%s1 + $0x54] sm:$0xf]
  %v50 = vld [vmem:[%s1 + $0x58] sm:$0xf]
  %v51 = vld [vmem:[%s1 + $0x5c] sm:$0xf]
  %v52 = vld [vmem:[%s1 + $0x60] sm:$0xf]
  %v53 = vld [vmem:[%s1 + $0x64] sm:$0xf]
  %v54 = vld [vmem:[%s1 + $0x68] sm:$0xf]
  %v55 = vld [vmem:[%s1 + $0x6c] sm:$0xf]
  %v56 = vld [vmem:[%s1 + $0x70] sm:$0xf]
  %v57 = vld [vmem:[%s1 + $0x74] sm:$0xf]
  %v58 = vld [vmem:[%s1 + $0x78] sm:$0xf]
  %v59 = vld [vmem:[%s1 + $0x7c] sm:$0xf]
  %v60 = vld [vmem:[%s1 + $0x80] sm:$0xf]
  %v61 = vld [vmem:[%s1 + $0x84] sm:$0xf]
  %v62 = vld [vmem:[%s1 + $0x88] sm:$0xf]
  %v63 = vld [vmem:[%s1 + $0x8c] sm:$0xf]
  %v64 = vld [vmem:[%s1 + $0x90] sm:$0xf]
  %v65 = vld [vmem:[%s1 + $0x94] sm:$0xf]
  %v66 = vld [vmem:[%s1 + $0x98] sm:$0xf]
  %v67 = vld [vmem:[%s1 + $0x9c] sm:$0xf]
  %v68 = vld [vmem:[%s1 + $0xa0] sm:$0xf]
  %v69 = vld [vmem:[%s1 + $0xa4] sm:$0xf]
  %v70 = vld [vmem:[%s1 + $0xa8] sm:$0xf]
  %v71 = vld [vmem:[%s1 + $0xac] sm:$0xf]
  %v72 = vld [vmem:[%s1 + $0xb0] sm:$0xf]
  %v73 = vld [vmem:[%s1 + $0xb4] sm:$0xf]
  %v74 = vld [vmem:[%s1 + $0xb8] sm:$0xf]
  %v75 = vld [vmem:[%s1 + $0xbc] sm:$0xf]
  %v76 = vld [vmem:[%s1 + $0xc0] sm:$0xf]
  %v77 = vld [vmem:[%s1 + $0xc4] sm:$0xf]
  %v78 = vld [vmem:[%s1 + $0xc8] sm:$0xf]
  %v79 = vld [vmem:[%s1 + $0xcc] sm:$0xf]
  %v80 = vld [vmem:[%s1 + $0xd0] sm:$0xf]
  %v81 = vld [vmem:[%s1 + $0xd4] sm:$0xf]
  %v82 = vld [vmem:[%s1 + $0xd8] sm:$0xf]
  %v83 = vld [vmem:[%s1 + $0xdc] sm:$0xf]
  %v84 = vld [vmem:[%s1 + $0xe0] sm:$0xf]
  %v85 = vld [vmem:[%s1 + $0xe4] sm:$0xf]
  %v86 = vld [vmem:[%s1 + $0xe8] sm:$0xf]
  %v87 = vld [vmem:[%s1 + $0xec] sm:$0xf]
  %v88 = vld [vmem:[%s1 + $0xf0] sm:$0xf]
  %v89 = vld [vmem:[%s1 + $0xf4] sm:$0xf]
  %v90 = vld [vmem:[%s1 + $0xf8] sm:$0xf]
  %v91 = vld [vmem:[%s1 + $0xfc] sm:$0xf]
  %v92 = vld [vmem:[%s2] sm:$0x1]
  %v94 = vperm.slane %v92, 0
  %v104 = vunpack.c.l.b16 %v20
  %v105 = vunpack.c.h.b16 %v20
  %v106 = vunpack.c.l.b16 %v21
  %v107 = vunpack.c.h.b16 %v21
  %v108 = vunpack.c.l.b16 %v22
  %v109 = vunpack.c.h.b16 %v22
  %v110 = vunpack.c.l.b16 %v23
  %v111 = vunpack.c.h.b16 %v23
  %v112 = vunpack.c.l.b16 %v24
  %v113 = vunpack.c.h.b16 %v24
  %v114 = vunpack.c.l.b16 %v25
  %v115 = vunpack.c.h.b16 %v25
  %v116 = vunpack.c.l.b16 %v26
  %v117 = vunpack.c.h.b16 %v26
  %v118 = vunpack.c.l.b16 %v27
  %v119 = vunpack.c.h.b16 %v27
  %v120 = vpack.c.b16 %v108, %v104
  %v121 = vpack.c.b16 %v109, %v105
  %v122 = vpack.c.b16 %v110, %v106
  %v123 = vpack.c.b16 %v111, %v107
  %v124 = vpack.c.b16 %v116, %v112
  %v125 = vpack.c.b16 %v117, %v113
  %v126 = vpack.c.b16 %v118, %v114
  %v127 = vpack.c.b16 %v119, %v115
  %v200 = vunpack.c.l.b16 %v28
  %v201 = vunpack.c.l.b16 %v29
  %v202 = vunpack.c.l.b16 %v30
  %v203 = vunpack.c.l.b16 %v31
  %v204 = vunpack.c.l.b16 %v32
  %v205 = vunpack.c.l.b16 %v33
  %v206 = vunpack.c.l.b16 %v34
  %v207 = vunpack.c.l.b16 %v35
  %v208 = vunpack.c.l.b16 %v36
  %v209 = vunpack.c.l.b16 %v37
  %v210 = vunpack.c.l.b16 %v38
  %v211 = vunpack.c.l.b16 %v39
  %v212 = vunpack.c.l.b16 %v40
  %v213 = vunpack.c.l.b16 %v41
  %v214 = vunpack.c.l.b16 %v42
  %v215 = vunpack.c.l.b16 %v43
  %v216 = vunpack.c.l.b16 %v44
  %v217 = vunpack.c.l.b16 %v45
  %v218 = vunpack.c.l.b16 %v46
  %v219 = vunpack.c.l.b16 %v47
  %v220 = vunpack.c.l.b16 %v48
  %v221 = vunpack.c.l.b16 %v49
  %v222 = vunpack.c.l.b16 %v50
  %v223 = vunpack.c.l.b16 %v51
  %v224 = vunpack.c.l.b16 %v52
  %v225 = vunpack.c.l.b16 %v53
  %v226 = vunpack.c.l.b16 %v54
  %v227 = vunpack.c.l.b16 %v55
  %v228 = vunpack.c.l.b16 %v56
  %v229 = vunpack.c.l.b16 %v57
  %v230 = vunpack.c.l.b16 %v58
  %v231 = vunpack.c.l.b16 %v59
  %v232 = vunpack.c.l.b16 %v60
  %v233 = vunpack.c.l.b16 %v61
  %v234 = vunpack.c.l.b16 %v62
  %v235 = vunpack.c.l.b16 %v63
  %v236 = vunpack.c.l.b16 %v64
  %v237 = vunpack.c.l.b16 %v65
  %v238 = vunpack.c.l.b16 %v66
  %v239 = vunpack.c.l.b16 %v67
  %v240 = vunpack.c.l.b16 %v68
  %v241 = vunpack.c.l.b16 %v69
  %v242 = vunpack.c.l.b16 %v70
  %v243 = vunpack.c.l.b16 %v71
  %v244 = vunpack.c.l.b16 %v72
  %v245 = vunpack.c.l.b16 %v73
  %v246 = vunpack.c.l.b16 %v74
  %v247 = vunpack.c.l.b16 %v75
  %v248 = vunpack.c.l.b16 %v76
  %v249 = vunpack.c.l.b16 %v77
  %v250 = vunpack.c.l.b16 %v78
  %v251 = vunpack.c.l.b16 %v79
  %v252 = vunpack.c.l.b16 %v80
  %v253 = vunpack.c.l.b16 %v81
  %v254 = vunpack.c.l.b16 %v82
  %v255 = vunpack.c.l.b16 %v83
  %v256 = vunpack.c.l.b16 %v84
  %v257 = vunpack.c.l.b16 %v85
  %v258 = vunpack.c.l.b16 %v86
  %v259 = vunpack.c.l.b16 %v87
  %v260 = vunpack.c.l.b16 %v88
  %v261 = vunpack.c.l.b16 %v89
  %v262 = vunpack.c.l.b16 %v90
  %v263 = vunpack.c.l.b16 %v91
  %v264 = vpack.c.b16 %v201, %v200
  %v265 = vpack.c.b16 %v203, %v202
  %v266 = vpack.c.b16 %v205, %v204
  %v267 = vpack.c.b16 %v207, %v206
  %v268 = vpack.c.b16 %v209, %v208
  %v269 = vpack.c.b16 %v211, %v210
  %v270 = vpack.c.b16 %v213, %v212
  %v271 = vpack.c.b16 %v215, %v214
  %v272 = vpack.c.b16 %v217, %v216
  %v273 = vpack.c.b16 %v219, %v218
  %v274 = vpack.c.b16 %v221, %v220
  %v275 = vpack.c.b16 %v223, %v222
  %v276 = vpack.c.b16 %v225, %v224
  %v277 = vpack.c.b16 %v227, %v226
  %v278 = vpack.c.b16 %v229, %v228
  %v279 = vpack.c.b16 %v231, %v230
  %v280 = vpack.c.b16 %v233, %v232
  %v281 = vpack.c.b16 %v235, %v234
  %v282 = vpack.c.b16 %v237, %v236
  %v283 = vpack.c.b16 %v239, %v238
  %v284 = vpack.c.b16 %v241, %v240
  %v285 = vpack.c.b16 %v243, %v242
  %v286 = vpack.c.b16 %v245, %v244
  %v287 = vpack.c.b16 %v247, %v246
  %v288 = vpack.c.b16 %v249, %v248
  %v289 = vpack.c.b16 %v251, %v250
  %v290 = vpack.c.b16 %v253, %v252
  %v291 = vpack.c.b16 %v255, %v254
  %v292 = vpack.c.b16 %v257, %v256
  %v293 = vpack.c.b16 %v259, %v258
  %v294 = vpack.c.b16 %v261, %v260
  %v295 = vpack.c.b16 %v263, %v262
  %328 = vmatpush.bf16.msra.mxu0 %v271
  %329 = vmatpush.bf16.msra.mxu0 %v270
  %330 = vmatpush.bf16.msra.mxu0 %v269
  %331 = vmatpush.bf16.msra.mxu0 %v268
  %332 = vmatpush.bf16.msra.mxu0 %v267
  %333 = vmatpush.bf16.msra.mxu0 %v266
  %334 = vmatpush.bf16.msra.mxu0 %v265
  %335 = vmatpush.bf16.msra.mxu0 %v264
  %336 = vmatmul.bf16.gmra.mxu0 %v120
  %v337 = vpop.f32.mrf.mxu0
  %v338 = vadd.f32 %v94, %v337
  %v339 = vpop.f32.mrf.mxu0
  %v340 = vadd.f32 %v94, %v339
  %341 = vmatmul.bf16.gmra.mxu0 %v124
  %v342 = vpop.f32.mrf.mxu0
  %v343 = vadd.f32 %v94, %v342
  %v344 = vpop.f32.mrf.mxu0
  %v345 = vadd.f32 %v94, %v344
  %346 = vdwg.mxu0
  %347 = vmatpush.bf16.msra.mxu0 %v279
  %348 = vmatpush.bf16.msra.mxu0 %v278
  %349 = vmatpush.bf16.msra.mxu0 %v277
  %350 = vmatpush.bf16.msra.mxu0 %v276
  %351 = vmatpush.bf16.msra.mxu0 %v275
  %352 = vmatpush.bf16.msra.mxu0 %v274
  %353 = vmatpush.bf16.msra.mxu0 %v273
  %354 = vmatpush.bf16.msra.mxu0 %v272
  %355 = vmatmul.bf16.gmra.mxu0 %v121
  %v356 = vpop.f32.mrf.mxu0
  %v357 = vadd.f32 %v338, %v356
  %v358 = vpop.f32.mrf.mxu0
  %v359 = vadd.f32 %v340, %v358
  %360 = vmatmul.bf16.gmra.mxu0 %v125
  %v361 = vpop.f32.mrf.mxu0
  %v362 = vadd.f32 %v343, %v361
  %v363 = vpop.f32.mrf.mxu0
  %v364 = vadd.f32 %v345, %v363
  %365 = vdwg.mxu0
  %366 = vmatpush.bf16.msra.mxu0 %v287
  %367 = vmatpush.bf16.msra.mxu0 %v286
  %368 = vmatpush.bf16.msra.mxu0 %v285
  %369 = vmatpush.bf16.msra.mxu0 %v284
  %370 = vmatpush.bf16.msra.mxu0 %v283
  %371 = vmatpush.bf16.msra.mxu0 %v282
  %372 = vmatpush.bf16.msra.mxu0 %v281
  %373 = vmatpush.bf16.msra.mxu0 %v280
  %374 = vmatmul.bf16.gmra.mxu0 %v122
  %v375 = vpop.f32.mrf.mxu0
  %v376 = vadd.f32 %v357, %v375
  %v377 = vpop.f32.mrf.mxu0
  %v378 = vadd.f32 %v359, %v377
  %379 = vmatmul.bf16.gmra.mxu0 %v126
  %v380 = vpop.f32.mrf.mxu0
  %v381 = vadd.f32 %v362, %v380
  %v382 = vpop.f32.mrf.mxu0
  %v383 = vadd.f32 %v364, %v382
  %384 = vdwg.mxu0
  %385 = vmatpush.bf16.msra.mxu0 %v295
  %386 = vmatpush.bf16.msra.mxu0 %v294
  %387 = vmatpush.bf16.msra.mxu0 %v293
  %388 = vmatpush.bf16.msra.mxu0 %v292
  %389 = vmatpush.bf16.msra.mxu0 %v291
  %390 = vmatpush.bf16.msra.mxu0 %v290
  %391 = vmatpush.bf16.msra.mxu0 %v289
  %392 = vmatpush.bf16.msra.mxu0 %v288
  %393 = vmatmul.bf16.gmra.mxu0 %v123
  %v394 = vpop.f32.mrf.mxu0
  %v395 = vadd.f32 %v376, %v394
  %v396 = vpop.f32.mrf.mxu0
  %v397 = vadd.f32 %v378, %v396
  %398 = vmatmul.bf16.gmra.mxu0 %v127
  %v399 = vpop.f32.mrf.mxu0
  %v400 = vadd.f32 %v381, %v399
  %v401 = vpop.f32.mrf.mxu0
  %v402 = vadd.f32 %v383, %v401
  %403 = vdwg.mxu0
  %vm404 = vcmask 523264
  %v405 = vsel %vm404, %v395, 0.0
  %v406 = vsel %vm404, %v397, 0.0
  %v407 = vadd.f32 %v405, %v406
  %v408 = vsel %vm404, %v400, 0.0
  %v409 = vadd.f32 %v407, %v408
  %v410 = vsel %vm404, %v402, 0.0
  %v411 = vadd.f32 %v409, %v410
  %v412 = vrot.slane %v411, 4
  %v413 = vadd.f32 %v411, %v412
  %v414 = vrot.slane %v413, 2
  %v415 = vadd.f32 %v413, %v414
  %v416 = vrot.slane %v415, 1
  %v417 = vadd.f32 %v415, %v416
  %v418 = vmul.f32 %v417, 0.03125
  %v419 = vsub.f32 %v395, %v418
  %v420 = vsub.f32 %v397, %v418
  %v421 = vsub.f32 %v400, %v418
  %v422 = vsub.f32 %v402, %v418
  %v423 = vmul.f32 %v419, %v419
  %v424 = vmul.f32 %v420, %v420
  %v425 = vmul.f32 %v421, %v421
  %v426 = vmul.f32 %v422, %v422
  %v427 = vsel %vm404, %v423, 0.0
  %v428 = vsel %vm404, %v424, 0.0
  %v429 = vadd.f32 %v427, %v428
  %v430 = vsel %vm404, %v425, 0.0
  %v431 = vadd.f32 %v429, %v430
  %v432 = vsel %vm404, %v426, 0.0
  %v433 = vadd.f32 %v431, %v432
  %v434 = vrot.slane %v433, 4
  %v435 = vadd.f32 %v433, %v434
  %v436 = vrot.slane %v435, 2
  %v437 = vadd.f32 %v435, %v436
  %v438 = vrot.slane %v437, 1
  %v439 = vadd.f32 %v437, %v438
  %v440 = vmul.f32 %v439, 0.03125
  %v441 = vadd.f32 %v440, 1e-05
  %v442 = vrsqrt.pop %v441
  %v443 = vmul.f32 %v442, %v441
  %v444 = vmul.f32 %v443, %v442
  %v445 = vmul.f32 0.5, %v444
  %v446 = vsub.f32 1.5, %v445
  %v447 = vmul.f32 %v442, %v446
  %vm448 = vweird.f32 %v441
  %vm449 = vweird.f32 %v442
  %vm450 = vmor %vm448, %vm449
  %v451 = vsel %vm450, %v442, %v447
  %v452 = vmul.f32 %v419, %v451
  %v453 = vmul.f32 %v420, %v451
  %v454 = vmul.f32 %v421, %v451
  %v455 = vmul.f32 %v422, %v451
  %v456 = vld [vmem:[%s3] sm:$0x1]
  %v458 = vperm.slane %v456, 0
  %v460 = vmul.f32 %v452, %v458
  %v461 = vmul.f32 %v453, %v458
  %v462 = vmul.f32 %v454, %v458
  %v463 = vmul.f32 %v455, %v458
  %v464 = vld [vmem:[%s4] sm:$0x1]
  %v466 = vperm.slane %v464, 0
  %v468 = vadd.f32 %v460, %v466
  %v469 = vadd.f32 %v461, %v466
  %v470 = vadd.f32 %v462, %v466
  %v471 = vadd.f32 %v463, %v466
  %v472 = vmax.f32 %v468, 0.0
  %v473 = vmax.f32 %v469, 0.0
  %v474 = vmax.f32 %v470, 0.0
  %v475 = vmax.f32 %v471, 0.0
  %v476 = vpack.c.bf16 %v472, %v472
  %v477 = vpack.c.bf16 %v473, %v473
  %v478 = vpack.c.bf16 %v474, %v474
  %v479 = vpack.c.bf16 %v475, %v475
  %vm480 = vcmask 519168
  %481 = vst.msk [vmem:[%s5] sm:$0xf] %vm480, %v476
  %482 = vst.msk [vmem:[%s5 + $0x4] sm:$0xf] %vm480, %v477
  %483 = vst.msk [vmem:[%s5 + $0x8] sm:$0xf] %vm480, %v478
  %484 = vst.msk [vmem:[%s5 + $0xc] sm:$0xf] %vm480, %v479
  // Predicated region
  $region22: #{color_mapper_forward.6} parent=0 // pred_check
    _
  $region23: #{color_mapper_forward.6} parent=0 // pred_check_branch
    %486 = sbr.rel (0) target = $region25
  $region24: #{color_mapper_forward.6} parent=0 // pred_region
    _
  $region25: #{color_mapper_forward.6} parent=0 // pred_fallthru
    _
  // Predicated region
  $region26: #{color_mapper_forward.6} parent=0 // pred_check
    _
  $region27: #{color_mapper_forward.6} parent=0 // pred_check_branch
    %488 = sbr.rel (0) target = $region29
  $region28: #{color_mapper_forward.6} parent=0 // pred_region
    _
  $region29: #{color_mapper_forward.6} parent=0 // pred_fallthru
    _

// kernel: color_mapper_forward.7
$region0: #{color_mapper_forward.7}
  #allocation0 [shape = 'u32[]', space=smem, size = 0x4, offset = 0x4, fixed_abs, tag = 'smem constant byte address 0x4 - core index']
  #allocation1 [shape = 'u32[72,128]{1,0:T(1,128)}', space=vmem, size = 0x9000, scoped, tag = 'internal scratch']
  %s0 = inlined_call_operand.vmem [shape: bf16[32,576], index: 0, kind: input, shape index: {}]
  %s1 = inlined_call_operand.vmem [shape: bf16[576,128], index: 1, kind: input, shape index: {}]
  %s2 = inlined_call_operand.vmem [shape: f32[1,128], index: 2, kind: input, shape index: {}]
  %s3 = inlined_call_operand.vmem [shape: bf16[32,128], index: 3, kind: output, shape index: {}]
  %s4 = sld [smem:[#allocation0]]
  $region22: #{color_mapper_forward.7} parent=0
    _
  %s6 = ssub.s32 1, %s4
  %s7 = scalar_select 0, %s6, %s4
  // Predicated region
  $region2: #{color_mapper_forward.7} parent=0 // pred_check
    _
  $region3: #{color_mapper_forward.7} parent=0 // pred_check_branch
    %9 = sbr.rel (0) target = $region5
  $region4: #{color_mapper_forward.7} parent=0 // pred_region
    _
  $region5: #{color_mapper_forward.7} parent=0 // pred_fallthru
    _
  // Predicated region
  $region6: #{color_mapper_forward.7} parent=0 // pred_check
    _
  $region7: #{color_mapper_forward.7} parent=0 // pred_check_branch
    %11 = sbr.rel (0) target = $region9
  $region8: #{color_mapper_forward.7} parent=0 // pred_region
    _
  $region9: #{color_mapper_forward.7} parent=0 // pred_fallthru
    _
  // Predicated region
  $region10: #{color_mapper_forward.7} parent=0 // pred_check
    _
  $region11: #{color_mapper_forward.7} parent=0 // pred_check_branch
    %13 = sbr.rel (0) target = $region13
  $region12: #{color_mapper_forward.7} parent=0 // pred_region
    _
  $region13: #{color_mapper_forward.7} parent=0 // pred_fallthru
    _
  %v15 = vld [vmem:[%s0] sm:$0xff]
  %v16 = vld [vmem:[%s0 + $0x8] sm:$0xff]
  %v17 = vld [vmem:[%s0 + $0x10] sm:$0xf]
  %v18 = vld [vmem:[%s0 + $0x14] sm:$0xff]
  %v19 = vld [vmem:[%s0 + $0x1c] sm:$0xff]
  %v20 = vld [vmem:[%s0 + $0x24] sm:$0xf]
  %v21 = vld [vmem:[%s0 + $0x28] sm:$0xff]
  %v22 = vld [vmem:[%s0 + $0x30] sm:$0xff]
  %v23 = vld [vmem:[%s0 + $0x38] sm:$0xf]
  %v24 = vld [vmem:[%s0 + $0x3c] sm:$0xff]
  %v25 = vld [vmem:[%s0 + $0x44] sm:$0xff]
  %v26 = vld [vmem:[%s0 + $0x4c] sm:$0xf]
  %v27 = vld [vmem:[%s1] sm:$0xf]
  %v28 = vld [vmem:[%s1 + $0x4] sm:$0xf]
  %v29 = vld [vmem:[%s1 + $0x8] sm:$0xf]
  %v30 = vld [vmem:[%s1 + $0xc] sm:$0xf]
  %v31 = vld [vmem:[%s1 + $0x10] sm:$0xf]
  %v32 = vld [vmem:[%s1 + $0x14] sm:$0xf]
  %v33 = vld [vmem:[%s1 + $0x18] sm:$0xf]
  %v34 = vld [vmem:[%s1 + $0x1c] sm:$0xf]
  %v35 = vld [vmem:[%s1 + $0x20] sm:$0xf]
  %v36 = vld [vmem:[%s1 + $0x24] sm:$0xf]
  %v37 = vld [vmem:[%s1 + $0x28] sm:$0xf]
  %v38 = vld [vmem:[%s1 + $0x2c] sm:$0xf]
  %v39 = vld [vmem:[%s1 + $0x30] sm:$0xf]
  %v40 = vld [vmem:[%s1 + $0x34] sm:$0xf]
  %v41 = vld [vmem:[%s1 + $0x38] sm:$0xf]
  %v42 = vld [vmem:[%s1 + $0x3c] sm:$0xf]
  %v43 = vld [vmem:[%s1 + $0x40] sm:$0xf]
  %v44 = vld [vmem:[%s1 + $0x44] sm:$0xf]
  %v45 = vld [vmem:[%s1 + $0x48] sm:$0xf]
  %v46 = vld [vmem:[%s1 + $0x4c] sm:$0xf]
  %v47 = vld [vmem:[%s1 + $0x50] sm:$0xf]
  %v48 = vld [vmem:[%s1 + $0x54] sm:$0xf]
  %v49 = vld [vmem:[%s1 + $0x58] sm:$0xf]
  %v50 = vld [vmem:[%s1 + $0x5c] sm:$0xf]
  %v51 = vld [vmem:[%s1 + $0x60] sm:$0xf]
  %v52 = vld [vmem:[%s1 + $0x64] sm:$0xf]
  %v53 = vld [vmem:[%s1 + $0x68] sm:$0xf]
  %v54 = vld [vmem:[%s1 + $0x6c] sm:$0xf]
  %v55 = vld [vmem:[%s1 + $0x70] sm:$0xf]
  %v56 = vld [vmem:[%s1 + $0x74] sm:$0xf]
  %v57 = vld [vmem:[%s1 + $0x78] sm:$0xf]
  %v58 = vld [vmem:[%s1 + $0x7c] sm:$0xf]
  %v59 = vld [vmem:[%s1 + $0x80] sm:$0xf]
  %v60 = vld [vmem:[%s1 + $0x84] sm:$0xf]
  %v61 = vld [vmem:[%s1 + $0x88] sm:$0xf]
  %v62 = vld [vmem:[%s1 + $0x8c] sm:$0xf]
  %v63 = vld [vmem:[%s1 + $0x90] sm:$0xf]
  %v64 = vld [vmem:[%s1 + $0x94] sm:$0xf]
  %v65 = vld [vmem:[%s1 + $0x98] sm:$0xf]
  %v66 = vld [vmem:[%s1 + $0x9c] sm:$0xf]
  %v67 = vld [vmem:[%s1 + $0xa0] sm:$0xf]
  %v68 = vld [vmem:[%s1 + $0xa4] sm:$0xf]
  %v69 = vld [vmem:[%s1 + $0xa8] sm:$0xf]
  %v70 = vld [vmem:[%s1 + $0xac] sm:$0xf]
  %v71 = vld [vmem:[%s1 + $0xb0] sm:$0xf]
  %v72 = vld [vmem:[%s1 + $0xb4] sm:$0xf]
  %v73 = vld [vmem:[%s1 + $0xb8] sm:$0xf]
  %v74 = vld [vmem:[%s1 + $0xbc] sm:$0xf]
  %v75 = vld [vmem:[%s1 + $0xc0] sm:$0xf]
  %v76 = vld [vmem:[%s1 + $0xc4] sm:$0xf]
  %v77 = vld [vmem:[%s1 + $0xc8] sm:$0xf]
  %v78 = vld [vmem:[%s1 + $0xcc] sm:$0xf]
  %v79 = vld [vmem:[%s1 + $0xd0] sm:$0xf]
  %v80 = vld [vmem:[%s1 + $0xd4] sm:$0xf]
  %v81 = vld [vmem:[%s1 + $0xd8] sm:$0xf]
  %v82 = vld [vmem:[%s1 + $0xdc] sm:$0xf]
  %v83 = vld [vmem:[%s1 + $0xe0] sm:$0xf]
  %v84 = vld [vmem:[%s1 + $0xe4] sm:$0xf]
  %v85 = vld [vmem:[%s1 + $0xe8] sm:$0xf]
  %v86 = vld [vmem:[%s1 + $0xec] sm:$0xf]
  %v87 = vld [vmem:[%s1 + $0xf0] sm:$0xf]
  %v88 = vld [vmem:[%s1 + $0xf4] sm:$0xf]
  %v89 = vld [vmem:[%s1 + $0xf8] sm:$0xf]
  %v90 = vld [vmem:[%s1 + $0xfc] sm:$0xf]
  %v91 = vld [vmem:[%s1 + $0x100] sm:$0xf]
  %v92 = vld [vmem:[%s1 + $0x104] sm:$0xf]
  %v93 = vld [vmem:[%s1 + $0x108] sm:$0xf]
  %v94 = vld [vmem:[%s1 + $0x10c] sm:$0xf]
  %v95 = vld [vmem:[%s1 + $0x110] sm:$0xf]
  %v96 = vld [vmem:[%s1 + $0x114] sm:$0xf]
  %v97 = vld [vmem:[%s1 + $0x118] sm:$0xf]
  %v98 = vld [vmem:[%s1 + $0x11c] sm:$0xf]
  %v99 = vld [vmem:[%s2] sm:$0x1]
  %v101 = vperm.slane %v99, 0
  %v115 = vunpack.c.l.b16 %v15
  %v116 = vunpack.c.h.b16 %v15
  %v117 = vunpack.c.l.b16 %v16
  %v118 = vunpack.c.h.b16 %v16
  %v119 = vunpack.c.l.b16 %v17
  %v120 = vunpack.c.l.b16 %v18
  %v121 = vunpack.c.h.b16 %v18
  %v122 = vunpack.c.l.b16 %v19
  %v123 = vunpack.c.h.b16 %v19
  %v124 = vunpack.c.l.b16 %v20
  %v125 = vunpack.c.l.b16 %v21
  %v126 = vunpack.c.h.b16 %v21
  %v127 = vunpack.c.l.b16 %v22
  %v128 = vunpack.c.h.b16 %v22
  %v129 = vunpack.c.l.b16 %v23
  %v130 = vunpack.c.l.b16 %v24
  %v131 = vunpack.c.h.b16 %v24
  %v132 = vunpack.c.l.b16 %v25
  %v133 = vunpack.c.h.b16 %v25
  %v134 = vunpack.c.l.b16 %v26
  %v135 = vpack.c.b16 %v120, %v115
  %v136 = vpack.c.b16 %v121, %v116
  %v137 = vpack.c.b16 %v122, %v117
  %v138 = vpack.c.b16 %v123, %v118
  %v139 = vpack.c.b16 %v124, %v119
  %v140 = vpack.c.b16 %v130, %v125
  %v141 = vpack.c.b16 %v131, %v126
  %v142 = vpack.c.b16 %v132, %v127
  %v143 = vpack.c.b16 %v133, %v128
  %v144 = vpack.c.b16 %v134, %v129
  %v225 = vunpack.c.l.b16 %v27
  %v226 = vunpack.c.l.b16 %v28
  %v227 = vunpack.c.l.b16 %v29
  %v228 = vunpack.c.l.b16 %v30
  %v229 = vunpack.c.l.b16 %v31
  %v230 = vunpack.c.l.b16 %v32
  %v231 = vunpack.c.l.b16 %v33
  %v232 = vunpack.c.l.b16 %v34
  %v233 = vunpack.c.l.b16 %v35
  %v234 = vunpack.c.l.b16 %v36
  %v235 = vunpack.c.l.b16 %v37
  %v236 = vunpack.c.l.b16 %v38
  %v237 = vunpack.c.l.b16 %v39
  %v238 = vunpack.c.l.b16 %v40
  %v239 = vunpack.c.l.b16 %v41
  %v240 = vunpack.c.l.b16 %v42
  %v241 = vunpack.c.l.b16 %v43
  %v242 = vunpack.c.l.b16 %v44
  %v243 = vunpack.c.l.b16 %v45
  %v244 = vunpack.c.l.b16 %v46
  %v245 = vunpack.c.l.b16 %v47
  %v246 = vunpack.c.l.b16 %v48
  %v247 = vunpack.c.l.b16 %v49
  %v248 = vunpack.c.l.b16 %v50
  %v249 = vunpack.c.l.b16 %v51
  %v250 = vunpack.c.l.b16 %v52
  %v251 = vunpack.c.l.b16 %v53
  %v252 = vunpack.c.l.b16 %v54
  %v253 = vunpack.c.l.b16 %v55
  %v254 = vunpack.c.l.b16 %v56
  %v255 = vunpack.c.l.b16 %v57
  %v256 = vunpack.c.l.b16 %v58
  %v257 = vunpack.c.l.b16 %v59
  %v258 = vunpack.c.l.b16 %v60
  %v259 = vunpack.c.l.b16 %v61
  %v260 = vunpack.c.l.b16 %v62
  %v261 = vunpack.c.l.b16 %v63
  %v262 = vunpack.c.l.b16 %v64
  %v263 = vunpack.c.l.b16 %v65
  %v264 = vunpack.c.l.b16 %v66
  %v265 = vunpack.c.l.b16 %v67
  %v266 = vunpack.c.l.b16 %v68
  %v267 = vunpack.c.l.b16 %v69
  %v268 = vunpack.c.l.b16 %v70
  %v269 = vunpack.c.l.b16 %v71
  %v270 = vunpack.c.l.b16 %v72
  %v271 = vunpack.c.l.b16 %v73
  %v272 = vunpack.c.l.b16 %v74
  %v273 = vunpack.c.l.b16 %v75
  %v274 = vunpack.c.l.b16 %v76
  %v275 = vunpack.c.l.b16 %v77
  %v276 = vunpack.c.l.b16 %v78
  %v277 = vunpack.c.l.b16 %v79
  %v278 = vunpack.c.l.b16 %v80
  %v279 = vunpack.c.l.b16 %v81
  %v280 = vunpack.c.l.b16 %v82
  %v281 = vunpack.c.l.b16 %v83
  %v282 = vunpack.c.l.b16 %v84
  %v283 = vunpack.c.l.b16 %v85
  %v284 = vunpack.c.l.b16 %v86
  %v285 = vunpack.c.l.b16 %v87
  %v286 = vunpack.c.l.b16 %v88
  %v287 = vunpack.c.l.b16 %v89
  %v288 = vunpack.c.l.b16 %v90
  %v289 = vunpack.c.l.b16 %v91
  %v290 = vunpack.c.l.b16 %v92
  %v291 = vunpack.c.l.b16 %v93
  %v292 = vunpack.c.l.b16 %v94
  %v293 = vunpack.c.l.b16 %v95
  %v294 = vunpack.c.l.b16 %v96
  %v295 = vunpack.c.l.b16 %v97
  %v296 = vunpack.c.l.b16 %v98
  %v297 = vpack.c.b16 %v226, %v225
  %v298 = vpack.c.b16 %v228, %v227
  %v299 = vpack.c.b16 %v230, %v229
  %v300 = vpack.c.b16 %v232, %v231
  %v301 = vpack.c.b16 %v234, %v233
  %v302 = vpack.c.b16 %v236, %v235
  %v303 = vpack.c.b16 %v238, %v237
  %v304 = vpack.c.b16 %v240, %v239
  %v305 = vpack.c.b16 %v242, %v241
  %v306 = vpack.c.b16 %v244, %v243
  %v307 = vpack.c.b16 %v246, %v245
  %v308 = vpack.c.b16 %v248, %v247
  %v309 = vpack.c.b16 %v250, %v249
  %v310 = vpack.c.b16 %v252, %v251
  %v311 = vpack.c.b16 %v254, %v253
  %v312 = vpack.c.b16 %v256, %v255
  %v313 = vpack.c.b16 %v258, %v257
  %v314 = vpack.c.b16 %v260, %v259
  %v315 = vpack.c.b16 %v262, %v261
  %v316 = vpack.c.b16 %v264, %v263
  %v317 = vpack.c.b16 %v266, %v265
  %v318 = vpack.c.b16 %v268, %v267
  %v319 = vpack.c.b16 %v270, %v269
  %v320 = vpack.c.b16 %v272, %v271
  %v321 = vpack.c.b16 %v274, %v273
  %v322 = vpack.c.b16 %v276, %v275
  %v323 = vpack.c.b16 %v278, %v277
  %v324 = vpack.c.b16 %v280, %v279
  %v325 = vpack.c.b16 %v282, %v281
  %v326 = vpack.c.b16 %v284, %v283
  %v327 = vpack.c.b16 %v286, %v285
  %v328 = vpack.c.b16 %v288, %v287
  %v329 = vpack.c.b16 %v290, %v289
  %v330 = vpack.c.b16 %v292, %v291
  %v331 = vpack.c.b16 %v294, %v293
  %v332 = vpack.c.b16 %v296, %v295
  %vm369 = vcmask 523264
  %v371 = vsel %vm369, %v139, 0
  %v374 = vsel %vm369, %v144, 0
  %376 = vmatpush.bf16.msra.mxu0 %v304
  %377 = vmatpush.bf16.msra.mxu0 %v303
  %378 = vmatpush.bf16.msra.mxu0 %v302
  %379 = vmatpush.bf16.msra.mxu0 %v301
  %380 = vmatpush.bf16.msra.mxu0 %v300
  %381 = vmatpush.bf16.msra.mxu0 %v299
  %382 = vmatpush.bf16.msra.mxu0 %v298
  %383 = vmatpush.bf16.msra.mxu0 %v297
  %384 = vmatmul.bf16.gmra.mxu0 %v135
  %v385 = vpop.f32.mrf.mxu0
  %v386 = vadd.f32 %v101, %v385
  %v387 = vpop.f32.mrf.mxu0
  %v388 = vadd.f32 %v101, %v387
  %389 = vmatmul.bf16.gmra.mxu0 %v140
  %v390 = vpop.f32.mrf.mxu0
  %v391 = vadd.f32 %v101, %v390
  %v392 = vpop.f32.mrf.mxu0
  %v393 = vadd.f32 %v101, %v392
  %394 = vdwg.mxu0
  %395 = vmatpush.bf16.msra.mxu0 %v312
  %396 = vmatpush.bf16.msra.mxu0 %v311
  %397 = vmatpush.bf16.msra.mxu0 %v310
  %398 = vmatpush.bf16.msra.mxu0 %v309
  %399 = vmatpush.bf16.msra.mxu0 %v308
  %400 = vmatpush.bf16.msra.mxu0 %v307
  %401 = vmatpush.bf16.msra.mxu0 %v306
  %402 = vmatpush.bf16.msra.mxu0 %v305
  %403 = vmatmul.bf16.gmra.mxu0 %v136
  %v404 = vpop.f32.mrf.mxu0
  %v405 = vadd.f32 %v386, %v404
  %v406 = vpop.f32.mrf.mxu0
  %v407 = vadd.f32 %v388, %v406
  %408 = vmatmul.bf16.gmra.mxu0 %v141
  %v409 = vpop.f32.mrf.mxu0
  %v410 = vadd.f32 %v391, %v409
  %v411 = vpop.f32.mrf.mxu0
  %v412 = vadd.f32 %v393, %v411
  %413 = vdwg.mxu0
  %414 = vmatpush.bf16.msra.mxu0 %v320
  %415 = vmatpush.bf16.msra.mxu0 %v319
  %416 = vmatpush.bf16.msra.mxu0 %v318
  %417 = vmatpush.bf16.msra.mxu0 %v317
  %418 = vmatpush.bf16.msra.mxu0 %v316
  %419 = vmatpush.bf16.msra.mxu0 %v315
  %420 = vmatpush.bf16.msra.mxu0 %v314
  %421 = vmatpush.bf16.msra.mxu0 %v313
  %422 = vmatmul.bf16.gmra.mxu0 %v137
  %v423 = vpop.f32.mrf.mxu0
  %v424 = vadd.f32 %v405, %v423
  %v425 = vpop.f32.mrf.mxu0
  %v426 = vadd.f32 %v407, %v425
  %427 = vmatmul.bf16.gmra.mxu0 %v142
  %v428 = vpop.f32.mrf.mxu0
  %v429 = vadd.f32 %v410, %v428
  %v430 = vpop.f32.mrf.mxu0
  %v431 = vadd.f32 %v412, %v430
  %432 = vdwg.mxu0
  %433 = vmatpush.bf16.msra.mxu0 %v328
  %434 = vmatpush.bf16.msra.mxu0 %v327
  %435 = vmatpush.bf16.msra.mxu0 %v326
  %436 = vmatpush.bf16.msra.mxu0 %v325
  %437 = vmatpush.bf16.msra.mxu0 %v324
  %438 = vmatpush.bf16.msra.mxu0 %v323
  %439 = vmatpush.bf16.msra.mxu0 %v322
  %440 = vmatpush.bf16.msra.mxu0 %v321
  %441 = vmatmul.bf16.gmra.mxu0 %v138
  %v442 = vpop.f32.mrf.mxu0
  %v443 = vadd.f32 %v424, %v442
  %v444 = vpop.f32.mrf.mxu0
  %v445 = vadd.f32 %v426, %v444
  %446 = vmatmul.bf16.gmra.mxu0 %v143
  %v447 = vpop.f32.mrf.mxu0
  %v448 = vadd.f32 %v429, %v447
  %v449 = vpop.f32.mrf.mxu0
  %v450 = vadd.f32 %v431, %v449
  %451 = vdwg.mxu0
  %452 = vmatpush.bf16.msra.mxu0 0
  %453 = vmatpush.bf16.msra.mxu0 0
  %454 = vmatpush.bf16.msra.mxu0 0
  %455 = vmatpush.bf16.msra.mxu0 0
  %456 = vmatpush.bf16.msra.mxu0 %v332
  %457 = vmatpush.bf16.msra.mxu0 %v331
  %458 = vmatpush.bf16.msra.mxu0 %v330
  %459 = vmatpush.bf16.msra.mxu0 %v329
  %460 = vmatmul.bf16.gmra.mxu0 %v371
  %v461 = vpop.f32.mrf.mxu0
  %v462 = vadd.f32 %v443, %v461
  %v463 = vpop.f32.mrf.mxu0
  %v464 = vadd.f32 %v445, %v463
  %465 = vmatmul.bf16.gmra.mxu0 %v374
  %v466 = vpop.f32.mrf.mxu0
  %v467 = vadd.f32 %v448, %v466
  %v468 = vpop.f32.mrf.mxu0
  %v469 = vadd.f32 %v450, %v468
  %470 = vdwg.mxu0
  %v471 = vmax.f32 %v462, 0.0
  %v472 = vmax.f32 %v464, 0.0
  %v473 = vmax.f32 %v467, 0.0
  %v474 = vmax.f32 %v469, 0.0
  %v475 = vpack.c.bf16 %v471, %v471
  %v476 = vpack.c.bf16 %v472, %v472
  %v477 = vpack.c.bf16 %v473, %v473
  %v478 = vpack.c.bf16 %v474, %v474
  %479 = vst [vmem:[%s3] sm:$0xf] %v475
  %480 = vst [vmem:[%s3 + $0x4] sm:$0xf] %v476
  %481 = vst [vmem:[%s3 + $0x8] sm:$0xf] %v477
  %482 = vst [vmem:[%s3 + $0xc] sm:$0xf] %v478
  // Predicated region
  $region14: #{color_mapper_forward.7} parent=0 // pred_check
    _
  $region15: #{color_mapper_forward.7} parent=0 // pred_check_branch
    %484 = sbr.rel (0) target = $region17
  $region16: #{color_mapper_forward.7} parent=0 // pred_region
    _
  $region17: #{color_mapper_forward.7} parent=0 // pred_fallthru
    _
  // Predicated region
  $region18: #{color_mapper_forward.7} parent=0 // pred_check
    _
  $region19: #{color_mapper_forward.7} parent=0 // pred_check_branch
    %486 = sbr.rel (0) target = $region21
  $region20: #{color_mapper_forward.7} parent=0 // pred_region
    _
  $region21: #{color_mapper_forward.7} parent=0 // pred_fallthru
    _

// kernel: color_mapper_forward.8
$region0: #{color_mapper_forward.8}
  #allocation0 [shape = 'u32[]', space=smem, size = 0x4, offset = 0x4, fixed_abs, tag = 'smem constant byte address 0x4 - core index']
  #allocation1 [shape = 'u32[72,128]{1,0:T(1,128)}', space=vmem, size = 0x9000, scoped, tag = 'internal scratch']
  %s0 = inlined_call_operand.vmem [shape: bf16[4,32,512], index: 0, kind: input, shape index: {}]
  %s1 = inlined_call_operand.vmem [shape: bf16[4,512,64], index: 1, kind: input, shape index: {}]
  %s2 = inlined_call_operand.vmem [shape: f32[1,64], index: 2, kind: input, shape index: {}]
  %s3 = inlined_call_operand.vmem [shape: f32[1,64], index: 3, kind: input, shape index: {}]
  %s4 = inlined_call_operand.vmem [shape: f32[1,64], index: 4, kind: input, shape index: {}]
  %s5 = inlined_call_operand.vmem [shape: bf16[4,32,64], index: 5, kind: output, shape index: {}]
  %s6 = sld [smem:[#allocation0]]
  $region30: #{color_mapper_forward.8} parent=0
    _
  %s8 = ssub.s32 1, %s6
  %s9 = scalar_select 0, %s8, %s6
  // Predicated region
  $region2: #{color_mapper_forward.8} parent=0 // pred_check
    _
  $region3: #{color_mapper_forward.8} parent=0 // pred_check_branch
    %11 = sbr.rel (0) target = $region5
  $region4: #{color_mapper_forward.8} parent=0 // pred_region
    _
  $region5: #{color_mapper_forward.8} parent=0 // pred_fallthru
    _
  // Predicated region
  $region6: #{color_mapper_forward.8} parent=0 // pred_check
    _
  $region7: #{color_mapper_forward.8} parent=0 // pred_check_branch
    %13 = sbr.rel (0) target = $region9
  $region8: #{color_mapper_forward.8} parent=0 // pred_region
    _
  $region9: #{color_mapper_forward.8} parent=0 // pred_fallthru
    _
  // Predicated region
  $region10: #{color_mapper_forward.8} parent=0 // pred_check
    _
  $region11: #{color_mapper_forward.8} parent=0 // pred_check_branch
    %15 = sbr.rel (0) target = $region13
  $region12: #{color_mapper_forward.8} parent=0 // pred_region
    _
  $region13: #{color_mapper_forward.8} parent=0 // pred_fallthru
    _
  // Predicated region
  $region14: #{color_mapper_forward.8} parent=0 // pred_check
    _
  $region15: #{color_mapper_forward.8} parent=0 // pred_check_branch
    %17 = sbr.rel (0) target = $region17
  $region16: #{color_mapper_forward.8} parent=0 // pred_region
    _
  $region17: #{color_mapper_forward.8} parent=0 // pred_fallthru
    _
  // Predicated region
  $region18: #{color_mapper_forward.8} parent=0 // pred_check
    _
  $region19: #{color_mapper_forward.8} parent=0 // pred_check_branch
    %19 = sbr.rel (0) target = $region21
  $region20: #{color_mapper_forward.8} parent=0 // pred_region
    _
  $region21: #{color_mapper_forward.8} parent=0 // pred_fallthru
    _
  %v20 = vld [vmem:[%s0] sm:$0xff]
  %v21 = vld [vmem:[%s0 + $0x8] sm:$0xff]
  %v22 = vld [vmem:[%s0 + $0x10] sm:$0xff]
  %v23 = vld [vmem:[%s0 + $0x18] sm:$0xff]
  %v24 = vld [vmem:[%s0 + $0x20] sm:$0xff]
  %v25 = vld [vmem:[%s0 + $0x28] sm:$0xff]
  %v26 = vld [vmem:[%s0 + $0x30] sm:$0xff]
  %v27 = vld [vmem:[%s0 + $0x38] sm:$0xff]
  %v28 = vld [vmem:[%s1] sm:$0xf]
  %v29 = vld [vmem:[%s1 + $0x4] sm:$0xf]
  %v30 = vld [vmem:[%s1 + $0x8] sm:$0xf]
  %v31 = vld [vmem:[%s1 + $0xc] sm:$0xf]
  %v32 = vld [vmem:[%s1 + $0x10] sm:$0xf]
  %v33 = vld [vmem:[%s1 + $0x14] sm:$0xf]
  %v34 = vld [vmem:[%s1 + $0x18] sm:$0xf]
  %v35 = vld [vmem:[%s1 + $0x1c] sm:$0xf]
  %v36 = vld [vmem:[%s1 + $0x20] sm:$0xf]
  %v37 = vld [vmem:[%s1 + $0x24] sm:$0xf]
  %v38 = vld [vmem:[%s1 + $0x28] sm:$0xf]
  %v39 = vld [vmem:[%s1 + $0x2c] sm:$0xf]
  %v40 = vld [vmem:[%s1 + $0x30] sm:$0xf]
  %v41 = vld [vmem:[%s1 + $0x34] sm:$0xf]
  %v42 = vld [vmem:[%s1 + $0x38] sm:$0xf]
  %v43 = vld [vmem:[%s1 + $0x3c] sm:$0xf]
  %v44 = vld [vmem:[%s1 + $0x40] sm:$0xf]
  %v45 = vld [vmem:[%s1 + $0x44] sm:$0xf]
  %v46 = vld [vmem:[%s1 + $0x48] sm:$0xf]
  %v47 = vld [vmem:[%s1 + $0x4c] sm:$0xf]
  %v48 = vld [vmem:[%s1 + $0x50] sm:$0xf]
  %v49 = vld [vmem:[%s1 + $0x54] sm:$0xf]
  %v50 = vld [vmem:[%s1 + $0x58] sm:$0xf]
  %v51 = vld [vmem:[%s1 + $0x5c] sm:$0xf]
  %v52 = vld [vmem:[%s1 + $0x60] sm:$0xf]
  %v53 = vld [vmem:[%s1 + $0x64] sm:$0xf]
  %v54 = vld [vmem:[%s1 + $0x68] sm:$0xf]
  %v55 = vld [vmem:[%s1 + $0x6c] sm:$0xf]
  %v56 = vld [vmem:[%s1 + $0x70] sm:$0xf]
  %v57 = vld [vmem:[%s1 + $0x74] sm:$0xf]
  %v58 = vld [vmem:[%s1 + $0x78] sm:$0xf]
  %v59 = vld [vmem:[%s1 + $0x7c] sm:$0xf]
  %v60 = vld [vmem:[%s1 + $0x80] sm:$0xf]
  %v61 = vld [vmem:[%s1 + $0x84] sm:$0xf]
  %v62 = vld [vmem:[%s1 + $0x88] sm:$0xf]
  %v63 = vld [vmem:[%s1 + $0x8c] sm:$0xf]
  %v64 = vld [vmem:[%s1 + $0x90] sm:$0xf]
  %v65 = vld [vmem:[%s1 + $0x94] sm:$0xf]
  %v66 = vld [vmem:[%s1 + $0x98] sm:$0xf]
  %v67 = vld [vmem:[%s1 + $0x9c] sm:$0xf]
  %v68 = vld [vmem:[%s1 + $0xa0] sm:$0xf]
  %v69 = vld [vmem:[%s1 + $0xa4] sm:$0xf]
  %v70 = vld [vmem:[%s1 + $0xa8] sm:$0xf]
  %v71 = vld [vmem:[%s1 + $0xac] sm:$0xf]
  %v72 = vld [vmem:[%s1 + $0xb0] sm:$0xf]
  %v73 = vld [vmem:[%s1 + $0xb4] sm:$0xf]
  %v74 = vld [vmem:[%s1 + $0xb8] sm:$0xf]
  %v75 = vld [vmem:[%s1 + $0xbc] sm:$0xf]
  %v76 = vld [vmem:[%s1 + $0xc0] sm:$0xf]
  %v77 = vld [vmem:[%s1 + $0xc4] sm:$0xf]
  %v78 = vld [vmem:[%s1 + $0xc8] sm:$0xf]
  %v79 = vld [vmem:[%s1 + $0xcc] sm:$0xf]
  %v80 = vld [vmem:[%s1 + $0xd0] sm:$0xf]
  %v81 = vld [vmem:[%s1 + $0xd4] sm:$0xf]
  %v82 = vld [vmem:[%s1 + $0xd8] sm:$0xf]
  %v83 = vld [vmem:[%s1 + $0xdc] sm:$0xf]
  %v84 = vld [vmem:[%s1 + $0xe0] sm:$0xf]
  %v85 = vld [vmem:[%s1 + $0xe4] sm:$0xf]
  %v86 = vld [vmem:[%s1 + $0xe8] sm:$0xf]
  %v87 = vld [vmem:[%s1 + $0xec] sm:$0xf]
  %v88 = vld [vmem:[%s1 + $0xf0] sm:$0xf]
  %v89 = vld [vmem:[%s1 + $0xf4] sm:$0xf]
  %v90 = vld [vmem:[%s1 + $0xf8] sm:$0xf]
  %v91 = vld [vmem:[%s1 + $0xfc] sm:$0xf]
  %v92 = vld [vmem:[%s2] sm:$0x1]
  %v94 = vperm.slane %v92, 0
  %v104 = vunpack.c.l.b16 %v20
  %v105 = vunpack.c.h.b16 %v20
  %v106 = vunpack.c.l.b16 %v21
  %v107 = vunpack.c.h.b16 %v21
  %v108 = vunpack.c.l.b16 %v22
  %v109 = vunpack.c.h.b16 %v22
  %v110 = vunpack.c.l.b16 %v23
  %v111 = vunpack.c.h.b16 %v23
  %v112 = vunpack.c.l.b16 %v24
  %v113 = vunpack.c.h.b16 %v24
  %v114 = vunpack.c.l.b16 %v25
  %v115 = vunpack.c.h.b16 %v25
  %v116 = vunpack.c.l.b16 %v26
  %v117 = vunpack.c.h.b16 %v26
  %v118 = vunpack.c.l.b16 %v27
  %v119 = vunpack.c.h.b16 %v27
  %v120 = vpack.c.b16 %v108, %v104
  %v121 = vpack.c.b16 %v109, %v105
  %v122 = vpack.c.b16 %v110, %v106
  %v123 = vpack.c.b16 %v111, %v107
  %v124 = vpack.c.b16 %v116, %v112
  %v125 = vpack.c.b16 %v117, %v113
  %v126 = vpack.c.b16 %v118, %v114
  %v127 = vpack.c.b16 %v119, %v115
  %v200 = vunpack.c.l.b16 %v28
  %v201 = vunpack.c.l.b16 %v29
  %v202 = vunpack.c.l.b16 %v30
  %v203 = vunpack.c.l.b16 %v31
  %v204 = vunpack.c.l.b16 %v32
  %v205 = vunpack.c.l.b16 %v33
  %v206 = vunpack.c.l.b16 %v34
  %v207 = vunpack.c.l.b16 %v35
  %v208 = vunpack.c.l.b16 %v36
  %v209 = vunpack.c.l.b16 %v37
  %v210 = vunpack.c.l.b16 %v38
  %v211 = vunpack.c.l.b16 %v39
  %v212 = vunpack.c.l.b16 %v40
  %v213 = vunpack.c.l.b16 %v41
  %v214 = vunpack.c.l.b16 %v42
  %v215 = vunpack.c.l.b16 %v43
  %v216 = vunpack.c.l.b16 %v44
  %v217 = vunpack.c.l.b16 %v45
  %v218 = vunpack.c.l.b16 %v46
  %v219 = vunpack.c.l.b16 %v47
  %v220 = vunpack.c.l.b16 %v48
  %v221 = vunpack.c.l.b16 %v49
  %v222 = vunpack.c.l.b16 %v50
  %v223 = vunpack.c.l.b16 %v51
  %v224 = vunpack.c.l.b16 %v52
  %v225 = vunpack.c.l.b16 %v53
  %v226 = vunpack.c.l.b16 %v54
  %v227 = vunpack.c.l.b16 %v55
  %v228 = vunpack.c.l.b16 %v56
  %v229 = vunpack.c.l.b16 %v57
  %v230 = vunpack.c.l.b16 %v58
  %v231 = vunpack.c.l.b16 %v59
  %v232 = vunpack.c.l.b16 %v60
  %v233 = vunpack.c.l.b16 %v61
  %v234 = vunpack.c.l.b16 %v62
  %v235 = vunpack.c.l.b16 %v63
  %v236 = vunpack.c.l.b16 %v64
  %v237 = vunpack.c.l.b16 %v65
  %v238 = vunpack.c.l.b16 %v66
  %v239 = vunpack.c.l.b16 %v67
  %v240 = vunpack.c.l.b16 %v68
  %v241 = vunpack.c.l.b16 %v69
  %v242 = vunpack.c.l.b16 %v70
  %v243 = vunpack.c.l.b16 %v71
  %v244 = vunpack.c.l.b16 %v72
  %v245 = vunpack.c.l.b16 %v73
  %v246 = vunpack.c.l.b16 %v74
  %v247 = vunpack.c.l.b16 %v75
  %v248 = vunpack.c.l.b16 %v76
  %v249 = vunpack.c.l.b16 %v77
  %v250 = vunpack.c.l.b16 %v78
  %v251 = vunpack.c.l.b16 %v79
  %v252 = vunpack.c.l.b16 %v80
  %v253 = vunpack.c.l.b16 %v81
  %v254 = vunpack.c.l.b16 %v82
  %v255 = vunpack.c.l.b16 %v83
  %v256 = vunpack.c.l.b16 %v84
  %v257 = vunpack.c.l.b16 %v85
  %v258 = vunpack.c.l.b16 %v86
  %v259 = vunpack.c.l.b16 %v87
  %v260 = vunpack.c.l.b16 %v88
  %v261 = vunpack.c.l.b16 %v89
  %v262 = vunpack.c.l.b16 %v90
  %v263 = vunpack.c.l.b16 %v91
  %v264 = vpack.c.b16 %v201, %v200
  %v265 = vpack.c.b16 %v203, %v202
  %v266 = vpack.c.b16 %v205, %v204
  %v267 = vpack.c.b16 %v207, %v206
  %v268 = vpack.c.b16 %v209, %v208
  %v269 = vpack.c.b16 %v211, %v210
  %v270 = vpack.c.b16 %v213, %v212
  %v271 = vpack.c.b16 %v215, %v214
  %v272 = vpack.c.b16 %v217, %v216
  %v273 = vpack.c.b16 %v219, %v218
  %v274 = vpack.c.b16 %v221, %v220
  %v275 = vpack.c.b16 %v223, %v222
  %v276 = vpack.c.b16 %v225, %v224
  %v277 = vpack.c.b16 %v227, %v226
  %v278 = vpack.c.b16 %v229, %v228
  %v279 = vpack.c.b16 %v231, %v230
  %v280 = vpack.c.b16 %v233, %v232
  %v281 = vpack.c.b16 %v235, %v234
  %v282 = vpack.c.b16 %v237, %v236
  %v283 = vpack.c.b16 %v239, %v238
  %v284 = vpack.c.b16 %v241, %v240
  %v285 = vpack.c.b16 %v243, %v242
  %v286 = vpack.c.b16 %v245, %v244
  %v287 = vpack.c.b16 %v247, %v246
  %v288 = vpack.c.b16 %v249, %v248
  %v289 = vpack.c.b16 %v251, %v250
  %v290 = vpack.c.b16 %v253, %v252
  %v291 = vpack.c.b16 %v255, %v254
  %v292 = vpack.c.b16 %v257, %v256
  %v293 = vpack.c.b16 %v259, %v258
  %v294 = vpack.c.b16 %v261, %v260
  %v295 = vpack.c.b16 %v263, %v262
  %328 = vmatpush.bf16.msra.mxu0 %v271
  %329 = vmatpush.bf16.msra.mxu0 %v270
  %330 = vmatpush.bf16.msra.mxu0 %v269
  %331 = vmatpush.bf16.msra.mxu0 %v268
  %332 = vmatpush.bf16.msra.mxu0 %v267
  %333 = vmatpush.bf16.msra.mxu0 %v266
  %334 = vmatpush.bf16.msra.mxu0 %v265
  %335 = vmatpush.bf16.msra.mxu0 %v264
  %336 = vmatmul.bf16.gmra.mxu0 %v120
  %v337 = vpop.f32.mrf.mxu0
  %v338 = vadd.f32 %v94, %v337
  %v339 = vpop.f32.mrf.mxu0
  %v340 = vadd.f32 %v94, %v339
  %341 = vmatmul.bf16.gmra.mxu0 %v124
  %v342 = vpop.f32.mrf.mxu0
  %v343 = vadd.f32 %v94, %v342
  %v344 = vpop.f32.mrf.mxu0
  %v345 = vadd.f32 %v94, %v344
  %346 = vdwg.mxu0
  %347 = vmatpush.bf16.msra.mxu0 %v279
  %348 = vmatpush.bf16.msra.mxu0 %v278
  %349 = vmatpush.bf16.msra.mxu0 %v277
  %350 = vmatpush.bf16.msra.mxu0 %v276
  %351 = vmatpush.bf16.msra.mxu0 %v275
  %352 = vmatpush.bf16.msra.mxu0 %v274
  %353 = vmatpush.bf16.msra.mxu0 %v273
  %354 = vmatpush.bf16.msra.mxu0 %v272
  %355 = vmatmul.bf16.gmra.mxu0 %v121
  %v356 = vpop.f32.mrf.mxu0
  %v357 = vadd.f32 %v338, %v356
  %v358 = vpop.f32.mrf.mxu0
  %v359 = vadd.f32 %v340, %v358
  %360 = vmatmul.bf16.gmra.mxu0 %v125
  %v361 = vpop.f32.mrf.mxu0
  %v362 = vadd.f32 %v343, %v361
  %v363 = vpop.f32.mrf.mxu0
  %v364 = vadd.f32 %v345, %v363
  %365 = vdwg.mxu0
  %366 = vmatpush.bf16.msra.mxu0 %v287
  %367 = vmatpush.bf16.msra.mxu0 %v286
  %368 = vmatpush.bf16.msra.mxu0 %v285
  %369 = vmatpush.bf16.msra.mxu0 %v284
  %370 = vmatpush.bf16.msra.mxu0 %v283
  %371 = vmatpush.bf16.msra.mxu0 %v282
  %372 = vmatpush.bf16.msra.mxu0 %v281
  %373 = vmatpush.bf16.msra.mxu0 %v280
  %374 = vmatmul.bf16.gmra.mxu0 %v122
  %v375 = vpop.f32.mrf.mxu0
  %v376 = vadd.f32 %v357, %v375
  %v377 = vpop.f32.mrf.mxu0
  %v378 = vadd.f32 %v359, %v377
  %379 = vmatmul.bf16.gmra.mxu0 %v126
  %v380 = vpop.f32.mrf.mxu0
  %v381 = vadd.f32 %v362, %v380
  %v382 = vpop.f32.mrf.mxu0
  %v383 = vadd.f32 %v364, %v382
  %384 = vdwg.mxu0
  %385 = vmatpush.bf16.msra.mxu0 %v295
  %386 = vmatpush.bf16.msra.mxu0 %v294
  %387 = vmatpush.bf16.msra.mxu0 %v293
  %388 = vmatpush.bf16.msra.mxu0 %v292
  %389 = vmatpush.bf16.msra.mxu0 %v291
  %390 = vmatpush.bf16.msra.mxu0 %v290
  %391 = vmatpush.bf16.msra.mxu0 %v289
  %392 = vmatpush.bf16.msra.mxu0 %v288
  %393 = vmatmul.bf16.gmra.mxu0 %v123
  %v394 = vpop.f32.mrf.mxu0
  %v395 = vadd.f32 %v376, %v394
  %v396 = vpop.f32.mrf.mxu0
  %v397 = vadd.f32 %v378, %v396
  %398 = vmatmul.bf16.gmra.mxu0 %v127
  %v399 = vpop.f32.mrf.mxu0
  %v400 = vadd.f32 %v381, %v399
  %v401 = vpop.f32.mrf.mxu0
  %v402 = vadd.f32 %v383, %v401
  %403 = vdwg.mxu0
  %s404 = scalar_lea.vmem %s0, 64
  %v405 = vld [vmem:[%s404] sm:$0xff]
  %v406 = vld [vmem:[%s404 + $0x8] sm:$0xff]
  %v407 = vld [vmem:[%s404 + $0x10] sm:$0xff]
  %v408 = vld [vmem:[%s404 + $0x18] sm:$0xff]
  %v409 = vld [vmem:[%s404 + $0x20] sm:$0xff]
  %v410 = vld [vmem:[%s404 + $0x28] sm:$0xff]
  %v411 = vld [vmem:[%s404 + $0x30] sm:$0xff]
  %v412 = vld [vmem:[%s404 + $0x38] sm:$0xff]
  %s413 = scalar_lea.vmem %s1, 256
  %v414 = vld [vmem:[%s413] sm:$0xf]
  %v415 = vld [vmem:[%s413 + $0x4] sm:$0xf]
  %v416 = vld [vmem:[%s413 + $0x8] sm:$0xf]
  %v417 = vld [vmem:[%s413 + $0xc] sm:$0xf]
  %v418 = vld [vmem:[%s413 + $0x10] sm:$0xf]
  %v419 = vld [vmem:[%s413 + $0x14] sm:$0xf]
  %v420 = vld [vmem:[%s413 + $0x18] sm:$0xf]
  %v421 = vld [vmem:[%s413 + $0x1c] sm:$0xf]
  %v422 = vld [vmem:[%s413 + $0x20] sm:$0xf]
  %v423 = vld [vmem:[%s413 + $0x24] sm:$0xf]
  %v424 = vld [vmem:[%s413 + $0x28] sm:$0xf]
  %v425 = vld [vmem:[%s413 + $0x2c] sm:$0xf]
  %v426 = vld [vmem:[%s413 + $0x30] sm:$0xf]
  %v427 = vld [vmem:[%s413 + $0x34] sm:$0xf]
  %v428 = vld [vmem:[%s413 + $0x38] sm:$0xf]
  %v429 = vld [vmem:[%s413 + $0x3c] sm:$0xf]
  %v430 = vld [vmem:[%s413 + $0x40] sm:$0xf]
  %v431 = vld [vmem:[%s413 + $0x44] sm:$0xf]
  %v432 = vld [vmem:[%s413 + $0x48] sm:$0xf]
  %v433 = vld [vmem:[%s413 + $0x4c] sm:$0xf]
  %v434 = vld [vmem:[%s413 + $0x50] sm:$0xf]
  %v435 = vld [vmem:[%s413 + $0x54] sm:$0xf]
  %v436 = vld [vmem:[%s413 + $0x58] sm:$0xf]
  %v437 = vld [vmem:[%s413 + $0x5c] sm:$0xf]
  %v438 = vld [vmem:[%s413 + $0x60] sm:$0xf]
  %v439 = vld [vmem:[%s413 + $0x64] sm:$0xf]
  %v440 = vld [vmem:[%s413 + $0x68] sm:$0xf]
  %v441 = vld [vmem:[%s413 + $0x6c] sm:$0xf]
  %v442 = vld [vmem:[%s413 + $0x70] sm:$0xf]
  %v443 = vld [vmem:[%s413 + $0x74] sm:$0xf]
  %v444 = vld [vmem:[%s413 + $0x78] sm:$0xf]
  %v445 = vld [vmem:[%s413 + $0x7c] sm:$0xf]
  %v446 = vld [vmem:[%s413 + $0x80] sm:$0xf]
  %v447 = vld [vmem:[%s413 + $0x84] sm:$0xf]
  %v448 = vld [vmem:[%s413 + $0x88] sm:$0xf]
  %v449 = vld [vmem:[%s413 + $0x8c] sm:$0xf]
  %v450 = vld [vmem:[%s413 + $0x90] sm:$0xf]
  %v451 = vld [vmem:[%s413 + $0x94] sm:$0xf]
  %v452 = vld [vmem:[%s413 + $0x98] sm:$0xf]
  %v453 = vld [vmem:[%s413 + $0x9c] sm:$0xf]
  %v454 = vld [vmem:[%s413 + $0xa0] sm:$0xf]
  %v455 = vld [vmem:[%s413 + $0xa4] sm:$0xf]
  %v456 = vld [vmem:[%s413 + $0xa8] sm:$0xf]
  %v457 = vld [vmem:[%s413 + $0xac] sm:$0xf]
  %v458 = vld [vmem:[%s413 + $0xb0] sm:$0xf]
  %v459 = vld [vmem:[%s413 + $0xb4] sm:$0xf]
  %v460 = vld [vmem:[%s413 + $0xb8] sm:$0xf]
  %v461 = vld [vmem:[%s413 + $0xbc] sm:$0xf]
  %v462 = vld [vmem:[%s413 + $0xc0] sm:$0xf]
  %v463 = vld [vmem:[%s413 + $0xc4] sm:$0xf]
  %v464 = vld [vmem:[%s413 + $0xc8] sm:$0xf]
  %v465 = vld [vmem:[%s413 + $0xcc] sm:$0xf]
  %v466 = vld [vmem:[%s413 + $0xd0] sm:$0xf]
  %v467 = vld [vmem:[%s413 + $0xd4] sm:$0xf]
  %v468 = vld [vmem:[%s413 + $0xd8] sm:$0xf]
  %v469 = vld [vmem:[%s413 + $0xdc] sm:$0xf]
  %v470 = vld [vmem:[%s413 + $0xe0] sm:$0xf]
  %v471 = vld [vmem:[%s413 + $0xe4] sm:$0xf]
  %v472 = vld [vmem:[%s413 + $0xe8] sm:$0xf]
  %v473 = vld [vmem:[%s413 + $0xec] sm:$0xf]
  %v474 = vld [vmem:[%s413 + $0xf0] sm:$0xf]
  %v475 = vld [vmem:[%s413 + $0xf4] sm:$0xf]
  %v476 = vld [vmem:[%s413 + $0xf8] sm:$0xf]
  %v477 = vld [vmem:[%s413 + $0xfc] sm:$0xf]
  %v486 = vunpack.c.l.b16 %v405
  %v487 = vunpack.c.h.b16 %v405
  %v488 = vunpack.c.l.b16 %v406
  %v489 = vunpack.c.h.b16 %v406
  %v490 = vunpack.c.l.b16 %v407
  %v491 = vunpack.c.h.b16 %v407
  %v492 = vunpack.c.l.b16 %v408
  %v493 = vunpack.c.h.b16 %v408
  %v494 = vunpack.c.l.b16 %v409
  %v495 = vunpack.c.h.b16 %v409
  %v496 = vunpack.c.l.b16 %v410
  %v497 = vunpack.c.h.b16 %v410
  %v498 = vunpack.c.l.b16 %v411
  %v499 = vunpack.c.h.b16 %v411
  %v500 = vunpack.c.l.b16 %v412
  %v501 = vunpack.c.h.b16 %v412
  %v502 = vpack.c.b16 %v490, %v486
  %v503 = vpack.c.b16 %v491, %v487
  %v504 = vpack.c.b16 %v492, %v488
  %v505 = vpack.c.b16 %v493, %v489
  %v506 = vpack.c.b16 %v498, %v494
  %v507 = vpack.c.b16 %v499, %v495
  %v508 = vpack.c.b16 %v500, %v496
  %v509 = vpack.c.b16 %v501, %v497
  %v582 = vunpack.c.l.b16 %v414
  %v583 = vunpack.c.l.b16 %v415
  %v584 = vunpack.c.l.b16 %v416
  %v585 = vunpack.c.l.b16 %v417
  %v586 = vunpack.c.l.b16 %v418
  %v587 = vunpack.c.l.b16 %v419
  %v588 = vunpack.c.l.b16 %v420
  %v589 = vunpack.c.l.b16 %v421
  %v590 = vunpack.c.l.b16 %v422
  %v591 = vunpack.c.l.b16 %v423
  %v592 = vunpack.c.l.b16 %v424
  %v593 = vunpack.c.l.b16 %v425
  %v594 = vunpack.c.l.b16 %v426
  %v595 = vunpack.c.l.b16 %v427
  %v596 = vunpack.c.l.b16 %v428
  %v597 = vunpack.c.l.b16 %v429
  %v598 = vunpack.c.l.b16 %v430
  %v599 = vunpack.c.l.b16 %v431
  %v600 = vunpack.c.l.b16 %v432
  %v601 = vunpack.c.l.b16 %v433
  %v602 = vunpack.c.l.b16 %v434
  %v603 = vunpack.c.l.b16 %v435
  %v604 = vunpack.c.l.b16 %v436
  %v605 = vunpack.c.l.b16 %v437
  %v606 = vunpack.c.l.b16 %v438
  %v607 = vunpack.c.l.b16 %v439
  %v608 = vunpack.c.l.b16 %v440
  %v609 = vunpack.c.l.b16 %v441
  %v610 = vunpack.c.l.b16 %v442
  %v611 = vunpack.c.l.b16 %v443
  %v612 = vunpack.c.l.b16 %v444
  %v613 = vunpack.c.l.b16 %v445
  %v614 = vunpack.c.l.b16 %v446
  %v615 = vunpack.c.l.b16 %v447
  %v616 = vunpack.c.l.b16 %v448
  %v617 = vunpack.c.l.b16 %v449
  %v618 = vunpack.c.l.b16 %v450
  %v619 = vunpack.c.l.b16 %v451
  %v620 = vunpack.c.l.b16 %v452
  %v621 = vunpack.c.l.b16 %v453
  %v622 = vunpack.c.l.b16 %v454
  %v623 = vunpack.c.l.b16 %v455
  %v624 = vunpack.c.l.b16 %v456
  %v625 = vunpack.c.l.b16 %v457
  %v626 = vunpack.c.l.b16 %v458
  %v627 = vunpack.c.l.b16 %v459
  %v628 = vunpack.c.l.b16 %v460
  %v629 = vunpack.c.l.b16 %v461
  %v630 = vunpack.c.l.b16 %v462
  %v631 = vunpack.c.l.b16 %v463
  %v632 = vunpack.c.l.b16 %v464
  %v633 = vunpack.c.l.b16 %v465
  %v634 = vunpack.c.l.b16 %v466
  %v635 = vunpack.c.l.b16 %v467
  %v636 = vunpack.c.l.b16 %v468
  %v637 = vunpack.c.l.b16 %v469
  %v638 = vunpack.c.l.b16 %v470
  %v639 = vunpack.c.l.b16 %v471
  %v640 = vunpack.c.l.b16 %v472
  %v641 = vunpack.c.l.b16 %v473
  %v642 = vunpack.c.l.b16 %v474
  %v643 = vunpack.c.l.b16 %v475
  %v644 = vunpack.c.l.b16 %v476
  %v645 = vunpack.c.l.b16 %v477
  %v646 = vpack.c.b16 %v583, %v582
  %v647 = vpack.c.b16 %v585, %v584
  %v648 = vpack.c.b16 %v587, %v586
  %v649 = vpack.c.b16 %v589, %v588
  %v650 = vpack.c.b16 %v591, %v590
  %v651 = vpack.c.b16 %v593, %v592
  %v652 = vpack.c.b16 %v595, %v594
  %v653 = vpack.c.b16 %v597, %v596
  %v654 = vpack.c.b16 %v599, %v598
  %v655 = vpack.c.b16 %v601, %v600
  %v656 = vpack.c.b16 %v603, %v602
  %v657 = vpack.c.b16 %v605, %v604
  %v658 = vpack.c.b16 %v607, %v606
  %v659 = vpack.c.b16 %v609, %v608
  %v660 = vpack.c.b16 %v611, %v610
  %v661 = vpack.c.b16 %v613, %v612
  %v662 = vpack.c.b16 %v615, %v614
  %v663 = vpack.c.b16 %v617, %v616
  %v664 = vpack.c.b16 %v619, %v618
  %v665 = vpack.c.b16 %v621, %v620
  %v666 = vpack.c.b16 %v623, %v622
  %v667 = vpack.c.b16 %v625, %v624
  %v668 = vpack.c.b16 %v627, %v626
  %v669 = vpack.c.b16 %v629, %v628
  %v670 = vpack.c.b16 %v631, %v630
  %v671 = vpack.c.b16 %v633, %v632
  %v672 = vpack.c.b16 %v635, %v634
  %v673 = vpack.c.b16 %v637, %v636
  %v674 = vpack.c.b16 %v639, %v638
  %v675 = vpack.c.b16 %v641, %v640
  %v676 = vpack.c.b16 %v643, %v642
  %v677 = vpack.c.b16 %v645, %v644
  %710 = vmatpush.bf16.msra.mxu0 %v653
  %711 = vmatpush.bf16.msra.mxu0 %v652
  %712 = vmatpush.bf16.msra.mxu0 %v651
  %713 = vmatpush.bf16.msra.mxu0 %v650
  %714 = vmatpush.bf16.msra.mxu0 %v649
  %715 = vmatpush.bf16.msra.mxu0 %v648
  %716 = vmatpush.bf16.msra.mxu0 %v647
  %717 = vmatpush.bf16.msra.mxu0 %v646
  %718 = vmatmul.bf16.gmra.mxu0 %v502
  %v719 = vpop.f32.mrf.mxu0
  %v720 = vadd.f32 %v94, %v719
  %v721 = vpop.f32.mrf.mxu0
  %v722 = vadd.f32 %v94, %v721
  %723 = vmatmul.bf16.gmra.mxu0 %v506
  %v724 = vpop.f32.mrf.mxu0
  %v725 = vadd.f32 %v94, %v724
  %v726 = vpop.f32.mrf.mxu0
  %v727 = vadd.f32 %v94, %v726
  %728 = vdwg.mxu0
  %729 = vmatpush.bf16.msra.mxu0 %v661
  %730 = vmatpush.bf16.msra.mxu0 %v660
  %731 = vmatpush.bf16.msra.mxu0 %v659
  %732 = vmatpush.bf16.msra.mxu0 %v658
  %733 = vmatpush.bf16.msra.mxu0 %v657
  %734 = vmatpush.bf16.msra.mxu0 %v656
  %735 = vmatpush.bf16.msra.mxu0 %v655
  %736 = vmatpush.bf16.msra.mxu0 %v654
  %737 = vmatmul.bf16.gmra.mxu0 %v503
  %v738 = vpop.f32.mrf.mxu0
  %v739 = vadd.f32 %v720, %v738
  %v740 = vpop.f32.mrf.mxu0
  %v741 = vadd.f32 %v722, %v740
  %742 = vmatmul.bf16.gmra.mxu0 %v507
  %v743 = vpop.f32.mrf.mxu0
  %v744 = vadd.f32 %v725, %v743
  %v745 = vpop.f32.mrf.mxu0
  %v746 = vadd.f32 %v727, %v745
  %747 = vdwg.mxu0
  %748 = vmatpush.bf16.msra.mxu0 %v669
  %749 = vmatpush.bf16.msra.mxu0 %v668
  %750 = vmatpush.bf16.msra.mxu0 %v667
  %751 = vmatpush.bf16.msra.mxu0 %v666
  %752 = vmatpush.bf16.msra.mxu0 %v665
  %753 = vmatpush.bf16.msra.mxu0 %v664
  %754 = vmatpush.bf16.msra.mxu0 %v663
  %755 = vmatpush.bf16.msra.mxu0 %v662
  %756 = vmatmul.bf16.gmra.mxu0 %v504
  %v757 = vpop.f32.mrf.mxu0
  %v758 = vadd.f32 %v739, %v757
  %v759 = vpop.f32.mrf.mxu0
  %v760 = vadd.f32 %v741, %v759
  %761 = vmatmul.bf16.gmra.mxu0 %v508
  %v762 = vpop.f32.mrf.mxu0
  %v763 = vadd.f32 %v744, %v762
  %v764 = vpop.f32.mrf.mxu0
  %v765 = vadd.f32 %v746, %v764
  %766 = vdwg.mxu0
  %767 = vmatpush.bf16.msra.mxu0 %v677
  %768 = vmatpush.bf16.msra.mxu0 %v676
  %769 = vmatpush.bf16.msra.mxu0 %v675
  %770 = vmatpush.bf16.msra.mxu0 %v674
  %771 = vmatpush.bf16.msra.mxu0 %v673
  %772 = vmatpush.bf16.msra.mxu0 %v672
  %773 = vmatpush.bf16.msra.mxu0 %v671
  %774 = vmatpush.bf16.msra.mxu0 %v670
  %775 = vmatmul.bf16.gmra.mxu0 %v505
  %v776 = vpop.f32.mrf.mxu0
  %v777 = vadd.f32 %v758, %v776
  %v778 = vpop.f32.mrf.mxu0
  %v779 = vadd.f32 %v760, %v778
  %780 = vmatmul.bf16.gmra.mxu0 %v509
  %v781 = vpop.f32.mrf.mxu0
  %v782 = vadd.f32 %v763, %v781
  %v783 = vpop.f32.mrf.mxu0
  %v784 = vadd.f32 %v765, %v783
  %785 = vdwg.mxu0
  %s786 = scalar_lea.vmem %s0, 128
  %v787 = vld [vmem:[%s786] sm:$0xff]
  %v788 = vld [vmem:[%s786 + $0x8] sm:$0xff]
  %v789 = vld [vmem:[%s786 + $0x10] sm:$0xff]
  %v790 = vld [vmem:[%s786 + $0x18] sm:$0xff]
  %v791 = vld [vmem:[%s786 + $0x20] sm:$0xff]
  %v792 = vld [vmem:[%s786 + $0x28] sm:$0xff]
  %v793 = vld [vmem:[%s786 + $0x30] sm:$0xff]
  %v794 = vld [vmem:[%s786 + $0x38] sm:$0xff]
  %s795 = scalar_lea.vmem %s1, 512
  %v796 = vld [vmem:[%s795] sm:$0xf]
  %v797 = vld [vmem:[%s795 + $0x4] sm:$0xf]
  %v798 = vld [vmem:[%s795 + $0x8] sm:$0xf]
  %v799 = vld [vmem:[%s795 + $0xc] sm:$0xf]
  %v800 = vld [vmem:[%s795 + $0x10] sm:$0xf]
  %v801 = vld [vmem:[%s795 + $0x14] sm:$0xf]
  %v802 = vld [vmem:[%s795 + $0x18] sm:$0xf]
  %v803 = vld [vmem:[%s795 + $0x1c] sm:$0xf]
  %v804 = vld [vmem:[%s795 + $0x20] sm:$0xf]
  %v805 = vld [vmem:[%s795 + $0x24] sm:$0xf]
  %v806 = vld [vmem:[%s795 + $0x28] sm:$0xf]
  %v807 = vld [vmem:[%s795 + $0x2c] sm:$0xf]
  %v808 = vld [vmem:[%s795 + $0x30] sm:$0xf]
  %v809 = vld [vmem:[%s795 + $0x34] sm:$0xf]
  %v810 = vld [vmem:[%s795 + $0x38] sm:$0xf]
  %v811 = vld [vmem:[%s795 + $0x3c] sm:$0xf]
  %v812 = vld [vmem:[%s795 + $0x40] sm:$0xf]
  %v813 = vld [vmem:[%s795 + $0x44] sm:$0xf]
  %v814 = vld [vmem:[%s795 + $0x48] sm:$0xf]
  %v815 = vld [vmem:[%s795 + $0x4c] sm:$0xf]
  %v816 = vld [vmem:[%s795 + $0x50] sm:$0xf]
  %v817 = vld [vmem:[%s795 + $0x54] sm:$0xf]
  %v818 = vld [vmem:[%s795 + $0x58] sm:$0xf]
  %v819 = vld [vmem:[%s795 + $0x5c] sm:$0xf]
  %v820 = vld [vmem:[%s795 + $0x60] sm:$0xf]
  %v821 = vld [vmem:[%s795 + $0x64] sm:$0xf]
  %v822 = vld [vmem:[%s795 + $0x68] sm:$0xf]
  %v823 = vld [vmem:[%s795 + $0x6c] sm:$0xf]
  %v824 = vld [vmem:[%s795 + $0x70] sm:$0xf]
  %v825 = vld [vmem:[%s795 + $0x74] sm:$0xf]
  %v826 = vld [vmem:[%s795 + $0x78] sm:$0xf]
  %v827 = vld [vmem:[%s795 + $0x7c] sm:$0xf]
  %v828 = vld [vmem:[%s795 + $0x80] sm:$0xf]
  %v829 = vld [vmem:[%s795 + $0x84] sm:$0xf]
  %v830 = vld [vmem:[%s795 + $0x88] sm:$0xf]
  %v831 = vld [vmem:[%s795 + $0x8c] sm:$0xf]
  %v832 = vld [vmem:[%s795 + $0x90] sm:$0xf]
  %v833 = vld [vmem:[%s795 + $0x94] sm:$0xf]
  %v834 = vld [vmem:[%s795 + $0x98] sm:$0xf]
  %v835 = vld [vmem:[%s795 + $0x9c] sm:$0xf]
  %v836 = vld [vmem:[%s795 + $0xa0] sm:$0xf]
  %v837 = vld [vmem:[%s795 + $0xa4] sm:$0xf]
  %v838 = vld [vmem:[%s795 + $0xa8] sm:$0xf]
  %v839 = vld [vmem:[%s795 + $0xac] sm:$0xf]
  %v840 = vld [vmem:[%s795 + $0xb0] sm:$0xf]
  %v841 = vld [vmem:[%s795 + $0xb4] sm:$0xf]
  %v842 = vld [vmem:[%s795 + $0xb8] sm:$0xf]
  %v843 = vld [vmem:[%s795 + $0xbc] sm:$0xf]
  %v844 = vld [vmem:[%s795 + $0xc0] sm:$0xf]
  %v845 = vld [vmem:[%s795 + $0xc4] sm:$0xf]
  %v846 = vld [vmem:[%s795 + $0xc8] sm:$0xf]
  %v847 = vld [vmem:[%s795 + $0xcc] sm:$0xf]
  %v848 = vld [vmem:[%s795 + $0xd0] sm:$0xf]
  %v849 = vld [vmem:[%s795 + $0xd4] sm:$0xf]
  %v850 = vld [vmem:[%s795 + $0xd8] sm:$0xf]
  %v851 = vld [vmem:[%s795 + $0xdc] sm:$0xf]
  %v852 = vld [vmem:[%s795 + $0xe0] sm:$0xf]
  %v853 = vld [vmem:[%s795 + $0xe4] sm:$0xf]
  %v854 = vld [vmem:[%s795 + $0xe8] sm:$0xf]
  %v855 = vld [vmem:[%s795 + $0xec] sm:$0xf]
  %v856 = vld [vmem:[%s795 + $0xf0] sm:$0xf]
  %v857 = vld [vmem:[%s795 + $0xf4] sm:$0xf]
  %v858 = vld [vmem:[%s795 + $0xf8] sm:$0xf]
  %v859 = vld [vmem:[%s795 + $0xfc] sm:$0xf]
  %v868 = vunpack.c.l.b16 %v787
  %v869 = vunpack.c.h.b16 %v787
  %v870 = vunpack.c.l.b16 %v788
  %v871 = vunpack.c.h.b16 %v788
  %v872 = vunpack.c.l.b16 %v789
  %v873 = vunpack.c.h.b16 %v789
  %v874 = vunpack.c.l.b16 %v790
  %v875 = vunpack.c.h.b16 %v790
  %v876 = vunpack.c.l.b16 %v791
  %v877 = vunpack.c.h.b16 %v791
  %v878 = vunpack.c.l.b16 %v792
  %v879 = vunpack.c.h.b16 %v792
  %v880 = vunpack.c.l.b16 %v793
  %v881 = vunpack.c.h.b16 %v793
  %v882 = vunpack.c.l.b16 %v794
  %v883 = vunpack.c.h.b16 %v794
  %v884 = vpack.c.b16 %v872, %v868
  %v885 = vpack.c.b16 %v873, %v869
  %v886 = vpack.c.b16 %v874, %v870
  %v887 = vpack.c.b16 %v875, %v871
  %v888 = vpack.c.b16 %v880, %v876
  %v889 = vpack.c.b16 %v881, %v877
  %v890 = vpack.c.b16 %v882, %v878
  %v891 = vpack.c.b16 %v883, %v879
  %v964 = vunpack.c.l.b16 %v796
  %v965 = vunpack.c.l.b16 %v797
  %v966 = vunpack.c.l.b16 %v798
  %v967 = vunpack.c.l.b16 %v799
  %v968 = vunpack.c.l.b16 %v800
  %v969 = vunpack.c.l.b16 %v801
  %v970 = vunpack.c.l.b16 %v802
  %v971 = vunpack.c.l.b16 %v803
  %v972 = vunpack.c.l.b16 %v804
  %v973 = vunpack.c.l.b16 %v805
  %v974 = vunpack.c.l.b16 %v806
  %v975 = vunpack.c.l.b16 %v807
  %v976 = vunpack.c.l.b16 %v808
  %v977 = vunpack.c.l.b16 %v809
  %v978 = vunpack.c.l.b16 %v810
  %v979 = vunpack.c.l.b16 %v811
  %v980 = vunpack.c.l.b16 %v812
  %v981 = vunpack.c.l.b16 %v813
  %v982 = vunpack.c.l.b16 %v814
  %v983 = vunpack.c.l.b16 %v815
  %v984 = vunpack.c.l.b16 %v816
  %v985 = vunpack.c.l.b16 %v817
  %v986 = vunpack.c.l.b16 %v818
  %v987 = vunpack.c.l.b16 %v819
  %v988 = vunpack.c.l.b16 %v820
  %v989 = vunpack.c.l.b16 %v821
  %v990 = vunpack.c.l.b16 %v822
  %v991 = vunpack.c.l.b16 %v823
  %v992 = vunpack.c.l.b16 %v824
  %v993 = vunpack.c.l.b16 %v825
  %v994 = vunpack.c.l.b16 %v826
  %v995 = vunpack.c.l.b16 %v827
  %v996 = vunpack.c.l.b16 %v828
  %v997 = vunpack.c.l.b16 %v829
  %v998 = vunpack.c.l.b16 %v830
  %v999 = vunpack.c.l.b16 %v831
  %v1000 = vunpack.c.l.b16 %v832
  %v1001 = vunpack.c.l.b16 %v833
  %v1002 = vunpack.c.l.b16 %v834
  %v1003 = vunpack.c.l.b16 %v835
  %v1004 = vunpack.c.l.b16 %v836
  %v1005 = vunpack.c.l.b16 %v837
  %v1006 = vunpack.c.l.b16 %v838
  %v1007 = vunpack.c.l.b16 %v839
  %v1008 = vunpack.c.l.b16 %v840
  %v1009 = vunpack.c.l.b16 %v841
  %v1010 = vunpack.c.l.b16 %v842
  %v1011 = vunpack.c.l.b16 %v843
  %v1012 = vunpack.c.l.b16 %v844
  %v1013 = vunpack.c.l.b16 %v845
  %v1014 = vunpack.c.l.b16 %v846
  %v1015 = vunpack.c.l.b16 %v847
  %v1016 = vunpack.c.l.b16 %v848
  %v1017 = vunpack.c.l.b16 %v849
  %v1018 = vunpack.c.l.b16 %v850
  %v1019 = vunpack.c.l.b16 %v851
  %v1020 = vunpack.c.l.b16 %v852
  %v1021 = vunpack.c.l.b16 %v853
  %v1022 = vunpack.c.l.b16 %v854
  %v1023 = vunpack.c.l.b16 %v855
  %v1024 = vunpack.c.l.b16 %v856
  %v1025 = vunpack.c.l.b16 %v857
  %v1026 = vunpack.c.l.b16 %v858
  %v1027 = vunpack.c.l.b16 %v859
  %v1028 = vpack.c.b16 %v965, %v964
  %v1029 = vpack.c.b16 %v967, %v966
  %v1030 = vpack.c.b16 %v969, %v968
  %v1031 = vpack.c.b16 %v971, %v970
  %v1032 = vpack.c.b16 %v973, %v972
  %v1033 = vpack.c.b16 %v975, %v974
  %v1034 = vpack.c.b16 %v977, %v976
  %v1035 = vpack.c.b16 %v979, %v978
  %v1036 = vpack.c.b16 %v981, %v980
  %v1037 = vpack.c.b16 %v983, %v982
  %v1038 = vpack.c.b16 %v985, %v984
  %v1039 = vpack.c.b16 %v987, %v986
  %v1040 = vpack.c.b16 %v989, %v988
  %v1041 = vpack.c.b16 %v991, %v990
  %v1042 = vpack.c.b16 %v993, %v992
  %v1043 = vpack.c.b16 %v995, %v994
  %v1044 = vpack.c.b16 %v997, %v996
  %v1045 = vpack.c.b16 %v999, %v998
  %v1046 = vpack.c.b16 %v1001, %v1000
  %v1047 = vpack.c.b16 %v1003, %v1002
  %v1048 = vpack.c.b16 %v1005, %v1004
  %v1049 = vpack.c.b16 %v1007, %v1006
  %v1050 = vpack.c.b16 %v1009, %v1008
  %v1051 = vpack.c.b16 %v1011, %v1010
  %v1052 = vpack.c.b16 %v1013, %v1012
  %v1053 = vpack.c.b16 %v1015, %v1014
  %v1054 = vpack.c.b16 %v1017, %v1016
  %v1055 = vpack.c.b16 %v1019, %v1018
  %v1056 = vpack.c.b16 %v1021, %v1020
  %v1057 = vpack.c.b16 %v1023, %v1022
  %v1058 = vpack.c.b16 %v1025, %v1024
  %v1059 = vpack.c.b16 %v1027, %v1026
  %1092 = vmatpush.bf16.msra.mxu0 %v1035
  %1093 = vmatpush.bf16.msra.mxu0 %v1034
  %1094 = vmatpush.bf16.msra.mxu0 %v1033
  %1095 = vmatpush.bf16.msra.mxu0 %v1032
  %1096 = vmatpush.bf16.msra.mxu0 %v1031
  %1097 = vmatpush.bf16.msra.mxu0 %v1030
  %1098 = vmatpush.bf16.msra.mxu0 %v1029
  %1099 = vmatpush.bf16.msra.mxu0 %v1028
  %1100 = vmatmul.bf16.gmra.mxu0 %v884
  %v1101 = vpop.f32.mrf.mxu0
  %v1102 = vadd.f32 %v94, %v1101
  %v1103 = vpop.f32.mrf.mxu0
  %v1104 = vadd.f32 %v94, %v1103
  %1105 = vmatmul.bf16.gmra.mxu0 %v888
  %v1106 = vpop.f32.mrf.mxu0
  %v1107 = vadd.f32 %v94, %v1106
  %v1108 = vpop.f32.mrf.mxu0
  %v1109 = vadd.f32 %v94, %v1108
  %1110 = vdwg.mxu0
  %1111 = vmatpush.bf16.msra.mxu0 %v1043
  %1112 = vmatpush.bf16.msra.mxu0 %v1042
  %1113 = vmatpush.bf16.msra.mxu0 %v1041
  %1114 = vmatpush.bf16.msra.mxu0 %v1040
  %1115 = vmatpush.bf16.msra.mxu0 %v1039
  %1116 = vmatpush.bf16.msra.mxu0 %v1038
  %1117 = vmatpush.bf16.msra.mxu0 %v1037
  %1118 = vmatpush.bf16.msra.mxu0 %v1036
  %1119 = vmatmul.bf16.gmra.mxu0 %v885
  %v1120 = vpop.f32.mrf.mxu0
  %v1121 = vadd.f32 %v1102, %v1120
  %v1122 = vpop.f32.mrf.mxu0
  %v1123 = vadd.f32 %v1104, %v1122
  %1124 = vmatmul.bf16.gmra.mxu0 %v889
  %v1125 = vpop.f32.mrf.mxu0
  %v1126 = vadd.f32 %v1107, %v1125
  %v1127 = vpop.f32.mrf.mxu0
  %v1128 = vadd.f32 %v1109, %v1127
  %1129 = vdwg.mxu0
  %1130 = vmatpush.bf16.msra.mxu0 %v1051
  %1131 = vmatpush.bf16.msra.mxu0 %v1050
  %1132 = vmatpush.bf16.msra.mxu0 %v1049
  %1133 = vmatpush.bf16.msra.mxu0 %v1048
  %1134 = vmatpush.bf16.msra.mxu0 %v1047
  %1135 = vmatpush.bf16.msra.mxu0 %v1046
  %1136 = vmatpush.bf16.msra.mxu0 %v1045
  %1137 = vmatpush.bf16.msra.mxu0 %v1044
  %1138 = vmatmul.bf16.gmra.mxu0 %v886
  %v1139 = vpop.f32.mrf.mxu0
  %v1140 = vadd.f32 %v1121, %v1139
  %v1141 = vpop.f32.mrf.mxu0
  %v1142 = vadd.f32 %v1123, %v1141
  %1143 = vmatmul.bf16.gmra.mxu0 %v890
  %v1144 = vpop.f32.mrf.mxu0
  %v1145 = vadd.f32 %v1126, %v1144
  %v1146 = vpop.f32.mrf.mxu0
  %v1147 = vadd.f32 %v1128, %v1146
  %1148 = vdwg.mxu0
  %1149 = vmatpush.bf16.msra.mxu0 %v1059
  %1150 = vmatpush.bf16.msra.mxu0 %v1058
  %1151 = vmatpush.bf16.msra.mxu0 %v1057
  %1152 = vmatpush.bf16.msra.mxu0 %v1056
  %1153 = vmatpush.bf16.msra.mxu0 %v1055
  %1154 = vmatpush.bf16.msra.mxu0 %v1054
  %1155 = vmatpush.bf16.msra.mxu0 %v1053
  %1156 = vmatpush.bf16.msra.mxu0 %v1052
  %1157 = vmatmul.bf16.gmra.mxu0 %v887
  %v1158 = vpop.f32.mrf.mxu0
  %v1159 = vadd.f32 %v1140, %v1158
  %v1160 = vpop.f32.mrf.mxu0
  %v1161 = vadd.f32 %v1142, %v1160
  %1162 = vmatmul.bf16.gmra.mxu0 %v891
  %v1163 = vpop.f32.mrf.mxu0
  %v1164 = vadd.f32 %v1145, %v1163
  %v1165 = vpop.f32.mrf.mxu0
  %v1166 = vadd.f32 %v1147, %v1165
  %1167 = vdwg.mxu0
  %s1168 = scalar_lea.vmem %s0, 192
  %v1169 = vld [vmem:[%s1168] sm:$0xff]
  %v1170 = vld [vmem:[%s1168 + $0x8] sm:$0xff]
  %v1171 = vld [vmem:[%s1168 + $0x10] sm:$0xff]
  %v1172 = vld [vmem:[%s1168 + $0x18] sm:$0xff]
  %v1173 = vld [vmem:[%s1168 + $0x20] sm:$0xff]
  %v1174 = vld [vmem:[%s1168 + $0x28] sm:$0xff]
  %v1175 = vld [vmem:[%s1168 + $0x30] sm:$0xff]
  %v1176 = vld [vmem:[%s1168 + $0x38] sm:$0xff]
  %s1177 = scalar_lea.vmem %s1, 768
  %v1178 = vld [vmem:[%s1177] sm:$0xf]
  %v1179 = vld [vmem:[%s1177 + $0x4] sm:$0xf]
  %v1180 = vld [vmem:[%s1177 + $0x8] sm:$0xf]
  %v1181 = vld [vmem:[%s1177 + $0xc] sm:$0xf]
  %v1182 = vld [vmem:[%s1177 + $0x10] sm:$0xf]
  %v1183 = vld [vmem:[%s1177 + $0x14] sm:$0xf]
  %v1184 = vld [vmem:[%s1177 + $0x18] sm:$0xf]
  %v1185 = vld [vmem:[%s1177 + $0x1c] sm:$0xf]
  %v1186 = vld [vmem:[%s1177 + $0x20] sm:$0xf]
  %v1187 = vld [vmem:[%s1177 + $0x24] sm:$0xf]
  %v1188 = vld [vmem:[%s1177 + $0x28] sm:$0xf]
  %v1189 = vld [vmem:[%s1177 + $0x2c] sm:$0xf]
  %v1190 = vld [vmem:[%s1177 + $0x30] sm:$0xf]
  %v1191 = vld [vmem:[%s1177 + $0x34] sm:$0xf]
  %v1192 = vld [vmem:[%s1177 + $0x38] sm:$0xf]
  %v1193 = vld [vmem:[%s1177 + $0x3c] sm:$0xf]
  %v1194 = vld [vmem:[%s1177 + $0x40] sm:$0xf]
  %v1195 = vld [vmem:[%s1177 + $0x44] sm:$0xf]
  %v1196 = vld [vmem:[%s1177 + $0x48] sm:$0xf]
  %v1197 = vld [vmem:[%s1177 + $0x4c] sm:$0xf]
  %v1198 = vld [vmem:[%s1177 + $0x50] sm:$0xf]
  %v1199 = vld [vmem:[%s1177 + $0x54] sm:$0xf]
  %v1200 = vld [vmem:[%s1177 + $0x58] sm:$0xf]
  %v1201 = vld [vmem:[%s1177 + $0x5c] sm:$0xf]
  %v1202 = vld [vmem:[%s1177 + $0x60] sm:$0xf]
  %v1203 = vld [vmem:[%s1177 + $0x64] sm:$0xf]
  %v1204 = vld [vmem:[%s1177 + $0x68] sm:$0xf]
  %v1205 = vld [vmem:[%s1177 + $0x6c] sm:$0xf]
  %v1206 = vld [vmem:[%s1177 + $0x70] sm:$0xf]
  %v1207 = vld [vmem:[%s1177 + $0x74] sm:$0xf]
  %v1208 = vld [vmem:[%s1177 + $0x78] sm:$0xf]
  %v1209 = vld [vmem:[%s1177 + $0x7c] sm:$0xf]
  %v1210 = vld [vmem:[%s1177 + $0x80] sm:$0xf]
  %v1211 = vld [vmem:[%s1177 + $0x84] sm:$0xf]
  %v1212 = vld [vmem:[%s1177 + $0x88] sm:$0xf]
  %v1213 = vld [vmem:[%s1177 + $0x8c] sm:$0xf]
  %v1214 = vld [vmem:[%s1177 + $0x90] sm:$0xf]
  %v1215 = vld [vmem:[%s1177 + $0x94] sm:$0xf]
  %v1216 = vld [vmem:[%s1177 + $0x98] sm:$0xf]
  %v1217 = vld [vmem:[%s1177 + $0x9c] sm:$0xf]
  %v1218 = vld [vmem:[%s1177 + $0xa0] sm:$0xf]
  %v1219 = vld [vmem:[%s1177 + $0xa4] sm:$0xf]
  %v1220 = vld [vmem:[%s1177 + $0xa8] sm:$0xf]
  %v1221 = vld [vmem:[%s1177 + $0xac] sm:$0xf]
  %v1222 = vld [vmem:[%s1177 + $0xb0] sm:$0xf]
  %v1223 = vld [vmem:[%s1177 + $0xb4] sm:$0xf]
  %v1224 = vld [vmem:[%s1177 + $0xb8] sm:$0xf]
  %v1225 = vld [vmem:[%s1177 + $0xbc] sm:$0xf]
  %v1226 = vld [vmem:[%s1177 + $0xc0] sm:$0xf]
  %v1227 = vld [vmem:[%s1177 + $0xc4] sm:$0xf]
  %v1228 = vld [vmem:[%s1177 + $0xc8] sm:$0xf]
  %v1229 = vld [vmem:[%s1177 + $0xcc] sm:$0xf]
  %v1230 = vld [vmem:[%s1177 + $0xd0] sm:$0xf]
  %v1231 = vld [vmem:[%s1177 + $0xd4] sm:$0xf]
  %v1232 = vld [vmem:[%s1177 + $0xd8] sm:$0xf]
  %v1233 = vld [vmem:[%s1177 + $0xdc] sm:$0xf]
  %v1234 = vld [vmem:[%s1177 + $0xe0] sm:$0xf]
  %v1235 = vld [vmem:[%s1177 + $0xe4] sm:$0xf]
  %v1236 = vld [vmem:[%s1177 + $0xe8] sm:$0xf]
  %v1237 = vld [vmem:[%s1177 + $0xec] sm:$0xf]
  %v1238 = vld [vmem:[%s1177 + $0xf0] sm:$0xf]
  %v1239 = vld [vmem:[%s1177 + $0xf4] sm:$0xf]
  %v1240 = vld [vmem:[%s1177 + $0xf8] sm:$0xf]
  %v1241 = vld [vmem:[%s1177 + $0xfc] sm:$0xf]
  %v1250 = vunpack.c.l.b16 %v1169
  %v1251 = vunpack.c.h.b16 %v1169
  %v1252 = vunpack.c.l.b16 %v1170
  %v1253 = vunpack.c.h.b16 %v1170
  %v1254 = vunpack.c.l.b16 %v1171
  %v1255 = vunpack.c.h.b16 %v1171
  %v1256 = vunpack.c.l.b16 %v1172
  %v1257 = vunpack.c.h.b16 %v1172
  %v1258 = vunpack.c.l.b16 %v1173
  %v1259 = vunpack.c.h.b16 %v1173
  %v1260 = vunpack.c.l.b16 %v1174
  %v1261 = vunpack.c.h.b16 %v1174
  %v1262 = vunpack.c.l.b16 %v1175
  %v1263 = vunpack.c.h.b16 %v1175
  %v1264 = vunpack.c.l.b16 %v1176
  %v1265 = vunpack.c.h.b16 %v1176
  %v1266 = vpack.c.b16 %v1254, %v1250
  %v1267 = vpack.c.b16 %v1255, %v1251
  %v1268 = vpack.c.b16 %v1256, %v1252
  %v1269 = vpack.c.b16 %v1257, %v1253
  %v1270 = vpack.c.b16 %v1262, %v1258
  %v1271 = vpack.c.b16 %v1263, %v1259
  %v1272 = vpack.c.b16 %v1264, %v1260
  %v1273 = vpack.c.b16 %v1265, %v1261
  %v1346 = vunpack.c.l.b16 %v1178
  %v1347 = vunpack.c.l.b16 %v1179
  %v1348 = vunpack.c.l.b16 %v1180
  %v1349 = vunpack.c.l.b16 %v1181
  %v1350 = vunpack.c.l.b16 %v1182
  %v1351 = vunpack.c.l.b16 %v1183
  %v1352 = vunpack.c.l.b16 %v1184
  %v1353 = vunpack.c.l.b16 %v1185
  %v1354 = vunpack.c.l.b16 %v1186
  %v1355 = vunpack.c.l.b16 %v1187
  %v1356 = vunpack.c.l.b16 %v1188
  %v1357 = vunpack.c.l.b16 %v1189
  %v1358 = vunpack.c.l.b16 %v1190
  %v1359 = vunpack.c.l.b16 %v1191
  %v1360 = vunpack.c.l.b16 %v1192
  %v1361 = vunpack.c.l.b16 %v1193
  %v1362 = vunpack.c.l.b16 %v1194
  %v1363 = vunpack.c.l.b16 %v1195
  %v1364 = vunpack.c.l.b16 %v1196
  %v1365 = vunpack.c.l.b16 %v1197
  %v1366 = vunpack.c.l.b16 %v1198
  %v1367 = vunpack.c.l.b16 %v1199
  %v1368 = vunpack.c.l.b16 %v1200
  %v1369 = vunpack.c.l.b16 %v1201
  %v1370 = vunpack.c.l.b16 %v1202
  %v1371 = vunpack.c.l.b16 %v1203
  %v1372 = vunpack.c.l.b16 %v1204
  %v1373 = vunpack.c.l.b16 %v1205
  %v1374 = vunpack.c.l.b16 %v1206
  %v1375 = vunpack.c.l.b16 %v1207
  %v1376 = vunpack.c.l.b16 %v1208
  %v1377 = vunpack.c.l.b16 %v1209
  %v1378 = vunpack.c.l.b16 %v1210
  %v1379 = vunpack.c.l.b16 %v1211
  %v1380 = vunpack.c.l.b16 %v1212
  %v1381 = vunpack.c.l.b16 %v1213
  %v1382 = vunpack.c.l.b16 %v1214
  %v1383 = vunpack.c.l.b16 %v1215
  %v1384 = vunpack.c.l.b16 %v1216
  %v1385 = vunpack.c.l.b16 %v1217
  %v1386 = vunpack.c.l.b16 %v1218
  %v1387 = vunpack.c.l.b16 %v1219
  %v1388 = vunpack.c.l.b16 %v1220
  %v1389 = vunpack.c.l.b16 %v1221
  %v1390 = vunpack.c.l.b16 %v1222
  %v1391 = vunpack.c.l.b16 %v1223
  %v1392 = vunpack.c.l.b16 %v1224
  %v1393 = vunpack.c.l.b16 %v1225
  %v1394 = vunpack.c.l.b16 %v1226
  %v1395 = vunpack.c.l.b16 %v1227
  %v1396 = vunpack.c.l.b16 %v1228
  %v1397 = vunpack.c.l.b16 %v1229
  %v1398 = vunpack.c.l.b16 %v1230
  %v1399 = vunpack.c.l.b16 %v1231
  %v1400 = vunpack.c.l.b16 %v1232
  %v1401 = vunpack.c.l.b16 %v1233
  %v1402 = vunpack.c.l.b16 %v1234
  %v1403 = vunpack.c.l.b16 %v1235
  %v1404 = vunpack.c.l.b16 %v1236
  %v1405 = vunpack.c.l.b16 %v1237
  %v1406 = vunpack.c.l.b16 %v1238
  %v1407 = vunpack.c.l.b16 %v1239
  %v1408 = vunpack.c.l.b16 %v1240
  %v1409 = vunpack.c.l.b16 %v1241
  %v1410 = vpack.c.b16 %v1347, %v1346
  %v1411 = vpack.c.b16 %v1349, %v1348
  %v1412 = vpack.c.b16 %v1351, %v1350
  %v1413 = vpack.c.b16 %v1353, %v1352
  %v1414 = vpack.c.b16 %v1355, %v1354
  %v1415 = vpack.c.b16 %v1357, %v1356
  %v1416 = vpack.c.b16 %v1359, %v1358
  %v1417 = vpack.c.b16 %v1361, %v1360
  %v1418 = vpack.c.b16 %v1363, %v1362
  %v1419 = vpack.c.b16 %v1365, %v1364
  %v1420 = vpack.c.b16 %v1367, %v1366
  %v1421 = vpack.c.b16 %v1369, %v1368
  %v1422 = vpack.c.b16 %v1371, %v1370
  %v1423 = vpack.c.b16 %v1373, %v1372
  %v1424 = vpack.c.b16 %v1375, %v1374
  %v1425 = vpack.c.b16 %v1377, %v1376
  %v1426 = vpack.c.b16 %v1379, %v1378
  %v1427 = vpack.c.b16 %v1381, %v1380
  %v1428 = vpack.c.b16 %v1383, %v1382
  %v1429 = vpack.c.b16 %v1385, %v1384
  %v1430 = vpack.c.b16 %v1387, %v1386
  %v1431 = vpack.c.b16 %v1389, %v1388
  %v1432 = vpack.c.b16 %v1391, %v1390
  %v1433 = vpack.c.b16 %v1393, %v1392
  %v1434 = vpack.c.b16 %v1395, %v1394
  %v1435 = vpack.c.b16 %v1397, %v1396
  %v1436 = vpack.c.b16 %v1399, %v1398
  %v1437 = vpack.c.b16 %v1401, %v1400
  %v1438 = vpack.c.b16 %v1403, %v1402
  %v1439 = vpack.c.b16 %v1405, %v1404
  %v1440 = vpack.c.b16 %v1407, %v1406
  %v1441 = vpack.c.b16 %v1409, %v1408
  %1474 = vmatpush.bf16.msra.mxu0 %v1417
  %1475 = vmatpush.bf16.msra.mxu0 %v1416
  %1476 = vmatpush.bf16.msra.mxu0 %v1415
  %1477 = vmatpush.bf16.msra.mxu0 %v1414
  %1478 = vmatpush.bf16.msra.mxu0 %v1413
  %1479 = vmatpush.bf16.msra.mxu0 %v1412
  %1480 = vmatpush.bf16.msra.mxu0 %v1411
  %1481 = vmatpush.bf16.msra.mxu0 %v1410
  %1482 = vmatmul.bf16.gmra.mxu0 %v1266
  %v1483 = vpop.f32.mrf.mxu0
  %v1484 = vadd.f32 %v94, %v1483
  %v1485 = vpop.f32.mrf.mxu0
  %v1486 = vadd.f32 %v94, %v1485
  %1487 = vmatmul.bf16.gmra.mxu0 %v1270
  %v1488 = vpop.f32.mrf.mxu0
  %v1489 = vadd.f32 %v94, %v1488
  %v1490 = vpop.f32.mrf.mxu0
  %v1491 = vadd.f32 %v94, %v1490
  %1492 = vdwg.mxu0
  %1493 = vmatpush.bf16.msra.mxu0 %v1425
  %1494 = vmatpush.bf16.msra.mxu0 %v1424
  %1495 = vmatpush.bf16.msra.mxu0 %v1423
  %1496 = vmatpush.bf16.msra.mxu0 %v1422
  %1497 = vmatpush.bf16.msra.mxu0 %v1421
  %1498 = vmatpush.bf16.msra.mxu0 %v1420
  %1499 = vmatpush.bf16.msra.mxu0 %v1419
  %1500 = vmatpush.bf16.msra.mxu0 %v1418
  %1501 = vmatmul.bf16.gmra.mxu0 %v1267
  %v1502 = vpop.f32.mrf.mxu0
  %v1503 = vadd.f32 %v1484, %v1502
  %v1504 = vpop.f32.mrf.mxu0
  %v1505 = vadd.f32 %v1486, %v1504
  %1506 = vmatmul.bf16.gmra.mxu0 %v1271
  %v1507 = vpop.f32.mrf.mxu0
  %v1508 = vadd.f32 %v1489, %v1507
  %v1509 = vpop.f32.mrf.mxu0
  %v1510 = vadd.f32 %v1491, %v1509
  %1511 = vdwg.mxu0
  %1512 = vmatpush.bf16.msra.mxu0 %v1433
  %1513 = vmatpush.bf16.msra.mxu0 %v1432
  %1514 = vmatpush.bf16.msra.mxu0 %v1431
  %1515 = vmatpush.bf16.msra.mxu0 %v1430
  %1516 = vmatpush.bf16.msra.mxu0 %v1429
  %1517 = vmatpush.bf16.msra.mxu0 %v1428
  %1518 = vmatpush.bf16.msra.mxu0 %v1427
  %1519 = vmatpush.bf16.msra.mxu0 %v1426
  %1520 = vmatmul.bf16.gmra.mxu0 %v1268
  %v1521 = vpop.f32.mrf.mxu0
  %v1522 = vadd.f32 %v1503, %v1521
  %v1523 = vpop.f32.mrf.mxu0
  %v1524 = vadd.f32 %v1505, %v1523
  %1525 = vmatmul.bf16.gmra.mxu0 %v1272
  %v1526 = vpop.f32.mrf.mxu0
  %v1527 = vadd.f32 %v1508, %v1526
  %v1528 = vpop.f32.mrf.mxu0
  %v1529 = vadd.f32 %v1510, %v1528
  %1530 = vdwg.mxu0
  %1531 = vmatpush.bf16.msra.mxu0 %v1441
  %1532 = vmatpush.bf16.msra.mxu0 %v1440
  %1533 = vmatpush.bf16.msra.mxu0 %v1439
  %1534 = vmatpush.bf16.msra.mxu0 %v1438
  %1535 = vmatpush.bf16.msra.mxu0 %v1437
  %1536 = vmatpush.bf16.msra.mxu0 %v1436
  %1537 = vmatpush.bf16.msra.mxu0 %v1435
  %1538 = vmatpush.bf16.msra.mxu0 %v1434
  %1539 = vmatmul.bf16.gmra.mxu0 %v1269
  %v1540 = vpop.f32.mrf.mxu0
  %v1541 = vadd.f32 %v1522, %v1540
  %v1542 = vpop.f32.mrf.mxu0
  %v1543 = vadd.f32 %v1524, %v1542
  %1544 = vmatmul.bf16.gmra.mxu0 %v1273
  %v1545 = vpop.f32.mrf.mxu0
  %v1546 = vadd.f32 %v1527, %v1545
  %v1547 = vpop.f32.mrf.mxu0
  %v1548 = vadd.f32 %v1529, %v1547
  %1549 = vdwg.mxu0
  %v1550 = vadd.f32 %v395, %v777
  %v1551 = vadd.f32 %v397, %v779
  %v1552 = vadd.f32 %v400, %v782
  %v1553 = vadd.f32 %v402, %v784
  %v1554 = vadd.f32 %v1550, %v1159
  %v1555 = vadd.f32 %v1551, %v1161
  %v1556 = vadd.f32 %v1552, %v1164
  %v1557 = vadd.f32 %v1553, %v1166
  %v1558 = vadd.f32 %v1554, %v1541
  %v1559 = vadd.f32 %v1555, %v1543
  %v1560 = vadd.f32 %v1556, %v1546
  %v1561 = vadd.f32 %v1557, %v1548
  %vm1562 = vcmask 523264
  %v1563 = vsel %vm1562, %v1558, 0.0
  %v1564 = vsel %vm1562, %v1559, 0.0
  %v1565 = vadd.f32 %v1563, %v1564
  %v1566 = vsel %vm1562, %v1560, 0.0
  %v1567 = vadd.f32 %v1565, %v1566
  %v1568 = vsel %vm1562, %v1561, 0.0
  %v1569 = vadd.f32 %v1567, %v1568
  %v1570 = vrot.slane %v1569, 4
  %v1571 = vadd.f32 %v1569, %v1570
  %v1572 = vrot.slane %v1571, 2
  %v1573 = vadd.f32 %v1571, %v1572
  %v1574 = vrot.slane %v1573, 1
  %v1575 = vadd.f32 %v1573, %v1574
  %v1576 = vmul.f32 %v1575, 0.0078125
  %v1577 = vsub.f32 %v395, %v1576
  %v1578 = vsub.f32 %v397, %v1576
  %v1579 = vsub.f32 %v400, %v1576
  %v1580 = vsub.f32 %v402, %v1576
  %v1581 = vmul.f32 %v1577, %v1577
  %v1582 = vmul.f32 %v1578, %v1578
  %v1583 = vmul.f32 %v1579, %v1579
  %v1584 = vmul.f32 %v1580, %v1580
  %v1585 = vsel %vm1562, %v1581, 0.0
  %v1586 = vsel %vm1562, %v1582, 0.0
  %v1587 = vadd.f32 %v1585, %v1586
  %v1588 = vsel %vm1562, %v1583, 0.0
  %v1589 = vadd.f32 %v1587, %v1588
  %v1590 = vsel %vm1562, %v1584, 0.0
  %v1591 = vadd.f32 %v1589, %v1590
  %v1592 = vrot.slane %v1591, 4
  %v1593 = vadd.f32 %v1591, %v1592
  %v1594 = vrot.slane %v1593, 2
  %v1595 = vadd.f32 %v1593, %v1594
  %v1596 = vrot.slane %v1595, 1
  %v1597 = vadd.f32 %v1595, %v1596
  %v1598 = vsub.f32 %v777, %v1576
  %v1599 = vsub.f32 %v779, %v1576
  %v1600 = vsub.f32 %v782, %v1576
  %v1601 = vsub.f32 %v784, %v1576
  %v1602 = vmul.f32 %v1598, %v1598
  %v1603 = vmul.f32 %v1599, %v1599
  %v1604 = vmul.f32 %v1600, %v1600
  %v1605 = vmul.f32 %v1601, %v1601
  %v1606 = vsel %vm1562, %v1602, 0.0
  %v1607 = vsel %vm1562, %v1603, 0.0
  %v1608 = vadd.f32 %v1606, %v1607
  %v1609 = vsel %vm1562, %v1604, 0.0
  %v1610 = vadd.f32 %v1608, %v1609
  %v1611 = vsel %vm1562, %v1605, 0.0
  %v1612 = vadd.f32 %v1610, %v1611
  %v1613 = vrot.slane %v1612, 4
  %v1614 = vadd.f32 %v1612, %v1613
  %v1615 = vrot.slane %v1614, 2
  %v1616 = vadd.f32 %v1614, %v1615
  %v1617 = vrot.slane %v1616, 1
  %v1618 = vadd.f32 %v1616, %v1617
  %v1619 = vadd.f32 %v1597, %v1618
  %v1620 = vsub.f32 %v1159, %v1576
  %v1621 = vsub.f32 %v1161, %v1576
  %v1622 = vsub.f32 %v1164, %v1576
  %v1623 = vsub.f32 %v1166, %v1576
  %v1624 = vmul.f32 %v1620, %v1620
  %v1625 = vmul.f32 %v1621, %v1621
  %v1626 = vmul.f32 %v1622, %v1622
  %v1627 = vmul.f32 %v1623, %v1623
  %v1628 = vsel %vm1562, %v1624, 0.0
  %v1629 = vsel %vm1562, %v1625, 0.0
  %v1630 = vadd.f32 %v1628, %v1629
  %v1631 = vsel %vm1562, %v1626, 0.0
  %v1632 = vadd.f32 %v1630, %v1631
  %v1633 = vsel %vm1562, %v1627, 0.0
  %v1634 = vadd.f32 %v1632, %v1633
  %v1635 = vrot.slane %v1634, 4
  %v1636 = vadd.f32 %v1634, %v1635
  %v1637 = vrot.slane %v1636, 2
  %v1638 = vadd.f32 %v1636, %v1637
  %v1639 = vrot.slane %v1638, 1
  %v1640 = vadd.f32 %v1638, %v1639
  %v1641 = vadd.f32 %v1619, %v1640
  %v1642 = vsub.f32 %v1541, %v1576
  %v1643 = vsub.f32 %v1543, %v1576
  %v1644 = vsub.f32 %v1546, %v1576
  %v1645 = vsub.f32 %v1548, %v1576
  %v1646 = vmul.f32 %v1642, %v1642
  %v1647 = vmul.f32 %v1643, %v1643
  %v1648 = vmul.f32 %v1644, %v1644
  %v1649 = vmul.f32 %v1645, %v1645
  %v1650 = vsel %vm1562, %v1646, 0.0
  %v1651 = vsel %vm1562, %v1647, 0.0
  %v1652 = vadd.f32 %v1650, %v1651
  %v1653 = vsel %vm1562, %v1648, 0.0
  %v1654 = vadd.f32 %v1652, %v1653
  %v1655 = vsel %vm1562, %v1649, 0.0
  %v1656 = vadd.f32 %v1654, %v1655
  %v1657 = vrot.slane %v1656, 4
  %v1658 = vadd.f32 %v1656, %v1657
  %v1659 = vrot.slane %v1658, 2
  %v1660 = vadd.f32 %v1658, %v1659
  %v1661 = vrot.slane %v1660, 1
  %v1662 = vadd.f32 %v1660, %v1661
  %v1663 = vadd.f32 %v1641, %v1662
  %v1664 = vmul.f32 %v1663, 0.0078125
  %v1665 = vadd.f32 %v1664, 1e-05
  %v1666 = vrsqrt.pop %v1665
  %v1667 = vmul.f32 %v1666, %v1665
  %v1668 = vmul.f32 %v1667, %v1666
  %v1669 = vmul.f32 0.5, %v1668
  %v1670 = vsub.f32 1.5, %v1669
  %v1671 = vmul.f32 %v1666, %v1670
  %vm1672 = vweird.f32 %v1665
  %vm1673 = vweird.f32 %v1666
  %vm1674 = vmor %vm1672, %vm1673
  %v1675 = vsel %vm1674, %v1666, %v1671
  %v1676 = vmul.f32 %v1577, %v1675
  %v1677 = vmul.f32 %v1578, %v1675
  %v1678 = vmul.f32 %v1579, %v1675
  %v1679 = vmul.f32 %v1580, %v1675
  %v1680 = vld [vmem:[%s3] sm:$0x1]
  %v1682 = vperm.slane %v1680, 0
  %v1684 = vmul.f32 %v1676, %v1682
  %v1685 = vmul.f32 %v1677, %v1682
  %v1686 = vmul.f32 %v1678, %v1682
  %v1687 = vmul.f32 %v1679, %v1682
  %v1688 = vld [vmem:[%s4] sm:$0x1]
  %v1690 = vperm.slane %v1688, 0
  %v1692 = vadd.f32 %v1684, %v1690
  %v1693 = vadd.f32 %v1685, %v1690
  %v1694 = vadd.f32 %v1686, %v1690
  %v1695 = vadd.f32 %v1687, %v1690
  %v1696 = vmax.f32 %v1692, 0.0
  %v1697 = vmax.f32 %v1693, 0.0
  %v1698 = vmax.f32 %v1694, 0.0
  %v1699 = vmax.f32 %v1695, 0.0
  %v1700 = vpack.c.bf16 %v1696, %v1696
  %v1701 = vpack.c.bf16 %v1697, %v1697
  %v1702 = vpack.c.bf16 %v1698, %v1698
  %v1703 = vpack.c.bf16 %v1699, %v1699
  %vm1704 = vcmask 519168
  %1705 = vst.msk [vmem:[%s5] sm:$0xf] %vm1704, %v1700
  %1706 = vst.msk [vmem:[%s5 + $0x4] sm:$0xf] %vm1704, %v1701
  %1707 = vst.msk [vmem:[%s5 + $0x8] sm:$0xf] %vm1704, %v1702
  %1708 = vst.msk [vmem:[%s5 + $0xc] sm:$0xf] %vm1704, %v1703
  %v1709 = vmul.f32 %v1598, %v1675
  %v1710 = vmul.f32 %v1599, %v1675
  %v1711 = vmul.f32 %v1600, %v1675
  %v1712 = vmul.f32 %v1601, %v1675
  %v1713 = vld [vmem:[%s3] sm:$0x1]
  %v1715 = vperm.slane %v1713, 0
  %v1717 = vmul.f32 %v1709, %v1715
  %v1718 = vmul.f32 %v1710, %v1715
  %v1719 = vmul.f32 %v1711, %v1715
  %v1720 = vmul.f32 %v1712, %v1715
  %v1721 = vld [vmem:[%s4] sm:$0x1]
  %v1723 = vperm.slane %v1721, 0
  %v1725 = vadd.f32 %v1717, %v1723
  %v1726 = vadd.f32 %v1718, %v1723
  %v1727 = vadd.f32 %v1719, %v1723
  %v1728 = vadd.f32 %v1720, %v1723
  %v1729 = vmax.f32 %v1725, 0.0
  %v1730 = vmax.f32 %v1726, 0.0
  %v1731 = vmax.f32 %v1727, 0.0
  %v1732 = vmax.f32 %v1728, 0.0
  %v1733 = vpack.c.bf16 %v1729, %v1729
  %v1734 = vpack.c.bf16 %v1730, %v1730
  %v1735 = vpack.c.bf16 %v1731, %v1731
  %v1736 = vpack.c.bf16 %v1732, %v1732
  %s1737 = scalar_lea.vmem %s5, 16
  %1738 = vst.msk [vmem:[%s1737] sm:$0xf] %vm1704, %v1733
  %1739 = vst.msk [vmem:[%s1737 + $0x4] sm:$0xf] %vm1704, %v1734
  %1740 = vst.msk [vmem:[%s1737 + $0x8] sm:$0xf] %vm1704, %v1735
  %1741 = vst.msk [vmem:[%s1737 + $0xc] sm:$0xf] %vm1704, %v1736
  %v1742 = vmul.f32 %v1620, %v1675
  %v1743 = vmul.f32 %v1621, %v1675
  %v1744 = vmul.f32 %v1622, %v1675
  %v1745 = vmul.f32 %v1623, %v1675
  %v1746 = vld [vmem:[%s3] sm:$0x1]
  %v1748 = vperm.slane %v1746, 0
  %v1750 = vmul.f32 %v1742, %v1748
  %v1751 = vmul.f32 %v1743, %v1748
  %v1752 = vmul.f32 %v1744, %v1748
  %v1753 = vmul.f32 %v1745, %v1748
  %v1754 = vld [vmem:[%s4] sm:$0x1]
  %v1756 = vperm.slane %v1754, 0
  %v1758 = vadd.f32 %v1750, %v1756
  %v1759 = vadd.f32 %v1751, %v1756
  %v1760 = vadd.f32 %v1752, %v1756
  %v1761 = vadd.f32 %v1753, %v1756
  %v1762 = vmax.f32 %v1758, 0.0
  %v1763 = vmax.f32 %v1759, 0.0
  %v1764 = vmax.f32 %v1760, 0.0
  %v1765 = vmax.f32 %v1761, 0.0
  %v1766 = vpack.c.bf16 %v1762, %v1762
  %v1767 = vpack.c.bf16 %v1763, %v1763
  %v1768 = vpack.c.bf16 %v1764, %v1764
  %v1769 = vpack.c.bf16 %v1765, %v1765
  %s1770 = scalar_lea.vmem %s5, 32
  %1771 = vst.msk [vmem:[%s1770] sm:$0xf] %vm1704, %v1766
  %1772 = vst.msk [vmem:[%s1770 + $0x4] sm:$0xf] %vm1704, %v1767
  %1773 = vst.msk [vmem:[%s1770 + $0x8] sm:$0xf] %vm1704, %v1768
  %1774 = vst.msk [vmem:[%s1770 + $0xc] sm:$0xf] %vm1704, %v1769
  %v1775 = vmul.f32 %v1642, %v1675
  %v1776 = vmul.f32 %v1643, %v1675
  %v1777 = vmul.f32 %v1644, %v1675
  %v1778 = vmul.f32 %v1645, %v1675
  %v1779 = vld [vmem:[%s3] sm:$0x1]
  %v1781 = vperm.slane %v1779, 0
  %v1783 = vmul.f32 %v1775, %v1781
  %v1784 = vmul.f32 %v1776, %v1781
  %v1785 = vmul.f32 %v1777, %v1781
  %v1786 = vmul.f32 %v1778, %v1781
  %v1787 = vld [vmem:[%s4] sm:$0x1]
  %v1789 = vperm.slane %v1787, 0
  %v1791 = vadd.f32 %v1783, %v1789
  %v1792 = vadd.f32 %v1784, %v1789
  %v1793 = vadd.f32 %v1785, %v1789
  %v1794 = vadd.f32 %v1786, %v1789
  %v1795 = vmax.f32 %v1791, 0.0
  %v1796 = vmax.f32 %v1792, 0.0
  %v1797 = vmax.f32 %v1793, 0.0
  %v1798 = vmax.f32 %v1794, 0.0
  %v1799 = vpack.c.bf16 %v1795, %v1795
  %v1800 = vpack.c.bf16 %v1796, %v1796
  %v1801 = vpack.c.bf16 %v1797, %v1797
  %v1802 = vpack.c.bf16 %v1798, %v1798
  %s1803 = scalar_lea.vmem %s5, 48
  %1804 = vst.msk [vmem:[%s1803] sm:$0xf] %vm1704, %v1799
  %1805 = vst.msk [vmem:[%s1803 + $0x4] sm:$0xf] %vm1704, %v1800
  %1806 = vst.msk [vmem:[%s1803 + $0x8] sm:$0xf] %vm1704, %v1801
  %1807 = vst.msk [vmem:[%s1803 + $0xc] sm:$0xf] %vm1704, %v1802
  // Predicated region
  $region22: #{color_mapper_forward.8} parent=0 // pred_check
    _
  $region23: #{color_mapper_forward.8} parent=0 // pred_check_branch
    %1809 = sbr.rel (0) target = $region25
  $region24: #{color_mapper_forward.8} parent=0 // pred_region
    _
  $region25: #{color_mapper_forward.8} parent=0 // pred_fallthru
    _
  // Predicated region
  $region26: #{color_mapper_forward.8} parent=0 // pred_check
    _
  $region27: #{color_mapper_forward.8} parent=0 // pred_check_branch
    %1811 = sbr.rel (0) target = $region29
  $region28: #{color_mapper_forward.8} parent=0 // pred_region
    _
  $region29: #{color_mapper_forward.8} parent=0 // pred_fallthru
    _

// kernel: color_mapper_forward.9
$region0: #{color_mapper_forward.9}
  #allocation0 [shape = 'u32[]', space=smem, size = 0x4, offset = 0x4, fixed_abs, tag = 'smem constant byte address 0x4 - core index']
  #allocation1 [shape = 'u32[72,128]{1,0:T(1,128)}', space=vmem, size = 0x9000, scoped, tag = 'internal scratch']
  %s0 = inlined_call_operand.vmem [shape: bf16[4,128,256], index: 0, kind: input, shape index: {}]
  %s1 = inlined_call_operand.vmem [shape: bf16[4,256,32], index: 1, kind: input, shape index: {}]
  %s2 = inlined_call_operand.vmem [shape: f32[1,32], index: 2, kind: input, shape index: {}]
  %s3 = inlined_call_operand.vmem [shape: f32[1,32], index: 3, kind: input, shape index: {}]
  %s4 = inlined_call_operand.vmem [shape: f32[1,32], index: 4, kind: input, shape index: {}]
  %s5 = inlined_call_operand.vmem [shape: bf16[32,3], index: 5, kind: input, shape index: {}]
  %s6 = inlined_call_operand.vmem [shape: f32[1,3], index: 6, kind: input, shape index: {}]
  %s7 = inlined_call_operand.vmem [shape: f32[4,128,3], index: 7, kind: output, shape index: {}]
  %s8 = sld [smem:[#allocation0]]
  $region38: #{color_mapper_forward.9} parent=0
    _
  %s10 = ssub.s32 1, %s8
  %s11 = scalar_select 0, %s10, %s8
  // Predicated region
  $region2: #{color_mapper_forward.9} parent=0 // pred_check
    _
  $region3: #{color_mapper_forward.9} parent=0 // pred_check_branch
    %13 = sbr.rel (0) target = $region5
  $region4: #{color_mapper_forward.9} parent=0 // pred_region
    _
  $region5: #{color_mapper_forward.9} parent=0 // pred_fallthru
    _
  // Predicated region
  $region6: #{color_mapper_forward.9} parent=0 // pred_check
    _
  $region7: #{color_mapper_forward.9} parent=0 // pred_check_branch
    %15 = sbr.rel (0) target = $region9
  $region8: #{color_mapper_forward.9} parent=0 // pred_region
    _
  $region9: #{color_mapper_forward.9} parent=0 // pred_fallthru
    _
  // Predicated region
  $region10: #{color_mapper_forward.9} parent=0 // pred_check
    _
  $region11: #{color_mapper_forward.9} parent=0 // pred_check_branch
    %17 = sbr.rel (0) target = $region13
  $region12: #{color_mapper_forward.9} parent=0 // pred_region
    _
  $region13: #{color_mapper_forward.9} parent=0 // pred_fallthru
    _
  // Predicated region
  $region14: #{color_mapper_forward.9} parent=0 // pred_check
    _
  $region15: #{color_mapper_forward.9} parent=0 // pred_check_branch
    %19 = sbr.rel (0) target = $region17
  $region16: #{color_mapper_forward.9} parent=0 // pred_region
    _
  $region17: #{color_mapper_forward.9} parent=0 // pred_fallthru
    _
  // Predicated region
  $region18: #{color_mapper_forward.9} parent=0 // pred_check
    _
  $region19: #{color_mapper_forward.9} parent=0 // pred_check_branch
    %21 = sbr.rel (0) target = $region21
  $region20: #{color_mapper_forward.9} parent=0 // pred_region
    _
  $region21: #{color_mapper_forward.9} parent=0 // pred_fallthru
    _
  // Predicated region
  $region22: #{color_mapper_forward.9} parent=0 // pred_check
    _
  $region23: #{color_mapper_forward.9} parent=0 // pred_check_branch
    %23 = sbr.rel (0) target = $region25
  $region24: #{color_mapper_forward.9} parent=0 // pred_region
    _
  $region25: #{color_mapper_forward.9} parent=0 // pred_fallthru
    _
  // Predicated region
  $region26: #{color_mapper_forward.9} parent=0 // pred_check
    _
  $region27: #{color_mapper_forward.9} parent=0 // pred_check_branch
    %25 = sbr.rel (0) target = $region29
  $region28: #{color_mapper_forward.9} parent=0 // pred_region
    _
  $region29: #{color_mapper_forward.9} parent=0 // pred_fallthru
    _
  %v27 = vld [vmem:[%s0] sm:$0xff]
  %v28 = vld [vmem:[%s0 + $0x8] sm:$0xff]
  %v29 = vld [vmem:[%s0 + $0x10] sm:$0xff]
  %v30 = vld [vmem:[%s0 + $0x18] sm:$0xff]
  %v31 = vld [vmem:[%s0 + $0x20] sm:$0xff]
  %v32 = vld [vmem:[%s0 + $0x28] sm:$0xff]
  %v33 = vld [vmem:[%s0 + $0x30] sm:$0xff]
  %v34 = vld [vmem:[%s0 + $0x38] sm:$0xff]
  %v35 = vld [vmem:[%s0 + $0x40] sm:$0xff]
  %v36 = vld [vmem:[%s0 + $0x48] sm:$0xff]
  %v37 = vld [vmem:[%s0 + $0x50] sm:$0xff]
  %v38 = vld [vmem:[%s0 + $0x58] sm:$0xff]
  %v39 = vld [vmem:[%s0 + $0x60] sm:$0xff]
  %v40 = vld [vmem:[%s0 + $0x68] sm:$0xff]
  %v41 = vld [vmem:[%s0 + $0x70] sm:$0xff]
  %v42 = vld [vmem:[%s0 + $0x78] sm:$0xff]
  %v43 = vld [vmem:[%s1] sm:$0xf]
  %v44 = vld [vmem:[%s1 + $0x4] sm:$0xf]
  %v45 = vld [vmem:[%s1 + $0x8] sm:$0xf]
  %v46 = vld [vmem:[%s1 + $0xc] sm:$0xf]
  %v47 = vld [vmem:[%s1 + $0x10] sm:$0xf]
  %v48 = vld [vmem:[%s1 + $0x14] sm:$0xf]
  %v49 = vld [vmem:[%s1 + $0x18] sm:$0xf]
  %v50 = vld [vmem:[%s1 + $0x1c] sm:$0xf]
  %v51 = vld [vmem:[%s1 + $0x20] sm:$0xf]
  %v52 = vld [vmem:[%s1 + $0x24] sm:$0xf]
  %v53 = vld [vmem:[%s1 + $0x28] sm:$0xf]
  %v54 = vld [vmem:[%s1 + $0x2c] sm:$0xf]
  %v55 = vld [vmem:[%s1 + $0x30] sm:$0xf]
  %v56 = vld [vmem:[%s1 + $0x34] sm:$0xf]
  %v57 = vld [vmem:[%s1 + $0x38] sm:$0xf]
  %v58 = vld [vmem:[%s1 + $0x3c] sm:$0xf]
  %v59 = vld [vmem:[%s1 + $0x40] sm:$0xf]
  %v60 = vld [vmem:[%s1 + $0x44] sm:$0xf]
  %v61 = vld [vmem:[%s1 + $0x48] sm:$0xf]
  %v62 = vld [vmem:[%s1 + $0x4c] sm:$0xf]
  %v63 = vld [vmem:[%s1 + $0x50] sm:$0xf]
  %v64 = vld [vmem:[%s1 + $0x54] sm:$0xf]
  %v65 = vld [vmem:[%s1 + $0x58] sm:$0xf]
  %v66 = vld [vmem:[%s1 + $0x5c] sm:$0xf]
  %v67 = vld [vmem:[%s1 + $0x60] sm:$0xf]
  %v68 = vld [vmem:[%s1 + $0x64] sm:$0xf]
  %v69 = vld [vmem:[%s1 + $0x68] sm:$0xf]
  %v70 = vld [vmem:[%s1 + $0x6c] sm:$0xf]
  %v71 = vld [vmem:[%s1 + $0x70] sm:$0xf]
  %v72 = vld [vmem:[%s1 + $0x74] sm:$0xf]
  %v73 = vld [vmem:[%s1 + $0x78] sm:$0xf]
  %v74 = vld [vmem:[%s1 + $0x7c] sm:$0xf]
  %v75 = vld [vmem:[%s2] sm:$0x1]
  %v77 = vperm.slane %v75, 0
  %v95 = vunpack.c.l.b16 %v27
  %v96 = vunpack.c.h.b16 %v27
  %v97 = vunpack.c.l.b16 %v28
  %v98 = vunpack.c.h.b16 %v28
  %v99 = vunpack.c.l.b16 %v29
  %v100 = vunpack.c.h.b16 %v29
  %v101 = vunpack.c.l.b16 %v30
  %v102 = vunpack.c.h.b16 %v30
  %v103 = vunpack.c.l.b16 %v31
  %v104 = vunpack.c.h.b16 %v31
  %v105 = vunpack.c.l.b16 %v32
  %v106 = vunpack.c.h.b16 %v32
  %v107 = vunpack.c.l.b16 %v33
  %v108 = vunpack.c.h.b16 %v33
  %v109 = vunpack.c.l.b16 %v34
  %v110 = vunpack.c.h.b16 %v34
  %v111 = vunpack.c.l.b16 %v35
  %v112 = vunpack.c.h.b16 %v35
  %v113 = vunpack.c.l.b16 %v36
  %v114 = vunpack.c.h.b16 %v36
  %v115 = vunpack.c.l.b16 %v37
  %v116 = vunpack.c.h.b16 %v37
  %v117 = vunpack.c.l.b16 %v38
  %v118 = vunpack.c.h.b16 %v38
  %v119 = vunpack.c.l.b16 %v39
  %v120 = vunpack.c.h.b16 %v39
  %v121 = vunpack.c.l.b16 %v40
  %v122 = vunpack.c.h.b16 %v40
  %v123 = vunpack.c.l.b16 %v41
  %v124 = vunpack.c.h.b16 %v41
  %v125 = vunpack.c.l.b16 %v42
  %v126 = vunpack.c.h.b16 %v42
  %v127 = vpack.c.b16 %v97, %v95
  %v128 = vpack.c.b16 %v98, %v96
  %v129 = vpack.c.b16 %v101, %v99
  %v130 = vpack.c.b16 %v102, %v100
  %v131 = vpack.c.b16 %v105, %v103
  %v132 = vpack.c.b16 %v106, %v104
  %v133 = vpack.c.b16 %v109, %v107
  %v134 = vpack.c.b16 %v110, %v108
  %v135 = vpack.c.b16 %v113, %v111
  %v136 = vpack.c.b16 %v114, %v112
  %v137 = vpack.c.b16 %v117, %v115
  %v138 = vpack.c.b16 %v118, %v116
  %v139 = vpack.c.b16 %v121, %v119
  %v140 = vpack.c.b16 %v122, %v120
  %v141 = vpack.c.b16 %v125, %v123
  %v142 = vpack.c.b16 %v126, %v124
  %v191 = vunpack.c.l.b16 %v43
  %v192 = vunpack.c.l.b16 %v44
  %v193 = vunpack.c.l.b16 %v45
  %v194 = vunpack.c.l.b16 %v46
  %v195 = vunpack.c.l.b16 %v47
  %v196 = vunpack.c.l.b16 %v48
  %v197 = vunpack.c.l.b16 %v49
  %v198 = vunpack.c.l.b16 %v50
  %v199 = vunpack.c.l.b16 %v51
  %v200 = vunpack.c.l.b16 %v52
  %v201 = vunpack.c.l.b16 %v53
  %v202 = vunpack.c.l.b16 %v54
  %v203 = vunpack.c.l.b16 %v55
  %v204 = vunpack.c.l.b16 %v56
  %v205 = vunpack.c.l.b16 %v57
  %v206 = vunpack.c.l.b16 %v58
  %v207 = vunpack.c.l.b16 %v59
  %v208 = vunpack.c.l.b16 %v60
  %v209 = vunpack.c.l.b16 %v61
  %v210 = vunpack.c.l.b16 %v62
  %v211 = vunpack.c.l.b16 %v63
  %v212 = vunpack.c.l.b16 %v64
  %v213 = vunpack.c.l.b16 %v65
  %v214 = vunpack.c.l.b16 %v66
  %v215 = vunpack.c.l.b16 %v67
  %v216 = vunpack.c.l.b16 %v68
  %v217 = vunpack.c.l.b16 %v69
  %v218 = vunpack.c.l.b16 %v70
  %v219 = vunpack.c.l.b16 %v71
  %v220 = vunpack.c.l.b16 %v72
  %v221 = vunpack.c.l.b16 %v73
  %v222 = vunpack.c.l.b16 %v74
  %v223 = vpack.c.b16 %v192, %v191
  %v224 = vpack.c.b16 %v194, %v193
  %v225 = vpack.c.b16 %v196, %v195
  %v226 = vpack.c.b16 %v198, %v197
  %v227 = vpack.c.b16 %v200, %v199
  %v228 = vpack.c.b16 %v202, %v201
  %v229 = vpack.c.b16 %v204, %v203
  %v230 = vpack.c.b16 %v206, %v205
  %v231 = vpack.c.b16 %v208, %v207
  %v232 = vpack.c.b16 %v210, %v209
  %v233 = vpack.c.b16 %v212, %v211
  %v234 = vpack.c.b16 %v214, %v213
  %v235 = vpack.c.b16 %v216, %v215
  %v236 = vpack.c.b16 %v218, %v217
  %v237 = vpack.c.b16 %v220, %v219
  %v238 = vpack.c.b16 %v222, %v221
  %255 = vmatpush.bf16.msra.mxu0 %v230
  %256 = vmatpush.bf16.msra.mxu0 %v229
  %257 = vmatpush.bf16.msra.mxu0 %v228
  %258 = vmatpush.bf16.msra.mxu0 %v227
  %259 = vmatpush.bf16.msra.mxu0 %v226
  %260 = vmatpush.bf16.msra.mxu0 %v225
  %261 = vmatpush.bf16.msra.mxu0 %v224
  %262 = vmatpush.bf16.msra.mxu0 %v223
  %263 = vmatmul.bf16.gmra.mxu0 %v127
  %v264 = vpop.f32.mrf.mxu0
  %v265 = vadd.f32 %v77, %v264
  %v266 = vpop.f32.mrf.mxu0
  %v267 = vadd.f32 %v77, %v266
  %268 = vmatmul.bf16.gmra.mxu0 %v129
  %v269 = vpop.f32.mrf.mxu0
  %v270 = vadd.f32 %v77, %v269
  %v271 = vpop.f32.mrf.mxu0
  %v272 = vadd.f32 %v77, %v271
  %273 = vmatmul.bf16.gmra.mxu0 %v131
  %v274 = vpop.f32.mrf.mxu0
  %v275 = vadd.f32 %v77, %v274
  %v276 = vpop.f32.mrf.mxu0
  %v277 = vadd.f32 %v77, %v276
  %278 = vmatmul.bf16.gmra.mxu0 %v133
  %v279 = vpop.f32.mrf.mxu0
  %v280 = vadd.f32 %v77, %v279
  %v281 = vpop.f32.mrf.mxu0
  %v282 = vadd.f32 %v77, %v281
  %283 = vmatmul.bf16.gmra.mxu0 %v135
  %v284 = vpop.f32.mrf.mxu0
  %v285 = vadd.f32 %v77, %v284
  %v286 = vpop.f32.mrf.mxu0
  %v287 = vadd.f32 %v77, %v286
  %288 = vmatmul.bf16.gmra.mxu0 %v137
  %v289 = vpop.f32.mrf.mxu0
  %v290 = vadd.f32 %v77, %v289
  %v291 = vpop.f32.mrf.mxu0
  %v292 = vadd.f32 %v77, %v291
  %293 = vmatmul.bf16.gmra.mxu0 %v139
  %v294 = vpop.f32.mrf.mxu0
  %v295 = vadd.f32 %v77, %v294
  %v296 = vpop.f32.mrf.mxu0
  %v297 = vadd.f32 %v77, %v296
  %298 = vmatmul.bf16.gmra.mxu0 %v141
  %v299 = vpop.f32.mrf.mxu0
  %v300 = vadd.f32 %v77, %v299
  %v301 = vpop.f32.mrf.mxu0
  %v302 = vadd.f32 %v77, %v301
  %303 = vdwg.mxu0
  %304 = vmatpush.bf16.msra.mxu0 %v238
  %305 = vmatpush.bf16.msra.mxu0 %v237
  %306 = vmatpush.bf16.msra.mxu0 %v236
  %307 = vmatpush.bf16.msra.mxu0 %v235
  %308 = vmatpush.bf16.msra.mxu0 %v234
  %309 = vmatpush.bf16.msra.mxu0 %v233
  %310 = vmatpush.bf16.msra.mxu0 %v232
  %311 = vmatpush.bf16.msra.mxu0 %v231
  %312 = vmatmul.bf16.gmra.mxu0 %v128
  %v313 = vpop.f32.mrf.mxu0
  %v314 = vadd.f32 %v265, %v313
  %v315 = vpop.f32.mrf.mxu0
  %v316 = vadd.f32 %v267, %v315
  %317 = vmatmul.bf16.gmra.mxu0 %v130
  %v318 = vpop.f32.mrf.mxu0
  %v319 = vadd.f32 %v270, %v318
  %v320 = vpop.f32.mrf.mxu0
  %v321 = vadd.f32 %v272, %v320
  %322 = vmatmul.bf16.gmra.mxu0 %v132
  %v323 = vpop.f32.mrf.mxu0
  %v324 = vadd.f32 %v275, %v323
  %v325 = vpop.f32.mrf.mxu0
  %v326 = vadd.f32 %v277, %v325
  %327 = vmatmul.bf16.gmra.mxu0 %v134
  %v328 = vpop.f32.mrf.mxu0
  %v329 = vadd.f32 %v280, %v328
  %v330 = vpop.f32.mrf.mxu0
  %v331 = vadd.f32 %v282, %v330
  %332 = vmatmul.bf16.gmra.mxu0 %v136
  %v333 = vpop.f32.mrf.mxu0
  %v334 = vadd.f32 %v285, %v333
  %v335 = vpop.f32.mrf.mxu0
  %v336 = vadd.f32 %v287, %v335
  %337 = vmatmul.bf16.gmra.mxu0 %v138
  %v338 = vpop.f32.mrf.mxu0
  %v339 = vadd.f32 %v290, %v338
  %v340 = vpop.f32.mrf.mxu0
  %v341 = vadd.f32 %v292, %v340
  %342 = vmatmul.bf16.gmra.mxu0 %v140
  %v343 = vpop.f32.mrf.mxu0
  %v344 = vadd.f32 %v295, %v343
  %v345 = vpop.f32.mrf.mxu0
  %v346 = vadd.f32 %v297, %v345
  %347 = vmatmul.bf16.gmra.mxu0 %v142
  %v348 = vpop.f32.mrf.mxu0
  %v349 = vadd.f32 %v300, %v348
  %v350 = vpop.f32.mrf.mxu0
  %v351 = vadd.f32 %v302, %v350
  %352 = vdwg.mxu0
  %s353 = scalar_lea.vmem %s0, 128
  %v354 = vld [vmem:[%s353] sm:$0xff]
  %v355 = vld [vmem:[%s353 + $0x8] sm:$0xff]
  %v356 = vld [vmem:[%s353 + $0x10] sm:$0xff]
  %v357 = vld [vmem:[%s353 + $0x18] sm:$0xff]
  %v358 = vld [vmem:[%s353 + $0x20] sm:$0xff]
  %v359 = vld [vmem:[%s353 + $0x28] sm:$0xff]
  %v360 = vld [vmem:[%s353 + $0x30] sm:$0xff]
  %v361 = vld [vmem:[%s353 + $0x38] sm:$0xff]
  %v362 = vld [vmem:[%s353 + $0x40] sm:$0xff]
  %v363 = vld [vmem:[%s353 + $0x48] sm:$0xff]
  %v364 = vld [vmem:[%s353 + $0x50] sm:$0xff]
  %v365 = vld [vmem:[%s353 + $0x58] sm:$0xff]
  %v366 = vld [vmem:[%s353 + $0x60] sm:$0xff]
  %v367 = vld [vmem:[%s353 + $0x68] sm:$0xff]
  %v368 = vld [vmem:[%s353 + $0x70] sm:$0xff]
  %v369 = vld [vmem:[%s353 + $0x78] sm:$0xff]
  %s370 = scalar_lea.vmem %s1, 128
  %v371 = vld [vmem:[%s370] sm:$0xf]
  %v372 = vld [vmem:[%s370 + $0x4] sm:$0xf]
  %v373 = vld [vmem:[%s370 + $0x8] sm:$0xf]
  %v374 = vld [vmem:[%s370 + $0xc] sm:$0xf]
  %v375 = vld [vmem:[%s370 + $0x10] sm:$0xf]
  %v376 = vld [vmem:[%s370 + $0x14] sm:$0xf]
  %v377 = vld [vmem:[%s370 + $0x18] sm:$0xf]
  %v378 = vld [vmem:[%s370 + $0x1c] sm:$0xf]
  %v379 = vld [vmem:[%s370 + $0x20] sm:$0xf]
  %v380 = vld [vmem:[%s370 + $0x24] sm:$0xf]
  %v381 = vld [vmem:[%s370 + $0x28] sm:$0xf]
  %v382 = vld [vmem:[%s370 + $0x2c] sm:$0xf]
  %v383 = vld [vmem:[%s370 + $0x30] sm:$0xf]
  %v384 = vld [vmem:[%s370 + $0x34] sm:$0xf]
  %v385 = vld [vmem:[%s370 + $0x38] sm:$0xf]
  %v386 = vld [vmem:[%s370 + $0x3c] sm:$0xf]
  %v387 = vld [vmem:[%s370 + $0x40] sm:$0xf]
  %v388 = vld [vmem:[%s370 + $0x44] sm:$0xf]
  %v389 = vld [vmem:[%s370 + $0x48] sm:$0xf]
  %v390 = vld [vmem:[%s370 + $0x4c] sm:$0xf]
  %v391 = vld [vmem:[%s370 + $0x50] sm:$0xf]
  %v392 = vld [vmem:[%s370 + $0x54] sm:$0xf]
  %v393 = vld [vmem:[%s370 + $0x58] sm:$0xf]
  %v394 = vld [vmem:[%s370 + $0x5c] sm:$0xf]
  %v395 = vld [vmem:[%s370 + $0x60] sm:$0xf]
  %v396 = vld [vmem:[%s370 + $0x64] sm:$0xf]
  %v397 = vld [vmem:[%s370 + $0x68] sm:$0xf]
  %v398 = vld [vmem:[%s370 + $0x6c] sm:$0xf]
  %v399 = vld [vmem:[%s370 + $0x70] sm:$0xf]
  %v400 = vld [vmem:[%s370 + $0x74] sm:$0xf]
  %v401 = vld [vmem:[%s370 + $0x78] sm:$0xf]
  %v402 = vld [vmem:[%s370 + $0x7c] sm:$0xf]
  %v419 = vunpack.c.l.b16 %v354
  %v420 = vunpack.c.h.b16 %v354
  %v421 = vunpack.c.l.b16 %v355
  %v422 = vunpack.c.h.b16 %v355
  %v423 = vunpack.c.l.b16 %v356
  %v424 = vunpack.c.h.b16 %v356
  %v425 = vunpack.c.l.b16 %v357
  %v426 = vunpack.c.h.b16 %v357
  %v427 = vunpack.c.l.b16 %v358
  %v428 = vunpack.c.h.b16 %v358
  %v429 = vunpack.c.l.b16 %v359
  %v430 = vunpack.c.h.b16 %v359
  %v431 = vunpack.c.l.b16 %v360
  %v432 = vunpack.c.h.b16 %v360
  %v433 = vunpack.c.l.b16 %v361
  %v434 = vunpack.c.h.b16 %v361
  %v435 = vunpack.c.l.b16 %v362
  %v436 = vunpack.c.h.b16 %v362
  %v437 = vunpack.c.l.b16 %v363
  %v438 = vunpack.c.h.b16 %v363
  %v439 = vunpack.c.l.b16 %v364
  %v440 = vunpack.c.h.b16 %v364
  %v441 = vunpack.c.l.b16 %v365
  %v442 = vunpack.c.h.b16 %v365
  %v443 = vunpack.c.l.b16 %v366
  %v444 = vunpack.c.h.b16 %v366
  %v445 = vunpack.c.l.b16 %v367
  %v446 = vunpack.c.h.b16 %v367
  %v447 = vunpack.c.l.b16 %v368
  %v448 = vunpack.c.h.b16 %v368
  %v449 = vunpack.c.l.b16 %v369
  %v450 = vunpack.c.h.b16 %v369
  %v451 = vpack.c.b16 %v421, %v419
  %v452 = vpack.c.b16 %v422, %v420
  %v453 = vpack.c.b16 %v425, %v423
  %v454 = vpack.c.b16 %v426, %v424
  %v455 = vpack.c.b16 %v429, %v427
  %v456 = vpack.c.b16 %v430, %v428
  %v457 = vpack.c.b16 %v433, %v431
  %v458 = vpack.c.b16 %v434, %v432
  %v459 = vpack.c.b16 %v437, %v435
  %v460 = vpack.c.b16 %v438, %v436
  %v461 = vpack.c.b16 %v441, %v439
  %v462 = vpack.c.b16 %v442, %v440
  %v463 = vpack.c.b16 %v445, %v443
  %v464 = vpack.c.b16 %v446, %v444
  %v465 = vpack.c.b16 %v449, %v447
  %v466 = vpack.c.b16 %v450, %v448
  %v515 = vunpack.c.l.b16 %v371
  %v516 = vunpack.c.l.b16 %v372
  %v517 = vunpack.c.l.b16 %v373
  %v518 = vunpack.c.l.b16 %v374
  %v519 = vunpack.c.l.b16 %v375
  %v520 = vunpack.c.l.b16 %v376
  %v521 = vunpack.c.l.b16 %v377
  %v522 = vunpack.c.l.b16 %v378
  %v523 = vunpack.c.l.b16 %v379
  %v524 = vunpack.c.l.b16 %v380
  %v525 = vunpack.c.l.b16 %v381
  %v526 = vunpack.c.l.b16 %v382
  %v527 = vunpack.c.l.b16 %v383
  %v528 = vunpack.c.l.b16 %v384
  %v529 = vunpack.c.l.b16 %v385
  %v530 = vunpack.c.l.b16 %v386
  %v531 = vunpack.c.l.b16 %v387
  %v532 = vunpack.c.l.b16 %v388
  %v533 = vunpack.c.l.b16 %v389
  %v534 = vunpack.c.l.b16 %v390
  %v535 = vunpack.c.l.b16 %v391
  %v536 = vunpack.c.l.b16 %v392
  %v537 = vunpack.c.l.b16 %v393
  %v538 = vunpack.c.l.b16 %v394
  %v539 = vunpack.c.l.b16 %v395
  %v540 = vunpack.c.l.b16 %v396
  %v541 = vunpack.c.l.b16 %v397
  %v542 = vunpack.c.l.b16 %v398
  %v543 = vunpack.c.l.b16 %v399
  %v544 = vunpack.c.l.b16 %v400
  %v545 = vunpack.c.l.b16 %v401
  %v546 = vunpack.c.l.b16 %v402
  %v547 = vpack.c.b16 %v516, %v515
  %v548 = vpack.c.b16 %v518, %v517
  %v549 = vpack.c.b16 %v520, %v519
  %v550 = vpack.c.b16 %v522, %v521
  %v551 = vpack.c.b16 %v524, %v523
  %v552 = vpack.c.b16 %v526, %v525
  %v553 = vpack.c.b16 %v528, %v527
  %v554 = vpack.c.b16 %v530, %v529
  %v555 = vpack.c.b16 %v532, %v531
  %v556 = vpack.c.b16 %v534, %v533
  %v557 = vpack.c.b16 %v536, %v535
  %v558 = vpack.c.b16 %v538, %v537
  %v559 = vpack.c.b16 %v540, %v539
  %v560 = vpack.c.b16 %v542, %v541
  %v561 = vpack.c.b16 %v544, %v543
  %v562 = vpack.c.b16 %v546, %v545
  %579 = vmatpush.bf16.msra.mxu0 %v554
  %580 = vmatpush.bf16.msra.mxu0 %v553
  %581 = vmatpush.bf16.msra.mxu0 %v552
  %582 = vmatpush.bf16.msra.mxu0 %v551
  %583 = vmatpush.bf16.msra.mxu0 %v550
  %584 = vmatpush.bf16.msra.mxu0 %v549
  %585 = vmatpush.bf16.msra.mxu0 %v548
  %586 = vmatpush.bf16.msra.mxu0 %v547
  %587 = vmatmul.bf16.gmra.mxu0 %v451
  %v588 = vpop.f32.mrf.mxu0
  %v589 = vadd.f32 %v77, %v588
  %v590 = vpop.f32.mrf.mxu0
  %v591 = vadd.f32 %v77, %v590
  %592 = vmatmul.bf16.gmra.mxu0 %v453
  %v593 = vpop.f32.mrf.mxu0
  %v594 = vadd.f32 %v77, %v593
  %v595 = vpop.f32.mrf.mxu0
  %v596 = vadd.f32 %v77, %v595
  %597 = vmatmul.bf16.gmra.mxu0 %v455
  %v598 = vpop.f32.mrf.mxu0
  %v599 = vadd.f32 %v77, %v598
  %v600 = vpop.f32.mrf.mxu0
  %v601 = vadd.f32 %v77, %v600
  %602 = vmatmul.bf16.gmra.mxu0 %v457
  %v603 = vpop.f32.mrf.mxu0
  %v604 = vadd.f32 %v77, %v603
  %v605 = vpop.f32.mrf.mxu0
  %v606 = vadd.f32 %v77, %v605
  %607 = vmatmul.bf16.gmra.mxu0 %v459
  %v608 = vpop.f32.mrf.mxu0
  %v609 = vadd.f32 %v77, %v608
  %v610 = vpop.f32.mrf.mxu0
  %v611 = vadd.f32 %v77, %v610
  %612 = vmatmul.bf16.gmra.mxu0 %v461
  %v613 = vpop.f32.mrf.mxu0
  %v614 = vadd.f32 %v77, %v613
  %v615 = vpop.f32.mrf.mxu0
  %v616 = vadd.f32 %v77, %v615
  %617 = vmatmul.bf16.gmra.mxu0 %v463
  %v618 = vpop.f32.mrf.mxu0
  %v619 = vadd.f32 %v77, %v618
  %v620 = vpop.f32.mrf.mxu0
  %v621 = vadd.f32 %v77, %v620
  %622 = vmatmul.bf16.gmra.mxu0 %v465
  %v623 = vpop.f32.mrf.mxu0
  %v624 = vadd.f32 %v77, %v623
  %v625 = vpop.f32.mrf.mxu0
  %v626 = vadd.f32 %v77, %v625
  %627 = vdwg.mxu0
  %628 = vmatpush.bf16.msra.mxu0 %v562
  %629 = vmatpush.bf16.msra.mxu0 %v561
  %630 = vmatpush.bf16.msra.mxu0 %v560
  %631 = vmatpush.bf16.msra.mxu0 %v559
  %632 = vmatpush.bf16.msra.mxu0 %v558
  %633 = vmatpush.bf16.msra.mxu0 %v557
  %634 = vmatpush.bf16.msra.mxu0 %v556
  %635 = vmatpush.bf16.msra.mxu0 %v555
  %636 = vmatmul.bf16.gmra.mxu0 %v452
  %v637 = vpop.f32.mrf.mxu0
  %v638 = vadd.f32 %v589, %v637
  %v639 = vpop.f32.mrf.mxu0
  %v640 = vadd.f32 %v591, %v639
  %641 = vmatmul.bf16.gmra.mxu0 %v454
  %v642 = vpop.f32.mrf.mxu0
  %v643 = vadd.f32 %v594, %v642
  %v644 = vpop.f32.mrf.mxu0
  %v645 = vadd.f32 %v596, %v644
  %646 = vmatmul.bf16.gmra.mxu0 %v456
  %v647 = vpop.f32.mrf.mxu0
  %v648 = vadd.f32 %v599, %v647
  %v649 = vpop.f32.mrf.mxu0
  %v650 = vadd.f32 %v601, %v649
  %651 = vmatmul.bf16.gmra.mxu0 %v458
  %v652 = vpop.f32.mrf.mxu0
  %v653 = vadd.f32 %v604, %v652
  %v654 = vpop.f32.mrf.mxu0
  %v655 = vadd.f32 %v606, %v654
  %656 = vmatmul.bf16.gmra.mxu0 %v460
  %v657 = vpop.f32.mrf.mxu0
  %v658 = vadd.f32 %v609, %v657
  %v659 = vpop.f32.mrf.mxu0
  %v660 = vadd.f32 %v611, %v659
  %661 = vmatmul.bf16.gmra.mxu0 %v462
  %v662 = vpop.f32.mrf.mxu0
  %v663 = vadd.f32 %v614, %v662
  %v664 = vpop.f32.mrf.mxu0
  %v665 = vadd.f32 %v616, %v664
  %666 = vmatmul.bf16.gmra.mxu0 %v464
  %v667 = vpop.f32.mrf.mxu0
  %v668 = vadd.f32 %v619, %v667
  %v669 = vpop.f32.mrf.mxu0
  %v670 = vadd.f32 %v621, %v669
  %671 = vmatmul.bf16.gmra.mxu0 %v466
  %v672 = vpop.f32.mrf.mxu0
  %v673 = vadd.f32 %v624, %v672
  %v674 = vpop.f32.mrf.mxu0
  %v675 = vadd.f32 %v626, %v674
  %676 = vdwg.mxu0
  %s677 = scalar_lea.vmem %s0, 256
  %v678 = vld [vmem:[%s677] sm:$0xff]
  %v679 = vld [vmem:[%s677 + $0x8] sm:$0xff]
  %v680 = vld [vmem:[%s677 + $0x10] sm:$0xff]
  %v681 = vld [vmem:[%s677 + $0x18] sm:$0xff]
  %v682 = vld [vmem:[%s677 + $0x20] sm:$0xff]
  %v683 = vld [vmem:[%s677 + $0x28] sm:$0xff]
  %v684 = vld [vmem:[%s677 + $0x30] sm:$0xff]
  %v685 = vld [vmem:[%s677 + $0x38] sm:$0xff]
  %v686 = vld [vmem:[%s677 + $0x40] sm:$0xff]
  %v687 = vld [vmem:[%s677 + $0x48] sm:$0xff]
  %v688 = vld [vmem:[%s677 + $0x50] sm:$0xff]
  %v689 = vld [vmem:[%s677 + $0x58] sm:$0xff]
  %v690 = vld [vmem:[%s677 + $0x60] sm:$0xff]
  %v691 = vld [vmem:[%s677 + $0x68] sm:$0xff]
  %v692 = vld [vmem:[%s677 + $0x70] sm:$0xff]
  %v693 = vld [vmem:[%s677 + $0x78] sm:$0xff]
  %s694 = scalar_lea.vmem %s1, 256
  %v695 = vld [vmem:[%s694] sm:$0xf]
  %v696 = vld [vmem:[%s694 + $0x4] sm:$0xf]
  %v697 = vld [vmem:[%s694 + $0x8] sm:$0xf]
  %v698 = vld [vmem:[%s694 + $0xc] sm:$0xf]
  %v699 = vld [vmem:[%s694 + $0x10] sm:$0xf]
  %v700 = vld [vmem:[%s694 + $0x14] sm:$0xf]
  %v701 = vld [vmem:[%s694 + $0x18] sm:$0xf]
  %v702 = vld [vmem:[%s694 + $0x1c] sm:$0xf]
  %v703 = vld [vmem:[%s694 + $0x20] sm:$0xf]
  %v704 = vld [vmem:[%s694 + $0x24] sm:$0xf]
  %v705 = vld [vmem:[%s694 + $0x28] sm:$0xf]
  %v706 = vld [vmem:[%s694 + $0x2c] sm:$0xf]
  %v707 = vld [vmem:[%s694 + $0x30] sm:$0xf]
  %v708 = vld [vmem:[%s694 + $0x34] sm:$0xf]
  %v709 = vld [vmem:[%s694 + $0x38] sm:$0xf]
  %v710 = vld [vmem:[%s694 + $0x3c] sm:$0xf]
  %v711 = vld [vmem:[%s694 + $0x40] sm:$0xf]
  %v712 = vld [vmem:[%s694 + $0x44] sm:$0xf]
  %v713 = vld [vmem:[%s694 + $0x48] sm:$0xf]
  %v714 = vld [vmem:[%s694 + $0x4c] sm:$0xf]
  %v715 = vld [vmem:[%s694 + $0x50] sm:$0xf]
  %v716 = vld [vmem:[%s694 + $0x54] sm:$0xf]
  %v717 = vld [vmem:[%s694 + $0x58] sm:$0xf]
  %v718 = vld [vmem:[%s694 + $0x5c] sm:$0xf]
  %v719 = vld [vmem:[%s694 + $0x60] sm:$0xf]
  %v720 = vld [vmem:[%s694 + $0x64] sm:$0xf]
  %v721 = vld [vmem:[%s694 + $0x68] sm:$0xf]
  %v722 = vld [vmem:[%s694 + $0x6c] sm:$0xf]
  %v723 = vld [vmem:[%s694 + $0x70] sm:$0xf]
  %v724 = vld [vmem:[%s694 + $0x74] sm:$0xf]
  %v725 = vld [vmem:[%s694 + $0x78] sm:$0xf]
  %v726 = vld [vmem:[%s694 + $0x7c] sm:$0xf]
  %v743 = vunpack.c.l.b16 %v678
  %v744 = vunpack.c.h.b16 %v678
  %v745 = vunpack.c.l.b16 %v679
  %v746 = vunpack.c.h.b16 %v679
  %v747 = vunpack.c.l.b16 %v680
  %v748 = vunpack.c.h.b16 %v680
  %v749 = vunpack.c.l.b16 %v681
  %v750 = vunpack.c.h.b16 %v681
  %v751 = vunpack.c.l.b16 %v682
  %v752 = vunpack.c.h.b16 %v682
  %v753 = vunpack.c.l.b16 %v683
  %v754 = vunpack.c.h.b16 %v683
  %v755 = vunpack.c.l.b16 %v684
  %v756 = vunpack.c.h.b16 %v684
  %v757 = vunpack.c.l.b16 %v685
  %v758 = vunpack.c.h.b16 %v685
  %v759 = vunpack.c.l.b16 %v686
  %v760 = vunpack.c.h.b16 %v686
  %v761 = vunpack.c.l.b16 %v687
  %v762 = vunpack.c.h.b16 %v687
  %v763 = vunpack.c.l.b16 %v688
  %v764 = vunpack.c.h.b16 %v688
  %v765 = vunpack.c.l.b16 %v689
  %v766 = vunpack.c.h.b16 %v689
  %v767 = vunpack.c.l.b16 %v690
  %v768 = vunpack.c.h.b16 %v690
  %v769 = vunpack.c.l.b16 %v691
  %v770 = vunpack.c.h.b16 %v691
  %v771 = vunpack.c.l.b16 %v692
  %v772 = vunpack.c.h.b16 %v692
  %v773 = vunpack.c.l.b16 %v693
  %v774 = vunpack.c.h.b16 %v693
  %v775 = vpack.c.b16 %v745, %v743
  %v776 = vpack.c.b16 %v746, %v744
  %v777 = vpack.c.b16 %v749, %v747
  %v778 = vpack.c.b16 %v750, %v748
  %v779 = vpack.c.b16 %v753, %v751
  %v780 = vpack.c.b16 %v754, %v752
  %v781 = vpack.c.b16 %v757, %v755
  %v782 = vpack.c.b16 %v758, %v756
  %v783 = vpack.c.b16 %v761, %v759
  %v784 = vpack.c.b16 %v762, %v760
  %v785 = vpack.c.b16 %v765, %v763
  %v786 = vpack.c.b16 %v766, %v764
  %v787 = vpack.c.b16 %v769, %v767
  %v788 = vpack.c.b16 %v770, %v768
  %v789 = vpack.c.b16 %v773, %v771
  %v790 = vpack.c.b16 %v774, %v772
  %v839 = vunpack.c.l.b16 %v695
  %v840 = vunpack.c.l.b16 %v696
  %v841 = vunpack.c.l.b16 %v697
  %v842 = vunpack.c.l.b16 %v698
  %v843 = vunpack.c.l.b16 %v699
  %v844 = vunpack.c.l.b16 %v700
  %v845 = vunpack.c.l.b16 %v701
  %v846 = vunpack.c.l.b16 %v702
  %v847 = vunpack.c.l.b16 %v703
  %v848 = vunpack.c.l.b16 %v704
  %v849 = vunpack.c.l.b16 %v705
  %v850 = vunpack.c.l.b16 %v706
  %v851 = vunpack.c.l.b16 %v707
  %v852 = vunpack.c.l.b16 %v708
  %v853 = vunpack.c.l.b16 %v709
  %v854 = vunpack.c.l.b16 %v710
  %v855 = vunpack.c.l.b16 %v711
  %v856 = vunpack.c.l.b16 %v712
  %v857 = vunpack.c.l.b16 %v713
  %v858 = vunpack.c.l.b16 %v714
  %v859 = vunpack.c.l.b16 %v715
  %v860 = vunpack.c.l.b16 %v716
  %v861 = vunpack.c.l.b16 %v717
  %v862 = vunpack.c.l.b16 %v718
  %v863 = vunpack.c.l.b16 %v719
  %v864 = vunpack.c.l.b16 %v720
  %v865 = vunpack.c.l.b16 %v721
  %v866 = vunpack.c.l.b16 %v722
  %v867 = vunpack.c.l.b16 %v723
  %v868 = vunpack.c.l.b16 %v724
  %v869 = vunpack.c.l.b16 %v725
  %v870 = vunpack.c.l.b16 %v726
  %v871 = vpack.c.b16 %v840, %v839
  %v872 = vpack.c.b16 %v842, %v841
  %v873 = vpack.c.b16 %v844, %v843
  %v874 = vpack.c.b16 %v846, %v845
  %v875 = vpack.c.b16 %v848, %v847
  %v876 = vpack.c.b16 %v850, %v849
  %v877 = vpack.c.b16 %v852, %v851
  %v878 = vpack.c.b16 %v854, %v853
  %v879 = vpack.c.b16 %v856, %v855
  %v880 = vpack.c.b16 %v858, %v857
  %v881 = vpack.c.b16 %v860, %v859
  %v882 = vpack.c.b16 %v862, %v861
  %v883 = vpack.c.b16 %v864, %v863
  %v884 = vpack.c.b16 %v866, %v865
  %v885 = vpack.c.b16 %v868, %v867
  %v886 = vpack.c.b16 %v870, %v869
  %903 = vmatpush.bf16.msra.mxu0 %v878
  %904 = vmatpush.bf16.msra.mxu0 %v877
  %905 = vmatpush.bf16.msra.mxu0 %v876
  %906 = vmatpush.bf16.msra.mxu0 %v875
  %907 = vmatpush.bf16.msra.mxu0 %v874
  %908 = vmatpush.bf16.msra.mxu0 %v873
  %909 = vmatpush.bf16.msra.mxu0 %v872
  %910 = vmatpush.bf16.msra.mxu0 %v871
  %911 = vmatmul.bf16.gmra.mxu0 %v775
  %v912 = vpop.f32.mrf.mxu0
  %v913 = vadd.f32 %v77, %v912
  %v914 = vpop.f32.mrf.mxu0
  %v915 = vadd.f32 %v77, %v914
  %916 = vmatmul.bf16.gmra.mxu0 %v777
  %v917 = vpop.f32.mrf.mxu0
  %v918 = vadd.f32 %v77, %v917
  %v919 = vpop.f32.mrf.mxu0
  %v920 = vadd.f32 %v77, %v919
  %921 = vmatmul.bf16.gmra.mxu0 %v779
  %v922 = vpop.f32.mrf.mxu0
  %v923 = vadd.f32 %v77, %v922
  %v924 = vpop.f32.mrf.mxu0
  %v925 = vadd.f32 %v77, %v924
  %926 = vmatmul.bf16.gmra.mxu0 %v781
  %v927 = vpop.f32.mrf.mxu0
  %v928 = vadd.f32 %v77, %v927
  %v929 = vpop.f32.mrf.mxu0
  %v930 = vadd.f32 %v77, %v929
  %931 = vmatmul.bf16.gmra.mxu0 %v783
  %v932 = vpop.f32.mrf.mxu0
  %v933 = vadd.f32 %v77, %v932
  %v934 = vpop.f32.mrf.mxu0
  %v935 = vadd.f32 %v77, %v934
  %936 = vmatmul.bf16.gmra.mxu0 %v785
  %v937 = vpop.f32.mrf.mxu0
  %v938 = vadd.f32 %v77, %v937
  %v939 = vpop.f32.mrf.mxu0
  %v940 = vadd.f32 %v77, %v939
  %941 = vmatmul.bf16.gmra.mxu0 %v787
  %v942 = vpop.f32.mrf.mxu0
  %v943 = vadd.f32 %v77, %v942
  %v944 = vpop.f32.mrf.mxu0
  %v945 = vadd.f32 %v77, %v944
  %946 = vmatmul.bf16.gmra.mxu0 %v789
  %v947 = vpop.f32.mrf.mxu0
  %v948 = vadd.f32 %v77, %v947
  %v949 = vpop.f32.mrf.mxu0
  %v950 = vadd.f32 %v77, %v949
  %951 = vdwg.mxu0
  %952 = vmatpush.bf16.msra.mxu0 %v886
  %953 = vmatpush.bf16.msra.mxu0 %v885
  %954 = vmatpush.bf16.msra.mxu0 %v884
  %955 = vmatpush.bf16.msra.mxu0 %v883
  %956 = vmatpush.bf16.msra.mxu0 %v882
  %957 = vmatpush.bf16.msra.mxu0 %v881
  %958 = vmatpush.bf16.msra.mxu0 %v880
  %959 = vmatpush.bf16.msra.mxu0 %v879
  %960 = vmatmul.bf16.gmra.mxu0 %v776
  %v961 = vpop.f32.mrf.mxu0
  %v962 = vadd.f32 %v913, %v961
  %v963 = vpop.f32.mrf.mxu0
  %v964 = vadd.f32 %v915, %v963
  %965 = vmatmul.bf16.gmra.mxu0 %v778
  %v966 = vpop.f32.mrf.mxu0
  %v967 = vadd.f32 %v918, %v966
  %v968 = vpop.f32.mrf.mxu0
  %v969 = vadd.f32 %v920, %v968
  %970 = vmatmul.bf16.gmra.mxu0 %v780
  %v971 = vpop.f32.mrf.mxu0
  %v972 = vadd.f32 %v923, %v971
  %v973 = vpop.f32.mrf.mxu0
  %v974 = vadd.f32 %v925, %v973
  %975 = vmatmul.bf16.gmra.mxu0 %v782
  %v976 = vpop.f32.mrf.mxu0
  %v977 = vadd.f32 %v928, %v976
  %v978 = vpop.f32.mrf.mxu0
  %v979 = vadd.f32 %v930, %v978
  %980 = vmatmul.bf16.gmra.mxu0 %v784
  %v981 = vpop.f32.mrf.mxu0
  %v982 = vadd.f32 %v933, %v981
  %v983 = vpop.f32.mrf.mxu0
  %v984 = vadd.f32 %v935, %v983
  %985 = vmatmul.bf16.gmra.mxu0 %v786
  %v986 = vpop.f32.mrf.mxu0
  %v987 = vadd.f32 %v938, %v986
  %v988 = vpop.f32.mrf.mxu0
  %v989 = vadd.f32 %v940, %v988
  %990 = vmatmul.bf16.gmra.mxu0 %v788
  %v991 = vpop.f32.mrf.mxu0
  %v992 = vadd.f32 %v943, %v991
  %v993 = vpop.f32.mrf.mxu0
  %v994 = vadd.f32 %v945, %v993
  %995 = vmatmul.bf16.gmra.mxu0 %v790
  %v996 = vpop.f32.mrf.mxu0
  %v997 = vadd.f32 %v948, %v996
  %v998 = vpop.f32.mrf.mxu0
  %v999 = vadd.f32 %v950, %v998
  %1000 = vdwg.mxu0
  %s1001 = scalar_lea.vmem %s0, 384
  %v1002 = vld [vmem:[%s1001] sm:$0xff]
  %v1003 = vld [vmem:[%s1001 + $0x8] sm:$0xff]
  %v1004 = vld [vmem:[%s1001 + $0x10] sm:$0xff]
  %v1005 = vld [vmem:[%s1001 + $0x18] sm:$0xff]
  %v1006 = vld [vmem:[%s1001 + $0x20] sm:$0xff]
  %v1007 = vld [vmem:[%s1001 + $0x28] sm:$0xff]
  %v1008 = vld [vmem:[%s1001 + $0x30] sm:$0xff]
  %v1009 = vld [vmem:[%s1001 + $0x38] sm:$0xff]
  %v1010 = vld [vmem:[%s1001 + $0x40] sm:$0xff]
  %v1011 = vld [vmem:[%s1001 + $0x48] sm:$0xff]
  %v1012 = vld [vmem:[%s1001 + $0x50] sm:$0xff]
  %v1013 = vld [vmem:[%s1001 + $0x58] sm:$0xff]
  %v1014 = vld [vmem:[%s1001 + $0x60] sm:$0xff]
  %v1015 = vld [vmem:[%s1001 + $0x68] sm:$0xff]
  %v1016 = vld [vmem:[%s1001 + $0x70] sm:$0xff]
  %v1017 = vld [vmem:[%s1001 + $0x78] sm:$0xff]
  %s1018 = scalar_lea.vmem %s1, 384
  %v1019 = vld [vmem:[%s1018] sm:$0xf]
  %v1020 = vld [vmem:[%s1018 + $0x4] sm:$0xf]
  %v1021 = vld [vmem:[%s1018 + $0x8] sm:$0xf]
  %v1022 = vld [vmem:[%s1018 + $0xc] sm:$0xf]
  %v1023 = vld [vmem:[%s1018 + $0x10] sm:$0xf]
  %v1024 = vld [vmem:[%s1018 + $0x14] sm:$0xf]
  %v1025 = vld [vmem:[%s1018 + $0x18] sm:$0xf]
  %v1026 = vld [vmem:[%s1018 + $0x1c] sm:$0xf]
  %v1027 = vld [vmem:[%s1018 + $0x20] sm:$0xf]
  %v1028 = vld [vmem:[%s1018 + $0x24] sm:$0xf]
  %v1029 = vld [vmem:[%s1018 + $0x28] sm:$0xf]
  %v1030 = vld [vmem:[%s1018 + $0x2c] sm:$0xf]
  %v1031 = vld [vmem:[%s1018 + $0x30] sm:$0xf]
  %v1032 = vld [vmem:[%s1018 + $0x34] sm:$0xf]
  %v1033 = vld [vmem:[%s1018 + $0x38] sm:$0xf]
  %v1034 = vld [vmem:[%s1018 + $0x3c] sm:$0xf]
  %v1035 = vld [vmem:[%s1018 + $0x40] sm:$0xf]
  %v1036 = vld [vmem:[%s1018 + $0x44] sm:$0xf]
  %v1037 = vld [vmem:[%s1018 + $0x48] sm:$0xf]
  %v1038 = vld [vmem:[%s1018 + $0x4c] sm:$0xf]
  %v1039 = vld [vmem:[%s1018 + $0x50] sm:$0xf]
  %v1040 = vld [vmem:[%s1018 + $0x54] sm:$0xf]
  %v1041 = vld [vmem:[%s1018 + $0x58] sm:$0xf]
  %v1042 = vld [vmem:[%s1018 + $0x5c] sm:$0xf]
  %v1043 = vld [vmem:[%s1018 + $0x60] sm:$0xf]
  %v1044 = vld [vmem:[%s1018 + $0x64] sm:$0xf]
  %v1045 = vld [vmem:[%s1018 + $0x68] sm:$0xf]
  %v1046 = vld [vmem:[%s1018 + $0x6c] sm:$0xf]
  %v1047 = vld [vmem:[%s1018 + $0x70] sm:$0xf]
  %v1048 = vld [vmem:[%s1018 + $0x74] sm:$0xf]
  %v1049 = vld [vmem:[%s1018 + $0x78] sm:$0xf]
  %v1050 = vld [vmem:[%s1018 + $0x7c] sm:$0xf]
  %v1067 = vunpack.c.l.b16 %v1002
  %v1068 = vunpack.c.h.b16 %v1002
  %v1069 = vunpack.c.l.b16 %v1003
  %v1070 = vunpack.c.h.b16 %v1003
  %v1071 = vunpack.c.l.b16 %v1004
  %v1072 = vunpack.c.h.b16 %v1004
  %v1073 = vunpack.c.l.b16 %v1005
  %v1074 = vunpack.c.h.b16 %v1005
  %v1075 = vunpack.c.l.b16 %v1006
  %v1076 = vunpack.c.h.b16 %v1006
  %v1077 = vunpack.c.l.b16 %v1007
  %v1078 = vunpack.c.h.b16 %v1007
  %v1079 = vunpack.c.l.b16 %v1008
  %v1080 = vunpack.c.h.b16 %v1008
  %v1081 = vunpack.c.l.b16 %v1009
  %v1082 = vunpack.c.h.b16 %v1009
  %v1083 = vunpack.c.l.b16 %v1010
  %v1084 = vunpack.c.h.b16 %v1010
  %v1085 = vunpack.c.l.b16 %v1011
  %v1086 = vunpack.c.h.b16 %v1011
  %v1087 = vunpack.c.l.b16 %v1012
  %v1088 = vunpack.c.h.b16 %v1012
  %v1089 = vunpack.c.l.b16 %v1013
  %v1090 = vunpack.c.h.b16 %v1013
  %v1091 = vunpack.c.l.b16 %v1014
  %v1092 = vunpack.c.h.b16 %v1014
  %v1093 = vunpack.c.l.b16 %v1015
  %v1094 = vunpack.c.h.b16 %v1015
  %v1095 = vunpack.c.l.b16 %v1016
  %v1096 = vunpack.c.h.b16 %v1016
  %v1097 = vunpack.c.l.b16 %v1017
  %v1098 = vunpack.c.h.b16 %v1017
  %v1099 = vpack.c.b16 %v1069, %v1067
  %v1100 = vpack.c.b16 %v1070, %v1068
  %v1101 = vpack.c.b16 %v1073, %v1071
  %v1102 = vpack.c.b16 %v1074, %v1072
  %v1103 = vpack.c.b16 %v1077, %v1075
  %v1104 = vpack.c.b16 %v1078, %v1076
  %v1105 = vpack.c.b16 %v1081, %v1079
  %v1106 = vpack.c.b16 %v1082, %v1080
  %v1107 = vpack.c.b16 %v1085, %v1083
  %v1108 = vpack.c.b16 %v1086, %v1084
  %v1109 = vpack.c.b16 %v1089, %v1087
  %v1110 = vpack.c.b16 %v1090, %v1088
  %v1111 = vpack.c.b16 %v1093, %v1091
  %v1112 = vpack.c.b16 %v1094, %v1092
  %v1113 = vpack.c.b16 %v1097, %v1095
  %v1114 = vpack.c.b16 %v1098, %v1096
  %v1163 = vunpack.c.l.b16 %v1019
  %v1164 = vunpack.c.l.b16 %v1020
  %v1165 = vunpack.c.l.b16 %v1021
  %v1166 = vunpack.c.l.b16 %v1022
  %v1167 = vunpack.c.l.b16 %v1023
  %v1168 = vunpack.c.l.b16 %v1024
  %v1169 = vunpack.c.l.b16 %v1025
  %v1170 = vunpack.c.l.b16 %v1026
  %v1171 = vunpack.c.l.b16 %v1027
  %v1172 = vunpack.c.l.b16 %v1028
  %v1173 = vunpack.c.l.b16 %v1029
  %v1174 = vunpack.c.l.b16 %v1030
  %v1175 = vunpack.c.l.b16 %v1031
  %v1176 = vunpack.c.l.b16 %v1032
  %v1177 = vunpack.c.l.b16 %v1033
  %v1178 = vunpack.c.l.b16 %v1034
  %v1179 = vunpack.c.l.b16 %v1035
  %v1180 = vunpack.c.l.b16 %v1036
  %v1181 = vunpack.c.l.b16 %v1037
  %v1182 = vunpack.c.l.b16 %v1038
  %v1183 = vunpack.c.l.b16 %v1039
  %v1184 = vunpack.c.l.b16 %v1040
  %v1185 = vunpack.c.l.b16 %v1041
  %v1186 = vunpack.c.l.b16 %v1042
  %v1187 = vunpack.c.l.b16 %v1043
  %v1188 = vunpack.c.l.b16 %v1044
  %v1189 = vunpack.c.l.b16 %v1045
  %v1190 = vunpack.c.l.b16 %v1046
  %v1191 = vunpack.c.l.b16 %v1047
  %v1192 = vunpack.c.l.b16 %v1048
  %v1193 = vunpack.c.l.b16 %v1049
  %v1194 = vunpack.c.l.b16 %v1050
  %v1195 = vpack.c.b16 %v1164, %v1163
  %v1196 = vpack.c.b16 %v1166, %v1165
  %v1197 = vpack.c.b16 %v1168, %v1167
  %v1198 = vpack.c.b16 %v1170, %v1169
  %v1199 = vpack.c.b16 %v1172, %v1171
  %v1200 = vpack.c.b16 %v1174, %v1173
  %v1201 = vpack.c.b16 %v1176, %v1175
  %v1202 = vpack.c.b16 %v1178, %v1177
  %v1203 = vpack.c.b16 %v1180, %v1179
  %v1204 = vpack.c.b16 %v1182, %v1181
  %v1205 = vpack.c.b16 %v1184, %v1183
  %v1206 = vpack.c.b16 %v1186, %v1185
  %v1207 = vpack.c.b16 %v1188, %v1187
  %v1208 = vpack.c.b16 %v1190, %v1189
  %v1209 = vpack.c.b16 %v1192, %v1191
  %v1210 = vpack.c.b16 %v1194, %v1193
  %1227 = vmatpush.bf16.msra.mxu0 %v1202
  %1228 = vmatpush.bf16.msra.mxu0 %v1201
  %1229 = vmatpush.bf16.msra.mxu0 %v1200
  %1230 = vmatpush.bf16.msra.mxu0 %v1199
  %1231 = vmatpush.bf16.msra.mxu0 %v1198
  %1232 = vmatpush.bf16.msra.mxu0 %v1197
  %1233 = vmatpush.bf16.msra.mxu0 %v1196
  %1234 = vmatpush.bf16.msra.mxu0 %v1195
  %1235 = vmatmul.bf16.gmra.mxu0 %v1099
  %v1236 = vpop.f32.mrf.mxu0
  %v1237 = vadd.f32 %v77, %v1236
  %v1238 = vpop.f32.mrf.mxu0
  %v1239 = vadd.f32 %v77, %v1238
  %1240 = vmatmul.bf16.gmra.mxu0 %v1101
  %v1241 = vpop.f32.mrf.mxu0
  %v1242 = vadd.f32 %v77, %v1241
  %v1243 = vpop.f32.mrf.mxu0
  %v1244 = vadd.f32 %v77, %v1243
  %1245 = vmatmul.bf16.gmra.mxu0 %v1103
  %v1246 = vpop.f32.mrf.mxu0
  %v1247 = vadd.f32 %v77, %v1246
  %v1248 = vpop.f32.mrf.mxu0
  %v1249 = vadd.f32 %v77, %v1248
  %1250 = vmatmul.bf16.gmra.mxu0 %v1105
  %v1251 = vpop.f32.mrf.mxu0
  %v1252 = vadd.f32 %v77, %v1251
  %v1253 = vpop.f32.mrf.mxu0
  %v1254 = vadd.f32 %v77, %v1253
  %1255 = vmatmul.bf16.gmra.mxu0 %v1107
  %v1256 = vpop.f32.mrf.mxu0
  %v1257 = vadd.f32 %v77, %v1256
  %v1258 = vpop.f32.mrf.mxu0
  %v1259 = vadd.f32 %v77, %v1258
  %1260 = vmatmul.bf16.gmra.mxu0 %v1109
  %v1261 = vpop.f32.mrf.mxu0
  %v1262 = vadd.f32 %v77, %v1261
  %v1263 = vpop.f32.mrf.mxu0
  %v1264 = vadd.f32 %v77, %v1263
  %1265 = vmatmul.bf16.gmra.mxu0 %v1111
  %v1266 = vpop.f32.mrf.mxu0
  %v1267 = vadd.f32 %v77, %v1266
  %v1268 = vpop.f32.mrf.mxu0
  %v1269 = vadd.f32 %v77, %v1268
  %1270 = vmatmul.bf16.gmra.mxu0 %v1113
  %v1271 = vpop.f32.mrf.mxu0
  %v1272 = vadd.f32 %v77, %v1271
  %v1273 = vpop.f32.mrf.mxu0
  %v1274 = vadd.f32 %v77, %v1273
  %1275 = vdwg.mxu0
  %1276 = vmatpush.bf16.msra.mxu0 %v1210
  %1277 = vmatpush.bf16.msra.mxu0 %v1209
  %1278 = vmatpush.bf16.msra.mxu0 %v1208
  %1279 = vmatpush.bf16.msra.mxu0 %v1207
  %1280 = vmatpush.bf16.msra.mxu0 %v1206
  %1281 = vmatpush.bf16.msra.mxu0 %v1205
  %1282 = vmatpush.bf16.msra.mxu0 %v1204
  %1283 = vmatpush.bf16.msra.mxu0 %v1203
  %1284 = vmatmul.bf16.gmra.mxu0 %v1100
  %v1285 = vpop.f32.mrf.mxu0
  %v1286 = vadd.f32 %v1237, %v1285
  %v1287 = vpop.f32.mrf.mxu0
  %v1288 = vadd.f32 %v1239, %v1287
  %1289 = vmatmul.bf16.gmra.mxu0 %v1102
  %v1290 = vpop.f32.mrf.mxu0
  %v1291 = vadd.f32 %v1242, %v1290
  %v1292 = vpop.f32.mrf.mxu0
  %v1293 = vadd.f32 %v1244, %v1292
  %1294 = vmatmul.bf16.gmra.mxu0 %v1104
  %v1295 = vpop.f32.mrf.mxu0
  %v1296 = vadd.f32 %v1247, %v1295
  %v1297 = vpop.f32.mrf.mxu0
  %v1298 = vadd.f32 %v1249, %v1297
  %1299 = vmatmul.bf16.gmra.mxu0 %v1106
  %v1300 = vpop.f32.mrf.mxu0
  %v1301 = vadd.f32 %v1252, %v1300
  %v1302 = vpop.f32.mrf.mxu0
  %v1303 = vadd.f32 %v1254, %v1302
  %1304 = vmatmul.bf16.gmra.mxu0 %v1108
  %v1305 = vpop.f32.mrf.mxu0
  %v1306 = vadd.f32 %v1257, %v1305
  %v1307 = vpop.f32.mrf.mxu0
  %v1308 = vadd.f32 %v1259, %v1307
  %1309 = vmatmul.bf16.gmra.mxu0 %v1110
  %v1310 = vpop.f32.mrf.mxu0
  %v1311 = vadd.f32 %v1262, %v1310
  %v1312 = vpop.f32.mrf.mxu0
  %v1313 = vadd.f32 %v1264, %v1312
  %1314 = vmatmul.bf16.gmra.mxu0 %v1112
  %v1315 = vpop.f32.mrf.mxu0
  %v1316 = vadd.f32 %v1267, %v1315
  %v1317 = vpop.f32.mrf.mxu0
  %v1318 = vadd.f32 %v1269, %v1317
  %1319 = vmatmul.bf16.gmra.mxu0 %v1114
  %v1320 = vpop.f32.mrf.mxu0
  %v1321 = vadd.f32 %v1272, %v1320
  %v1322 = vpop.f32.mrf.mxu0
  %v1323 = vadd.f32 %v1274, %v1322
  %1324 = vdwg.mxu0
  %v1325 = vadd.f32 %v314, %v638
  %v1326 = vadd.f32 %v316, %v640
  %v1327 = vadd.f32 %v319, %v643
  %v1328 = vadd.f32 %v321, %v645
  %v1329 = vadd.f32 %v324, %v648
  %v1330 = vadd.f32 %v326, %v650
  %v1331 = vadd.f32 %v329, %v653
  %v1332 = vadd.f32 %v331, %v655
  %v1333 = vadd.f32 %v334, %v658
  %v1334 = vadd.f32 %v336, %v660
  %v1335 = vadd.f32 %v339, %v663
  %v1336 = vadd.f32 %v341, %v665
  %v1337 = vadd.f32 %v344, %v668
  %v1338 = vadd.f32 %v346, %v670
  %v1339 = vadd.f32 %v349, %v673
  %v1340 = vadd.f32 %v351, %v675
  %v1341 = vadd.f32 %v1325, %v962
  %v1342 = vadd.f32 %v1326, %v964
  %v1343 = vadd.f32 %v1327, %v967
  %v1344 = vadd.f32 %v1328, %v969
  %v1345 = vadd.f32 %v1329, %v972
  %v1346 = vadd.f32 %v1330, %v974
  %v1347 = vadd.f32 %v1331, %v977
  %v1348 = vadd.f32 %v1332, %v979
  %v1349 = vadd.f32 %v1333, %v982
  %v1350 = vadd.f32 %v1334, %v984
  %v1351 = vadd.f32 %v1335, %v987
  %v1352 = vadd.f32 %v1336, %v989
  %v1353 = vadd.f32 %v1337, %v992
  %v1354 = vadd.f32 %v1338, %v994
  %v1355 = vadd.f32 %v1339, %v997
  %v1356 = vadd.f32 %v1340, %v999
  %v1357 = vadd.f32 %v1341, %v1286
  %v1358 = vadd.f32 %v1342, %v1288
  %v1359 = vadd.f32 %v1343, %v1291
  %v1360 = vadd.f32 %v1344, %v1293
  %v1361 = vadd.f32 %v1345, %v1296
  %v1362 = vadd.f32 %v1346, %v1298
  %v1363 = vadd.f32 %v1347, %v1301
  %v1364 = vadd.f32 %v1348, %v1303
  %v1365 = vadd.f32 %v1349, %v1306
  %v1366 = vadd.f32 %v1350, %v1308
  %v1367 = vadd.f32 %v1351, %v1311
  %v1368 = vadd.f32 %v1352, %v1313
  %v1369 = vadd.f32 %v1353, %v1316
  %v1370 = vadd.f32 %v1354, %v1318
  %v1371 = vadd.f32 %v1355, %v1321
  %v1372 = vadd.f32 %v1356, %v1323
  %vm1373 = vcmask 261120
  %v1374 = vsel %vm1373, %v1357, 0.0
  %v1375 = vsel %vm1373, %v1358, 0.0
  %v1376 = vadd.f32 %v1374, %v1375
  %v1377 = vsel %vm1373, %v1359, 0.0
  %v1378 = vadd.f32 %v1376, %v1377
  %v1379 = vsel %vm1373, %v1360, 0.0
  %v1380 = vadd.f32 %v1378, %v1379
  %v1381 = vsel %vm1373, %v1361, 0.0
  %v1382 = vadd.f32 %v1380, %v1381
  %v1383 = vsel %vm1373, %v1362, 0.0
  %v1384 = vadd.f32 %v1382, %v1383
  %v1385 = vsel %vm1373, %v1363, 0.0
  %v1386 = vadd.f32 %v1384, %v1385
  %v1387 = vsel %vm1373, %v1364, 0.0
  %v1388 = vadd.f32 %v1386, %v1387
  %v1389 = vsel %vm1373, %v1365, 0.0
  %v1390 = vadd.f32 %v1388, %v1389
  %v1391 = vsel %vm1373, %v1366, 0.0
  %v1392 = vadd.f32 %v1390, %v1391
  %v1393 = vsel %vm1373, %v1367, 0.0
  %v1394 = vadd.f32 %v1392, %v1393
  %v1395 = vsel %vm1373, %v1368, 0.0
  %v1396 = vadd.f32 %v1394, %v1395
  %v1397 = vsel %vm1373, %v1369, 0.0
  %v1398 = vadd.f32 %v1396, %v1397
  %v1399 = vsel %vm1373, %v1370, 0.0
  %v1400 = vadd.f32 %v1398, %v1399
  %v1401 = vsel %vm1373, %v1371, 0.0
  %v1402 = vadd.f32 %v1400, %v1401
  %v1403 = vsel %vm1373, %v1372, 0.0
  %v1404 = vadd.f32 %v1402, %v1403
  %v1405 = vrot.slane %v1404, 4
  %v1406 = vadd.f32 %v1404, %v1405
  %v1407 = vrot.slane %v1406, 2
  %v1408 = vadd.f32 %v1406, %v1407
  %v1409 = vrot.slane %v1408, 1
  %v1410 = vadd.f32 %v1408, %v1409
  %v1411 = vmul.f32 %v1410, 0.001953125
  %v1412 = vsub.f32 %v314, %v1411
  %v1413 = vsub.f32 %v316, %v1411
  %v1414 = vsub.f32 %v319, %v1411
  %v1415 = vsub.f32 %v321, %v1411
  %v1416 = vsub.f32 %v324, %v1411
  %v1417 = vsub.f32 %v326, %v1411
  %v1418 = vsub.f32 %v329, %v1411
  %v1419 = vsub.f32 %v331, %v1411
  %v1420 = vsub.f32 %v334, %v1411
  %v1421 = vsub.f32 %v336, %v1411
  %v1422 = vsub.f32 %v339, %v1411
  %v1423 = vsub.f32 %v341, %v1411
  %v1424 = vsub.f32 %v344, %v1411
  %v1425 = vsub.f32 %v346, %v1411
  %v1426 = vsub.f32 %v349, %v1411
  %v1427 = vsub.f32 %v351, %v1411
  %v1428 = vmul.f32 %v1412, %v1412
  %v1429 = vmul.f32 %v1413, %v1413
  %v1430 = vmul.f32 %v1414, %v1414
  %v1431 = vmul.f32 %v1415, %v1415
  %v1432 = vmul.f32 %v1416, %v1416
  %v1433 = vmul.f32 %v1417, %v1417
  %v1434 = vmul.f32 %v1418, %v1418
  %v1435 = vmul.f32 %v1419, %v1419
  %v1436 = vmul.f32 %v1420, %v1420
  %v1437 = vmul.f32 %v1421, %v1421
  %v1438 = vmul.f32 %v1422, %v1422
  %v1439 = vmul.f32 %v1423, %v1423
  %v1440 = vmul.f32 %v1424, %v1424
  %v1441 = vmul.f32 %v1425, %v1425
  %v1442 = vmul.f32 %v1426, %v1426
  %v1443 = vmul.f32 %v1427, %v1427
  %v1444 = vsel %vm1373, %v1428, 0.0
  %v1445 = vsel %vm1373, %v1429, 0.0
  %v1446 = vadd.f32 %v1444, %v1445
  %v1447 = vsel %vm1373, %v1430, 0.0
  %v1448 = vadd.f32 %v1446, %v1447
  %v1449 = vsel %vm1373, %v1431, 0.0
  %v1450 = vadd.f32 %v1448, %v1449
  %v1451 = vsel %vm1373, %v1432, 0.0
  %v1452 = vadd.f32 %v1450, %v1451
  %v1453 = vsel %vm1373, %v1433, 0.0
  %v1454 = vadd.f32 %v1452, %v1453
  %v1455 = vsel %vm1373, %v1434, 0.0
  %v1456 = vadd.f32 %v1454, %v1455
  %v1457 = vsel %vm1373, %v1435, 0.0
  %v1458 = vadd.f32 %v1456, %v1457
  %v1459 = vsel %vm1373, %v1436, 0.0
  %v1460 = vadd.f32 %v1458, %v1459
  %v1461 = vsel %vm1373, %v1437, 0.0
  %v1462 = vadd.f32 %v1460, %v1461
  %v1463 = vsel %vm1373, %v1438, 0.0
  %v1464 = vadd.f32 %v1462, %v1463
  %v1465 = vsel %vm1373, %v1439, 0.0
  %v1466 = vadd.f32 %v1464, %v1465
  %v1467 = vsel %vm1373, %v1440, 0.0
  %v1468 = vadd.f32 %v1466, %v1467
  %v1469 = vsel %vm1373, %v1441, 0.0
  %v1470 = vadd.f32 %v1468, %v1469
  %v1471 = vsel %vm1373, %v1442, 0.0
  %v1472 = vadd.f32 %v1470, %v1471
  %v1473 = vsel %vm1373, %v1443, 0.0
  %v1474 = vadd.f32 %v1472, %v1473
  %v1475 = vrot.slane %v1474, 4
  %v1476 = vadd.f32 %v1474, %v1475
  %v1477 = vrot.slane %v1476, 2
  %v1478 = vadd.f32 %v1476, %v1477
  %v1479 = vrot.slane %v1478, 1
  %v1480 = vadd.f32 %v1478, %v1479
  %v1481 = vsub.f32 %v638, %v1411
  %v1482 = vsub.f32 %v640, %v1411
  %v1483 = vsub.f32 %v643, %v1411
  %v1484 = vsub.f32 %v645, %v1411
  %v1485 = vsub.f32 %v648, %v1411
  %v1486 = vsub.f32 %v650, %v1411
  %v1487 = vsub.f32 %v653, %v1411
  %v1488 = vsub.f32 %v655, %v1411
  %v1489 = vsub.f32 %v658, %v1411
  %v1490 = vsub.f32 %v660, %v1411
  %v1491 = vsub.f32 %v663, %v1411
  %v1492 = vsub.f32 %v665, %v1411
  %v1493 = vsub.f32 %v668, %v1411
  %v1494 = vsub.f32 %v670, %v1411
  %v1495 = vsub.f32 %v673, %v1411
  %v1496 = vsub.f32 %v675, %v1411
  %v1497 = vmul.f32 %v1481, %v1481
  %v1498 = vmul.f32 %v1482, %v1482
  %v1499 = vmul.f32 %v1483, %v1483
  %v1500 = vmul.f32 %v1484, %v1484
  %v1501 = vmul.f32 %v1485, %v1485
  %v1502 = vmul.f32 %v1486, %v1486
  %v1503 = vmul.f32 %v1487, %v1487
  %v1504 = vmul.f32 %v1488, %v1488
  %v1505 = vmul.f32 %v1489, %v1489
  %v1506 = vmul.f32 %v1490, %v1490
  %v1507 = vmul.f32 %v1491, %v1491
  %v1508 = vmul.f32 %v1492, %v1492
  %v1509 = vmul.f32 %v1493, %v1493
  %v1510 = vmul.f32 %v1494, %v1494
  %v1511 = vmul.f32 %v1495, %v1495
  %v1512 = vmul.f32 %v1496, %v1496
  %v1513 = vsel %vm1373, %v1497, 0.0
  %v1514 = vsel %vm1373, %v1498, 0.0
  %v1515 = vadd.f32 %v1513, %v1514
  %v1516 = vsel %vm1373, %v1499, 0.0
  %v1517 = vadd.f32 %v1515, %v1516
  %v1518 = vsel %vm1373, %v1500, 0.0
  %v1519 = vadd.f32 %v1517, %v1518
  %v1520 = vsel %vm1373, %v1501, 0.0
  %v1521 = vadd.f32 %v1519, %v1520
  %v1522 = vsel %vm1373, %v1502, 0.0
  %v1523 = vadd.f32 %v1521, %v1522
  %v1524 = vsel %vm1373, %v1503, 0.0
  %v1525 = vadd.f32 %v1523, %v1524
  %v1526 = vsel %vm1373, %v1504, 0.0
  %v1527 = vadd.f32 %v1525, %v1526
  %v1528 = vsel %vm1373, %v1505, 0.0
  %v1529 = vadd.f32 %v1527, %v1528
  %v1530 = vsel %vm1373, %v1506, 0.0
  %v1531 = vadd.f32 %v1529, %v1530
  %v1532 = vsel %vm1373, %v1507, 0.0
  %v1533 = vadd.f32 %v1531, %v1532
  %v1534 = vsel %vm1373, %v1508, 0.0
  %v1535 = vadd.f32 %v1533, %v1534
  %v1536 = vsel %vm1373, %v1509, 0.0
  %v1537 = vadd.f32 %v1535, %v1536
  %v1538 = vsel %vm1373, %v1510, 0.0
  %v1539 = vadd.f32 %v1537, %v1538
  %v1540 = vsel %vm1373, %v1511, 0.0
  %v1541 = vadd.f32 %v1539, %v1540
  %v1542 = vsel %vm1373, %v1512, 0.0
  %v1543 = vadd.f32 %v1541, %v1542
  %v1544 = vrot.slane %v1543, 4
  %v1545 = vadd.f32 %v1543, %v1544
  %v1546 = vrot.slane %v1545, 2
  %v1547 = vadd.f32 %v1545, %v1546
  %v1548 = vrot.slane %v1547, 1
  %v1549 = vadd.f32 %v1547, %v1548
  %v1550 = vadd.f32 %v1480, %v1549
  %v1551 = vsub.f32 %v962, %v1411
  %v1552 = vsub.f32 %v964, %v1411
  %v1553 = vsub.f32 %v967, %v1411
  %v1554 = vsub.f32 %v969, %v1411
  %v1555 = vsub.f32 %v972, %v1411
  %v1556 = vsub.f32 %v974, %v1411
  %v1557 = vsub.f32 %v977, %v1411
  %v1558 = vsub.f32 %v979, %v1411
  %v1559 = vsub.f32 %v982, %v1411
  %v1560 = vsub.f32 %v984, %v1411
  %v1561 = vsub.f32 %v987, %v1411
  %v1562 = vsub.f32 %v989, %v1411
  %v1563 = vsub.f32 %v992, %v1411
  %v1564 = vsub.f32 %v994, %v1411
  %v1565 = vsub.f32 %v997, %v1411
  %v1566 = vsub.f32 %v999, %v1411
  %v1567 = vmul.f32 %v1551, %v1551
  %v1568 = vmul.f32 %v1552, %v1552
  %v1569 = vmul.f32 %v1553, %v1553
  %v1570 = vmul.f32 %v1554, %v1554
  %v1571 = vmul.f32 %v1555, %v1555
  %v1572 = vmul.f32 %v1556, %v1556
  %v1573 = vmul.f32 %v1557, %v1557
  %v1574 = vmul.f32 %v1558, %v1558
  %v1575 = vmul.f32 %v1559, %v1559
  %v1576 = vmul.f32 %v1560, %v1560
  %v1577 = vmul.f32 %v1561, %v1561
  %v1578 = vmul.f32 %v1562, %v1562
  %v1579 = vmul.f32 %v1563, %v1563
  %v1580 = vmul.f32 %v1564, %v1564
  %v1581 = vmul.f32 %v1565, %v1565
  %v1582 = vmul.f32 %v1566, %v1566
  %v1583 = vsel %vm1373, %v1567, 0.0
  %v1584 = vsel %vm1373, %v1568, 0.0
  %v1585 = vadd.f32 %v1583, %v1584
  %v1586 = vsel %vm1373, %v1569, 0.0
  %v1587 = vadd.f32 %v1585, %v1586
  %v1588 = vsel %vm1373, %v1570, 0.0
  %v1589 = vadd.f32 %v1587, %v1588
  %v1590 = vsel %vm1373, %v1571, 0.0
  %v1591 = vadd.f32 %v1589, %v1590
  %v1592 = vsel %vm1373, %v1572, 0.0
  %v1593 = vadd.f32 %v1591, %v1592
  %v1594 = vsel %vm1373, %v1573, 0.0
  %v1595 = vadd.f32 %v1593, %v1594
  %v1596 = vsel %vm1373, %v1574, 0.0
  %v1597 = vadd.f32 %v1595, %v1596
  %v1598 = vsel %vm1373, %v1575, 0.0
  %v1599 = vadd.f32 %v1597, %v1598
  %v1600 = vsel %vm1373, %v1576, 0.0
  %v1601 = vadd.f32 %v1599, %v1600
  %v1602 = vsel %vm1373, %v1577, 0.0
  %v1603 = vadd.f32 %v1601, %v1602
  %v1604 = vsel %vm1373, %v1578, 0.0
  %v1605 = vadd.f32 %v1603, %v1604
  %v1606 = vsel %vm1373, %v1579, 0.0
  %v1607 = vadd.f32 %v1605, %v1606
  %v1608 = vsel %vm1373, %v1580, 0.0
  %v1609 = vadd.f32 %v1607, %v1608
  %v1610 = vsel %vm1373, %v1581, 0.0
  %v1611 = vadd.f32 %v1609, %v1610
  %v1612 = vsel %vm1373, %v1582, 0.0
  %v1613 = vadd.f32 %v1611, %v1612
  %v1614 = vrot.slane %v1613, 4
  %v1615 = vadd.f32 %v1613, %v1614
  %v1616 = vrot.slane %v1615, 2
  %v1617 = vadd.f32 %v1615, %v1616
  %v1618 = vrot.slane %v1617, 1
  %v1619 = vadd.f32 %v1617, %v1618
  %v1620 = vadd.f32 %v1550, %v1619
  %v1621 = vsub.f32 %v1286, %v1411
  %v1622 = vsub.f32 %v1288, %v1411
  %v1623 = vsub.f32 %v1291, %v1411
  %v1624 = vsub.f32 %v1293, %v1411
  %v1625 = vsub.f32 %v1296, %v1411
  %v1626 = vsub.f32 %v1298, %v1411
  %v1627 = vsub.f32 %v1301, %v1411
  %v1628 = vsub.f32 %v1303, %v1411
  %v1629 = vsub.f32 %v1306, %v1411
  %v1630 = vsub.f32 %v1308, %v1411
  %v1631 = vsub.f32 %v1311, %v1411
  %v1632 = vsub.f32 %v1313, %v1411
  %v1633 = vsub.f32 %v1316, %v1411
  %v1634 = vsub.f32 %v1318, %v1411
  %v1635 = vsub.f32 %v1321, %v1411
  %v1636 = vsub.f32 %v1323, %v1411
  %v1637 = vmul.f32 %v1621, %v1621
  %v1638 = vmul.f32 %v1622, %v1622
  %v1639 = vmul.f32 %v1623, %v1623
  %v1640 = vmul.f32 %v1624, %v1624
  %v1641 = vmul.f32 %v1625, %v1625
  %v1642 = vmul.f32 %v1626, %v1626
  %v1643 = vmul.f32 %v1627, %v1627
  %v1644 = vmul.f32 %v1628, %v1628
  %v1645 = vmul.f32 %v1629, %v1629
  %v1646 = vmul.f32 %v1630, %v1630
  %v1647 = vmul.f32 %v1631, %v1631
  %v1648 = vmul.f32 %v1632, %v1632
  %v1649 = vmul.f32 %v1633, %v1633
  %v1650 = vmul.f32 %v1634, %v1634
  %v1651 = vmul.f32 %v1635, %v1635
  %v1652 = vmul.f32 %v1636, %v1636
  %v1653 = vsel %vm1373, %v1637, 0.0
  %v1654 = vsel %vm1373, %v1638, 0.0
  %v1655 = vadd.f32 %v1653, %v1654
  %v1656 = vsel %vm1373, %v1639, 0.0
  %v1657 = vadd.f32 %v1655, %v1656
  %v1658 = vsel %vm1373, %v1640, 0.0
  %v1659 = vadd.f32 %v1657, %v1658
  %v1660 = vsel %vm1373, %v1641, 0.0
  %v1661 = vadd.f32 %v1659, %v1660
  %v1662 = vsel %vm1373, %v1642, 0.0
  %v1663 = vadd.f32 %v1661, %v1662
  %v1664 = vsel %vm1373, %v1643, 0.0
  %v1665 = vadd.f32 %v1663, %v1664
  %v1666 = vsel %vm1373, %v1644, 0.0
  %v1667 = vadd.f32 %v1665, %v1666
  %v1668 = vsel %vm1373, %v1645, 0.0
  %v1669 = vadd.f32 %v1667, %v1668
  %v1670 = vsel %vm1373, %v1646, 0.0
  %v1671 = vadd.f32 %v1669, %v1670
  %v1672 = vsel %vm1373, %v1647, 0.0
  %v1673 = vadd.f32 %v1671, %v1672
  %v1674 = vsel %vm1373, %v1648, 0.0
  %v1675 = vadd.f32 %v1673, %v1674
  %v1676 = vsel %vm1373, %v1649, 0.0
  %v1677 = vadd.f32 %v1675, %v1676
  %v1678 = vsel %vm1373, %v1650, 0.0
  %v1679 = vadd.f32 %v1677, %v1678
  %v1680 = vsel %vm1373, %v1651, 0.0
  %v1681 = vadd.f32 %v1679, %v1680
  %v1682 = vsel %vm1373, %v1652, 0.0
  %v1683 = vadd.f32 %v1681, %v1682
  %v1684 = vrot.slane %v1683, 4
  %v1685 = vadd.f32 %v1683, %v1684
  %v1686 = vrot.slane %v1685, 2
  %v1687 = vadd.f32 %v1685, %v1686
  %v1688 = vrot.slane %v1687, 1
  %v1689 = vadd.f32 %v1687, %v1688
  %v1690 = vadd.f32 %v1620, %v1689
  %v1691 = vmul.f32 %v1690, 0.001953125
  %v1692 = vadd.f32 %v1691, 1e-05
  %v1693 = vrsqrt.pop %v1692
  %v1694 = vmul.f32 %v1693, %v1692
  %v1695 = vmul.f32 %v1694, %v1693
  %v1696 = vmul.f32 0.5, %v1695
  %v1697 = vsub.f32 1.5, %v1696
  %v1698 = vmul.f32 %v1693, %v1697
  %vm1699 = vweird.f32 %v1692
  %vm1700 = vweird.f32 %v1693
  %vm1701 = vmor %vm1699, %vm1700
  %v1702 = vsel %vm1701, %v1693, %v1698
  %v1703 = vmul.f32 %v1412, %v1702
  %v1704 = vmul.f32 %v1413, %v1702
  %v1705 = vmul.f32 %v1414, %v1702
  %v1706 = vmul.f32 %v1415, %v1702
  %v1707 = vmul.f32 %v1416, %v1702
  %v1708 = vmul.f32 %v1417, %v1702
  %v1709 = vmul.f32 %v1418, %v1702
  %v1710 = vmul.f32 %v1419, %v1702
  %v1711 = vmul.f32 %v1420, %v1702
  %v1712 = vmul.f32 %v1421, %v1702
  %v1713 = vmul.f32 %v1422, %v1702
  %v1714 = vmul.f32 %v1423, %v1702
  %v1715 = vmul.f32 %v1424, %v1702
  %v1716 = vmul.f32 %v1425, %v1702
  %v1717 = vmul.f32 %v1426, %v1702
  %v1718 = vmul.f32 %v1427, %v1702
  %v1719 = vld [vmem:[%s3] sm:$0x1]
  %v1721 = vperm.slane %v1719, 0
  %v1723 = vmul.f32 %v1703, %v1721
  %v1724 = vmul.f32 %v1704, %v1721
  %v1725 = vmul.f32 %v1705, %v1721
  %v1726 = vmul.f32 %v1706, %v1721
  %v1727 = vmul.f32 %v1707, %v1721
  %v1728 = vmul.f32 %v1708, %v1721
  %v1729 = vmul.f32 %v1709, %v1721
  %v1730 = vmul.f32 %v1710, %v1721
  %v1731 = vmul.f32 %v1711, %v1721
  %v1732 = vmul.f32 %v1712, %v1721
  %v1733 = vmul.f32 %v1713, %v1721
  %v1734 = vmul.f32 %v1714, %v1721
  %v1735 = vmul.f32 %v1715, %v1721
  %v1736 = vmul.f32 %v1716, %v1721
  %v1737 = vmul.f32 %v1717, %v1721
  %v1738 = vmul.f32 %v1718, %v1721
  %v1739 = vld [vmem:[%s4] sm:$0x1]
  %v1741 = vperm.slane %v1739, 0
  %v1743 = vadd.f32 %v1723, %v1741
  %v1744 = vadd.f32 %v1724, %v1741
  %v1745 = vadd.f32 %v1725, %v1741
  %v1746 = vadd.f32 %v1726, %v1741
  %v1747 = vadd.f32 %v1727, %v1741
  %v1748 = vadd.f32 %v1728, %v1741
  %v1749 = vadd.f32 %v1729, %v1741
  %v1750 = vadd.f32 %v1730, %v1741
  %v1751 = vadd.f32 %v1731, %v1741
  %v1752 = vadd.f32 %v1732, %v1741
  %v1753 = vadd.f32 %v1733, %v1741
  %v1754 = vadd.f32 %v1734, %v1741
  %v1755 = vadd.f32 %v1735, %v1741
  %v1756 = vadd.f32 %v1736, %v1741
  %v1757 = vadd.f32 %v1737, %v1741
  %v1758 = vadd.f32 %v1738, %v1741
  %v1759 = vmax.f32 %v1743, 0.0
  %v1760 = vmax.f32 %v1744, 0.0
  %v1761 = vmax.f32 %v1745, 0.0
  %v1762 = vmax.f32 %v1746, 0.0
  %v1763 = vmax.f32 %v1747, 0.0
  %v1764 = vmax.f32 %v1748, 0.0
  %v1765 = vmax.f32 %v1749, 0.0
  %v1766 = vmax.f32 %v1750, 0.0
  %v1767 = vmax.f32 %v1751, 0.0
  %v1768 = vmax.f32 %v1752, 0.0
  %v1769 = vmax.f32 %v1753, 0.0
  %v1770 = vmax.f32 %v1754, 0.0
  %v1771 = vmax.f32 %v1755, 0.0
  %v1772 = vmax.f32 %v1756, 0.0
  %v1773 = vmax.f32 %v1757, 0.0
  %v1774 = vmax.f32 %v1758, 0.0
  %v1775 = vpack.c.bf16 %v1760, %v1759
  %v1776 = vpack.c.bf16 %v1762, %v1761
  %v1777 = vpack.c.bf16 %v1764, %v1763
  %v1778 = vpack.c.bf16 %v1766, %v1765
  %v1779 = vpack.c.bf16 %v1768, %v1767
  %v1780 = vpack.c.bf16 %v1770, %v1769
  %v1781 = vpack.c.bf16 %v1772, %v1771
  %v1782 = vpack.c.bf16 %v1774, %v1773
  %v1783 = vld [vmem:[%s5] sm:$0xf]
  %v1784 = vld [vmem:[%s5 + $0x4] sm:$0xf]
  %v1785 = vld [vmem:[%s5 + $0x8] sm:$0xf]
  %v1786 = vld [vmem:[%s5 + $0xc] sm:$0xf]
  %v1787 = vld [vmem:[%s6] sm:$0x1]
  %v1789 = vperm.slane %v1787, 0
  %v1795 = vunpack.c.l.b16 %v1783
  %v1796 = vunpack.c.l.b16 %v1784
  %v1797 = vunpack.c.l.b16 %v1785
  %v1798 = vunpack.c.l.b16 %v1786
  %v1799 = vpack.c.b16 %v1796, %v1795
  %v1800 = vpack.c.b16 %v1798, %v1797
  %v1804 = vsel %vm1373, %v1775, 0
  %v1807 = vsel %vm1373, %v1776, 0
  %v1810 = vsel %vm1373, %v1777, 0
  %v1813 = vsel %vm1373, %v1778, 0
  %v1816 = vsel %vm1373, %v1779, 0
  %v1819 = vsel %vm1373, %v1780, 0
  %v1822 = vsel %vm1373, %v1781, 0
  %v1825 = vsel %vm1373, %v1782, 0
  %1827 = vmatpush.bf16.msra.mxu0 0
  %1828 = vmatpush.bf16.msra.mxu0 0
  %1829 = vmatpush.bf16.msra.mxu0 0
  %1830 = vmatpush.bf16.msra.mxu0 0
  %1831 = vmatpush.bf16.msra.mxu0 0
  %1832 = vmatpush.bf16.msra.mxu0 0
  %1833 = vmatpush.bf16.msra.mxu0 %v1800
  %1834 = vmatpush.bf16.msra.mxu0 %v1799
  %1835 = vmatmul.bf16.gmra.mxu0 %v1804
  %v1836 = vpop.f32.mrf.mxu0
  %v1837 = vadd.f32 %v1789, %v1836
  %v1838 = vpop.f32.mrf.mxu0
  %v1839 = vadd.f32 %v1789, %v1838
  %1840 = vmatmul.bf16.gmra.mxu0 %v1807
  %v1841 = vpop.f32.mrf.mxu0
  %v1842 = vadd.f32 %v1789, %v1841
  %v1843 = vpop.f32.mrf.mxu0
  %v1844 = vadd.f32 %v1789, %v1843
  %1845 = vmatmul.bf16.gmra.mxu0 %v1810
  %v1846 = vpop.f32.mrf.mxu0
  %v1847 = vadd.f32 %v1789, %v1846
  %v1848 = vpop.f32.mrf.mxu0
  %v1849 = vadd.f32 %v1789, %v1848
  %1850 = vmatmul.bf16.gmra.mxu0 %v1813
  %v1851 = vpop.f32.mrf.mxu0
  %v1852 = vadd.f32 %v1789, %v1851
  %v1853 = vpop.f32.mrf.mxu0
  %v1854 = vadd.f32 %v1789, %v1853
  %1855 = vmatmul.bf16.gmra.mxu0 %v1816
  %v1856 = vpop.f32.mrf.mxu0
  %v1857 = vadd.f32 %v1789, %v1856
  %v1858 = vpop.f32.mrf.mxu0
  %v1859 = vadd.f32 %v1789, %v1858
  %1860 = vmatmul.bf16.gmra.mxu0 %v1819
  %v1861 = vpop.f32.mrf.mxu0
  %v1862 = vadd.f32 %v1789, %v1861
  %v1863 = vpop.f32.mrf.mxu0
  %v1864 = vadd.f32 %v1789, %v1863
  %1865 = vmatmul.bf16.gmra.mxu0 %v1822
  %v1866 = vpop.f32.mrf.mxu0
  %v1867 = vadd.f32 %v1789, %v1866
  %v1868 = vpop.f32.mrf.mxu0
  %v1869 = vadd.f32 %v1789, %v1868
  %1870 = vmatmul.bf16.gmra.mxu0 %v1825
  %v1871 = vpop.f32.mrf.mxu0
  %v1872 = vadd.f32 %v1789, %v1871
  %v1873 = vpop.f32.mrf.mxu0
  %v1874 = vadd.f32 %v1789, %v1873
  %1875 = vdwg.mxu0
  %v1876 = vsub.f32 0.0, %v1837
  %v1877 = vsub.f32 0.0, %v1839
  %v1878 = vsub.f32 0.0, %v1842
  %v1879 = vsub.f32 0.0, %v1844
  %v1880 = vsub.f32 0.0, %v1847
  %v1881 = vsub.f32 0.0, %v1849
  %v1882 = vsub.f32 0.0, %v1852
  %v1883 = vsub.f32 0.0, %v1854
  %v1884 = vsub.f32 0.0, %v1857
  %v1885 = vsub.f32 0.0, %v1859
  %v1886 = vsub.f32 0.0, %v1862
  %v1887 = vsub.f32 0.0, %v1864
  %v1888 = vsub.f32 0.0, %v1867
  %v1889 = vsub.f32 0.0, %v1869
  %v1890 = vsub.f32 0.0, %v1872
  %v1891 = vsub.f32 0.0, %v1874
  %v1892 = vmul.f32 %v1876, 1.442695
  %v1893 = vpow.pop %v1892
  %v1894 = vmul.f32 %v1877, 1.442695
  %v1895 = vpow.pop %v1894
  %v1896 = vmul.f32 %v1878, 1.442695
  %v1897 = vpow.pop %v1896
  %v1898 = vmul.f32 %v1879, 1.442695
  %v1899 = vpow.pop %v1898
  %v1900 = vmul.f32 %v1880, 1.442695
  %v1901 = vpow.pop %v1900
  %v1902 = vmul.f32 %v1881, 1.442695
  %v1903 = vpow.pop %v1902
  %v1904 = vmul.f32 %v1882, 1.442695
  %v1905 = vpow.pop %v1904
  %v1906 = vmul.f32 %v1883, 1.442695
  %v1907 = vpow.pop %v1906
  %v1908 = vmul.f32 %v1884, 1.442695
  %v1909 = vpow.pop %v1908
  %v1910 = vmul.f32 %v1885, 1.442695
  %v1911 = vpow.pop %v1910
  %v1912 = vmul.f32 %v1886, 1.442695
  %v1913 = vpow.pop %v1912
  %v1914 = vmul.f32 %v1887, 1.442695
  %v1915 = vpow.pop %v1914
  %v1916 = vmul.f32 %v1888, 1.442695
  %v1917 = vpow.pop %v1916
  %v1918 = vmul.f32 %v1889, 1.442695
  %v1919 = vpow.pop %v1918
  %v1920 = vmul.f32 %v1890, 1.442695
  %v1921 = vpow.pop %v1920
  %v1922 = vmul.f32 %v1891, 1.442695
  %v1923 = vpow.pop %v1922
  %v1924 = vadd.f32 %v1893, 1.0
  %v1925 = vadd.f32 %v1895, 1.0
  %v1926 = vadd.f32 %v1897, 1.0
  %v1927 = vadd.f32 %v1899, 1.0
  %v1928 = vadd.f32 %v1901, 1.0
  %v1929 = vadd.f32 %v1903, 1.0
  %v1930 = vadd.f32 %v1905, 1.0
  %v1931 = vadd.f32 %v1907, 1.0
  %v1932 = vadd.f32 %v1909, 1.0
  %v1933 = vadd.f32 %v1911, 1.0
  %v1934 = vadd.f32 %v1913, 1.0
  %v1935 = vadd.f32 %v1915, 1.0
  %v1936 = vadd.f32 %v1917, 1.0
  %v1937 = vadd.f32 %v1919, 1.0
  %v1938 = vadd.f32 %v1921, 1.0
  %v1939 = vadd.f32 %v1923, 1.0
  %v1940 = vrcp.pop %v1924
  %v1941 = vmul.f32 %v1924, %v1940
  %v1942 = vsub.f32 1.0, %v1941
  %v1943 = vmul.f32 %v1940, %v1942
  %v1944 = vadd.f32 %v1940, %v1943
  %vm1945 = vweird.f32 %v1924
  %vm1946 = vweird.f32 %v1940
  %vm1947 = vmor %vm1945, %vm1946
  %v1948 = vsel %vm1947, %v1940, %v1944
  %v1949 = vand.u32 2147483647, %v1924
  %vm1950 = vcmp.eq.f32.partialorder %v1949, 8.507059e+37
  %v1951 = vand.u32 %v1924, 2147483648
  %v1952 = vor.u32 1.1754944e-38, %v1951
  %v1953 = vsel %vm1950, %v1952, %v1948
  %v1954 = vrcp.pop %v1925
  %v1955 = vmul.f32 %v1925, %v1954
  %v1956 = vsub.f32 1.0, %v1955
  %v1957 = vmul.f32 %v1954, %v1956
  %v1958 = vadd.f32 %v1954, %v1957
  %vm1959 = vweird.f32 %v1925
  %vm1960 = vweird.f32 %v1954
  %vm1961 = vmor %vm1959, %vm1960
  %v1962 = vsel %vm1961, %v1954, %v1958
  %v1963 = vand.u32 2147483647, %v1925
  %vm1964 = vcmp.eq.f32.partialorder %v1963, 8.507059e+37
  %v1965 = vand.u32 %v1925, 2147483648
  %v1966 = vor.u32 1.1754944e-38, %v1965
  %v1967 = vsel %vm1964, %v1966, %v1962
  %v1968 = vrcp.pop %v1926
  %v1969 = vmul.f32 %v1926, %v1968
  %v1970 = vsub.f32 1.0, %v1969
  %v1971 = vmul.f32 %v1968, %v1970
  %v1972 = vadd.f32 %v1968, %v1971
  %vm1973 = vweird.f32 %v1926
  %vm1974 = vweird.f32 %v1968
  %vm1975 = vmor %vm1973, %vm1974
  %v1976 = vsel %vm1975, %v1968, %v1972
  %v1977 = vand.u32 2147483647, %v1926
  %vm1978 = vcmp.eq.f32.partialorder %v1977, 8.507059e+37
  %v1979 = vand.u32 %v1926, 2147483648
  %v1980 = vor.u32 1.1754944e-38, %v1979
  %v1981 = vsel %vm1978, %v1980, %v1976
  %v1982 = vrcp.pop %v1927
  %v1983 = vmul.f32 %v1927, %v1982
  %v1984 = vsub.f32 1.0, %v1983
  %v1985 = vmul.f32 %v1982, %v1984
  %v1986 = vadd.f32 %v1982, %v1985
  %vm1987 = vweird.f32 %v1927
  %vm1988 = vweird.f32 %v1982
  %vm1989 = vmor %vm1987, %vm1988
  %v1990 = vsel %vm1989, %v1982, %v1986
  %v1991 = vand.u32 2147483647, %v1927
  %vm1992 = vcmp.eq.f32.partialorder %v1991, 8.507059e+37
  %v1993 = vand.u32 %v1927, 2147483648
  %v1994 = vor.u32 1.1754944e-38, %v1993
  %v1995 = vsel %vm1992, %v1994, %v1990
  %v1996 = vrcp.pop %v1928
  %v1997 = vmul.f32 %v1928, %v1996
  %v1998 = vsub.f32 1.0, %v1997
  %v1999 = vmul.f32 %v1996, %v1998
  %v2000 = vadd.f32 %v1996, %v1999
  %vm2001 = vweird.f32 %v1928
  %vm2002 = vweird.f32 %v1996
  %vm2003 = vmor %vm2001, %vm2002
  %v2004 = vsel %vm2003, %v1996, %v2000
  %v2005 = vand.u32 2147483647, %v1928
  %vm2006 = vcmp.eq.f32.partialorder %v2005, 8.507059e+37
  %v2007 = vand.u32 %v1928, 2147483648
  %v2008 = vor.u32 1.1754944e-38, %v2007
  %v2009 = vsel %vm2006, %v2008, %v2004
  %v2010 = vrcp.pop %v1929
  %v2011 = vmul.f32 %v1929, %v2010
  %v2012 = vsub.f32 1.0, %v2011
  %v2013 = vmul.f32 %v2010, %v2012
  %v2014 = vadd.f32 %v2010, %v2013
  %vm2015 = vweird.f32 %v1929
  %vm2016 = vweird.f32 %v2010
  %vm2017 = vmor %vm2015, %vm2016
  %v2018 = vsel %vm2017, %v2010, %v2014
  %v2019 = vand.u32 2147483647, %v1929
  %vm2020 = vcmp.eq.f32.partialorder %v2019, 8.507059e+37
  %v2021 = vand.u32 %v1929, 2147483648
  %v2022 = vor.u32 1.1754944e-38, %v2021
  %v2023 = vsel %vm2020, %v2022, %v2018
  %v2024 = vrcp.pop %v1930
  %v2025 = vmul.f32 %v1930, %v2024
  %v2026 = vsub.f32 1.0, %v2025
  %v2027 = vmul.f32 %v2024, %v2026
  %v2028 = vadd.f32 %v2024, %v2027
  %vm2029 = vweird.f32 %v1930
  %vm2030 = vweird.f32 %v2024
  %vm2031 = vmor %vm2029, %vm2030
  %v2032 = vsel %vm2031, %v2024, %v2028
  %v2033 = vand.u32 2147483647, %v1930
  %vm2034 = vcmp.eq.f32.partialorder %v2033, 8.507059e+37
  %v2035 = vand.u32 %v1930, 2147483648
  %v2036 = vor.u32 1.1754944e-38, %v2035
  %v2037 = vsel %vm2034, %v2036, %v2032
  %v2038 = vrcp.pop %v1931
  %v2039 = vmul.f32 %v1931, %v2038
  %v2040 = vsub.f32 1.0, %v2039
  %v2041 = vmul.f32 %v2038, %v2040
  %v2042 = vadd.f32 %v2038, %v2041
  %vm2043 = vweird.f32 %v1931
  %vm2044 = vweird.f32 %v2038
  %vm2045 = vmor %vm2043, %vm2044
  %v2046 = vsel %vm2045, %v2038, %v2042
  %v2047 = vand.u32 2147483647, %v1931
  %vm2048 = vcmp.eq.f32.partialorder %v2047, 8.507059e+37
  %v2049 = vand.u32 %v1931, 2147483648
  %v2050 = vor.u32 1.1754944e-38, %v2049
  %v2051 = vsel %vm2048, %v2050, %v2046
  %v2052 = vrcp.pop %v1932
  %v2053 = vmul.f32 %v1932, %v2052
  %v2054 = vsub.f32 1.0, %v2053
  %v2055 = vmul.f32 %v2052, %v2054
  %v2056 = vadd.f32 %v2052, %v2055
  %vm2057 = vweird.f32 %v1932
  %vm2058 = vweird.f32 %v2052
  %vm2059 = vmor %vm2057, %vm2058
  %v2060 = vsel %vm2059, %v2052, %v2056
  %v2061 = vand.u32 2147483647, %v1932
  %vm2062 = vcmp.eq.f32.partialorder %v2061, 8.507059e+37
  %v2063 = vand.u32 %v1932, 2147483648
  %v2064 = vor.u32 1.1754944e-38, %v2063
  %v2065 = vsel %vm2062, %v2064, %v2060
  %v2066 = vrcp.pop %v1933
  %v2067 = vmul.f32 %v1933, %v2066
  %v2068 = vsub.f32 1.0, %v2067
  %v2069 = vmul.f32 %v2066, %v2068
  %v2070 = vadd.f32 %v2066, %v2069
  %vm2071 = vweird.f32 %v1933
  %vm2072 = vweird.f32 %v2066
  %vm2073 = vmor %vm2071, %vm2072
  %v2074 = vsel %vm2073, %v2066, %v2070
  %v2075 = vand.u32 2147483647, %v1933
  %vm2076 = vcmp.eq.f32.partialorder %v2075, 8.507059e+37
  %v2077 = vand.u32 %v1933, 2147483648
  %v2078 = vor.u32 1.1754944e-38, %v2077
  %v2079 = vsel %vm2076, %v2078, %v2074
  %v2080 = vrcp.pop %v1934
  %v2081 = vmul.f32 %v1934, %v2080
  %v2082 = vsub.f32 1.0, %v2081
  %v2083 = vmul.f32 %v2080, %v2082
  %v2084 = vadd.f32 %v2080, %v2083
  %vm2085 = vweird.f32 %v1934
  %vm2086 = vweird.f32 %v2080
  %vm2087 = vmor %vm2085, %vm2086
  %v2088 = vsel %vm2087, %v2080, %v2084
  %v2089 = vand.u32 2147483647, %v1934
  %vm2090 = vcmp.eq.f32.partialorder %v2089, 8.507059e+37
  %v2091 = vand.u32 %v1934, 2147483648
  %v2092 = vor.u32 1.1754944e-38, %v2091
  %v2093 = vsel %vm2090, %v2092, %v2088
  %v2094 = vrcp.pop %v1935
  %v2095 = vmul.f32 %v1935, %v2094
  %v2096 = vsub.f32 1.0, %v2095
  %v2097 = vmul.f32 %v2094, %v2096
  %v2098 = vadd.f32 %v2094, %v2097
  %vm2099 = vweird.f32 %v1935
  %vm2100 = vweird.f32 %v2094
  %vm2101 = vmor %vm2099, %vm2100
  %v2102 = vsel %vm2101, %v2094, %v2098
  %v2103 = vand.u32 2147483647, %v1935
  %vm2104 = vcmp.eq.f32.partialorder %v2103, 8.507059e+37
  %v2105 = vand.u32 %v1935, 2147483648
  %v2106 = vor.u32 1.1754944e-38, %v2105
  %v2107 = vsel %vm2104, %v2106, %v2102
  %v2108 = vrcp.pop %v1936
  %v2109 = vmul.f32 %v1936, %v2108
  %v2110 = vsub.f32 1.0, %v2109
  %v2111 = vmul.f32 %v2108, %v2110
  %v2112 = vadd.f32 %v2108, %v2111
  %vm2113 = vweird.f32 %v1936
  %vm2114 = vweird.f32 %v2108
  %vm2115 = vmor %vm2113, %vm2114
  %v2116 = vsel %vm2115, %v2108, %v2112
  %v2117 = vand.u32 2147483647, %v1936
  %vm2118 = vcmp.eq.f32.partialorder %v2117, 8.507059e+37
  %v2119 = vand.u32 %v1936, 2147483648
  %v2120 = vor.u32 1.1754944e-38, %v2119
  %v2121 = vsel %vm2118, %v2120, %v2116
  %v2122 = vrcp.pop %v1937
  %v2123 = vmul.f32 %v1937, %v2122
  %v2124 = vsub.f32 1.0, %v2123
  %v2125 = vmul.f32 %v2122, %v2124
  %v2126 = vadd.f32 %v2122, %v2125
  %vm2127 = vweird.f32 %v1937
  %vm2128 = vweird.f32 %v2122
  %vm2129 = vmor %vm2127, %vm2128
  %v2130 = vsel %vm2129, %v2122, %v2126
  %v2131 = vand.u32 2147483647, %v1937
  %vm2132 = vcmp.eq.f32.partialorder %v2131, 8.507059e+37
  %v2133 = vand.u32 %v1937, 2147483648
  %v2134 = vor.u32 1.1754944e-38, %v2133
  %v2135 = vsel %vm2132, %v2134, %v2130
  %v2136 = vrcp.pop %v1938
  %v2137 = vmul.f32 %v1938, %v2136
  %v2138 = vsub.f32 1.0, %v2137
  %v2139 = vmul.f32 %v2136, %v2138
  %v2140 = vadd.f32 %v2136, %v2139
  %vm2141 = vweird.f32 %v1938
  %vm2142 = vweird.f32 %v2136
  %vm2143 = vmor %vm2141, %vm2142
  %v2144 = vsel %vm2143, %v2136, %v2140
  %v2145 = vand.u32 2147483647, %v1938
  %vm2146 = vcmp.eq.f32.partialorder %v2145, 8.507059e+37
  %v2147 = vand.u32 %v1938, 2147483648
  %v2148 = vor.u32 1.1754944e-38, %v2147
  %v2149 = vsel %vm2146, %v2148, %v2144
  %v2150 = vrcp.pop %v1939
  %v2151 = vmul.f32 %v1939, %v2150
  %v2152 = vsub.f32 1.0, %v2151
  %v2153 = vmul.f32 %v2150, %v2152
  %v2154 = vadd.f32 %v2150, %v2153
  %vm2155 = vweird.f32 %v1939
  %vm2156 = vweird.f32 %v2150
  %vm2157 = vmor %vm2155, %vm2156
  %v2158 = vsel %vm2157, %v2150, %v2154
  %v2159 = vand.u32 2147483647, %v1939
  %vm2160 = vcmp.eq.f32.partialorder %v2159, 8.507059e+37
  %v2161 = vand.u32 %v1939, 2147483648
  %v2162 = vor.u32 1.1754944e-38, %v2161
  %v2163 = vsel %vm2160, %v2162, %v2158
  %vm2164 = vcmask 23552
  %2165 = vst.msk [vmem:[%s7] sm:$0xff] %vm2164, %v1953
  %2166 = vst.msk [vmem:[%s7 + $0x8] sm:$0xff] %vm2164, %v1967
  %2167 = vst.msk [vmem:[%s7 + $0x10] sm:$0xff] %vm2164, %v1981
  %2168 = vst.msk [vmem:[%s7 + $0x18] sm:$0xff] %vm2164, %v1995
  %2169 = vst.msk [vmem:[%s7 + $0x20] sm:$0xff] %vm2164, %v2009
  %2170 = vst.msk [vmem:[%s7 + $0x28] sm:$0xff] %vm2164, %v2023
  %2171 = vst.msk [vmem:[%s7 + $0x30] sm:$0xff] %vm2164, %v2037
  %2172 = vst.msk [vmem:[%s7 + $0x38] sm:$0xff] %vm2164, %v2051
  %2173 = vst.msk [vmem:[%s7 + $0x40] sm:$0xff] %vm2164, %v2065
  %2174 = vst.msk [vmem:[%s7 + $0x48] sm:$0xff] %vm2164, %v2079
  %2175 = vst.msk [vmem:[%s7 + $0x50] sm:$0xff] %vm2164, %v2093
  %2176 = vst.msk [vmem:[%s7 + $0x58] sm:$0xff] %vm2164, %v2107
  %2177 = vst.msk [vmem:[%s7 + $0x60] sm:$0xff] %vm2164, %v2121
  %2178 = vst.msk [vmem:[%s7 + $0x68] sm:$0xff] %vm2164, %v2135
  %2179 = vst.msk [vmem:[%s7 + $0x70] sm:$0xff] %vm2164, %v2149
  %2180 = vst.msk [vmem:[%s7 + $0x78] sm:$0xff] %vm2164, %v2163
  %v2181 = vmul.f32 %v1481, %v1702
  %v2182 = vmul.f32 %v1482, %v1702
  %v2183 = vmul.f32 %v1483, %v1702
  %v2184 = vmul.f32 %v1484, %v1702
  %v2185 = vmul.f32 %v1485, %v1702
  %v2186 = vmul.f32 %v1486, %v1702
  %v2187 = vmul.f32 %v1487, %v1702
  %v2188 = vmul.f32 %v1488, %v1702
  %v2189 = vmul.f32 %v1489, %v1702
  %v2190 = vmul.f32 %v1490, %v1702
  %v2191 = vmul.f32 %v1491, %v1702
  %v2192 = vmul.f32 %v1492, %v1702
  %v2193 = vmul.f32 %v1493, %v1702
  %v2194 = vmul.f32 %v1494, %v1702
  %v2195 = vmul.f32 %v1495, %v1702
  %v2196 = vmul.f32 %v1496, %v1702
  %v2197 = vld [vmem:[%s3] sm:$0x1]
  %v2199 = vperm.slane %v2197, 0
  %v2201 = vmul.f32 %v2181, %v2199
  %v2202 = vmul.f32 %v2182, %v2199
  %v2203 = vmul.f32 %v2183, %v2199
  %v2204 = vmul.f32 %v2184, %v2199
  %v2205 = vmul.f32 %v2185, %v2199
  %v2206 = vmul.f32 %v2186, %v2199
  %v2207 = vmul.f32 %v2187, %v2199
  %v2208 = vmul.f32 %v2188, %v2199
  %v2209 = vmul.f32 %v2189, %v2199
  %v2210 = vmul.f32 %v2190, %v2199
  %v2211 = vmul.f32 %v2191, %v2199
  %v2212 = vmul.f32 %v2192, %v2199
  %v2213 = vmul.f32 %v2193, %v2199
  %v2214 = vmul.f32 %v2194, %v2199
  %v2215 = vmul.f32 %v2195, %v2199
  %v2216 = vmul.f32 %v2196, %v2199
  %v2217 = vld [vmem:[%s4] sm:$0x1]
  %v2219 = vperm.slane %v2217, 0
  %v2221 = vadd.f32 %v2201, %v2219
  %v2222 = vadd.f32 %v2202, %v2219
  %v2223 = vadd.f32 %v2203, %v2219
  %v2224 = vadd.f32 %v2204, %v2219
  %v2225 = vadd.f32 %v2205, %v2219
  %v2226 = vadd.f32 %v2206, %v2219
  %v2227 = vadd.f32 %v2207, %v2219
  %v2228 = vadd.f32 %v2208, %v2219
  %v2229 = vadd.f32 %v2209, %v2219
  %v2230 = vadd.f32 %v2210, %v2219
  %v2231 = vadd.f32 %v2211, %v2219
  %v2232 = vadd.f32 %v2212, %v2219
  %v2233 = vadd.f32 %v2213, %v2219
  %v2234 = vadd.f32 %v2214, %v2219
  %v2235 = vadd.f32 %v2215, %v2219
  %v2236 = vadd.f32 %v2216, %v2219
  %v2237 = vmax.f32 %v2221, 0.0
  %v2238 = vmax.f32 %v2222, 0.0
  %v2239 = vmax.f32 %v2223, 0.0
  %v2240 = vmax.f32 %v2224, 0.0
  %v2241 = vmax.f32 %v2225, 0.0
  %v2242 = vmax.f32 %v2226, 0.0
  %v2243 = vmax.f32 %v2227, 0.0
  %v2244 = vmax.f32 %v2228, 0.0
  %v2245 = vmax.f32 %v2229, 0.0
  %v2246 = vmax.f32 %v2230, 0.0
  %v2247 = vmax.f32 %v2231, 0.0
  %v2248 = vmax.f32 %v2232, 0.0
  %v2249 = vmax.f32 %v2233, 0.0
  %v2250 = vmax.f32 %v2234, 0.0
  %v2251 = vmax.f32 %v2235, 0.0
  %v2252 = vmax.f32 %v2236, 0.0
  %v2253 = vpack.c.bf16 %v2238, %v2237
  %v2254 = vpack.c.bf16 %v2240, %v2239
  %v2255 = vpack.c.bf16 %v2242, %v2241
  %v2256 = vpack.c.bf16 %v2244, %v2243
  %v2257 = vpack.c.bf16 %v2246, %v2245
  %v2258 = vpack.c.bf16 %v2248, %v2247
  %v2259 = vpack.c.bf16 %v2250, %v2249
  %v2260 = vpack.c.bf16 %v2252, %v2251
  %v2261 = vld [vmem:[%s5] sm:$0xf]
  %v2262 = vld [vmem:[%s5 + $0x4] sm:$0xf]
  %v2263 = vld [vmem:[%s5 + $0x8] sm:$0xf]
  %v2264 = vld [vmem:[%s5 + $0xc] sm:$0xf]
  %v2265 = vld [vmem:[%s6] sm:$0x1]
  %v2267 = vperm.slane %v2265, 0
  %v2273 = vunpack.c.l.b16 %v2261
  %v2274 = vunpack.c.l.b16 %v2262
  %v2275 = vunpack.c.l.b16 %v2263
  %v2276 = vunpack.c.l.b16 %v2264
  %v2277 = vpack.c.b16 %v2274, %v2273
  %v2278 = vpack.c.b16 %v2276, %v2275
  %v2282 = vsel %vm1373, %v2253, 0
  %v2285 = vsel %vm1373, %v2254, 0
  %v2288 = vsel %vm1373, %v2255, 0
  %v2291 = vsel %vm1373, %v2256, 0
  %v2294 = vsel %vm1373, %v2257, 0
  %v2297 = vsel %vm1373, %v2258, 0
  %v2300 = vsel %vm1373, %v2259, 0
  %v2303 = vsel %vm1373, %v2260, 0
  %2305 = vmatpush.bf16.msra.mxu0 0
  %2306 = vmatpush.bf16.msra.mxu0 0
  %2307 = vmatpush.bf16.msra.mxu0 0
  %2308 = vmatpush.bf16.msra.mxu0 0
  %2309 = vmatpush.bf16.msra.mxu0 0
  %2310 = vmatpush.bf16.msra.mxu0 0
  %2311 = vmatpush.bf16.msra.mxu0 %v2278
  %2312 = vmatpush.bf16.msra.mxu0 %v2277
  %2313 = vmatmul.bf16.gmra.mxu0 %v2282
  %v2314 = vpop.f32.mrf.mxu0
  %v2315 = vadd.f32 %v2267, %v2314
  %v2316 = vpop.f32.mrf.mxu0
  %v2317 = vadd.f32 %v2267, %v2316
  %2318 = vmatmul.bf16.gmra.mxu0 %v2285
  %v2319 = vpop.f32.mrf.mxu0
  %v2320 = vadd.f32 %v2267, %v2319
  %v2321 = vpop.f32.mrf.mxu0
  %v2322 = vadd.f32 %v2267, %v2321
  %2323 = vmatmul.bf16.gmra.mxu0 %v2288
  %v2324 = vpop.f32.mrf.mxu0
  %v2325 = vadd.f32 %v2267, %v2324
  %v2326 = vpop.f32.mrf.mxu0
  %v2327 = vadd.f32 %v2267, %v2326
  %2328 = vmatmul.bf16.gmra.mxu0 %v2291
  %v2329 = vpop.f32.mrf.mxu0
  %v2330 = vadd.f32 %v2267, %v2329
  %v2331 = vpop.f32.mrf.mxu0
  %v2332 = vadd.f32 %v2267, %v2331
  %2333 = vmatmul.bf16.gmra.mxu0 %v2294
  %v2334 = vpop.f32.mrf.mxu0
  %v2335 = vadd.f32 %v2267, %v2334
  %v2336 = vpop.f32.mrf.mxu0
  %v2337 = vadd.f32 %v2267, %v2336
  %2338 = vmatmul.bf16.gmra.mxu0 %v2297
  %v2339 = vpop.f32.mrf.mxu0
  %v2340 = vadd.f32 %v2267, %v2339
  %v2341 = vpop.f32.mrf.mxu0
  %v2342 = vadd.f32 %v2267, %v2341
  %2343 = vmatmul.bf16.gmra.mxu0 %v2300
  %v2344 = vpop.f32.mrf.mxu0
  %v2345 = vadd.f32 %v2267, %v2344
  %v2346 = vpop.f32.mrf.mxu0
  %v2347 = vadd.f32 %v2267, %v2346
  %2348 = vmatmul.bf16.gmra.mxu0 %v2303
  %v2349 = vpop.f32.mrf.mxu0
  %v2350 = vadd.f32 %v2267, %v2349
  %v2351 = vpop.f32.mrf.mxu0
  %v2352 = vadd.f32 %v2267, %v2351
  %2353 = vdwg.mxu0
  %v2354 = vsub.f32 0.0, %v2315
  %v2355 = vsub.f32 0.0, %v2317
  %v2356 = vsub.f32 0.0, %v2320
  %v2357 = vsub.f32 0.0, %v2322
  %v2358 = vsub.f32 0.0, %v2325
  %v2359 = vsub.f32 0.0, %v2327
  %v2360 = vsub.f32 0.0, %v2330
  %v2361 = vsub.f32 0.0, %v2332
  %v2362 = vsub.f32 0.0, %v2335
  %v2363 = vsub.f32 0.0, %v2337
  %v2364 = vsub.f32 0.0, %v2340
  %v2365 = vsub.f32 0.0, %v2342
  %v2366 = vsub.f32 0.0, %v2345
  %v2367 = vsub.f32 0.0, %v2347
  %v2368 = vsub.f32 0.0, %v2350
  %v2369 = vsub.f32 0.0, %v2352
  %v2370 = vmul.f32 %v2354, 1.442695
  %v2371 = vpow.pop %v2370
  %v2372 = vmul.f32 %v2355, 1.442695
  %v2373 = vpow.pop %v2372
  %v2374 = vmul.f32 %v2356, 1.442695
  %v2375 = vpow.pop %v2374
  %v2376 = vmul.f32 %v2357, 1.442695
  %v2377 = vpow.pop %v2376
  %v2378 = vmul.f32 %v2358, 1.442695
  %v2379 = vpow.pop %v2378
  %v2380 = vmul.f32 %v2359, 1.442695
  %v2381 = vpow.pop %v2380
  %v2382 = vmul.f32 %v2360, 1.442695
  %v2383 = vpow.pop %v2382
  %v2384 = vmul.f32 %v2361, 1.442695
  %v2385 = vpow.pop %v2384
  %v2386 = vmul.f32 %v2362, 1.442695
  %v2387 = vpow.pop %v2386
  %v2388 = vmul.f32 %v2363, 1.442695
  %v2389 = vpow.pop %v2388
  %v2390 = vmul.f32 %v2364, 1.442695
  %v2391 = vpow.pop %v2390
  %v2392 = vmul.f32 %v2365, 1.442695
  %v2393 = vpow.pop %v2392
  %v2394 = vmul.f32 %v2366, 1.442695
  %v2395 = vpow.pop %v2394
  %v2396 = vmul.f32 %v2367, 1.442695
  %v2397 = vpow.pop %v2396
  %v2398 = vmul.f32 %v2368, 1.442695
  %v2399 = vpow.pop %v2398
  %v2400 = vmul.f32 %v2369, 1.442695
  %v2401 = vpow.pop %v2400
  %v2402 = vadd.f32 %v2371, 1.0
  %v2403 = vadd.f32 %v2373, 1.0
  %v2404 = vadd.f32 %v2375, 1.0
  %v2405 = vadd.f32 %v2377, 1.0
  %v2406 = vadd.f32 %v2379, 1.0
  %v2407 = vadd.f32 %v2381, 1.0
  %v2408 = vadd.f32 %v2383, 1.0
  %v2409 = vadd.f32 %v2385, 1.0
  %v2410 = vadd.f32 %v2387, 1.0
  %v2411 = vadd.f32 %v2389, 1.0
  %v2412 = vadd.f32 %v2391, 1.0
  %v2413 = vadd.f32 %v2393, 1.0
  %v2414 = vadd.f32 %v2395, 1.0
  %v2415 = vadd.f32 %v2397, 1.0
  %v2416 = vadd.f32 %v2399, 1.0
  %v2417 = vadd.f32 %v2401, 1.0
  %v2418 = vrcp.pop %v2402
  %v2419 = vmul.f32 %v2402, %v2418
  %v2420 = vsub.f32 1.0, %v2419
  %v2421 = vmul.f32 %v2418, %v2420
  %v2422 = vadd.f32 %v2418, %v2421
  %vm2423 = vweird.f32 %v2402
  %vm2424 = vweird.f32 %v2418
  %vm2425 = vmor %vm2423, %vm2424
  %v2426 = vsel %vm2425, %v2418, %v2422
  %v2427 = vand.u32 2147483647, %v2402
  %vm2428 = vcmp.eq.f32.partialorder %v2427, 8.507059e+37
  %v2429 = vand.u32 %v2402, 2147483648
  %v2430 = vor.u32 1.1754944e-38, %v2429
  %v2431 = vsel %vm2428, %v2430, %v2426
  %v2432 = vrcp.pop %v2403
  %v2433 = vmul.f32 %v2403, %v2432
  %v2434 = vsub.f32 1.0, %v2433
  %v2435 = vmul.f32 %v2432, %v2434
  %v2436 = vadd.f32 %v2432, %v2435
  %vm2437 = vweird.f32 %v2403
  %vm2438 = vweird.f32 %v2432
  %vm2439 = vmor %vm2437, %vm2438
  %v2440 = vsel %vm2439, %v2432, %v2436
  %v2441 = vand.u32 2147483647, %v2403
  %vm2442 = vcmp.eq.f32.partialorder %v2441, 8.507059e+37
  %v2443 = vand.u32 %v2403, 2147483648
  %v2444 = vor.u32 1.1754944e-38, %v2443
  %v2445 = vsel %vm2442, %v2444, %v2440
  %v2446 = vrcp.pop %v2404
  %v2447 = vmul.f32 %v2404, %v2446
  %v2448 = vsub.f32 1.0, %v2447
  %v2449 = vmul.f32 %v2446, %v2448
  %v2450 = vadd.f32 %v2446, %v2449
  %vm2451 = vweird.f32 %v2404
  %vm2452 = vweird.f32 %v2446
  %vm2453 = vmor %vm2451, %vm2452
  %v2454 = vsel %vm2453, %v2446, %v2450
  %v2455 = vand.u32 2147483647, %v2404
  %vm2456 = vcmp.eq.f32.partialorder %v2455, 8.507059e+37
  %v2457 = vand.u32 %v2404, 2147483648
  %v2458 = vor.u32 1.1754944e-38, %v2457
  %v2459 = vsel %vm2456, %v2458, %v2454
  %v2460 = vrcp.pop %v2405
  %v2461 = vmul.f32 %v2405, %v2460
  %v2462 = vsub.f32 1.0, %v2461
  %v2463 = vmul.f32 %v2460, %v2462
  %v2464 = vadd.f32 %v2460, %v2463
  %vm2465 = vweird.f32 %v2405
  %vm2466 = vweird.f32 %v2460
  %vm2467 = vmor %vm2465, %vm2466
  %v2468 = vsel %vm2467, %v2460, %v2464
  %v2469 = vand.u32 2147483647, %v2405
  %vm2470 = vcmp.eq.f32.partialorder %v2469, 8.507059e+37
  %v2471 = vand.u32 %v2405, 2147483648
  %v2472 = vor.u32 1.1754944e-38, %v2471
  %v2473 = vsel %vm2470, %v2472, %v2468
  %v2474 = vrcp.pop %v2406
  %v2475 = vmul.f32 %v2406, %v2474
  %v2476 = vsub.f32 1.0, %v2475
  %v2477 = vmul.f32 %v2474, %v2476
  %v2478 = vadd.f32 %v2474, %v2477
  %vm2479 = vweird.f32 %v2406
  %vm2480 = vweird.f32 %v2474
  %vm2481 = vmor %vm2479, %vm2480
  %v2482 = vsel %vm2481, %v2474, %v2478
  %v2483 = vand.u32 2147483647, %v2406
  %vm2484 = vcmp.eq.f32.partialorder %v2483, 8.507059e+37
  %v2485 = vand.u32 %v2406, 2147483648
  %v2486 = vor.u32 1.1754944e-38, %v2485
  %v2487 = vsel %vm2484, %v2486, %v2482
  %v2488 = vrcp.pop %v2407
  %v2489 = vmul.f32 %v2407, %v2488
  %v2490 = vsub.f32 1.0, %v2489
  %v2491 = vmul.f32 %v2488, %v2490
  %v2492 = vadd.f32 %v2488, %v2491
  %vm2493 = vweird.f32 %v2407
  %vm2494 = vweird.f32 %v2488
  %vm2495 = vmor %vm2493, %vm2494
  %v2496 = vsel %vm2495, %v2488, %v2492
  %v2497 = vand.u32 2147483647, %v2407
  %vm2498 = vcmp.eq.f32.partialorder %v2497, 8.507059e+37
  %v2499 = vand.u32 %v2407, 2147483648
  %v2500 = vor.u32 1.1754944e-38, %v2499
  %v2501 = vsel %vm2498, %v2500, %v2496
  %v2502 = vrcp.pop %v2408
  %v2503 = vmul.f32 %v2408, %v2502
  %v2504 = vsub.f32 1.0, %v2503
  %v2505 = vmul.f32 %v2502, %v2504
  %v2506 = vadd.f32 %v2502, %v2505
  %vm2507 = vweird.f32 %v2408
  %vm2508 = vweird.f32 %v2502
  %vm2509 = vmor %vm2507, %vm2508
  %v2510 = vsel %vm2509, %v2502, %v2506
  %v2511 = vand.u32 2147483647, %v2408
  %vm2512 = vcmp.eq.f32.partialorder %v2511, 8.507059e+37
  %v2513 = vand.u32 %v2408, 2147483648
  %v2514 = vor.u32 1.1754944e-38, %v2513
  %v2515 = vsel %vm2512, %v2514, %v2510
  %v2516 = vrcp.pop %v2409
  %v2517 = vmul.f32 %v2409, %v2516
  %v2518 = vsub.f32 1.0, %v2517
  %v2519 = vmul.f32 %v2516, %v2518
  %v2520 = vadd.f32 %v2516, %v2519
  %vm2521 = vweird.f32 %v2409
  %vm2522 = vweird.f32 %v2516
  %vm2523 = vmor %vm2521, %vm2522
  %v2524 = vsel %vm2523, %v2516, %v2520
  %v2525 = vand.u32 2147483647, %v2409
  %vm2526 = vcmp.eq.f32.partialorder %v2525, 8.507059e+37
  %v2527 = vand.u32 %v2409, 2147483648
  %v2528 = vor.u32 1.1754944e-38, %v2527
  %v2529 = vsel %vm2526, %v2528, %v2524
  %v2530 = vrcp.pop %v2410
  %v2531 = vmul.f32 %v2410, %v2530
  %v2532 = vsub.f32 1.0, %v2531
  %v2533 = vmul.f32 %v2530, %v2532
  %v2534 = vadd.f32 %v2530, %v2533
  %vm2535 = vweird.f32 %v2410
  %vm2536 = vweird.f32 %v2530
  %vm2537 = vmor %vm2535, %vm2536
  %v2538 = vsel %vm2537, %v2530, %v2534
  %v2539 = vand.u32 2147483647, %v2410
  %vm2540 = vcmp.eq.f32.partialorder %v2539, 8.507059e+37
  %v2541 = vand.u32 %v2410, 2147483648
  %v2542 = vor.u32 1.1754944e-38, %v2541
  %v2543 = vsel %vm2540, %v2542, %v2538
  %v2544 = vrcp.pop %v2411
  %v2545 = vmul.f32 %v2411, %v2544
  %v2546 = vsub.f32 1.0, %v2545
  %v2547 = vmul.f32 %v2544, %v2546
  %v2548 = vadd.f32 %v2544, %v2547
  %vm2549 = vweird.f32 %v2411
  %vm2550 = vweird.f32 %v2544
  %vm2551 = vmor %vm2549, %vm2550
  %v2552 = vsel %vm2551, %v2544, %v2548
  %v2553 = vand.u32 2147483647, %v2411
  %vm2554 = vcmp.eq.f32.partialorder %v2553, 8.507059e+37
  %v2555 = vand.u32 %v2411, 2147483648
  %v2556 = vor.u32 1.1754944e-38, %v2555
  %v2557 = vsel %vm2554, %v2556, %v2552
  %v2558 = vrcp.pop %v2412
  %v2559 = vmul.f32 %v2412, %v2558
  %v2560 = vsub.f32 1.0, %v2559
  %v2561 = vmul.f32 %v2558, %v2560
  %v2562 = vadd.f32 %v2558, %v2561
  %vm2563 = vweird.f32 %v2412
  %vm2564 = vweird.f32 %v2558
  %vm2565 = vmor %vm2563, %vm2564
  %v2566 = vsel %vm2565, %v2558, %v2562
  %v2567 = vand.u32 2147483647, %v2412
  %vm2568 = vcmp.eq.f32.partialorder %v2567, 8.507059e+37
  %v2569 = vand.u32 %v2412, 2147483648
  %v2570 = vor.u32 1.1754944e-38, %v2569
  %v2571 = vsel %vm2568, %v2570, %v2566
  %v2572 = vrcp.pop %v2413
  %v2573 = vmul.f32 %v2413, %v2572
  %v2574 = vsub.f32 1.0, %v2573
  %v2575 = vmul.f32 %v2572, %v2574
  %v2576 = vadd.f32 %v2572, %v2575
  %vm2577 = vweird.f32 %v2413
  %vm2578 = vweird.f32 %v2572
  %vm2579 = vmor %vm2577, %vm2578
  %v2580 = vsel %vm2579, %v2572, %v2576
  %v2581 = vand.u32 2147483647, %v2413
  %vm2582 = vcmp.eq.f32.partialorder %v2581, 8.507059e+37
  %v2583 = vand.u32 %v2413, 2147483648
  %v2584 = vor.u32 1.1754944e-38, %v2583
  %v2585 = vsel %vm2582, %v2584, %v2580
  %v2586 = vrcp.pop %v2414
  %v2587 = vmul.f32 %v2414, %v2586
  %v2588 = vsub.f32 1.0, %v2587
  %v2589 = vmul.f32 %v2586, %v2588
  %v2590 = vadd.f32 %v2586, %v2589
  %vm2591 = vweird.f32 %v2414
  %vm2592 = vweird.f32 %v2586
  %vm2593 = vmor %vm2591, %vm2592
  %v2594 = vsel %vm2593, %v2586, %v2590
  %v2595 = vand.u32 2147483647, %v2414
  %vm2596 = vcmp.eq.f32.partialorder %v2595, 8.507059e+37
  %v2597 = vand.u32 %v2414, 2147483648
  %v2598 = vor.u32 1.1754944e-38, %v2597
  %v2599 = vsel %vm2596, %v2598, %v2594
  %v2600 = vrcp.pop %v2415
  %v2601 = vmul.f32 %v2415, %v2600
  %v2602 = vsub.f32 1.0, %v2601
  %v2603 = vmul.f32 %v2600, %v2602
  %v2604 = vadd.f32 %v2600, %v2603
  %vm2605 = vweird.f32 %v2415
  %vm2606 = vweird.f32 %v2600
  %vm2607 = vmor %vm2605, %vm2606
  %v2608 = vsel %vm2607, %v2600, %v2604
  %v2609 = vand.u32 2147483647, %v2415
  %vm2610 = vcmp.eq.f32.partialorder %v2609, 8.507059e+37
  %v2611 = vand.u32 %v2415, 2147483648
  %v2612 = vor.u32 1.1754944e-38, %v2611
  %v2613 = vsel %vm2610, %v2612, %v2608
  %v2614 = vrcp.pop %v2416
  %v2615 = vmul.f32 %v2416, %v2614
  %v2616 = vsub.f32 1.0, %v2615
  %v2617 = vmul.f32 %v2614, %v2616
  %v2618 = vadd.f32 %v2614, %v2617
  %vm2619 = vweird.f32 %v2416
  %vm2620 = vweird.f32 %v2614
  %vm2621 = vmor %vm2619, %vm2620
  %v2622 = vsel %vm2621, %v2614, %v2618
  %v2623 = vand.u32 2147483647, %v2416
  %vm2624 = vcmp.eq.f32.partialorder %v2623, 8.507059e+37
  %v2625 = vand.u32 %v2416, 2147483648
  %v2626 = vor.u32 1.1754944e-38, %v2625
  %v2627 = vsel %vm2624, %v2626, %v2622
  %v2628 = vrcp.pop %v2417
  %v2629 = vmul.f32 %v2417, %v2628
  %v2630 = vsub.f32 1.0, %v2629
  %v2631 = vmul.f32 %v2628, %v2630
  %v2632 = vadd.f32 %v2628, %v2631
  %vm2633 = vweird.f32 %v2417
  %vm2634 = vweird.f32 %v2628
  %vm2635 = vmor %vm2633, %vm2634
  %v2636 = vsel %vm2635, %v2628, %v2632
  %v2637 = vand.u32 2147483647, %v2417
  %vm2638 = vcmp.eq.f32.partialorder %v2637, 8.507059e+37
  %v2639 = vand.u32 %v2417, 2147483648
  %v2640 = vor.u32 1.1754944e-38, %v2639
  %v2641 = vsel %vm2638, %v2640, %v2636
  %s2642 = scalar_lea.vmem %s7, 128
  %2643 = vst.msk [vmem:[%s2642] sm:$0xff] %vm2164, %v2431
  %2644 = vst.msk [vmem:[%s2642 + $0x8] sm:$0xff] %vm2164, %v2445
  %2645 = vst.msk [vmem:[%s2642 + $0x10] sm:$0xff] %vm2164, %v2459
  %2646 = vst.msk [vmem:[%s2642 + $0x18] sm:$0xff] %vm2164, %v2473
  %2647 = vst.msk [vmem:[%s2642 + $0x20] sm:$0xff] %vm2164, %v2487
  %2648 = vst.msk [vmem:[%s2642 + $0x28] sm:$0xff] %vm2164, %v2501
  %2649 = vst.msk [vmem:[%s2642 + $0x30] sm:$0xff] %vm2164, %v2515
  %2650 = vst.msk [vmem:[%s2642 + $0x38] sm:$0xff] %vm2164, %v2529
  %2651 = vst.msk [vmem:[%s2642 + $0x40] sm:$0xff] %vm2164, %v2543
  %2652 = vst.msk [vmem:[%s2642 + $0x48] sm:$0xff] %vm2164, %v2557
  %2653 = vst.msk [vmem:[%s2642 + $0x50] sm:$0xff] %vm2164, %v2571
  %2654 = vst.msk [vmem:[%s2642 + $0x58] sm:$0xff] %vm2164, %v2585
  %2655 = vst.msk [vmem:[%s2642 + $0x60] sm:$0xff] %vm2164, %v2599
  %2656 = vst.msk [vmem:[%s2642 + $0x68] sm:$0xff] %vm2164, %v2613
  %2657 = vst.msk [vmem:[%s2642 + $0x70] sm:$0xff] %vm2164, %v2627
  %2658 = vst.msk [vmem:[%s2642 + $0x78] sm:$0xff] %vm2164, %v2641
  %v2659 = vmul.f32 %v1551, %v1702
  %v2660 = vmul.f32 %v1552, %v1702
  %v2661 = vmul.f32 %v1553, %v1702
  %v2662 = vmul.f32 %v1554, %v1702
  %v2663 = vmul.f32 %v1555, %v1702
  %v2664 = vmul.f32 %v1556, %v1702
  %v2665 = vmul.f32 %v1557, %v1702
  %v2666 = vmul.f32 %v1558, %v1702
  %v2667 = vmul.f32 %v1559, %v1702
  %v2668 = vmul.f32 %v1560, %v1702
  %v2669 = vmul.f32 %v1561, %v1702
  %v2670 = vmul.f32 %v1562, %v1702
  %v2671 = vmul.f32 %v1563, %v1702
  %v2672 = vmul.f32 %v1564, %v1702
  %v2673 = vmul.f32 %v1565, %v1702
  %v2674 = vmul.f32 %v1566, %v1702
  %v2675 = vld [vmem:[%s3] sm:$0x1]
  %v2677 = vperm.slane %v2675, 0
  %v2679 = vmul.f32 %v2659, %v2677
  %v2680 = vmul.f32 %v2660, %v2677
  %v2681 = vmul.f32 %v2661, %v2677
  %v2682 = vmul.f32 %v2662, %v2677
  %v2683 = vmul.f32 %v2663, %v2677
  %v2684 = vmul.f32 %v2664, %v2677
  %v2685 = vmul.f32 %v2665, %v2677
  %v2686 = vmul.f32 %v2666, %v2677
  %v2687 = vmul.f32 %v2667, %v2677
  %v2688 = vmul.f32 %v2668, %v2677
  %v2689 = vmul.f32 %v2669, %v2677
  %v2690 = vmul.f32 %v2670, %v2677
  %v2691 = vmul.f32 %v2671, %v2677
  %v2692 = vmul.f32 %v2672, %v2677
  %v2693 = vmul.f32 %v2673, %v2677
  %v2694 = vmul.f32 %v2674, %v2677
  %v2695 = vld [vmem:[%s4] sm:$0x1]
  %v2697 = vperm.slane %v2695, 0
  %v2699 = vadd.f32 %v2679, %v2697
  %v2700 = vadd.f32 %v2680, %v2697
  %v2701 = vadd.f32 %v2681, %v2697
  %v2702 = vadd.f32 %v2682, %v2697
  %v2703 = vadd.f32 %v2683, %v2697
  %v2704 = vadd.f32 %v2684, %v2697
  %v2705 = vadd.f32 %v2685, %v2697
  %v2706 = vadd.f32 %v2686, %v2697
  %v2707 = vadd.f32 %v2687, %v2697
  %v2708 = vadd.f32 %v2688, %v2697
  %v2709 = vadd.f32 %v2689, %v2697
  %v2710 = vadd.f32 %v2690, %v2697
  %v2711 = vadd.f32 %v2691, %v2697
  %v2712 = vadd.f32 %v2692, %v2697
  %v2713 = vadd.f32 %v2693, %v2697
  %v2714 = vadd.f32 %v2694, %v2697
  %v2715 = vmax.f32 %v2699, 0.0
  %v2716 = vmax.f32 %v2700, 0.0
  %v2717 = vmax.f32 %v2701, 0.0
  %v2718 = vmax.f32 %v2702, 0.0
  %v2719 = vmax.f32 %v2703, 0.0
  %v2720 = vmax.f32 %v2704, 0.0
  %v2721 = vmax.f32 %v2705, 0.0
  %v2722 = vmax.f32 %v2706, 0.0
  %v2723 = vmax.f32 %v2707, 0.0
  %v2724 = vmax.f32 %v2708, 0.0
  %v2725 = vmax.f32 %v2709, 0.0
  %v2726 = vmax.f32 %v2710, 0.0
  %v2727 = vmax.f32 %v2711, 0.0
  %v2728 = vmax.f32 %v2712, 0.0
  %v2729 = vmax.f32 %v2713, 0.0
  %v2730 = vmax.f32 %v2714, 0.0
  %v2731 = vpack.c.bf16 %v2716, %v2715
  %v2732 = vpack.c.bf16 %v2718, %v2717
  %v2733 = vpack.c.bf16 %v2720, %v2719
  %v2734 = vpack.c.bf16 %v2722, %v2721
  %v2735 = vpack.c.bf16 %v2724, %v2723
  %v2736 = vpack.c.bf16 %v2726, %v2725
  %v2737 = vpack.c.bf16 %v2728, %v2727
  %v2738 = vpack.c.bf16 %v2730, %v2729
  %v2739 = vld [vmem:[%s5] sm:$0xf]
  %v2740 = vld [vmem:[%s5 + $0x4] sm:$0xf]
  %v2741 = vld [vmem:[%s5 + $0x8] sm:$0xf]
  %v2742 = vld [vmem:[%s5 + $0xc] sm:$0xf]
  %v2743 = vld [vmem:[%s6] sm:$0x1]
  %v2745 = vperm.slane %v2743, 0
  %v2751 = vunpack.c.l.b16 %v2739
  %v2752 = vunpack.c.l.b16 %v2740
  %v2753 = vunpack.c.l.b16 %v2741
  %v2754 = vunpack.c.l.b16 %v2742
  %v2755 = vpack.c.b16 %v2752, %v2751
  %v2756 = vpack.c.b16 %v2754, %v2753
  %v2760 = vsel %vm1373, %v2731, 0
  %v2763 = vsel %vm1373, %v2732, 0
  %v2766 = vsel %vm1373, %v2733, 0
  %v2769 = vsel %vm1373, %v2734, 0
  %v2772 = vsel %vm1373, %v2735, 0
  %v2775 = vsel %vm1373, %v2736, 0
  %v2778 = vsel %vm1373, %v2737, 0
  %v2781 = vsel %vm1373, %v2738, 0
  %2783 = vmatpush.bf16.msra.mxu0 0
  %2784 = vmatpush.bf16.msra.mxu0 0
  %2785 = vmatpush.bf16.msra.mxu0 0
  %2786 = vmatpush.bf16.msra.mxu0 0
  %2787 = vmatpush.bf16.msra.mxu0 0
  %2788 = vmatpush.bf16.msra.mxu0 0
  %2789 = vmatpush.bf16.msra.mxu0 %v2756
  %2790 = vmatpush.bf16.msra.mxu0 %v2755
  %2791 = vmatmul.bf16.gmra.mxu0 %v2760
  %v2792 = vpop.f32.mrf.mxu0
  %v2793 = vadd.f32 %v2745, %v2792
  %v2794 = vpop.f32.mrf.mxu0
  %v2795 = vadd.f32 %v2745, %v2794
  %2796 = vmatmul.bf16.gmra.mxu0 %v2763
  %v2797 = vpop.f32.mrf.mxu0
  %v2798 = vadd.f32 %v2745, %v2797
  %v2799 = vpop.f32.mrf.mxu0
  %v2800 = vadd.f32 %v2745, %v2799
  %2801 = vmatmul.bf16.gmra.mxu0 %v2766
  %v2802 = vpop.f32.mrf.mxu0
  %v2803 = vadd.f32 %v2745, %v2802
  %v2804 = vpop.f32.mrf.mxu0
  %v2805 = vadd.f32 %v2745, %v2804
  %2806 = vmatmul.bf16.gmra.mxu0 %v2769
  %v2807 = vpop.f32.mrf.mxu0
  %v2808 = vadd.f32 %v2745, %v2807
  %v2809 = vpop.f32.mrf.mxu0
  %v2810 = vadd.f32 %v2745, %v2809
  %2811 = vmatmul.bf16.gmra.mxu0 %v2772
  %v2812 = vpop.f32.mrf.mxu0
  %v2813 = vadd.f32 %v2745, %v2812
  %v2814 = vpop.f32.mrf.mxu0
  %v2815 = vadd.f32 %v2745, %v2814
  %2816 = vmatmul.bf16.gmra.mxu0 %v2775
  %v2817 = vpop.f32.mrf.mxu0
  %v2818 = vadd.f32 %v2745, %v2817
  %v2819 = vpop.f32.mrf.mxu0
  %v2820 = vadd.f32 %v2745, %v2819
  %2821 = vmatmul.bf16.gmra.mxu0 %v2778
  %v2822 = vpop.f32.mrf.mxu0
  %v2823 = vadd.f32 %v2745, %v2822
  %v2824 = vpop.f32.mrf.mxu0
  %v2825 = vadd.f32 %v2745, %v2824
  %2826 = vmatmul.bf16.gmra.mxu0 %v2781
  %v2827 = vpop.f32.mrf.mxu0
  %v2828 = vadd.f32 %v2745, %v2827
  %v2829 = vpop.f32.mrf.mxu0
  %v2830 = vadd.f32 %v2745, %v2829
  %2831 = vdwg.mxu0
  %v2832 = vsub.f32 0.0, %v2793
  %v2833 = vsub.f32 0.0, %v2795
  %v2834 = vsub.f32 0.0, %v2798
  %v2835 = vsub.f32 0.0, %v2800
  %v2836 = vsub.f32 0.0, %v2803
  %v2837 = vsub.f32 0.0, %v2805
  %v2838 = vsub.f32 0.0, %v2808
  %v2839 = vsub.f32 0.0, %v2810
  %v2840 = vsub.f32 0.0, %v2813
  %v2841 = vsub.f32 0.0, %v2815
  %v2842 = vsub.f32 0.0, %v2818
  %v2843 = vsub.f32 0.0, %v2820
  %v2844 = vsub.f32 0.0, %v2823
  %v2845 = vsub.f32 0.0, %v2825
  %v2846 = vsub.f32 0.0, %v2828
  %v2847 = vsub.f32 0.0, %v2830
  %v2848 = vmul.f32 %v2832, 1.442695
  %v2849 = vpow.pop %v2848
  %v2850 = vmul.f32 %v2833, 1.442695
  %v2851 = vpow.pop %v2850
  %v2852 = vmul.f32 %v2834, 1.442695
  %v2853 = vpow.pop %v2852
  %v2854 = vmul.f32 %v2835, 1.442695
  %v2855 = vpow.pop %v2854
  %v2856 = vmul.f32 %v2836, 1.442695
  %v2857 = vpow.pop %v2856
  %v2858 = vmul.f32 %v2837, 1.442695
  %v2859 = vpow.pop %v2858
  %v2860 = vmul.f32 %v2838, 1.442695
  %v2861 = vpow.pop %v2860
  %v2862 = vmul.f32 %v2839, 1.442695
  %v2863 = vpow.pop %v2862
  %v2864 = vmul.f32 %v2840, 1.442695
  %v2865 = vpow.pop %v2864
  %v2866 = vmul.f32 %v2841, 1.442695
  %v2867 = vpow.pop %v2866
  %v2868 = vmul.f32 %v2842, 1.442695
  %v2869 = vpow.pop %v2868
  %v2870 = vmul.f32 %v2843, 1.442695
  %v2871 = vpow.pop %v2870
  %v2872 = vmul.f32 %v2844, 1.442695
  %v2873 = vpow.pop %v2872
  %v2874 = vmul.f32 %v2845, 1.442695
  %v2875 = vpow.pop %v2874
  %v2876 = vmul.f32 %v2846, 1.442695
  %v2877 = vpow.pop %v2876
  %v2878 = vmul.f32 %v2847, 1.442695
  %v2879 = vpow.pop %v2878
  %v2880 = vadd.f32 %v2849, 1.0
  %v2881 = vadd.f32 %v2851, 1.0
  %v2882 = vadd.f32 %v2853, 1.0
  %v2883 = vadd.f32 %v2855, 1.0
  %v2884 = vadd.f32 %v2857, 1.0
  %v2885 = vadd.f32 %v2859, 1.0
  %v2886 = vadd.f32 %v2861, 1.0
  %v2887 = vadd.f32 %v2863, 1.0
  %v2888 = vadd.f32 %v2865, 1.0
  %v2889 = vadd.f32 %v2867, 1.0
  %v2890 = vadd.f32 %v2869, 1.0
  %v2891 = vadd.f32 %v2871, 1.0
  %v2892 = vadd.f32 %v2873, 1.0
  %v2893 = vadd.f32 %v2875, 1.0
  %v2894 = vadd.f32 %v2877, 1.0
  %v2895 = vadd.f32 %v2879, 1.0
  %v2896 = vrcp.pop %v2880
  %v2897 = vmul.f32 %v2880, %v2896
  %v2898 = vsub.f32 1.0, %v2897
  %v2899 = vmul.f32 %v2896, %v2898
  %v2900 = vadd.f32 %v2896, %v2899
  %vm2901 = vweird.f32 %v2880
  %vm2902 = vweird.f32 %v2896
  %vm2903 = vmor %vm2901, %vm2902
  %v2904 = vsel %vm2903, %v2896, %v2900
  %v2905 = vand.u32 2147483647, %v2880
  %vm2906 = vcmp.eq.f32.partialorder %v2905, 8.507059e+37
  %v2907 = vand.u32 %v2880, 2147483648
  %v2908 = vor.u32 1.1754944e-38, %v2907
  %v2909 = vsel %vm2906, %v2908, %v2904
  %v2910 = vrcp.pop %v2881
  %v2911 = vmul.f32 %v2881, %v2910
  %v2912 = vsub.f32 1.0, %v2911
  %v2913 = vmul.f32 %v2910, %v2912
  %v2914 = vadd.f32 %v2910, %v2913
  %vm2915 = vweird.f32 %v2881
  %vm2916 = vweird.f32 %v2910
  %vm2917 = vmor %vm2915, %vm2916
  %v2918 = vsel %vm2917, %v2910, %v2914
  %v2919 = vand.u32 2147483647, %v2881
  %vm2920 = vcmp.eq.f32.partialorder %v2919, 8.507059e+37
  %v2921 = vand.u32 %v2881, 2147483648
  %v2922 = vor.u32 1.1754944e-38, %v2921
  %v2923 = vsel %vm2920, %v2922, %v2918
  %v2924 = vrcp.pop %v2882
  %v2925 = vmul.f32 %v2882, %v2924
  %v2926 = vsub.f32 1.0, %v2925
  %v2927 = vmul.f32 %v2924, %v2926
  %v2928 = vadd.f32 %v2924, %v2927
  %vm2929 = vweird.f32 %v2882
  %vm2930 = vweird.f32 %v2924
  %vm2931 = vmor %vm2929, %vm2930
  %v2932 = vsel %vm2931, %v2924, %v2928
  %v2933 = vand.u32 2147483647, %v2882
  %vm2934 = vcmp.eq.f32.partialorder %v2933, 8.507059e+37
  %v2935 = vand.u32 %v2882, 2147483648
  %v2936 = vor.u32 1.1754944e-38, %v2935
  %v2937 = vsel %vm2934, %v2936, %v2932
  %v2938 = vrcp.pop %v2883
  %v2939 = vmul.f32 %v2883, %v2938
  %v2940 = vsub.f32 1.0, %v2939
  %v2941 = vmul.f32 %v2938, %v2940
  %v2942 = vadd.f32 %v2938, %v2941
  %vm2943 = vweird.f32 %v2883
  %vm2944 = vweird.f32 %v2938
  %vm2945 = vmor %vm2943, %vm2944
  %v2946 = vsel %vm2945, %v2938, %v2942
  %v2947 = vand.u32 2147483647, %v2883
  %vm2948 = vcmp.eq.f32.partialorder %v2947, 8.507059e+37
  %v2949 = vand.u32 %v2883, 2147483648
  %v2950 = vor.u32 1.1754944e-38, %v2949
  %v2951 = vsel %vm2948, %v2950, %v2946
  %v2952 = vrcp.pop %v2884
  %v2953 = vmul.f32 %v2884, %v2952
  %v2954 = vsub.f32 1.0, %v2953
  %v2955 = vmul.f32 %v2952, %v2954
  %v2956 = vadd.f32 %v2952, %v2955
  %vm2957 = vweird.f32 %v2884
  %vm2958 = vweird.f32 %v2952
  %vm2959 = vmor %vm2957, %vm2958
  %v2960 = vsel %vm2959, %v2952, %v2956
  %v2961 = vand.u32 2147483647, %v2884
  %vm2962 = vcmp.eq.f32.partialorder %v2961, 8.507059e+37
  %v2963 = vand.u32 %v2884, 2147483648
  %v2964 = vor.u32 1.1754944e-38, %v2963
  %v2965 = vsel %vm2962, %v2964, %v2960
  %v2966 = vrcp.pop %v2885
  %v2967 = vmul.f32 %v2885, %v2966
  %v2968 = vsub.f32 1.0, %v2967
  %v2969 = vmul.f32 %v2966, %v2968
  %v2970 = vadd.f32 %v2966, %v2969
  %vm2971 = vweird.f32 %v2885
  %vm2972 = vweird.f32 %v2966
  %vm2973 = vmor %vm2971, %vm2972
  %v2974 = vsel %vm2973, %v2966, %v2970
  %v2975 = vand.u32 2147483647, %v2885
  %vm2976 = vcmp.eq.f32.partialorder %v2975, 8.507059e+37
  %v2977 = vand.u32 %v2885, 2147483648
  %v2978 = vor.u32 1.1754944e-38, %v2977
  %v2979 = vsel %vm2976, %v2978, %v2974
  %v2980 = vrcp.pop %v2886
  %v2981 = vmul.f32 %v2886, %v2980
  %v2982 = vsub.f32 1.0, %v2981
  %v2983 = vmul.f32 %v2980, %v2982
  %v2984 = vadd.f32 %v2980, %v2983
  %vm2985 = vweird.f32 %v2886
  %vm2986 = vweird.f32 %v2980
  %vm2987 = vmor %vm2985, %vm2986
  %v2988 = vsel %vm2987, %v2980, %v2984
  %v2989 = vand.u32 2147483647, %v2886
  %vm2990 = vcmp.eq.f32.partialorder %v2989, 8.507059e+37
  %v2991 = vand.u32 %v2886, 2147483648
  %v2992 = vor.u32 1.1754944e-38, %v2991
  %v2993 = vsel %vm2990, %v2992, %v2988
  %v2994 = vrcp.pop %v2887
  %v2995 = vmul.f32 %v2887, %v2994
  %v2996 = vsub.f32 1.0, %v2995
  %v2997 = vmul.f32 %v2994, %v2996
  %v2998 = vadd.f32 %v2994, %v2997
  %vm2999 = vweird.f32 %v2887
  %vm3000 = vweird.f32 %v2994
  %vm3001 = vmor %vm2999, %vm3000
  %v3002 = vsel %vm3001, %v2994, %v2998
  %v3003 = vand.u32 2147483647, %v2887
  %vm3004 = vcmp.eq.f32.partialorder %v3003, 8.507059e+37
  %v3005 = vand.u32 %v2887, 2147483648
  %v3006 = vor.u32 1.1754944e-38, %v3005
  %v3007 = vsel %vm3004, %v3006, %v3002
  %v3008 = vrcp.pop %v2888
  %v3009 = vmul.f32 %v2888, %v3008
  %v3010 = vsub.f32 1.0, %v3009
  %v3011 = vmul.f32 %v3008, %v3010
  %v3012 = vadd.f32 %v3008, %v3011
  %vm3013 = vweird.f32 %v2888
  %vm3014 = vweird.f32 %v3008
  %vm3015 = vmor %vm3013, %vm3014
  %v3016 = vsel %vm3015, %v3008, %v3012
  %v3017 = vand.u32 2147483647, %v2888
  %vm3018 = vcmp.eq.f32.partialorder %v3017, 8.507059e+37
  %v3019 = vand.u32 %v2888, 2147483648
  %v3020 = vor.u32 1.1754944e-38, %v3019
  %v3021 = vsel %vm3018, %v3020, %v3016
  %v3022 = vrcp.pop %v2889
  %v3023 = vmul.f32 %v2889, %v3022
  %v3024 = vsub.f32 1.0, %v3023
  %v3025 = vmul.f32 %v3022, %v3024
  %v3026 = vadd.f32 %v3022, %v3025
  %vm3027 = vweird.f32 %v2889
  %vm3028 = vweird.f32 %v3022
  %vm3029 = vmor %vm3027, %vm3028
  %v3030 = vsel %vm3029, %v3022, %v3026
  %v3031 = vand.u32 2147483647, %v2889
  %vm3032 = vcmp.eq.f32.partialorder %v3031, 8.507059e+37
  %v3033 = vand.u32 %v2889, 2147483648
  %v3034 = vor.u32 1.1754944e-38, %v3033
  %v3035 = vsel %vm3032, %v3034, %v3030
  %v3036 = vrcp.pop %v2890
  %v3037 = vmul.f32 %v2890, %v3036
  %v3038 = vsub.f32 1.0, %v3037
  %v3039 = vmul.f32 %v3036, %v3038
  %v3040 = vadd.f32 %v3036, %v3039
  %vm3041 = vweird.f32 %v2890
  %vm3042 = vweird.f32 %v3036
  %vm3043 = vmor %vm3041, %vm3042
  %v3044 = vsel %vm3043, %v3036, %v3040
  %v3045 = vand.u32 2147483647, %v2890
  %vm3046 = vcmp.eq.f32.partialorder %v3045, 8.507059e+37
  %v3047 = vand.u32 %v2890, 2147483648
  %v3048 = vor.u32 1.1754944e-38, %v3047
  %v3049 = vsel %vm3046, %v3048, %v3044
  %v3050 = vrcp.pop %v2891
  %v3051 = vmul.f32 %v2891, %v3050
  %v3052 = vsub.f32 1.0, %v3051
  %v3053 = vmul.f32 %v3050, %v3052
  %v3054 = vadd.f32 %v3050, %v3053
  %vm3055 = vweird.f32 %v2891
  %vm3056 = vweird.f32 %v3050
  %vm3057 = vmor %vm3055, %vm3056
  %v3058 = vsel %vm3057, %v3050, %v3054
  %v3059 = vand.u32 2147483647, %v2891
  %vm3060 = vcmp.eq.f32.partialorder %v3059, 8.507059e+37
  %v3061 = vand.u32 %v2891, 2147483648
  %v3062 = vor.u32 1.1754944e-38, %v3061
  %v3063 = vsel %vm3060, %v3062, %v3058
  %v3064 = vrcp.pop %v2892
  %v3065 = vmul.f32 %v2892, %v3064
  %v3066 = vsub.f32 1.0, %v3065
  %v3067 = vmul.f32 %v3064, %v3066
  %v3068 = vadd.f32 %v3064, %v3067
  %vm3069 = vweird.f32 %v2892
  %vm3070 = vweird.f32 %v3064
  %vm3071 = vmor %vm3069, %vm3070
  %v3072 = vsel %vm3071, %v3064, %v3068
  %v3073 = vand.u32 2147483647, %v2892
  %vm3074 = vcmp.eq.f32.partialorder %v3073, 8.507059e+37
  %v3075 = vand.u32 %v2892, 2147483648
  %v3076 = vor.u32 1.1754944e-38, %v3075
  %v3077 = vsel %vm3074, %v3076, %v3072
  %v3078 = vrcp.pop %v2893
  %v3079 = vmul.f32 %v2893, %v3078
  %v3080 = vsub.f32 1.0, %v3079
  %v3081 = vmul.f32 %v3078, %v3080
  %v3082 = vadd.f32 %v3078, %v3081
  %vm3083 = vweird.f32 %v2893
  %vm3084 = vweird.f32 %v3078
  %vm3085 = vmor %vm3083, %vm3084
  %v3086 = vsel %vm3085, %v3078, %v3082
  %v3087 = vand.u32 2147483647, %v2893
  %vm3088 = vcmp.eq.f32.partialorder %v3087, 8.507059e+37
  %v3089 = vand.u32 %v2893, 2147483648
  %v3090 = vor.u32 1.1754944e-38, %v3089
  %v3091 = vsel %vm3088, %v3090, %v3086
  %v3092 = vrcp.pop %v2894
  %v3093 = vmul.f32 %v2894, %v3092
  %v3094 = vsub.f32 1.0, %v3093
  %v3095 = vmul.f32 %v3092, %v3094
  %v3096 = vadd.f32 %v3092, %v3095
  %vm3097 = vweird.f32 %v2894
  %vm3098 = vweird.f32 %v3092
  %vm3099 = vmor %vm3097, %vm3098
  %v3100 = vsel %vm3099, %v3092, %v3096
  %v3101 = vand.u32 2147483647, %v2894
  %vm3102 = vcmp.eq.f32.partialorder %v3101, 8.507059e+37
  %v3103 = vand.u32 %v2894, 2147483648
  %v3104 = vor.u32 1.1754944e-38, %v3103
  %v3105 = vsel %vm3102, %v3104, %v3100
  %v3106 = vrcp.pop %v2895
  %v3107 = vmul.f32 %v2895, %v3106
  %v3108 = vsub.f32 1.0, %v3107
  %v3109 = vmul.f32 %v3106, %v3108
  %v3110 = vadd.f32 %v3106, %v3109
  %vm3111 = vweird.f32 %v2895
  %vm3112 = vweird.f32 %v3106
  %vm3113 = vmor %vm3111, %vm3112
  %v3114 = vsel %vm3113, %v3106, %v3110
  %v3115 = vand.u32 2147483647, %v2895
  %vm3116 = vcmp.eq.f32.partialorder %v3115, 8.507059e+37
  %v3117 = vand.u32 %v2895, 2147483648
  %v3118 = vor.u32 1.1754944e-38, %v3117
  %v3119 = vsel %vm3116, %v3118, %v3114
  %s3120 = scalar_lea.vmem %s7, 256
  %3121 = vst.msk [vmem:[%s3120] sm:$0xff] %vm2164, %v2909
  %3122 = vst.msk [vmem:[%s3120 + $0x8] sm:$0xff] %vm2164, %v2923
  %3123 = vst.msk [vmem:[%s3120 + $0x10] sm:$0xff] %vm2164, %v2937
  %3124 = vst.msk [vmem:[%s3120 + $0x18] sm:$0xff] %vm2164, %v2951
  %3125 = vst.msk [vmem:[%s3120 + $0x20] sm:$0xff] %vm2164, %v2965
  %3126 = vst.msk [vmem:[%s3120 + $0x28] sm:$0xff] %vm2164, %v2979
  %3127 = vst.msk [vmem:[%s3120 + $0x30] sm:$0xff] %vm2164, %v2993
  %3128 = vst.msk [vmem:[%s3120 + $0x38] sm:$0xff] %vm2164, %v3007
  %3129 = vst.msk [vmem:[%s3120 + $0x40] sm:$0xff] %vm2164, %v3021
  %3130 = vst.msk [vmem:[%s3120 + $0x48] sm:$0xff] %vm2164, %v3035
  %3131 = vst.msk [vmem:[%s3120 + $0x50] sm:$0xff] %vm2164, %v3049
  %3132 = vst.msk [vmem:[%s3120 + $0x58] sm:$0xff] %vm2164, %v3063
  %3133 = vst.msk [vmem:[%s3120 + $0x60] sm:$0xff] %vm2164, %v3077
  %3134 = vst.msk [vmem:[%s3120 + $0x68] sm:$0xff] %vm2164, %v3091
  %3135 = vst.msk [vmem:[%s3120 + $0x70] sm:$0xff] %vm2164, %v3105
  %3136 = vst.msk [vmem:[%s3120 + $0x78] sm:$0xff] %vm2164, %v3119
  %v3137 = vmul.f32 %v1621, %v1702
  %v3138 = vmul.f32 %v1622, %v1702
  %v3139 = vmul.f32 %v1623, %v1702
  %v3140 = vmul.f32 %v1624, %v1702
  %v3141 = vmul.f32 %v1625, %v1702
  %v3142 = vmul.f32 %v1626, %v1702
  %v3143 = vmul.f32 %v1627, %v1702
  %v3144 = vmul.f32 %v1628, %v1702
  %v3145 = vmul.f32 %v1629, %v1702
  %v3146 = vmul.f32 %v1630, %v1702
  %v3147 = vmul.f32 %v1631, %v1702
  %v3148 = vmul.f32 %v1632, %v1702
  %v3149 = vmul.f32 %v1633, %v1702
  %v3150 = vmul.f32 %v1634, %v1702
  %v3151 = vmul.f32 %v1635, %v1702
  %v3152 = vmul.f32 %v1636, %v1702
  %v3153 = vld [vmem:[%s3] sm:$0x1]
  %v3155 = vperm.slane %v3153, 0
  %v3157 = vmul.f32 %v3137, %v3155
  %v3158 = vmul.f32 %v3138, %v3155
  %v3159 = vmul.f32 %v3139, %v3155
  %v3160 = vmul.f32 %v3140, %v3155
  %v3161 = vmul.f32 %v3141, %v3155
  %v3162 = vmul.f32 %v3142, %v3155
  %v3163 = vmul.f32 %v3143, %v3155
  %v3164 = vmul.f32 %v3144, %v3155
  %v3165 = vmul.f32 %v3145, %v3155
  %v3166 = vmul.f32 %v3146, %v3155
  %v3167 = vmul.f32 %v3147, %v3155
  %v3168 = vmul.f32 %v3148, %v3155
  %v3169 = vmul.f32 %v3149, %v3155
  %v3170 = vmul.f32 %v3150, %v3155
  %v3171 = vmul.f32 %v3151, %v3155
  %v3172 = vmul.f32 %v3152, %v3155
  %v3173 = vld [vmem:[%s4] sm:$0x1]
  %v3175 = vperm.slane %v3173, 0
  %v3177 = vadd.f32 %v3157, %v3175
  %v3178 = vadd.f32 %v3158, %v3175
  %v3179 = vadd.f32 %v3159, %v3175
  %v3180 = vadd.f32 %v3160, %v3175
  %v3181 = vadd.f32 %v3161, %v3175
  %v3182 = vadd.f32 %v3162, %v3175
  %v3183 = vadd.f32 %v3163, %v3175
  %v3184 = vadd.f32 %v3164, %v3175
  %v3185 = vadd.f32 %v3165, %v3175
  %v3186 = vadd.f32 %v3166, %v3175
  %v3187 = vadd.f32 %v3167, %v3175
  %v3188 = vadd.f32 %v3168, %v3175
  %v3189 = vadd.f32 %v3169, %v3175
  %v3190 = vadd.f32 %v3170, %v3175
  %v3191 = vadd.f32 %v3171, %v3175
  %v3192 = vadd.f32 %v3172, %v3175
  %v3193 = vmax.f32 %v3177, 0.0
  %v3194 = vmax.f32 %v3178, 0.0
  %v3195 = vmax.f32 %v3179, 0.0
  %v3196 = vmax.f32 %v3180, 0.0
  %v3197 = vmax.f32 %v3181, 0.0
  %v3198 = vmax.f32 %v3182, 0.0
  %v3199 = vmax.f32 %v3183, 0.0
  %v3200 = vmax.f32 %v3184, 0.0
  %v3201 = vmax.f32 %v3185, 0.0
  %v3202 = vmax.f32 %v3186, 0.0
  %v3203 = vmax.f32 %v3187, 0.0
  %v3204 = vmax.f32 %v3188, 0.0
  %v3205 = vmax.f32 %v3189, 0.0
  %v3206 = vmax.f32 %v3190, 0.0
  %v3207 = vmax.f32 %v3191, 0.0
  %v3208 = vmax.f32 %v3192, 0.0
  %v3209 = vpack.c.bf16 %v3194, %v3193
  %v3210 = vpack.c.bf16 %v3196, %v3195
  %v3211 = vpack.c.bf16 %v3198, %v3197
  %v3212 = vpack.c.bf16 %v3200, %v3199
  %v3213 = vpack.c.bf16 %v3202, %v3201
  %v3214 = vpack.c.bf16 %v3204, %v3203
  %v3215 = vpack.c.bf16 %v3206, %v3205
  %v3216 = vpack.c.bf16 %v3208, %v3207
  %v3217 = vld [vmem:[%s5] sm:$0xf]
  %v3218 = vld [vmem:[%s5 + $0x4] sm:$0xf]
  %v3219 = vld [vmem:[%s5 + $0x8] sm:$0xf]
  %v3220 = vld [vmem:[%s5 + $0xc] sm:$0xf]
  %v3221 = vld [vmem:[%s6] sm:$0x1]
  %v3223 = vperm.slane %v3221, 0
  %v3229 = vunpack.c.l.b16 %v3217
  %v3230 = vunpack.c.l.b16 %v3218
  %v3231 = vunpack.c.l.b16 %v3219
  %v3232 = vunpack.c.l.b16 %v3220
  %v3233 = vpack.c.b16 %v3230, %v3229
  %v3234 = vpack.c.b16 %v3232, %v3231
  %v3238 = vsel %vm1373, %v3209, 0
  %v3241 = vsel %vm1373, %v3210, 0
  %v3244 = vsel %vm1373, %v3211, 0
  %v3247 = vsel %vm1373, %v3212, 0
  %v3250 = vsel %vm1373, %v3213, 0
  %v3253 = vsel %vm1373, %v3214, 0
  %v3256 = vsel %vm1373, %v3215, 0
  %v3259 = vsel %vm1373, %v3216, 0
  %3261 = vmatpush.bf16.msra.mxu0 0
  %3262 = vmatpush.bf16.msra.mxu0 0
  %3263 = vmatpush.bf16.msra.mxu0 0
  %3264 = vmatpush.bf16.msra.mxu0 0
  %3265 = vmatpush.bf16.msra.mxu0 0
  %3266 = vmatpush.bf16.msra.mxu0 0
  %3267 = vmatpush.bf16.msra.mxu0 %v3234
  %3268 = vmatpush.bf16.msra.mxu0 %v3233
  %3269 = vmatmul.bf16.gmra.mxu0 %v3238
  %v3270 = vpop.f32.mrf.mxu0
  %v3271 = vadd.f32 %v3223, %v3270
  %v3272 = vpop.f32.mrf.mxu0
  %v3273 = vadd.f32 %v3223, %v3272
  %3274 = vmatmul.bf16.gmra.mxu0 %v3241
  %v3275 = vpop.f32.mrf.mxu0
  %v3276 = vadd.f32 %v3223, %v3275
  %v3277 = vpop.f32.mrf.mxu0
  %v3278 = vadd.f32 %v3223, %v3277
  %3279 = vmatmul.bf16.gmra.mxu0 %v3244
  %v3280 = vpop.f32.mrf.mxu0
  %v3281 = vadd.f32 %v3223, %v3280
  %v3282 = vpop.f32.mrf.mxu0
  %v3283 = vadd.f32 %v3223, %v3282
  %3284 = vmatmul.bf16.gmra.mxu0 %v3247
  %v3285 = vpop.f32.mrf.mxu0
  %v3286 = vadd.f32 %v3223, %v3285
  %v3287 = vpop.f32.mrf.mxu0
  %v3288 = vadd.f32 %v3223, %v3287
  %3289 = vmatmul.bf16.gmra.mxu0 %v3250
  %v3290 = vpop.f32.mrf.mxu0
  %v3291 = vadd.f32 %v3223, %v3290
  %v3292 = vpop.f32.mrf.mxu0
  %v3293 = vadd.f32 %v3223, %v3292
  %3294 = vmatmul.bf16.gmra.mxu0 %v3253
  %v3295 = vpop.f32.mrf.mxu0
  %v3296 = vadd.f32 %v3223, %v3295
  %v3297 = vpop.f32.mrf.mxu0
  %v3298 = vadd.f32 %v3223, %v3297
  %3299 = vmatmul.bf16.gmra.mxu0 %v3256
  %v3300 = vpop.f32.mrf.mxu0
  %v3301 = vadd.f32 %v3223, %v3300
  %v3302 = vpop.f32.mrf.mxu0
  %v3303 = vadd.f32 %v3223, %v3302
  %3304 = vmatmul.bf16.gmra.mxu0 %v3259
  %v3305 = vpop.f32.mrf.mxu0
  %v3306 = vadd.f32 %v3223, %v3305
  %v3307 = vpop.f32.mrf.mxu0
  %v3308 = vadd.f32 %v3223, %v3307
  %3309 = vdwg.mxu0
  %v3310 = vsub.f32 0.0, %v3271
  %v3311 = vsub.f32 0.0, %v3273
  %v3312 = vsub.f32 0.0, %v3276
  %v3313 = vsub.f32 0.0, %v3278
  %v3314 = vsub.f32 0.0, %v3281
  %v3315 = vsub.f32 0.0, %v3283
  %v3316 = vsub.f32 0.0, %v3286
  %v3317 = vsub.f32 0.0, %v3288
  %v3318 = vsub.f32 0.0, %v3291
  %v3319 = vsub.f32 0.0, %v3293
  %v3320 = vsub.f32 0.0, %v3296
  %v3321 = vsub.f32 0.0, %v3298
  %v3322 = vsub.f32 0.0, %v3301
  %v3323 = vsub.f32 0.0, %v3303
  %v3324 = vsub.f32 0.0, %v3306
  %v3325 = vsub.f32 0.0, %v3308
  %v3326 = vmul.f32 %v3310, 1.442695
  %v3327 = vpow.pop %v3326
  %v3328 = vmul.f32 %v3311, 1.442695
  %v3329 = vpow.pop %v3328
  %v3330 = vmul.f32 %v3312, 1.442695
  %v3331 = vpow.pop %v3330
  %v3332 = vmul.f32 %v3313, 1.442695
  %v3333 = vpow.pop %v3332
  %v3334 = vmul.f32 %v3314, 1.442695
  %v3335 = vpow.pop %v3334
  %v3336 = vmul.f32 %v3315, 1.442695
  %v3337 = vpow.pop %v3336
  %v3338 = vmul.f32 %v3316, 1.442695
  %v3339 = vpow.pop %v3338
  %v3340 = vmul.f32 %v3317, 1.442695
  %v3341 = vpow.pop %v3340
  %v3342 = vmul.f32 %v3318, 1.442695
  %v3343 = vpow.pop %v3342
  %v3344 = vmul.f32 %v3319, 1.442695
  %v3345 = vpow.pop %v3344
  %v3346 = vmul.f32 %v3320, 1.442695
  %v3347 = vpow.pop %v3346
  %v3348 = vmul.f32 %v3321, 1.442695
  %v3349 = vpow.pop %v3348
  %v3350 = vmul.f32 %v3322, 1.442695
  %v3351 = vpow.pop %v3350
  %v3352 = vmul.f32 %v3323, 1.442695
  %v3353 = vpow.pop %v3352
  %v3354 = vmul.f32 %v3324, 1.442695
  %v3355 = vpow.pop %v3354
  %v3356 = vmul.f32 %v3325, 1.442695
  %v3357 = vpow.pop %v3356
  %v3358 = vadd.f32 %v3327, 1.0
  %v3359 = vadd.f32 %v3329, 1.0
  %v3360 = vadd.f32 %v3331, 1.0
  %v3361 = vadd.f32 %v3333, 1.0
  %v3362 = vadd.f32 %v3335, 1.0
  %v3363 = vadd.f32 %v3337, 1.0
  %v3364 = vadd.f32 %v3339, 1.0
  %v3365 = vadd.f32 %v3341, 1.0
  %v3366 = vadd.f32 %v3343, 1.0
  %v3367 = vadd.f32 %v3345, 1.0
  %v3368 = vadd.f32 %v3347, 1.0
  %v3369 = vadd.f32 %v3349, 1.0
  %v3370 = vadd.f32 %v3351, 1.0
  %v3371 = vadd.f32 %v3353, 1.0
  %v3372 = vadd.f32 %v3355, 1.0
  %v3373 = vadd.f32 %v3357, 1.0
  %v3374 = vrcp.pop %v3358
  %v3375 = vmul.f32 %v3358, %v3374
  %v3376 = vsub.f32 1.0, %v3375
  %v3377 = vmul.f32 %v3374, %v3376
  %v3378 = vadd.f32 %v3374, %v3377
  %vm3379 = vweird.f32 %v3358
  %vm3380 = vweird.f32 %v3374
  %vm3381 = vmor %vm3379, %vm3380
  %v3382 = vsel %vm3381, %v3374, %v3378
  %v3383 = vand.u32 2147483647, %v3358
  %vm3384 = vcmp.eq.f32.partialorder %v3383, 8.507059e+37
  %v3385 = vand.u32 %v3358, 2147483648
  %v3386 = vor.u32 1.1754944e-38, %v3385
  %v3387 = vsel %vm3384, %v3386, %v3382
  %v3388 = vrcp.pop %v3359
  %v3389 = vmul.f32 %v3359, %v3388
  %v3390 = vsub.f32 1.0, %v3389
  %v3391 = vmul.f32 %v3388, %v3390
  %v3392 = vadd.f32 %v3388, %v3391
  %vm3393 = vweird.f32 %v3359
  %vm3394 = vweird.f32 %v3388
  %vm3395 = vmor %vm3393, %vm3394
  %v3396 = vsel %vm3395, %v3388, %v3392
  %v3397 = vand.u32 2147483647, %v3359
  %vm3398 = vcmp.eq.f32.partialorder %v3397, 8.507059e+37
  %v3399 = vand.u32 %v3359, 2147483648
  %v3400 = vor.u32 1.1754944e-38, %v3399
  %v3401 = vsel %vm3398, %v3400, %v3396
  %v3402 = vrcp.pop %v3360
  %v3403 = vmul.f32 %v3360, %v3402
  %v3404 = vsub.f32 1.0, %v3403
  %v3405 = vmul.f32 %v3402, %v3404
  %v3406 = vadd.f32 %v3402, %v3405
  %vm3407 = vweird.f32 %v3360
  %vm3408 = vweird.f32 %v3402
  %vm3409 = vmor %vm3407, %vm3408
  %v3410 = vsel %vm3409, %v3402, %v3406
  %v3411 = vand.u32 2147483647, %v3360
  %vm3412 = vcmp.eq.f32.partialorder %v3411, 8.507059e+37
  %v3413 = vand.u32 %v3360, 2147483648
  %v3414 = vor.u32 1.1754944e-38, %v3413
  %v3415 = vsel %vm3412, %v3414, %v3410
  %v3416 = vrcp.pop %v3361
  %v3417 = vmul.f32 %v3361, %v3416
  %v3418 = vsub.f32 1.0, %v3417
  %v3419 = vmul.f32 %v3416, %v3418
  %v3420 = vadd.f32 %v3416, %v3419
  %vm3421 = vweird.f32 %v3361
  %vm3422 = vweird.f32 %v3416
  %vm3423 = vmor %vm3421, %vm3422
  %v3424 = vsel %vm3423, %v3416, %v3420
  %v3425 = vand.u32 2147483647, %v3361
  %vm3426 = vcmp.eq.f32.partialorder %v3425, 8.507059e+37
  %v3427 = vand.u32 %v3361, 2147483648
  %v3428 = vor.u32 1.1754944e-38, %v3427
  %v3429 = vsel %vm3426, %v3428, %v3424
  %v3430 = vrcp.pop %v3362
  %v3431 = vmul.f32 %v3362, %v3430
  %v3432 = vsub.f32 1.0, %v3431
  %v3433 = vmul.f32 %v3430, %v3432
  %v3434 = vadd.f32 %v3430, %v3433
  %vm3435 = vweird.f32 %v3362
  %vm3436 = vweird.f32 %v3430
  %vm3437 = vmor %vm3435, %vm3436
  %v3438 = vsel %vm3437, %v3430, %v3434
  %v3439 = vand.u32 2147483647, %v3362
  %vm3440 = vcmp.eq.f32.partialorder %v3439, 8.507059e+37
  %v3441 = vand.u32 %v3362, 2147483648
  %v3442 = vor.u32 1.1754944e-38, %v3441
  %v3443 = vsel %vm3440, %v3442, %v3438
  %v3444 = vrcp.pop %v3363
  %v3445 = vmul.f32 %v3363, %v3444
  %v3446 = vsub.f32 1.0, %v3445
  %v3447 = vmul.f32 %v3444, %v3446
  %v3448 = vadd.f32 %v3444, %v3447
  %vm3449 = vweird.f32 %v3363
  %vm3450 = vweird.f32 %v3444
  %vm3451 = vmor %vm3449, %vm3450
  %v3452 = vsel %vm3451, %v3444, %v3448
  %v3453 = vand.u32 2147483647, %v3363
  %vm3454 = vcmp.eq.f32.partialorder %v3453, 8.507059e+37
  %v3455 = vand.u32 %v3363, 2147483648
  %v3456 = vor.u32 1.1754944e-38, %v3455
  %v3457 = vsel %vm3454, %v3456, %v3452
  %v3458 = vrcp.pop %v3364
  %v3459 = vmul.f32 %v3364, %v3458
  %v3460 = vsub.f32 1.0, %v3459
  %v3461 = vmul.f32 %v3458, %v3460
  %v3462 = vadd.f32 %v3458, %v3461
  %vm3463 = vweird.f32 %v3364
  %vm3464 = vweird.f32 %v3458
  %vm3465 = vmor %vm3463, %vm3464
  %v3466 = vsel %vm3465, %v3458, %v3462
  %v3467 = vand.u32 2147483647, %v3364
  %vm3468 = vcmp.eq.f32.partialorder %v3467, 8.507059e+37
  %v3469 = vand.u32 %v3364, 2147483648
  %v3470 = vor.u32 1.1754944e-38, %v3469
  %v3471 = vsel %vm3468, %v3470, %v3466
  %v3472 = vrcp.pop %v3365
  %v3473 = vmul.f32 %v3365, %v3472
  %v3474 = vsub.f32 1.0, %v3473
  %v3475 = vmul.f32 %v3472, %v3474
  %v3476 = vadd.f32 %v3472, %v3475
  %vm3477 = vweird.f32 %v3365
  %vm3478 = vweird.f32 %v3472
  %vm3479 = vmor %vm3477, %vm3478
  %v3480 = vsel %vm3479, %v3472, %v3476
  %v3481 = vand.u32 2147483647, %v3365
  %vm3482 = vcmp.eq.f32.partialorder %v3481, 8.507059e+37
  %v3483 = vand.u32 %v3365, 2147483648
  %v3484 = vor.u32 1.1754944e-38, %v3483
  %v3485 = vsel %vm3482, %v3484, %v3480
  %v3486 = vrcp.pop %v3366
  %v3487 = vmul.f32 %v3366, %v3486
  %v3488 = vsub.f32 1.0, %v3487
  %v3489 = vmul.f32 %v3486, %v3488
  %v3490 = vadd.f32 %v3486, %v3489
  %vm3491 = vweird.f32 %v3366
  %vm3492 = vweird.f32 %v3486
  %vm3493 = vmor %vm3491, %vm3492
  %v3494 = vsel %vm3493, %v3486, %v3490
  %v3495 = vand.u32 2147483647, %v3366
  %vm3496 = vcmp.eq.f32.partialorder %v3495, 8.507059e+37
  %v3497 = vand.u32 %v3366, 2147483648
  %v3498 = vor.u32 1.1754944e-38, %v3497
  %v3499 = vsel %vm3496, %v3498, %v3494
  %v3500 = vrcp.pop %v3367
  %v3501 = vmul.f32 %v3367, %v3500
  %v3502 = vsub.f32 1.0, %v3501
  %v3503 = vmul.f32 %v3500, %v3502
  %v3504 = vadd.f32 %v3500, %v3503
  %vm3505 = vweird.f32 %v3367
  %vm3506 = vweird.f32 %v3500
  %vm3507 = vmor %vm3505, %vm3506
  %v3508 = vsel %vm3507, %v3500, %v3504
  %v3509 = vand.u32 2147483647, %v3367
  %vm3510 = vcmp.eq.f32.partialorder %v3509, 8.507059e+37
  %v3511 = vand.u32 %v3367, 2147483648
  %v3512 = vor.u32 1.1754944e-38, %v3511
  %v3513 = vsel %vm3510, %v3512, %v3508
  %v3514 = vrcp.pop %v3368
  %v3515 = vmul.f32 %v3368, %v3514
  %v3516 = vsub.f32 1.0, %v3515
  %v3517 = vmul.f32 %v3514, %v3516
  %v3518 = vadd.f32 %v3514, %v3517
  %vm3519 = vweird.f32 %v3368
  %vm3520 = vweird.f32 %v3514
  %vm3521 = vmor %vm3519, %vm3520
  %v3522 = vsel %vm3521, %v3514, %v3518
  %v3523 = vand.u32 2147483647, %v3368
  %vm3524 = vcmp.eq.f32.partialorder %v3523, 8.507059e+37
  %v3525 = vand.u32 %v3368, 2147483648
  %v3526 = vor.u32 1.1754944e-38, %v3525
  %v3527 = vsel %vm3524, %v3526, %v3522
  %v3528 = vrcp.pop %v3369
  %v3529 = vmul.f32 %v3369, %v3528
  %v3530 = vsub.f32 1.0, %v3529
  %v3531 = vmul.f32 %v3528, %v3530
  %v3532 = vadd.f32 %v3528, %v3531
  %vm3533 = vweird.f32 %v3369
  %vm3534 = vweird.f32 %v3528
  %vm3535 = vmor %vm3533, %vm3534
  %v3536 = vsel %vm3535, %v3528, %v3532
  %v3537 = vand.u32 2147483647, %v3369
  %vm3538 = vcmp.eq.f32.partialorder %v3537, 8.507059e+37
  %v3539 = vand.u32 %v3369, 2147483648
  %v3540 = vor.u32 1.1754944e-38, %v3539
  %v3541 = vsel %vm3538, %v3540, %v3536
  %v3542 = vrcp.pop %v3370
  %v3543 = vmul.f32 %v3370, %v3542
  %v3544 = vsub.f32 1.0, %v3543
  %v3545 = vmul.f32 %v3542, %v3544
  %v3546 = vadd.f32 %v3542, %v3545
  %vm3547 = vweird.f32 %v3370
  %vm3548 = vweird.f32 %v3542
  %vm3549 = vmor %vm3547, %vm3548
  %v3550 = vsel %vm3549, %v3542, %v3546
  %v3551 = vand.u32 2147483647, %v3370
  %vm3552 = vcmp.eq.f32.partialorder %v3551, 8.507059e+37
  %v3553 = vand.u32 %v3370, 2147483648
  %v3554 = vor.u32 1.1754944e-38, %v3553
  %v3555 = vsel %vm3552, %v3554, %v3550
  %v3556 = vrcp.pop %v3371
  %v3557 = vmul.f32 %v3371, %v3556
  %v3558 = vsub.f32 1.0, %v3557
  %v3559 = vmul.f32 %v3556, %v3558
  %v3560 = vadd.f32 %v3556, %v3559
  %vm3561 = vweird.f32 %v3371
  %vm3562 = vweird.f32 %v3556
  %vm3563 = vmor %vm3561, %vm3562
  %v3564 = vsel %vm3563, %v3556, %v3560
  %v3565 = vand.u32 2147483647, %v3371
  %vm3566 = vcmp.eq.f32.partialorder %v3565, 8.507059e+37
  %v3567 = vand.u32 %v3371, 2147483648
  %v3568 = vor.u32 1.1754944e-38, %v3567
  %v3569 = vsel %vm3566, %v3568, %v3564
  %v3570 = vrcp.pop %v3372
  %v3571 = vmul.f32 %v3372, %v3570
  %v3572 = vsub.f32 1.0, %v3571
  %v3573 = vmul.f32 %v3570, %v3572
  %v3574 = vadd.f32 %v3570, %v3573
  %vm3575 = vweird.f32 %v3372
  %vm3576 = vweird.f32 %v3570
  %vm3577 = vmor %vm3575, %vm3576
  %v3578 = vsel %vm3577, %v3570, %v3574
  %v3579 = vand.u32 2147483647, %v3372
  %vm3580 = vcmp.eq.f32.partialorder %v3579, 8.507059e+37
  %v3581 = vand.u32 %v3372, 2147483648
  %v3582 = vor.u32 1.1754944e-38, %v3581
  %v3583 = vsel %vm3580, %v3582, %v3578
  %v3584 = vrcp.pop %v3373
  %v3585 = vmul.f32 %v3373, %v3584
  %v3586 = vsub.f32 1.0, %v3585
  %v3587 = vmul.f32 %v3584, %v3586
  %v3588 = vadd.f32 %v3584, %v3587
  %vm3589 = vweird.f32 %v3373
  %vm3590 = vweird.f32 %v3584
  %vm3591 = vmor %vm3589, %vm3590
  %v3592 = vsel %vm3591, %v3584, %v3588
  %v3593 = vand.u32 2147483647, %v3373
  %vm3594 = vcmp.eq.f32.partialorder %v3593, 8.507059e+37
  %v3595 = vand.u32 %v3373, 2147483648
  %v3596 = vor.u32 1.1754944e-38, %v3595
  %v3597 = vsel %vm3594, %v3596, %v3592
  %s3598 = scalar_lea.vmem %s7, 384
  %3599 = vst.msk [vmem:[%s3598] sm:$0xff] %vm2164, %v3387
  %3600 = vst.msk [vmem:[%s3598 + $0x8] sm:$0xff] %vm2164, %v3401
  %3601 = vst.msk [vmem:[%s3598 + $0x10] sm:$0xff] %vm2164, %v3415
  %3602 = vst.msk [vmem:[%s3598 + $0x18] sm:$0xff] %vm2164, %v3429
  %3603 = vst.msk [vmem:[%s3598 + $0x20] sm:$0xff] %vm2164, %v3443
  %3604 = vst.msk [vmem:[%s3598 + $0x28] sm:$0xff] %vm2164, %v3457
  %3605 = vst.msk [vmem:[%s3598 + $0x30] sm:$0xff] %vm2164, %v3471
  %3606 = vst.msk [vmem:[%s3598 + $0x38] sm:$0xff] %vm2164, %v3485
  %3607 = vst.msk [vmem:[%s3598 + $0x40] sm:$0xff] %vm2164, %v3499
  %3608 = vst.msk [vmem:[%s3598 + $0x48] sm:$0xff] %vm2164, %v3513
  %3609 = vst.msk [vmem:[%s3598 + $0x50] sm:$0xff] %vm2164, %v3527
  %3610 = vst.msk [vmem:[%s3598 + $0x58] sm:$0xff] %vm2164, %v3541
  %3611 = vst.msk [vmem:[%s3598 + $0x60] sm:$0xff] %vm2164, %v3555
  %3612 = vst.msk [vmem:[%s3598 + $0x68] sm:$0xff] %vm2164, %v3569
  %3613 = vst.msk [vmem:[%s3598 + $0x70] sm:$0xff] %vm2164, %v3583
  %3614 = vst.msk [vmem:[%s3598 + $0x78] sm:$0xff] %vm2164, %v3597
  // Predicated region
  $region30: #{color_mapper_forward.9} parent=0 // pred_check
    _
  $region31: #{color_mapper_forward.9} parent=0 // pred_check_branch
    %3616 = sbr.rel (0) target = $region33
  $region32: #{color_mapper_forward.9} parent=0 // pred_region
    _
  $region33: #{color_mapper_forward.9} parent=0 // pred_fallthru
    _
  // Predicated region
  $region34: #{color_mapper_forward.9} parent=0 // pred_check
    _
  $region35: #{color_mapper_forward.9} parent=0 // pred_check_branch
    %3618 = sbr.rel (0) target = $region37
  $region36: #{color_mapper_forward.9} parent=0 // pred_region
    _
  $region37: #{color_mapper_forward.9} parent=0 // pred_fallthru
    _

</llo_original>
